<compile_context>
chip_gen: v5e
topology: v5e:2x2
jax: 0.10.0
libtpu: 0.0.40
codegen_flags: <defaults>
</compile_context>

<pallas_src>
import jax
import jax.numpy as jnp
from jax.experimental import pallas as pl
from jax.experimental.pallas import tpu as pltpu

BN_EPS = 1e-5
LANE = 128


def _round_up(v, m):
    return (v + m - 1) // m * m


def resblock_kernel(x_ref, w1_ref, w2_ref, g1_ref, b1_ref, g2_ref, b2_ref,
                    out_ref, xp_ref):
    """All refs live in VMEM.

    x_ref   : (N, H, W, CP)      f32 input, channels pre-padded to CP lanes
    w*_ref  : (9*CP, CP)         im2col conv weights (row block t = 3*dh + dw)
    g*,b*   : (1, CP)            batchnorm gamma / beta (identity on pad lanes)
    out_ref : (N*H*W, CP)        f32 lane-dense output (wrapper slices [:, :C])
    xp_ref  : (N, H+2, W+2, CP)  f32 scratch: zero halo + current activation
    """
    N, HP, WP, CP = xp_ref.shape
    H, W = HP - 2, WP - 2
    M = N * H * W
    mxu_dtype = w1_ref.dtype

    # One-time zero halo (in-kernel padding); only the interior is rewritten.
    xp_ref[...] = jnp.zeros(xp_ref.shape, xp_ref.dtype)
    xp_ref[:, 1:H + 1, 1:W + 1, :] = x_ref[...]

    def conv3x3(w_ref):
        # Build the im2col patch once, then a single lane-dense MXU matmul:
        #   (M, 9*CP) @ (9*CP, CP) -> (M, CP), f32 accumulation.
        taps = []
        center = None
        for dh in range(3):
            for dw in range(3):
                tap = xp_ref[:, dh:dh + H, dw:dw + W, :].reshape(M, CP)
                if dh == 1 and dw == 1:
                    center = tap                 # f32 snapshot of the interior
                taps.append(tap.astype(mxu_dtype))
        patch = jnp.concatenate(taps, axis=-1)                       # (M, 9*CP)
        y = jnp.dot(patch, w_ref[...], preferred_element_type=jnp.float32)
        return y, center

    def batchnorm(y, g_ref, b_ref):
        # Training-mode BN: per-channel batch stats, biased variance (all f32).
        mean = jnp.mean(y, axis=0, keepdims=True)                    # (1, CP)
        var = jnp.mean((y - mean) ** 2, axis=0, keepdims=True)       # (1, CP)
        return (y - mean) * jax.lax.rsqrt(var + BN_EPS) * g_ref[...] + b_ref[...]

    # --- conv1 -> bn1 -> relu -------------------------------------------------
    y1, resid = conv3x3(w1_ref)                                      # resid = x
    h1 = jnp.maximum(batchnorm(y1, g1_ref, b1_ref), 0.0)             # (M, CP)

    # Reuse the same padded scratch as conv2's input (halo is already zero).
    xp_ref[:, 1:H + 1, 1:W + 1, :] = h1.reshape(N, H, W, CP)

    # --- conv2 -> bn2 -> +x -> relu --------------------------------------------
    y2, _ = conv3x3(w2_ref)
    y2 = batchnorm(y2, g2_ref, b2_ref)
    out_ref[...] = jnp.maximum(y2 + resid, 0.0).astype(out_ref.dtype)


def _conv_weight_matrix(w_hwio, cp, dtype):
    """(3, 3, C, C) HWIO -> (9*cp, cp) im2col weight matrix (zero-padded)."""
    kh, kw, ci, co = w_hwio.shape
    wm = jnp.zeros((kh * kw, cp, cp), jnp.float32)
    wm = wm.at[:, :ci, :co].set(w_hwio.reshape(kh * kw, ci, co).astype(jnp.float32))
    return wm.reshape(kh * kw * cp, cp).astype(dtype)


def _pad_bn_param(v, cp, fill):
    c = v.shape[0]
    v = v.astype(jnp.float32)
    if cp > c:
        v = jnp.concatenate([v, jnp.full((cp - c,), fill, jnp.float32)])
    return v.reshape(1, cp)


def residual_block(x_nchw, w1, w2, g1, b1, g2, b2, mxu_dtype=jnp.bfloat16):
    """NCHW in / NCHW out.  mxu_dtype=bf16 recommended on v6e/v7x; use f32 for
    bit-close parity with an f32 reference (e.g. on v5e)."""
    N, C, H, W = x_nchw.shape
    CP = _round_up(C, LANE)
    M = N * H * W

    # NHWC; channel pad to a full lane multiple (free when C % 128 == 0).
    # Spatial zero-padding is done inside the kernel, not here.
    x = jnp.transpose(x_nchw, (0, 2, 3, 1)).astype(jnp.float32)
    if CP > C:
        x = jnp.pad(x, ((0, 0), (0, 0), (0, 0), (0, CP - C)))

    w1m = _conv_weight_matrix(w1, CP, mxu_dtype)
    w2m = _conv_weight_matrix(w2, CP, mxu_dtype)
    g1p = _pad_bn_param(g1, CP, 1.0)
    b1p = _pad_bn_param(b1, CP, 0.0)
    g2p = _pad_bn_param(g2, CP, 1.0)
    b2p = _pad_bn_param(b2, CP, 0.0)

    out2d = pl.pallas_call(
        resblock_kernel,
        out_shape=jax.ShapeDtypeStruct((M, CP), jnp.float32),
        in_specs=[pl.BlockSpec(memory_space=pltpu.MemorySpace.VMEM)] * 7,
        out_specs=pl.BlockSpec(memory_space=pltpu.MemorySpace.VMEM),
        scratch_shapes=[pltpu.VMEM((N, H + 2, W + 2, CP), jnp.float32)],
        compiler_params=pltpu.CompilerParams(vmem_limit_bytes=32 * 1024 * 1024),
    )(x, w1m, w2m, g1p, b1p, g2p, b2p)

    out = out2d[:, :C].reshape(N, H, W, C)
    return jnp.transpose(out, (0, 3, 1, 2))                          # back to NCHW


def ref_forward(x_nchw, w1, w2, g1, b1, g2, b2):
    """Pure-JAX reference mirroring the PyTorch forward (training-mode BN)."""
    x = jnp.transpose(x_nchw, (0, 2, 3, 1)).astype(jnp.float32)

    def conv(y, w):
        return jax.lax.conv_general_dilated(
            y, w, window_strides=(1, 1), padding="SAME",
            dimension_numbers=("NHWC", "HWIO", "NHWC"))

    def bn(y, g, b):
        mean = y.mean(axis=(0, 1, 2), keepdims=True)
        var = ((y - mean) ** 2).mean(axis=(0, 1, 2), keepdims=True)
        return (y - mean) / jnp.sqrt(var + BN_EPS) * g.reshape(1, 1, 1, -1) \
            + b.reshape(1, 1, 1, -1)

    out = jax.nn.relu(bn(conv(x, w1), g1, b1))
    out = bn(conv(out, w2), g2, b2) + x
    out = jax.nn.relu(out)
    return jnp.transpose(out, (0, 3, 1, 2))


if __name__ == "__main__":
    key = jax.random.PRNGKey(0)
    N, C, H, W = 2, 4, 16, 16
    k_x, k_w1, k_w2 = jax.random.split(key, 3)

    x = jax.random.normal(k_x, (N, C, H, W), jnp.float32)            # NCHW input
    w1 = 0.1 * jax.random.normal(k_w1, (3, 3, C, C), jnp.float32)    # HWIO
    w2 = 0.1 * jax.random.normal(k_w2, (3, 3, C, C), jnp.float32)
    g1 = jnp.ones((C,), jnp.float32)
    b1 = jnp.zeros((C,), jnp.float32)
    g2 = jnp.ones((C,), jnp.float32)
    b2 = jnp.zeros((C,), jnp.float32)

    ref = jax.block_until_ready(ref_forward(x, w1, w2, g1, b1, g2, b2))

    # Exact-parity path: f32 MXU inputs (recommended default on v5e).
    out_f32 = jax.block_until_ready(
        residual_block(x, w1, w2, g1, b1, g2, b2, mxu_dtype=jnp.float32))
    assert out_f32.shape == (N, C, H, W), out_f32.shape
    assert jnp.allclose(out_f32, ref, atol=2e-4, rtol=2e-4), \
        f"f32 max abs err = {jnp.max(jnp.abs(out_f32 - ref))}"

    # Perf path recommended for v6e/v7x: bf16 MXU inputs, f32 accumulation.
    # Tolerance is widened per the review note (bf16 mantissa on the conv taps).
    out_bf16 = jax.block_until_ready(
        residual_block(x, w1, w2, g1, b1, g2, b2, mxu_dtype=jnp.bfloat16))
    assert out_bf16.shape == (N, C, H, W), out_bf16.shape
    assert jnp.allclose(out_bf16, ref, atol=1e-1, rtol=1e-1), \
        f"bf16 max abs err = {jnp.max(jnp.abs(out_bf16 - ref))}"

    print("KERNEL_OK")
</pallas_src>

<mosaic_0001>
module attributes {stable_mosaic.version = 11 : i64} {
  func.func @resblock_kernel(%arg0: memref<2x16x16x128xf32, #tpu.memory_space<vmem>>, %arg1: memref<1152x128xf32, #tpu.memory_space<vmem>>, %arg2: memref<1152x128xf32, #tpu.memory_space<vmem>>, %arg3: memref<1x128xf32, #tpu.memory_space<vmem>>, %arg4: memref<1x128xf32, #tpu.memory_space<vmem>>, %arg5: memref<1x128xf32, #tpu.memory_space<vmem>>, %arg6: memref<1x128xf32, #tpu.memory_space<vmem>>, %arg7: memref<512x128xf32, #tpu.memory_space<vmem>>, %arg8: memref<2x18x18x128xf32, #tpu.memory_space<vmem>>) attributes {dimension_semantics = [], scalar_prefetch = 0 : i64, scratch_operands = 1 : i64, tpu.core_type = #tpu.core_type<tc>} {
    %cst = arith.constant 0.000000e+00 : f32
    %0 = vector.broadcast %cst : f32 to vector<2x18x18x128xf32>
    %c0 = arith.constant 0 : index
    %c0_0 = arith.constant 0 : index
    %c0_1 = arith.constant 0 : index
    %c0_2 = arith.constant 0 : index
    %1 = vector.load %arg8[%c0, %c0_0, %c0_1, %c0_2] : memref<2x18x18x128xf32, #tpu.memory_space<vmem>>, vector<2x18x18x128xf32>
    tpu.vector_store %arg8[%c0, %c0_0, %c0_1, %c0_2], %0 {strides = array<i32>} : memref<2x18x18x128xf32, #tpu.memory_space<vmem>>, vector<2x18x18x128xf32>,
    %c0_3 = arith.constant 0 : index
    %c0_4 = arith.constant 0 : index
    %c0_5 = arith.constant 0 : index
    %c0_6 = arith.constant 0 : index
    %2 = vector.load %arg0[%c0_3, %c0_4, %c0_5, %c0_6] : memref<2x16x16x128xf32, #tpu.memory_space<vmem>>, vector<2x16x16x128xf32>
    %c0_7 = arith.constant 0 : index
    %c1 = arith.constant 1 : index
    %c1_8 = arith.constant 1 : index
    %c0_9 = arith.constant 0 : index
    %3 = vector.load %arg8[%c0_7, %c1, %c1_8, %c0_9] : memref<2x18x18x128xf32, #tpu.memory_space<vmem>>, vector<2x16x16x128xf32>
    tpu.vector_store %arg8[%c0_7, %c1, %c1_8, %c0_9], %2 {strides = array<i32>} : memref<2x18x18x128xf32, #tpu.memory_space<vmem>>, vector<2x16x16x128xf32>,
    %c0_10 = arith.constant 0 : index
    %c0_11 = arith.constant 0 : index
    %c0_12 = arith.constant 0 : index
    %c0_13 = arith.constant 0 : index
    %4 = vector.load %arg8[%c0_10, %c0_11, %c0_12, %c0_13] : memref<2x18x18x128xf32, #tpu.memory_space<vmem>>, vector<2x16x16x128xf32>
    %5 = vector.shape_cast %4 : vector<2x16x16x128xf32> to vector<512x128xf32>
    %c0_14 = arith.constant 0 : index
    %c0_15 = arith.constant 0 : index
    %c1_16 = arith.constant 1 : index
    %c0_17 = arith.constant 0 : index
    %6 = vector.load %arg8[%c0_14, %c0_15, %c1_16, %c0_17] : memref<2x18x18x128xf32, #tpu.memory_space<vmem>>, vector<2x16x16x128xf32>
    %7 = vector.shape_cast %6 : vector<2x16x16x128xf32> to vector<512x128xf32>
    %c0_18 = arith.constant 0 : index
    %c0_19 = arith.constant 0 : index
    %c2 = arith.constant 2 : index
    %c0_20 = arith.constant 0 : index
    %8 = vector.load %arg8[%c0_18, %c0_19, %c2, %c0_20] : memref<2x18x18x128xf32, #tpu.memory_space<vmem>>, vector<2x16x16x128xf32>
    %9 = vector.shape_cast %8 : vector<2x16x16x128xf32> to vector<512x128xf32>
    %c0_21 = arith.constant 0 : index
    %c1_22 = arith.constant 1 : index
    %c0_23 = arith.constant 0 : index
    %c0_24 = arith.constant 0 : index
    %10 = vector.load %arg8[%c0_21, %c1_22, %c0_23, %c0_24] : memref<2x18x18x128xf32, #tpu.memory_space<vmem>>, vector<2x16x16x128xf32>
    %11 = vector.shape_cast %10 : vector<2x16x16x128xf32> to vector<512x128xf32>
    %c0_25 = arith.constant 0 : index
    %c1_26 = arith.constant 1 : index
    %c1_27 = arith.constant 1 : index
    %c0_28 = arith.constant 0 : index
    %12 = vector.load %arg8[%c0_25, %c1_26, %c1_27, %c0_28] : memref<2x18x18x128xf32, #tpu.memory_space<vmem>>, vector<2x16x16x128xf32>
    %13 = vector.shape_cast %12 : vector<2x16x16x128xf32> to vector<512x128xf32>
    %c0_29 = arith.constant 0 : index
    %c1_30 = arith.constant 1 : index
    %c2_31 = arith.constant 2 : index
    %c0_32 = arith.constant 0 : index
    %14 = vector.load %arg8[%c0_29, %c1_30, %c2_31, %c0_32] : memref<2x18x18x128xf32, #tpu.memory_space<vmem>>, vector<2x16x16x128xf32>
    %15 = vector.shape_cast %14 : vector<2x16x16x128xf32> to vector<512x128xf32>
    %c0_33 = arith.constant 0 : index
    %c2_34 = arith.constant 2 : index
    %c0_35 = arith.constant 0 : index
    %c0_36 = arith.constant 0 : index
    %16 = vector.load %arg8[%c0_33, %c2_34, %c0_35, %c0_36] : memref<2x18x18x128xf32, #tpu.memory_space<vmem>>, vector<2x16x16x128xf32>
    %17 = vector.shape_cast %16 : vector<2x16x16x128xf32> to vector<512x128xf32>
    %c0_37 = arith.constant 0 : index
    %c2_38 = arith.constant 2 : index
    %c1_39 = arith.constant 1 : index
    %c0_40 = arith.constant 0 : index
    %18 = vector.load %arg8[%c0_37, %c2_38, %c1_39, %c0_40] : memref<2x18x18x128xf32, #tpu.memory_space<vmem>>, vector<2x16x16x128xf32>
    %19 = vector.shape_cast %18 : vector<2x16x16x128xf32> to vector<512x128xf32>
    %c0_41 = arith.constant 0 : index
    %c2_42 = arith.constant 2 : index
    %c2_43 = arith.constant 2 : index
    %c0_44 = arith.constant 0 : index
    %20 = vector.load %arg8[%c0_41, %c2_42, %c2_43, %c0_44] : memref<2x18x18x128xf32, #tpu.memory_space<vmem>>, vector<2x16x16x128xf32>
    %21 = vector.shape_cast %20 : vector<2x16x16x128xf32> to vector<512x128xf32>
    %22 = tpu.concatenate %5, %7, %9, %11, %13, %15, %17, %19, %21 in 1 : vector<512x128xf32>, vector<512x128xf32>, vector<512x128xf32>, vector<512x128xf32>, vector<512x128xf32>, vector<512x128xf32>, vector<512x128xf32>, vector<512x128xf32>, vector<512x128xf32> -> vector<512x1152xf32>
    %c0_45 = arith.constant 0 : index
    %c0_46 = arith.constant 0 : index
    %23 = vector.load %arg1[%c0_45, %c0_46] : memref<1152x128xf32, #tpu.memory_space<vmem>>, vector<1152x128xf32>
    %cst_47 = arith.constant dense<0.000000e+00> : vector<512x128xf32>
    %24 = tpu.matmul %22, %23, %cst_47 {dimension_numbers = #tpu.dot_dimension_numbers<[1], [0], [0], [1], [0, 0, 1, 1], [], []>} : vector<512x1152xf32>, vector<1152x128xf32>, vector<512x128xf32> -> vector<512x128xf32>
    %cst_48 = arith.constant dense<0.000000e+00> : vector<128xf32>
    %25 = vector.multi_reduction <add>, %24, %cst_48 [0] : vector<512x128xf32> to vector<128xf32>
    %26 = vector.shape_cast %25 : vector<128xf32> to vector<1x128xf32>
    %cst_49 = arith.constant 5.120000e+02 : f32
    %27 = vector.broadcast %cst_49 : f32 to vector<1x128xf32>
    %28 = arith.divf %26, %27 : vector<1x128xf32>
    %29 = vector.broadcast %28 : vector<1x128xf32> to vector<512x128xf32>
    %30 = arith.subf %24, %29 : vector<512x128xf32>
    %31 = arith.mulf %30, %30 : vector<512x128xf32>
    %cst_50 = arith.constant dense<0.000000e+00> : vector<128xf32>
    %32 = vector.multi_reduction <add>, %31, %cst_50 [0] : vector<512x128xf32> to vector<128xf32>
    %33 = vector.shape_cast %32 : vector<128xf32> to vector<1x128xf32>
    %cst_51 = arith.constant 5.120000e+02 : f32
    %34 = vector.broadcast %cst_51 : f32 to vector<1x128xf32>
    %35 = arith.divf %33, %34 : vector<1x128xf32>
    %36 = vector.broadcast %28 : vector<1x128xf32> to vector<512x128xf32>
    %37 = arith.subf %24, %36 : vector<512x128xf32>
    %cst_52 = arith.constant 9.99999974E-6 : f32
    %38 = vector.broadcast %cst_52 : f32 to vector<1x128xf32>
    %39 = arith.addf %35, %38 : vector<1x128xf32>
    %40 = math.rsqrt %39 : vector<1x128xf32>
    %41 = vector.broadcast %40 : vector<1x128xf32> to vector<512x128xf32>
    %42 = arith.mulf %37, %41 : vector<512x128xf32>
    %c0_53 = arith.constant 0 : index
    %c0_54 = arith.constant 0 : index
    %43 = vector.load %arg3[%c0_53, %c0_54] : memref<1x128xf32, #tpu.memory_space<vmem>>, vector<1x128xf32>
    %44 = vector.broadcast %43 : vector<1x128xf32> to vector<512x128xf32>
    %45 = arith.mulf %42, %44 : vector<512x128xf32>
    %c0_55 = arith.constant 0 : index
    %c0_56 = arith.constant 0 : index
    %46 = vector.load %arg4[%c0_55, %c0_56] : memref<1x128xf32, #tpu.memory_space<vmem>>, vector<1x128xf32>
    %47 = vector.broadcast %46 : vector<1x128xf32> to vector<512x128xf32>
    %48 = arith.addf %45, %47 : vector<512x128xf32>
    %cst_57 = arith.constant 0.000000e+00 : f32
    %49 = vector.broadcast %cst_57 : f32 to vector<512x128xf32>
    %50 = arith.maximumf %48, %49 : vector<512x128xf32>
    %51 = vector.shape_cast %50 : vector<512x128xf32> to vector<2x16x16x128xf32>
    %c0_58 = arith.constant 0 : index
    %c1_59 = arith.constant 1 : index
    %c1_60 = arith.constant 1 : index
    %c0_61 = arith.constant 0 : index
    %52 = vector.load %arg8[%c0_58, %c1_59, %c1_60, %c0_61] : memref<2x18x18x128xf32, #tpu.memory_space<vmem>>, vector<2x16x16x128xf32>
    tpu.vector_store %arg8[%c0_58, %c1_59, %c1_60, %c0_61], %51 {strides = array<i32>} : memref<2x18x18x128xf32, #tpu.memory_space<vmem>>, vector<2x16x16x128xf32>,
    %c0_62 = arith.constant 0 : index
    %c0_63 = arith.constant 0 : index
    %c0_64 = arith.constant 0 : index
    %c0_65 = arith.constant 0 : index
    %53 = vector.load %arg8[%c0_62, %c0_63, %c0_64, %c0_65] : memref<2x18x18x128xf32, #tpu.memory_space<vmem>>, vector<2x16x16x128xf32>
    %54 = vector.shape_cast %53 : vector<2x16x16x128xf32> to vector<512x128xf32>
    %c0_66 = arith.constant 0 : index
    %c0_67 = arith.constant 0 : index
    %c1_68 = arith.constant 1 : index
    %c0_69 = arith.constant 0 : index
    %55 = vector.load %arg8[%c0_66, %c0_67, %c1_68, %c0_69] : memref<2x18x18x128xf32, #tpu.memory_space<vmem>>, vector<2x16x16x128xf32>
    %56 = vector.shape_cast %55 : vector<2x16x16x128xf32> to vector<512x128xf32>
    %c0_70 = arith.constant 0 : index
    %c0_71 = arith.constant 0 : index
    %c2_72 = arith.constant 2 : index
    %c0_73 = arith.constant 0 : index
    %57 = vector.load %arg8[%c0_70, %c0_71, %c2_72, %c0_73] : memref<2x18x18x128xf32, #tpu.memory_space<vmem>>, vector<2x16x16x128xf32>
    %58 = vector.shape_cast %57 : vector<2x16x16x128xf32> to vector<512x128xf32>
    %c0_74 = arith.constant 0 : index
    %c1_75 = arith.constant 1 : index
    %c0_76 = arith.constant 0 : index
    %c0_77 = arith.constant 0 : index
    %59 = vector.load %arg8[%c0_74, %c1_75, %c0_76, %c0_77] : memref<2x18x18x128xf32, #tpu.memory_space<vmem>>, vector<2x16x16x128xf32>
    %60 = vector.shape_cast %59 : vector<2x16x16x128xf32> to vector<512x128xf32>
    %c0_78 = arith.constant 0 : index
    %c1_79 = arith.constant 1 : index
    %c1_80 = arith.constant 1 : index
    %c0_81 = arith.constant 0 : index
    %61 = vector.load %arg8[%c0_78, %c1_79, %c1_80, %c0_81] : memref<2x18x18x128xf32, #tpu.memory_space<vmem>>, vector<2x16x16x128xf32>
    %62 = vector.shape_cast %61 : vector<2x16x16x128xf32> to vector<512x128xf32>
    %c0_82 = arith.constant 0 : index
    %c1_83 = arith.constant 1 : index
    %c2_84 = arith.constant 2 : index
    %c0_85 = arith.constant 0 : index
    %63 = vector.load %arg8[%c0_82, %c1_83, %c2_84, %c0_85] : memref<2x18x18x128xf32, #tpu.memory_space<vmem>>, vector<2x16x16x128xf32>
    %64 = vector.shape_cast %63 : vector<2x16x16x128xf32> to vector<512x128xf32>
    %c0_86 = arith.constant 0 : index
    %c2_87 = arith.constant 2 : index
    %c0_88 = arith.constant 0 : index
    %c0_89 = arith.constant 0 : index
    %65 = vector.load %arg8[%c0_86, %c2_87, %c0_88, %c0_89] : memref<2x18x18x128xf32, #tpu.memory_space<vmem>>, vector<2x16x16x128xf32>
    %66 = vector.shape_cast %65 : vector<2x16x16x128xf32> to vector<512x128xf32>
    %c0_90 = arith.constant 0 : index
    %c2_91 = arith.constant 2 : index
    %c1_92 = arith.constant 1 : index
    %c0_93 = arith.constant 0 : index
    %67 = vector.load %arg8[%c0_90, %c2_91, %c1_92, %c0_93] : memref<2x18x18x128xf32, #tpu.memory_space<vmem>>, vector<2x16x16x128xf32>
    %68 = vector.shape_cast %67 : vector<2x16x16x128xf32> to vector<512x128xf32>
    %c0_94 = arith.constant 0 : index
    %c2_95 = arith.constant 2 : index
    %c2_96 = arith.constant 2 : index
    %c0_97 = arith.constant 0 : index
    %69 = vector.load %arg8[%c0_94, %c2_95, %c2_96, %c0_97] : memref<2x18x18x128xf32, #tpu.memory_space<vmem>>, vector<2x16x16x128xf32>
    %70 = vector.shape_cast %69 : vector<2x16x16x128xf32> to vector<512x128xf32>
    %71 = tpu.concatenate %54, %56, %58, %60, %62, %64, %66, %68, %70 in 1 : vector<512x128xf32>, vector<512x128xf32>, vector<512x128xf32>, vector<512x128xf32>, vector<512x128xf32>, vector<512x128xf32>, vector<512x128xf32>, vector<512x128xf32>, vector<512x128xf32> -> vector<512x1152xf32>
    %c0_98 = arith.constant 0 : index
    %c0_99 = arith.constant 0 : index
    %72 = vector.load %arg2[%c0_98, %c0_99] : memref<1152x128xf32, #tpu.memory_space<vmem>>, vector<1152x128xf32>
    %cst_100 = arith.constant dense<0.000000e+00> : vector<512x128xf32>
    %73 = tpu.matmul %71, %72, %cst_100 {dimension_numbers = #tpu.dot_dimension_numbers<[1], [0], [0], [1], [0, 0, 1, 1], [], []>} : vector<512x1152xf32>, vector<1152x128xf32>, vector<512x128xf32> -> vector<512x128xf32>
    %cst_101 = arith.constant dense<0.000000e+00> : vector<128xf32>
    %74 = vector.multi_reduction <add>, %73, %cst_101 [0] : vector<512x128xf32> to vector<128xf32>
    %75 = vector.shape_cast %74 : vector<128xf32> to vector<1x128xf32>
    %cst_102 = arith.constant 5.120000e+02 : f32
    %76 = vector.broadcast %cst_102 : f32 to vector<1x128xf32>
    %77 = arith.divf %75, %76 : vector<1x128xf32>
    %78 = vector.broadcast %77 : vector<1x128xf32> to vector<512x128xf32>
    %79 = arith.subf %73, %78 : vector<512x128xf32>
    %80 = arith.mulf %79, %79 : vector<512x128xf32>
    %cst_103 = arith.constant dense<0.000000e+00> : vector<128xf32>
    %81 = vector.multi_reduction <add>, %80, %cst_103 [0] : vector<512x128xf32> to vector<128xf32>
    %82 = vector.shape_cast %81 : vector<128xf32> to vector<1x128xf32>
    %cst_104 = arith.constant 5.120000e+02 : f32
    %83 = vector.broadcast %cst_104 : f32 to vector<1x128xf32>
    %84 = arith.divf %82, %83 : vector<1x128xf32>
    %85 = vector.broadcast %77 : vector<1x128xf32> to vector<512x128xf32>
    %86 = arith.subf %73, %85 : vector<512x128xf32>
    %cst_105 = arith.constant 9.99999974E-6 : f32
    %87 = vector.broadcast %cst_105 : f32 to vector<1x128xf32>
    %88 = arith.addf %84, %87 : vector<1x128xf32>
    %89 = math.rsqrt %88 : vector<1x128xf32>
    %90 = vector.broadcast %89 : vector<1x128xf32> to vector<512x128xf32>
    %91 = arith.mulf %86, %90 : vector<512x128xf32>
    %c0_106 = arith.constant 0 : index
    %c0_107 = arith.constant 0 : index
    %92 = vector.load %arg5[%c0_106, %c0_107] : memref<1x128xf32, #tpu.memory_space<vmem>>, vector<1x128xf32>
    %93 = vector.broadcast %92 : vector<1x128xf32> to vector<512x128xf32>
    %94 = arith.mulf %91, %93 : vector<512x128xf32>
    %c0_108 = arith.constant 0 : index
    %c0_109 = arith.constant 0 : index
    %95 = vector.load %arg6[%c0_108, %c0_109] : memref<1x128xf32, #tpu.memory_space<vmem>>, vector<1x128xf32>
    %96 = vector.broadcast %95 : vector<1x128xf32> to vector<512x128xf32>
    %97 = arith.addf %94, %96 : vector<512x128xf32>
    %98 = arith.addf %97, %13 : vector<512x128xf32>
    %cst_110 = arith.constant 0.000000e+00 : f32
    %99 = vector.broadcast %cst_110 : f32 to vector<512x128xf32>
    %100 = arith.maximumf %98, %99 : vector<512x128xf32>
    %c0_111 = arith.constant 0 : index
    %c0_112 = arith.constant 0 : index
    %101 = vector.load %arg7[%c0_111, %c0_112] : memref<512x128xf32, #tpu.memory_space<vmem>>, vector<512x128xf32>
    tpu.vector_store %arg7[%c0_111, %c0_112], %100 {strides = array<i32>} : memref<512x128xf32, #tpu.memory_space<vmem>>, vector<512x128xf32>,
    return
  }
}

</mosaic_0001>

<llo_original>
// kernel: tpu_custom_call.1
$region0: #{tpu_custom_call.1}
  #allocation0 [shape = 'u32[]', space=smem, size = 0x4, offset = 0x4, fixed_abs, tag = 'smem constant byte address 0x4 - core index']
  #allocation1 [shape = 'u32[72,128]{1,0:T(1,128)}', space=vmem, size = 0x9000, scoped, tag = 'internal scratch']
  #allocation2 [shape = 'f32[2,18,18,128]{3,2,1,0:T(8,128)}', space=vmem, size = 0x6c000, scoped, tag = 'scratch operand']
  %s0 = inlined_call_operand.hbm [shape: f32[2,16,16,128], index: 0, kind: input, shape index: {}]
  %s1 = inlined_call_operand.hbm [shape: f32[1152,128], index: 1, kind: input, shape index: {}]
  %s2 = inlined_call_operand.hbm [shape: f32[1152,128], index: 2, kind: input, shape index: {}]
  %s3 = inlined_call_operand.vmem [shape: f32[1,128], index: 3, kind: input, shape index: {}]
  %s4 = inlined_call_operand.vmem [shape: f32[1,128], index: 4, kind: input, shape index: {}]
  %s5 = inlined_call_operand.vmem [shape: f32[1,128], index: 5, kind: input, shape index: {}]
  %s6 = inlined_call_operand.vmem [shape: f32[1,128], index: 6, kind: input, shape index: {}]
  %s7 = inlined_call_operand.hbm [shape: f32[512,128], index: 7, kind: output, shape index: {}]
  %s8 = sld [smem:[#allocation0]]
  $region50: #{tpu_custom_call.1} parent=0
    _
  %s10 = ssub.s32 1, %s8
  %s11 = scalar_select 0, %s10, %s8
  $region1: #{tpu_custom_call.1} parent=0
    #allocation3 [shape = 'u8[262144]{0}', space=vmem, size = 0x40000, scoped, tag = 'input window, operand 0, single buffered']
    #allocation4 [shape = 's32[1]{0}', space=sflag, size = 0x4, scoped, tag = 'scoped memory for tpu_custom_call.1']
    #allocation5 [shape = 's32[1]{0}', space=sflag, size = 0x4, scoped, tag = 'scoped memory for tpu_custom_call.1']
    #allocation6 [shape = 'u8[589824]{0}', space=vmem, size = 0x90000, scoped, tag = 'input window, operand 1, single buffered']
    #allocation7 [shape = 's32[1]{0}', space=sflag, size = 0x4, scoped, tag = 'scoped memory for tpu_custom_call.1']
    #allocation8 [shape = 'u8[589824]{0}', space=vmem, size = 0x90000, scoped, tag = 'input window, operand 2, single buffered']
    #allocation9 [shape = 'u8[262144]{0}', space=vmem, size = 0x40000, scoped, tag = 'output window, operand 0, single buffered']
    %12 = vsyncpa [#allocation4], 0
    %13 = vsyncpa [#allocation7], 0
    %14 = vsyncpa [#allocation5], 0
    // Predicated region
    $region2: #{tpu_custom_call.1} parent=1 // pred_check
      _
    $region3: #{tpu_custom_call.1} parent=1 // pred_check_branch
      %16 = sbr.rel (0) target = $region5
    $region4: #{tpu_custom_call.1} parent=1 // pred_region
      %18 = vsyncadd [#allocation4], 0
      %s19 = sshll.u32 %s0, 4
      %s20 = int_to_ptr.hbm [resolvable:$true] %s19
      %s21 = sshll.u32 [#allocation3], 4
      %s22 = int_to_ptr.vmem [resolvable:$true] %s21
      %27 = dma.hbm_to_vmem [thread:$0]  %s20, 8192, %s22, [#allocation4], 128, 128, 8
    $region5: #{tpu_custom_call.1} parent=1 // pred_fallthru
      _
    // Predicated region
    $region6: #{tpu_custom_call.1} parent=1 // pred_check
      _
    $region7: #{tpu_custom_call.1} parent=1 // pred_check_branch
      %29 = sbr.rel (0) target = $region9
    $region8: #{tpu_custom_call.1} parent=1 // pred_region
      %31 = vsyncadd [#allocation7], 0
      %s32 = sshll.u32 %s1, 4
      %s33 = int_to_ptr.hbm [resolvable:$true] %s32
      %s34 = sshll.u32 [#allocation6], 4
      %s35 = int_to_ptr.vmem [resolvable:$true] %s34
      %40 = dma.hbm_to_vmem [thread:$0]  %s33, 18432, %s35, [#allocation7], 128, 128, 8
    $region9: #{tpu_custom_call.1} parent=1 // pred_fallthru
      _
    // Predicated region
    $region10: #{tpu_custom_call.1} parent=1 // pred_check
      _
    $region11: #{tpu_custom_call.1} parent=1 // pred_check_branch
      %42 = sbr.rel (0) target = $region13
    $region12: #{tpu_custom_call.1} parent=1 // pred_region
      %44 = vsyncadd [#allocation7], 0
      %s45 = sshll.u32 %s2, 4
      %s46 = int_to_ptr.hbm [resolvable:$true] %s45
      %s47 = sshll.u32 [#allocation8], 4
      %s48 = int_to_ptr.vmem [resolvable:$true] %s47
      %53 = dma.hbm_to_vmem [thread:$0]  %s46, 18432, %s48, [#allocation7], 128, 128, 8
    $region13: #{tpu_custom_call.1} parent=1 // pred_fallthru
      _
    // Predicated region
    $region14: #{tpu_custom_call.1} parent=1 // pred_check
      _
    $region15: #{tpu_custom_call.1} parent=1 // pred_check_branch
      %55 = sbr.rel (0) target = $region17
    $region16: #{tpu_custom_call.1} parent=1 // pred_region
      _
    $region17: #{tpu_custom_call.1} parent=1 // pred_fallthru
      _
    // Predicated region
    $region18: #{tpu_custom_call.1} parent=1 // pred_check
      _
    $region19: #{tpu_custom_call.1} parent=1 // pred_check_branch
      %57 = sbr.rel (0) target = $region21
    $region20: #{tpu_custom_call.1} parent=1 // pred_region
      _
    $region21: #{tpu_custom_call.1} parent=1 // pred_fallthru
      _
    // Predicated region
    $region22: #{tpu_custom_call.1} parent=1 // pred_check
      _
    $region23: #{tpu_custom_call.1} parent=1 // pred_check_branch
      %59 = sbr.rel (0) target = $region25
    $region24: #{tpu_custom_call.1} parent=1 // pred_region
      _
    $region25: #{tpu_custom_call.1} parent=1 // pred_fallthru
      _
    // Predicated region
    $region26: #{tpu_custom_call.1} parent=1 // pred_check
      _
    $region27: #{tpu_custom_call.1} parent=1 // pred_check_branch
      %61 = sbr.rel (0) target = $region29
    $region28: #{tpu_custom_call.1} parent=1 // pred_region
      _
    $region29: #{tpu_custom_call.1} parent=1 // pred_fallthru
      _
    // Predicated region
    $region30: #{tpu_custom_call.1} parent=1 // pred_check
      _
    $region31: #{tpu_custom_call.1} parent=1 // pred_check_branch
      %63 = sbr.rel (0) target = $region33
    $region32: #{tpu_custom_call.1} parent=1 // pred_region
      %65 = dma.done [#allocation4], 8192
    $region33: #{tpu_custom_call.1} parent=1 // pred_fallthru
      _
    // Predicated region
    $region34: #{tpu_custom_call.1} parent=1 // pred_check
      _
    $region35: #{tpu_custom_call.1} parent=1 // pred_check_branch
      %67 = sbr.rel (0) target = $region37
    $region36: #{tpu_custom_call.1} parent=1 // pred_region
      %69 = dma.done [#allocation7], 18432
    $region37: #{tpu_custom_call.1} parent=1 // pred_fallthru
      _
    // Predicated region
    $region38: #{tpu_custom_call.1} parent=1 // pred_check
      _
    $region39: #{tpu_custom_call.1} parent=1 // pred_check_branch
      %71 = sbr.rel (0) target = $region41
    $region40: #{tpu_custom_call.1} parent=1 // pred_region
      %73 = dma.done [#allocation7], 18432
    $region41: #{tpu_custom_call.1} parent=1 // pred_fallthru
      _
    %74 = vst [vmem:[#allocation2] sm:$0xff] 0.0
    %75 = vst [vmem:[#allocation2 + $0x8] sm:$0xff] 0.0
    %76 = vst [vmem:[#allocation2 + $0x10] sm:$0x3] 0.0
    %77 = vst [vmem:[#allocation2 + $0x18] sm:$0xff] 0.0
    %78 = vst [vmem:[#allocation2 + $0x20] sm:$0xff] 0.0
    %79 = vst [vmem:[#allocation2 + $0x28] sm:$0x3] 0.0
    %80 = vst [vmem:[#allocation2 + $0x30] sm:$0xff] 0.0
    %81 = vst [vmem:[#allocation2 + $0x38] sm:$0xff] 0.0
    %82 = vst [vmem:[#allocation2 + $0x40] sm:$0x3] 0.0
    %83 = vst [vmem:[#allocation2 + $0x48] sm:$0xff] 0.0
    %84 = vst [vmem:[#allocation2 + $0x50] sm:$0xff] 0.0
    %85 = vst [vmem:[#allocation2 + $0x58] sm:$0x3] 0.0
    %86 = vst [vmem:[#allocation2 + $0x60] sm:$0xff] 0.0
    %87 = vst [vmem:[#allocation2 + $0x68] sm:$0xff] 0.0
    %88 = vst [vmem:[#allocation2 + $0x70] sm:$0x3] 0.0
    %89 = vst [vmem:[#allocation2 + $0x78] sm:$0xff] 0.0
    %90 = vst [vmem:[#allocation2 + $0x80] sm:$0xff] 0.0
    %91 = vst [vmem:[#allocation2 + $0x88] sm:$0x3] 0.0
    %92 = vst [vmem:[#allocation2 + $0x90] sm:$0xff] 0.0
    %93 = vst [vmem:[#allocation2 + $0x98] sm:$0xff] 0.0
    %94 = vst [vmem:[#allocation2 + $0xa0] sm:$0x3] 0.0
    %95 = vst [vmem:[#allocation2 + $0xa8] sm:$0xff] 0.0
    %96 = vst [vmem:[#allocation2 + $0xb0] sm:$0xff] 0.0
    %97 = vst [vmem:[#allocation2 + $0xb8] sm:$0x3] 0.0
    %98 = vst [vmem:[#allocation2 + $0xc0] sm:$0xff] 0.0
    %99 = vst [vmem:[#allocation2 + $0xc8] sm:$0xff] 0.0
    %100 = vst [vmem:[#allocation2 + $0xd0] sm:$0x3] 0.0
    %101 = vst [vmem:[#allocation2 + $0xd8] sm:$0xff] 0.0
    %102 = vst [vmem:[#allocation2 + $0xe0] sm:$0xff] 0.0
    %103 = vst [vmem:[#allocation2 + $0xe8] sm:$0x3] 0.0
    %104 = vst [vmem:[#allocation2 + $0xf0] sm:$0xff] 0.0
    %105 = vst [vmem:[#allocation2 + $0xf8] sm:$0xff] 0.0
    %106 = vst [vmem:[#allocation2 + $0x100] sm:$0x3] 0.0
    %107 = vst [vmem:[#allocation2 + $0x108] sm:$0xff] 0.0
    %108 = vst [vmem:[#allocation2 + $0x110] sm:$0xff] 0.0
    %109 = vst [vmem:[#allocation2 + $0x118] sm:$0x3] 0.0
    %110 = vst [vmem:[#allocation2 + $0x120] sm:$0xff] 0.0
    %111 = vst [vmem:[#allocation2 + $0x128] sm:$0xff] 0.0
    %112 = vst [vmem:[#allocation2 + $0x130] sm:$0x3] 0.0
    %113 = vst [vmem:[#allocation2 + $0x138] sm:$0xff] 0.0
    %114 = vst [vmem:[#allocation2 + $0x140] sm:$0xff] 0.0
    %115 = vst [vmem:[#allocation2 + $0x148] sm:$0x3] 0.0
    %116 = vst [vmem:[#allocation2 + $0x150] sm:$0xff] 0.0
    %117 = vst [vmem:[#allocation2 + $0x158] sm:$0xff] 0.0
    %118 = vst [vmem:[#allocation2 + $0x160] sm:$0x3] 0.0
    %119 = vst [vmem:[#allocation2 + $0x168] sm:$0xff] 0.0
    %120 = vst [vmem:[#allocation2 + $0x170] sm:$0xff] 0.0
    %121 = vst [vmem:[#allocation2 + $0x178] sm:$0x3] 0.0
    %122 = vst [vmem:[#allocation2 + $0x180] sm:$0xff] 0.0
    %123 = vst [vmem:[#allocation2 + $0x188] sm:$0xff] 0.0
    %124 = vst [vmem:[#allocation2 + $0x190] sm:$0x3] 0.0
    %125 = vst [vmem:[#allocation2 + $0x198] sm:$0xff] 0.0
    %126 = vst [vmem:[#allocation2 + $0x1a0] sm:$0xff] 0.0
    %127 = vst [vmem:[#allocation2 + $0x1a8] sm:$0x3] 0.0
    %128 = vst [vmem:[#allocation2 + $0x1b0] sm:$0xff] 0.0
    %129 = vst [vmem:[#allocation2 + $0x1b8] sm:$0xff] 0.0
    %130 = vst [vmem:[#allocation2 + $0x1c0] sm:$0x3] 0.0
    %131 = vst [vmem:[#allocation2 + $0x1c8] sm:$0xff] 0.0
    %132 = vst [vmem:[#allocation2 + $0x1d0] sm:$0xff] 0.0
    %133 = vst [vmem:[#allocation2 + $0x1d8] sm:$0x3] 0.0
    %134 = vst [vmem:[#allocation2 + $0x1e0] sm:$0xff] 0.0
    %135 = vst [vmem:[#allocation2 + $0x1e8] sm:$0xff] 0.0
    %136 = vst [vmem:[#allocation2 + $0x1f0] sm:$0x3] 0.0
    %137 = vst [vmem:[#allocation2 + $0x1f8] sm:$0xff] 0.0
    %138 = vst [vmem:[#allocation2 + $0x200] sm:$0xff] 0.0
    %139 = vst [vmem:[#allocation2 + $0x208] sm:$0x3] 0.0
    %140 = vst [vmem:[#allocation2 + $0x210] sm:$0xff] 0.0
    %141 = vst [vmem:[#allocation2 + $0x218] sm:$0xff] 0.0
    %142 = vst [vmem:[#allocation2 + $0x220] sm:$0x3] 0.0
    %143 = vst [vmem:[#allocation2 + $0x228] sm:$0xff] 0.0
    %144 = vst [vmem:[#allocation2 + $0x230] sm:$0xff] 0.0
    %145 = vst [vmem:[#allocation2 + $0x238] sm:$0x3] 0.0
    %146 = vst [vmem:[#allocation2 + $0x240] sm:$0xff] 0.0
    %147 = vst [vmem:[#allocation2 + $0x248] sm:$0xff] 0.0
    %148 = vst [vmem:[#allocation2 + $0x250] sm:$0x3] 0.0
    %149 = vst [vmem:[#allocation2 + $0x258] sm:$0xff] 0.0
    %150 = vst [vmem:[#allocation2 + $0x260] sm:$0xff] 0.0
    %151 = vst [vmem:[#allocation2 + $0x268] sm:$0x3] 0.0
    %152 = vst [vmem:[#allocation2 + $0x270] sm:$0xff] 0.0
    %153 = vst [vmem:[#allocation2 + $0x278] sm:$0xff] 0.0
    %154 = vst [vmem:[#allocation2 + $0x280] sm:$0x3] 0.0
    %155 = vst [vmem:[#allocation2 + $0x288] sm:$0xff] 0.0
    %156 = vst [vmem:[#allocation2 + $0x290] sm:$0xff] 0.0
    %157 = vst [vmem:[#allocation2 + $0x298] sm:$0x3] 0.0
    %158 = vst [vmem:[#allocation2 + $0x2a0] sm:$0xff] 0.0
    %159 = vst [vmem:[#allocation2 + $0x2a8] sm:$0xff] 0.0
    %160 = vst [vmem:[#allocation2 + $0x2b0] sm:$0x3] 0.0
    %161 = vst [vmem:[#allocation2 + $0x2b8] sm:$0xff] 0.0
    %162 = vst [vmem:[#allocation2 + $0x2c0] sm:$0xff] 0.0
    %163 = vst [vmem:[#allocation2 + $0x2c8] sm:$0x3] 0.0
    %164 = vst [vmem:[#allocation2 + $0x2d0] sm:$0xff] 0.0
    %165 = vst [vmem:[#allocation2 + $0x2d8] sm:$0xff] 0.0
    %166 = vst [vmem:[#allocation2 + $0x2e0] sm:$0x3] 0.0
    %167 = vst [vmem:[#allocation2 + $0x2e8] sm:$0xff] 0.0
    %168 = vst [vmem:[#allocation2 + $0x2f0] sm:$0xff] 0.0
    %169 = vst [vmem:[#allocation2 + $0x2f8] sm:$0x3] 0.0
    %170 = vst [vmem:[#allocation2 + $0x300] sm:$0xff] 0.0
    %171 = vst [vmem:[#allocation2 + $0x308] sm:$0xff] 0.0
    %172 = vst [vmem:[#allocation2 + $0x310] sm:$0x3] 0.0
    %173 = vst [vmem:[#allocation2 + $0x318] sm:$0xff] 0.0
    %174 = vst [vmem:[#allocation2 + $0x320] sm:$0xff] 0.0
    %175 = vst [vmem:[#allocation2 + $0x328] sm:$0x3] 0.0
    %176 = vst [vmem:[#allocation2 + $0x330] sm:$0xff] 0.0
    %177 = vst [vmem:[#allocation2 + $0x338] sm:$0xff] 0.0
    %178 = vst [vmem:[#allocation2 + $0x340] sm:$0x3] 0.0
    %179 = vst [vmem:[#allocation2 + $0x348] sm:$0xff] 0.0
    %180 = vst [vmem:[#allocation2 + $0x350] sm:$0xff] 0.0
    %181 = vst [vmem:[#allocation2 + $0x358] sm:$0x3] 0.0
    %v182 = vld [vmem:[#allocation3] sm:$0xff]
    %v183 = vld [vmem:[#allocation3 + $0x8] sm:$0xff]
    %v184 = vld [vmem:[#allocation3 + $0x10] sm:$0xff]
    %v185 = vld [vmem:[#allocation3 + $0x18] sm:$0xff]
    %v186 = vld [vmem:[#allocation3 + $0x20] sm:$0xff]
    %v187 = vld [vmem:[#allocation3 + $0x28] sm:$0xff]
    %v188 = vld [vmem:[#allocation3 + $0x30] sm:$0xff]
    %v189 = vld [vmem:[#allocation3 + $0x38] sm:$0xff]
    %v190 = vld [vmem:[#allocation3 + $0x40] sm:$0xff]
    %v191 = vld [vmem:[#allocation3 + $0x48] sm:$0xff]
    %v192 = vld [vmem:[#allocation3 + $0x50] sm:$0xff]
    %v193 = vld [vmem:[#allocation3 + $0x58] sm:$0xff]
    %v194 = vld [vmem:[#allocation3 + $0x60] sm:$0xff]
    %v195 = vld [vmem:[#allocation3 + $0x68] sm:$0xff]
    %v196 = vld [vmem:[#allocation3 + $0x70] sm:$0xff]
    %v197 = vld [vmem:[#allocation3 + $0x78] sm:$0xff]
    %v198 = vld [vmem:[#allocation3 + $0x80] sm:$0xff]
    %v199 = vld [vmem:[#allocation3 + $0x88] sm:$0xff]
    %v200 = vld [vmem:[#allocation3 + $0x90] sm:$0xff]
    %v201 = vld [vmem:[#allocation3 + $0x98] sm:$0xff]
    %v202 = vld [vmem:[#allocation3 + $0xa0] sm:$0xff]
    %v203 = vld [vmem:[#allocation3 + $0xa8] sm:$0xff]
    %v204 = vld [vmem:[#allocation3 + $0xb0] sm:$0xff]
    %v205 = vld [vmem:[#allocation3 + $0xb8] sm:$0xff]
    %v206 = vld [vmem:[#allocation3 + $0xc0] sm:$0xff]
    %v207 = vld [vmem:[#allocation3 + $0xc8] sm:$0xff]
    %v208 = vld [vmem:[#allocation3 + $0xd0] sm:$0xff]
    %v209 = vld [vmem:[#allocation3 + $0xd8] sm:$0xff]
    %v210 = vld [vmem:[#allocation3 + $0xe0] sm:$0xff]
    %v211 = vld [vmem:[#allocation3 + $0xe8] sm:$0xff]
    %v212 = vld [vmem:[#allocation3 + $0xf0] sm:$0xff]
    %v213 = vld [vmem:[#allocation3 + $0xf8] sm:$0xff]
    %v214 = vld [vmem:[#allocation3 + $0x100] sm:$0xff]
    %v215 = vld [vmem:[#allocation3 + $0x108] sm:$0xff]
    %v216 = vld [vmem:[#allocation3 + $0x110] sm:$0xff]
    %v217 = vld [vmem:[#allocation3 + $0x118] sm:$0xff]
    %v218 = vld [vmem:[#allocation3 + $0x120] sm:$0xff]
    %v219 = vld [vmem:[#allocation3 + $0x128] sm:$0xff]
    %v220 = vld [vmem:[#allocation3 + $0x130] sm:$0xff]
    %v221 = vld [vmem:[#allocation3 + $0x138] sm:$0xff]
    %v222 = vld [vmem:[#allocation3 + $0x140] sm:$0xff]
    %v223 = vld [vmem:[#allocation3 + $0x148] sm:$0xff]
    %v224 = vld [vmem:[#allocation3 + $0x150] sm:$0xff]
    %v225 = vld [vmem:[#allocation3 + $0x158] sm:$0xff]
    %v226 = vld [vmem:[#allocation3 + $0x160] sm:$0xff]
    %v227 = vld [vmem:[#allocation3 + $0x168] sm:$0xff]
    %v228 = vld [vmem:[#allocation3 + $0x170] sm:$0xff]
    %v229 = vld [vmem:[#allocation3 + $0x178] sm:$0xff]
    %v230 = vld [vmem:[#allocation3 + $0x180] sm:$0xff]
    %v231 = vld [vmem:[#allocation3 + $0x188] sm:$0xff]
    %v232 = vld [vmem:[#allocation3 + $0x190] sm:$0xff]
    %v233 = vld [vmem:[#allocation3 + $0x198] sm:$0xff]
    %v234 = vld [vmem:[#allocation3 + $0x1a0] sm:$0xff]
    %v235 = vld [vmem:[#allocation3 + $0x1a8] sm:$0xff]
    %v236 = vld [vmem:[#allocation3 + $0x1b0] sm:$0xff]
    %v237 = vld [vmem:[#allocation3 + $0x1b8] sm:$0xff]
    %v238 = vld [vmem:[#allocation3 + $0x1c0] sm:$0xff]
    %v239 = vld [vmem:[#allocation3 + $0x1c8] sm:$0xff]
    %v240 = vld [vmem:[#allocation3 + $0x1d0] sm:$0xff]
    %v241 = vld [vmem:[#allocation3 + $0x1d8] sm:$0xff]
    %v242 = vld [vmem:[#allocation3 + $0x1e0] sm:$0xff]
    %v243 = vld [vmem:[#allocation3 + $0x1e8] sm:$0xff]
    %v244 = vld [vmem:[#allocation3 + $0x1f0] sm:$0xff]
    %v245 = vld [vmem:[#allocation3 + $0x1f8] sm:$0xff]
    %s246 = scalar_lea.vmem [#allocation2], 24
    %247 = vst [vmem:[%s246 + $0x1] sm:$0xff] %v182
    %248 = vst [vmem:[%s246 + $0x9] sm:$0xff] %v183
    %249 = vst [vmem:[%s246 + $0x19] sm:$0xff] %v184
    %250 = vst [vmem:[%s246 + $0x21] sm:$0xff] %v185
    %251 = vst [vmem:[%s246 + $0x31] sm:$0xff] %v186
    %252 = vst [vmem:[%s246 + $0x39] sm:$0xff] %v187
    %253 = vst [vmem:[%s246 + $0x49] sm:$0xff] %v188
    %254 = vst [vmem:[%s246 + $0x51] sm:$0xff] %v189
    %255 = vst [vmem:[%s246 + $0x61] sm:$0xff] %v190
    %256 = vst [vmem:[%s246 + $0x69] sm:$0xff] %v191
    %257 = vst [vmem:[%s246 + $0x79] sm:$0xff] %v192
    %258 = vst [vmem:[%s246 + $0x81] sm:$0xff] %v193
    %259 = vst [vmem:[%s246 + $0x91] sm:$0xff] %v194
    %260 = vst [vmem:[%s246 + $0x99] sm:$0xff] %v195
    %261 = vst [vmem:[%s246 + $0xa9] sm:$0xff] %v196
    %262 = vst [vmem:[%s246 + $0xb1] sm:$0xff] %v197
    %263 = vst [vmem:[%s246 + $0xc1] sm:$0xff] %v198
    %264 = vst [vmem:[%s246 + $0xc9] sm:$0xff] %v199
    %265 = vst [vmem:[%s246 + $0xd9] sm:$0xff] %v200
    %266 = vst [vmem:[%s246 + $0xe1] sm:$0xff] %v201
    %267 = vst [vmem:[%s246 + $0xf1] sm:$0xff] %v202
    %268 = vst [vmem:[%s246 + $0xf9] sm:$0xff] %v203
    %269 = vst [vmem:[%s246 + $0x109] sm:$0xff] %v204
    %270 = vst [vmem:[%s246 + $0x111] sm:$0xff] %v205
    %271 = vst [vmem:[%s246 + $0x121] sm:$0xff] %v206
    %272 = vst [vmem:[%s246 + $0x129] sm:$0xff] %v207
    %273 = vst [vmem:[%s246 + $0x139] sm:$0xff] %v208
    %274 = vst [vmem:[%s246 + $0x141] sm:$0xff] %v209
    %275 = vst [vmem:[%s246 + $0x151] sm:$0xff] %v210
    %276 = vst [vmem:[%s246 + $0x159] sm:$0xff] %v211
    %277 = vst [vmem:[%s246 + $0x169] sm:$0xff] %v212
    %278 = vst [vmem:[%s246 + $0x171] sm:$0xff] %v213
    %279 = vst [vmem:[%s246 + $0x1b1] sm:$0xff] %v214
    %280 = vst [vmem:[%s246 + $0x1b9] sm:$0xff] %v215
    %281 = vst [vmem:[%s246 + $0x1c9] sm:$0xff] %v216
    %282 = vst [vmem:[%s246 + $0x1d1] sm:$0xff] %v217
    %283 = vst [vmem:[%s246 + $0x1e1] sm:$0xff] %v218
    %284 = vst [vmem:[%s246 + $0x1e9] sm:$0xff] %v219
    %285 = vst [vmem:[%s246 + $0x1f9] sm:$0xff] %v220
    %286 = vst [vmem:[%s246 + $0x201] sm:$0xff] %v221
    %287 = vst [vmem:[%s246 + $0x211] sm:$0xff] %v222
    %288 = vst [vmem:[%s246 + $0x219] sm:$0xff] %v223
    %289 = vst [vmem:[%s246 + $0x229] sm:$0xff] %v224
    %290 = vst [vmem:[%s246 + $0x231] sm:$0xff] %v225
    %291 = vst [vmem:[%s246 + $0x241] sm:$0xff] %v226
    %292 = vst [vmem:[%s246 + $0x249] sm:$0xff] %v227
    %293 = vst [vmem:[%s246 + $0x259] sm:$0xff] %v228
    %294 = vst [vmem:[%s246 + $0x261] sm:$0xff] %v229
    %295 = vst [vmem:[%s246 + $0x271] sm:$0xff] %v230
    %296 = vst [vmem:[%s246 + $0x279] sm:$0xff] %v231
    %297 = vst [vmem:[%s246 + $0x289] sm:$0xff] %v232
    %298 = vst [vmem:[%s246 + $0x291] sm:$0xff] %v233
    %299 = vst [vmem:[%s246 + $0x2a1] sm:$0xff] %v234
    %300 = vst [vmem:[%s246 + $0x2a9] sm:$0xff] %v235
    %301 = vst [vmem:[%s246 + $0x2b9] sm:$0xff] %v236
    %302 = vst [vmem:[%s246 + $0x2c1] sm:$0xff] %v237
    %303 = vst [vmem:[%s246 + $0x2d1] sm:$0xff] %v238
    %304 = vst [vmem:[%s246 + $0x2d9] sm:$0xff] %v239
    %305 = vst [vmem:[%s246 + $0x2e9] sm:$0xff] %v240
    %306 = vst [vmem:[%s246 + $0x2f1] sm:$0xff] %v241
    %307 = vst [vmem:[%s246 + $0x301] sm:$0xff] %v242
    %308 = vst [vmem:[%s246 + $0x309] sm:$0xff] %v243
    %309 = vst [vmem:[%s246 + $0x319] sm:$0xff] %v244
    %310 = vst [vmem:[%s246 + $0x321] sm:$0xff] %v245
    %v311 = vld [vmem:[#allocation2] sm:$0xff]
    %v312 = vld [vmem:[#allocation2 + $0x8] sm:$0xff]
    %v313 = vld [vmem:[#allocation2 + $0x18] sm:$0xff]
    %v314 = vld [vmem:[#allocation2 + $0x20] sm:$0xff]
    %v315 = vld [vmem:[#allocation2 + $0x30] sm:$0xff]
    %v316 = vld [vmem:[#allocation2 + $0x38] sm:$0xff]
    %v317 = vld [vmem:[#allocation2 + $0x48] sm:$0xff]
    %v318 = vld [vmem:[#allocation2 + $0x50] sm:$0xff]
    %v319 = vld [vmem:[#allocation2 + $0x60] sm:$0xff]
    %v320 = vld [vmem:[#allocation2 + $0x68] sm:$0xff]
    %v321 = vld [vmem:[#allocation2 + $0x78] sm:$0xff]
    %v322 = vld [vmem:[#allocation2 + $0x80] sm:$0xff]
    %v323 = vld [vmem:[#allocation2 + $0x90] sm:$0xff]
    %v324 = vld [vmem:[#allocation2 + $0x98] sm:$0xff]
    %v325 = vld [vmem:[#allocation2 + $0xa8] sm:$0xff]
    %v326 = vld [vmem:[#allocation2 + $0xb0] sm:$0xff]
    %v327 = vld [vmem:[#allocation2 + $0xc0] sm:$0xff]
    %v328 = vld [vmem:[#allocation2 + $0xc8] sm:$0xff]
    %v329 = vld [vmem:[#allocation2 + $0xd8] sm:$0xff]
    %v330 = vld [vmem:[#allocation2 + $0xe0] sm:$0xff]
    %v331 = vld [vmem:[#allocation2 + $0xf0] sm:$0xff]
    %v332 = vld [vmem:[#allocation2 + $0xf8] sm:$0xff]
    %v333 = vld [vmem:[#allocation2 + $0x108] sm:$0xff]
    %v334 = vld [vmem:[#allocation2 + $0x110] sm:$0xff]
    %v335 = vld [vmem:[#allocation2 + $0x120] sm:$0xff]
    %v336 = vld [vmem:[#allocation2 + $0x128] sm:$0xff]
    %v337 = vld [vmem:[#allocation2 + $0x138] sm:$0xff]
    %v338 = vld [vmem:[#allocation2 + $0x140] sm:$0xff]
    %v339 = vld [vmem:[#allocation2 + $0x150] sm:$0xff]
    %v340 = vld [vmem:[#allocation2 + $0x158] sm:$0xff]
    %v341 = vld [vmem:[#allocation2 + $0x168] sm:$0xff]
    %v342 = vld [vmem:[#allocation2 + $0x170] sm:$0xff]
    %v343 = vld [vmem:[#allocation2 + $0x1b0] sm:$0xff]
    %v344 = vld [vmem:[#allocation2 + $0x1b8] sm:$0xff]
    %v345 = vld [vmem:[#allocation2 + $0x1c8] sm:$0xff]
    %v346 = vld [vmem:[#allocation2 + $0x1d0] sm:$0xff]
    %v347 = vld [vmem:[#allocation2 + $0x1e0] sm:$0xff]
    %v348 = vld [vmem:[#allocation2 + $0x1e8] sm:$0xff]
    %v349 = vld [vmem:[#allocation2 + $0x1f8] sm:$0xff]
    %v350 = vld [vmem:[#allocation2 + $0x200] sm:$0xff]
    %v351 = vld [vmem:[#allocation2 + $0x210] sm:$0xff]
    %v352 = vld [vmem:[#allocation2 + $0x218] sm:$0xff]
    %v353 = vld [vmem:[#allocation2 + $0x228] sm:$0xff]
    %v354 = vld [vmem:[#allocation2 + $0x230] sm:$0xff]
    %v355 = vld [vmem:[#allocation2 + $0x240] sm:$0xff]
    %v356 = vld [vmem:[#allocation2 + $0x248] sm:$0xff]
    %v357 = vld [vmem:[#allocation2 + $0x258] sm:$0xff]
    %v358 = vld [vmem:[#allocation2 + $0x260] sm:$0xff]
    %v359 = vld [vmem:[#allocation2 + $0x270] sm:$0xff]
    %v360 = vld [vmem:[#allocation2 + $0x278] sm:$0xff]
    %v361 = vld [vmem:[#allocation2 + $0x288] sm:$0xff]
    %v362 = vld [vmem:[#allocation2 + $0x290] sm:$0xff]
    %v363 = vld [vmem:[#allocation2 + $0x2a0] sm:$0xff]
    %v364 = vld [vmem:[#allocation2 + $0x2a8] sm:$0xff]
    %v365 = vld [vmem:[#allocation2 + $0x2b8] sm:$0xff]
    %v366 = vld [vmem:[#allocation2 + $0x2c0] sm:$0xff]
    %v367 = vld [vmem:[#allocation2 + $0x2d0] sm:$0xff]
    %v368 = vld [vmem:[#allocation2 + $0x2d8] sm:$0xff]
    %v369 = vld [vmem:[#allocation2 + $0x2e8] sm:$0xff]
    %v370 = vld [vmem:[#allocation2 + $0x2f0] sm:$0xff]
    %v371 = vld [vmem:[#allocation2 + $0x300] sm:$0xff]
    %v372 = vld [vmem:[#allocation2 + $0x308] sm:$0xff]
    %v373 = vld [vmem:[#allocation2 + $0x318] sm:$0xff]
    %v374 = vld [vmem:[#allocation2 + $0x320] sm:$0xff]
    %v375 = vld [vmem:[#allocation2 + $0x1] sm:$0xff]
    %v376 = vld [vmem:[#allocation2 + $0x9] sm:$0xff]
    %v377 = vld [vmem:[#allocation2 + $0x19] sm:$0xff]
    %v378 = vld [vmem:[#allocation2 + $0x21] sm:$0xff]
    %v379 = vld [vmem:[#allocation2 + $0x31] sm:$0xff]
    %v380 = vld [vmem:[#allocation2 + $0x39] sm:$0xff]
    %v381 = vld [vmem:[#allocation2 + $0x49] sm:$0xff]
    %v382 = vld [vmem:[#allocation2 + $0x51] sm:$0xff]
    %v383 = vld [vmem:[#allocation2 + $0x61] sm:$0xff]
    %v384 = vld [vmem:[#allocation2 + $0x69] sm:$0xff]
    %v385 = vld [vmem:[#allocation2 + $0x79] sm:$0xff]
    %v386 = vld [vmem:[#allocation2 + $0x81] sm:$0xff]
    %v387 = vld [vmem:[#allocation2 + $0x91] sm:$0xff]
    %v388 = vld [vmem:[#allocation2 + $0x99] sm:$0xff]
    %v389 = vld [vmem:[#allocation2 + $0xa9] sm:$0xff]
    %v390 = vld [vmem:[#allocation2 + $0xb1] sm:$0xff]
    %v391 = vld [vmem:[#allocation2 + $0xc1] sm:$0xff]
    %v392 = vld [vmem:[#allocation2 + $0xc9] sm:$0xff]
    %v393 = vld [vmem:[#allocation2 + $0xd9] sm:$0xff]
    %v394 = vld [vmem:[#allocation2 + $0xe1] sm:$0xff]
    %v395 = vld [vmem:[#allocation2 + $0xf1] sm:$0xff]
    %v396 = vld [vmem:[#allocation2 + $0xf9] sm:$0xff]
    %v397 = vld [vmem:[#allocation2 + $0x109] sm:$0xff]
    %v398 = vld [vmem:[#allocation2 + $0x111] sm:$0xff]
    %v399 = vld [vmem:[#allocation2 + $0x121] sm:$0xff]
    %v400 = vld [vmem:[#allocation2 + $0x129] sm:$0xff]
    %v401 = vld [vmem:[#allocation2 + $0x139] sm:$0xff]
    %v402 = vld [vmem:[#allocation2 + $0x141] sm:$0xff]
    %v403 = vld [vmem:[#allocation2 + $0x151] sm:$0xff]
    %v404 = vld [vmem:[#allocation2 + $0x159] sm:$0xff]
    %v405 = vld [vmem:[#allocation2 + $0x169] sm:$0xff]
    %v406 = vld [vmem:[#allocation2 + $0x171] sm:$0xff]
    %v407 = vld [vmem:[#allocation2 + $0x1b1] sm:$0xff]
    %v408 = vld [vmem:[#allocation2 + $0x1b9] sm:$0xff]
    %v409 = vld [vmem:[#allocation2 + $0x1c9] sm:$0xff]
    %v410 = vld [vmem:[#allocation2 + $0x1d1] sm:$0xff]
    %v411 = vld [vmem:[#allocation2 + $0x1e1] sm:$0xff]
    %v412 = vld [vmem:[#allocation2 + $0x1e9] sm:$0xff]
    %v413 = vld [vmem:[#allocation2 + $0x1f9] sm:$0xff]
    %v414 = vld [vmem:[#allocation2 + $0x201] sm:$0xff]
    %v415 = vld [vmem:[#allocation2 + $0x211] sm:$0xff]
    %v416 = vld [vmem:[#allocation2 + $0x219] sm:$0xff]
    %v417 = vld [vmem:[#allocation2 + $0x229] sm:$0xff]
    %v418 = vld [vmem:[#allocation2 + $0x231] sm:$0xff]
    %v419 = vld [vmem:[#allocation2 + $0x241] sm:$0xff]
    %v420 = vld [vmem:[#allocation2 + $0x249] sm:$0xff]
    %v421 = vld [vmem:[#allocation2 + $0x259] sm:$0xff]
    %v422 = vld [vmem:[#allocation2 + $0x261] sm:$0xff]
    %v423 = vld [vmem:[#allocation2 + $0x271] sm:$0xff]
    %v424 = vld [vmem:[#allocation2 + $0x279] sm:$0xff]
    %v425 = vld [vmem:[#allocation2 + $0x289] sm:$0xff]
    %v426 = vld [vmem:[#allocation2 + $0x291] sm:$0xff]
    %v427 = vld [vmem:[#allocation2 + $0x2a1] sm:$0xff]
    %v428 = vld [vmem:[#allocation2 + $0x2a9] sm:$0xff]
    %v429 = vld [vmem:[#allocation2 + $0x2b9] sm:$0xff]
    %v430 = vld [vmem:[#allocation2 + $0x2c1] sm:$0xff]
    %v431 = vld [vmem:[#allocation2 + $0x2d1] sm:$0xff]
    %v432 = vld [vmem:[#allocation2 + $0x2d9] sm:$0xff]
    %v433 = vld [vmem:[#allocation2 + $0x2e9] sm:$0xff]
    %v434 = vld [vmem:[#allocation2 + $0x2f1] sm:$0xff]
    %v435 = vld [vmem:[#allocation2 + $0x301] sm:$0xff]
    %v436 = vld [vmem:[#allocation2 + $0x309] sm:$0xff]
    %v437 = vld [vmem:[#allocation2 + $0x319] sm:$0xff]
    %v438 = vld [vmem:[#allocation2 + $0x321] sm:$0xff]
    %v439 = vld [vmem:[#allocation2 + $0x2] sm:$0xff]
    %v440 = vld [vmem:[#allocation2 + $0xa] sm:$0xff]
    %v441 = vld [vmem:[#allocation2 + $0x1a] sm:$0xff]
    %v442 = vld [vmem:[#allocation2 + $0x22] sm:$0xff]
    %v443 = vld [vmem:[#allocation2 + $0x32] sm:$0xff]
    %v444 = vld [vmem:[#allocation2 + $0x3a] sm:$0xff]
    %v445 = vld [vmem:[#allocation2 + $0x4a] sm:$0xff]
    %v446 = vld [vmem:[#allocation2 + $0x52] sm:$0xff]
    %v447 = vld [vmem:[#allocation2 + $0x62] sm:$0xff]
    %v448 = vld [vmem:[#allocation2 + $0x6a] sm:$0xff]
    %v449 = vld [vmem:[#allocation2 + $0x7a] sm:$0xff]
    %v450 = vld [vmem:[#allocation2 + $0x82] sm:$0xff]
    %v451 = vld [vmem:[#allocation2 + $0x92] sm:$0xff]
    %v452 = vld [vmem:[#allocation2 + $0x9a] sm:$0xff]
    %v453 = vld [vmem:[#allocation2 + $0xaa] sm:$0xff]
    %v454 = vld [vmem:[#allocation2 + $0xb2] sm:$0xff]
    %v455 = vld [vmem:[#allocation2 + $0xc2] sm:$0xff]
    %v456 = vld [vmem:[#allocation2 + $0xca] sm:$0xff]
    %v457 = vld [vmem:[#allocation2 + $0xda] sm:$0xff]
    %v458 = vld [vmem:[#allocation2 + $0xe2] sm:$0xff]
    %v459 = vld [vmem:[#allocation2 + $0xf2] sm:$0xff]
    %v460 = vld [vmem:[#allocation2 + $0xfa] sm:$0xff]
    %v461 = vld [vmem:[#allocation2 + $0x10a] sm:$0xff]
    %v462 = vld [vmem:[#allocation2 + $0x112] sm:$0xff]
    %v463 = vld [vmem:[#allocation2 + $0x122] sm:$0xff]
    %v464 = vld [vmem:[#allocation2 + $0x12a] sm:$0xff]
    %v465 = vld [vmem:[#allocation2 + $0x13a] sm:$0xff]
    %v466 = vld [vmem:[#allocation2 + $0x142] sm:$0xff]
    %v467 = vld [vmem:[#allocation2 + $0x152] sm:$0xff]
    %v468 = vld [vmem:[#allocation2 + $0x15a] sm:$0xff]
    %v469 = vld [vmem:[#allocation2 + $0x16a] sm:$0xff]
    %v470 = vld [vmem:[#allocation2 + $0x172] sm:$0xff]
    %v471 = vld [vmem:[#allocation2 + $0x1b2] sm:$0xff]
    %v472 = vld [vmem:[#allocation2 + $0x1ba] sm:$0xff]
    %v473 = vld [vmem:[#allocation2 + $0x1ca] sm:$0xff]
    %v474 = vld [vmem:[#allocation2 + $0x1d2] sm:$0xff]
    %v475 = vld [vmem:[#allocation2 + $0x1e2] sm:$0xff]
    %v476 = vld [vmem:[#allocation2 + $0x1ea] sm:$0xff]
    %v477 = vld [vmem:[#allocation2 + $0x1fa] sm:$0xff]
    %v478 = vld [vmem:[#allocation2 + $0x202] sm:$0xff]
    %v479 = vld [vmem:[#allocation2 + $0x212] sm:$0xff]
    %v480 = vld [vmem:[#allocation2 + $0x21a] sm:$0xff]
    %v481 = vld [vmem:[#allocation2 + $0x22a] sm:$0xff]
    %v482 = vld [vmem:[#allocation2 + $0x232] sm:$0xff]
    %v483 = vld [vmem:[#allocation2 + $0x242] sm:$0xff]
    %v484 = vld [vmem:[#allocation2 + $0x24a] sm:$0xff]
    %v485 = vld [vmem:[#allocation2 + $0x25a] sm:$0xff]
    %v486 = vld [vmem:[#allocation2 + $0x262] sm:$0xff]
    %v487 = vld [vmem:[#allocation2 + $0x272] sm:$0xff]
    %v488 = vld [vmem:[#allocation2 + $0x27a] sm:$0xff]
    %v489 = vld [vmem:[#allocation2 + $0x28a] sm:$0xff]
    %v490 = vld [vmem:[#allocation2 + $0x292] sm:$0xff]
    %v491 = vld [vmem:[#allocation2 + $0x2a2] sm:$0xff]
    %v492 = vld [vmem:[#allocation2 + $0x2aa] sm:$0xff]
    %v493 = vld [vmem:[#allocation2 + $0x2ba] sm:$0xff]
    %v494 = vld [vmem:[#allocation2 + $0x2c2] sm:$0xff]
    %v495 = vld [vmem:[#allocation2 + $0x2d2] sm:$0xff]
    %v496 = vld [vmem:[#allocation2 + $0x2da] sm:$0xff]
    %v497 = vld [vmem:[#allocation2 + $0x2ea] sm:$0xff]
    %v498 = vld [vmem:[#allocation2 + $0x2f2] sm:$0xff]
    %v499 = vld [vmem:[#allocation2 + $0x302] sm:$0xff]
    %v500 = vld [vmem:[#allocation2 + $0x30a] sm:$0xff]
    %v501 = vld [vmem:[#allocation2 + $0x31a] sm:$0xff]
    %v502 = vld [vmem:[#allocation2 + $0x322] sm:$0xff]
    %v503 = vld [vmem:[%s246] sm:$0xff]
    %v504 = vld [vmem:[%s246 + $0x8] sm:$0xff]
    %v505 = vld [vmem:[%s246 + $0x18] sm:$0xff]
    %v506 = vld [vmem:[%s246 + $0x20] sm:$0xff]
    %v507 = vld [vmem:[%s246 + $0x30] sm:$0xff]
    %v508 = vld [vmem:[%s246 + $0x38] sm:$0xff]
    %v509 = vld [vmem:[%s246 + $0x48] sm:$0xff]
    %v510 = vld [vmem:[%s246 + $0x50] sm:$0xff]
    %v511 = vld [vmem:[%s246 + $0x60] sm:$0xff]
    %v512 = vld [vmem:[%s246 + $0x68] sm:$0xff]
    %v513 = vld [vmem:[%s246 + $0x78] sm:$0xff]
    %v514 = vld [vmem:[%s246 + $0x80] sm:$0xff]
    %v515 = vld [vmem:[%s246 + $0x90] sm:$0xff]
    %v516 = vld [vmem:[%s246 + $0x98] sm:$0xff]
    %v517 = vld [vmem:[%s246 + $0xa8] sm:$0xff]
    %v518 = vld [vmem:[%s246 + $0xb0] sm:$0xff]
    %v519 = vld [vmem:[%s246 + $0xc0] sm:$0xff]
    %v520 = vld [vmem:[%s246 + $0xc8] sm:$0xff]
    %v521 = vld [vmem:[%s246 + $0xd8] sm:$0xff]
    %v522 = vld [vmem:[%s246 + $0xe0] sm:$0xff]
    %v523 = vld [vmem:[%s246 + $0xf0] sm:$0xff]
    %v524 = vld [vmem:[%s246 + $0xf8] sm:$0xff]
    %v525 = vld [vmem:[%s246 + $0x108] sm:$0xff]
    %v526 = vld [vmem:[%s246 + $0x110] sm:$0xff]
    %v527 = vld [vmem:[%s246 + $0x120] sm:$0xff]
    %v528 = vld [vmem:[%s246 + $0x128] sm:$0xff]
    %v529 = vld [vmem:[%s246 + $0x138] sm:$0xff]
    %v530 = vld [vmem:[%s246 + $0x140] sm:$0xff]
    %v531 = vld [vmem:[%s246 + $0x150] sm:$0xff]
    %v532 = vld [vmem:[%s246 + $0x158] sm:$0xff]
    %v533 = vld [vmem:[%s246 + $0x168] sm:$0xff]
    %v534 = vld [vmem:[%s246 + $0x170] sm:$0xff]
    %v535 = vld [vmem:[%s246 + $0x1b0] sm:$0xff]
    %v536 = vld [vmem:[%s246 + $0x1b8] sm:$0xff]
    %v537 = vld [vmem:[%s246 + $0x1c8] sm:$0xff]
    %v538 = vld [vmem:[%s246 + $0x1d0] sm:$0xff]
    %v539 = vld [vmem:[%s246 + $0x1e0] sm:$0xff]
    %v540 = vld [vmem:[%s246 + $0x1e8] sm:$0xff]
    %v541 = vld [vmem:[%s246 + $0x1f8] sm:$0xff]
    %v542 = vld [vmem:[%s246 + $0x200] sm:$0xff]
    %v543 = vld [vmem:[%s246 + $0x210] sm:$0xff]
    %v544 = vld [vmem:[%s246 + $0x218] sm:$0xff]
    %v545 = vld [vmem:[%s246 + $0x228] sm:$0xff]
    %v546 = vld [vmem:[%s246 + $0x230] sm:$0xff]
    %v547 = vld [vmem:[%s246 + $0x240] sm:$0xff]
    %v548 = vld [vmem:[%s246 + $0x248] sm:$0xff]
    %v549 = vld [vmem:[%s246 + $0x258] sm:$0xff]
    %v550 = vld [vmem:[%s246 + $0x260] sm:$0xff]
    %v551 = vld [vmem:[%s246 + $0x270] sm:$0xff]
    %v552 = vld [vmem:[%s246 + $0x278] sm:$0xff]
    %v553 = vld [vmem:[%s246 + $0x288] sm:$0xff]
    %v554 = vld [vmem:[%s246 + $0x290] sm:$0xff]
    %v555 = vld [vmem:[%s246 + $0x2a0] sm:$0xff]
    %v556 = vld [vmem:[%s246 + $0x2a8] sm:$0xff]
    %v557 = vld [vmem:[%s246 + $0x2b8] sm:$0xff]
    %v558 = vld [vmem:[%s246 + $0x2c0] sm:$0xff]
    %v559 = vld [vmem:[%s246 + $0x2d0] sm:$0xff]
    %v560 = vld [vmem:[%s246 + $0x2d8] sm:$0xff]
    %v561 = vld [vmem:[%s246 + $0x2e8] sm:$0xff]
    %v562 = vld [vmem:[%s246 + $0x2f0] sm:$0xff]
    %v563 = vld [vmem:[%s246 + $0x300] sm:$0xff]
    %v564 = vld [vmem:[%s246 + $0x308] sm:$0xff]
    %v565 = vld [vmem:[%s246 + $0x318] sm:$0xff]
    %v566 = vld [vmem:[%s246 + $0x320] sm:$0xff]
    %v567 = vld [vmem:[%s246 + $0x1] sm:$0xff]
    %v568 = vld [vmem:[%s246 + $0x9] sm:$0xff]
    %v569 = vld [vmem:[%s246 + $0x19] sm:$0xff]
    %v570 = vld [vmem:[%s246 + $0x21] sm:$0xff]
    %v571 = vld [vmem:[%s246 + $0x31] sm:$0xff]
    %v572 = vld [vmem:[%s246 + $0x39] sm:$0xff]
    %v573 = vld [vmem:[%s246 + $0x49] sm:$0xff]
    %v574 = vld [vmem:[%s246 + $0x51] sm:$0xff]
    %v575 = vld [vmem:[%s246 + $0x61] sm:$0xff]
    %v576 = vld [vmem:[%s246 + $0x69] sm:$0xff]
    %v577 = vld [vmem:[%s246 + $0x79] sm:$0xff]
    %v578 = vld [vmem:[%s246 + $0x81] sm:$0xff]
    %v579 = vld [vmem:[%s246 + $0x91] sm:$0xff]
    %v580 = vld [vmem:[%s246 + $0x99] sm:$0xff]
    %v581 = vld [vmem:[%s246 + $0xa9] sm:$0xff]
    %v582 = vld [vmem:[%s246 + $0xb1] sm:$0xff]
    %v583 = vld [vmem:[%s246 + $0xc1] sm:$0xff]
    %v584 = vld [vmem:[%s246 + $0xc9] sm:$0xff]
    %v585 = vld [vmem:[%s246 + $0xd9] sm:$0xff]
    %v586 = vld [vmem:[%s246 + $0xe1] sm:$0xff]
    %v587 = vld [vmem:[%s246 + $0xf1] sm:$0xff]
    %v588 = vld [vmem:[%s246 + $0xf9] sm:$0xff]
    %v589 = vld [vmem:[%s246 + $0x109] sm:$0xff]
    %v590 = vld [vmem:[%s246 + $0x111] sm:$0xff]
    %v591 = vld [vmem:[%s246 + $0x121] sm:$0xff]
    %v592 = vld [vmem:[%s246 + $0x129] sm:$0xff]
    %v593 = vld [vmem:[%s246 + $0x139] sm:$0xff]
    %v594 = vld [vmem:[%s246 + $0x141] sm:$0xff]
    %v595 = vld [vmem:[%s246 + $0x151] sm:$0xff]
    %v596 = vld [vmem:[%s246 + $0x159] sm:$0xff]
    %v597 = vld [vmem:[%s246 + $0x169] sm:$0xff]
    %v598 = vld [vmem:[%s246 + $0x171] sm:$0xff]
    %v599 = vld [vmem:[%s246 + $0x1b1] sm:$0xff]
    %v600 = vld [vmem:[%s246 + $0x1b9] sm:$0xff]
    %v601 = vld [vmem:[%s246 + $0x1c9] sm:$0xff]
    %v602 = vld [vmem:[%s246 + $0x1d1] sm:$0xff]
    %v603 = vld [vmem:[%s246 + $0x1e1] sm:$0xff]
    %v604 = vld [vmem:[%s246 + $0x1e9] sm:$0xff]
    %v605 = vld [vmem:[%s246 + $0x1f9] sm:$0xff]
    %v606 = vld [vmem:[%s246 + $0x201] sm:$0xff]
    %v607 = vld [vmem:[%s246 + $0x211] sm:$0xff]
    %v608 = vld [vmem:[%s246 + $0x219] sm:$0xff]
    %v609 = vld [vmem:[%s246 + $0x229] sm:$0xff]
    %v610 = vld [vmem:[%s246 + $0x231] sm:$0xff]
    %v611 = vld [vmem:[%s246 + $0x241] sm:$0xff]
    %v612 = vld [vmem:[%s246 + $0x249] sm:$0xff]
    %v613 = vld [vmem:[%s246 + $0x259] sm:$0xff]
    %v614 = vld [vmem:[%s246 + $0x261] sm:$0xff]
    %v615 = vld [vmem:[%s246 + $0x271] sm:$0xff]
    %v616 = vld [vmem:[%s246 + $0x279] sm:$0xff]
    %v617 = vld [vmem:[%s246 + $0x289] sm:$0xff]
    %v618 = vld [vmem:[%s246 + $0x291] sm:$0xff]
    %v619 = vld [vmem:[%s246 + $0x2a1] sm:$0xff]
    %v620 = vld [vmem:[%s246 + $0x2a9] sm:$0xff]
    %v621 = vld [vmem:[%s246 + $0x2b9] sm:$0xff]
    %v622 = vld [vmem:[%s246 + $0x2c1] sm:$0xff]
    %v623 = vld [vmem:[%s246 + $0x2d1] sm:$0xff]
    %v624 = vld [vmem:[%s246 + $0x2d9] sm:$0xff]
    %v625 = vld [vmem:[%s246 + $0x2e9] sm:$0xff]
    %v626 = vld [vmem:[%s246 + $0x2f1] sm:$0xff]
    %v627 = vld [vmem:[%s246 + $0x301] sm:$0xff]
    %v628 = vld [vmem:[%s246 + $0x309] sm:$0xff]
    %v629 = vld [vmem:[%s246 + $0x319] sm:$0xff]
    %v630 = vld [vmem:[%s246 + $0x321] sm:$0xff]
    %v631 = vld [vmem:[%s246 + $0x2] sm:$0xff]
    %v632 = vld [vmem:[%s246 + $0xa] sm:$0xff]
    %v633 = vld [vmem:[%s246 + $0x1a] sm:$0xff]
    %v634 = vld [vmem:[%s246 + $0x22] sm:$0xff]
    %v635 = vld [vmem:[%s246 + $0x32] sm:$0xff]
    %v636 = vld [vmem:[%s246 + $0x3a] sm:$0xff]
    %v637 = vld [vmem:[%s246 + $0x4a] sm:$0xff]
    %v638 = vld [vmem:[%s246 + $0x52] sm:$0xff]
    %v639 = vld [vmem:[%s246 + $0x62] sm:$0xff]
    %v640 = vld [vmem:[%s246 + $0x6a] sm:$0xff]
    %v641 = vld [vmem:[%s246 + $0x7a] sm:$0xff]
    %v642 = vld [vmem:[%s246 + $0x82] sm:$0xff]
    %v643 = vld [vmem:[%s246 + $0x92] sm:$0xff]
    %v644 = vld [vmem:[%s246 + $0x9a] sm:$0xff]
    %v645 = vld [vmem:[%s246 + $0xaa] sm:$0xff]
    %v646 = vld [vmem:[%s246 + $0xb2] sm:$0xff]
    %v647 = vld [vmem:[%s246 + $0xc2] sm:$0xff]
    %v648 = vld [vmem:[%s246 + $0xca] sm:$0xff]
    %v649 = vld [vmem:[%s246 + $0xda] sm:$0xff]
    %v650 = vld [vmem:[%s246 + $0xe2] sm:$0xff]
    %v651 = vld [vmem:[%s246 + $0xf2] sm:$0xff]
    %v652 = vld [vmem:[%s246 + $0xfa] sm:$0xff]
    %v653 = vld [vmem:[%s246 + $0x10a] sm:$0xff]
    %v654 = vld [vmem:[%s246 + $0x112] sm:$0xff]
    %v655 = vld [vmem:[%s246 + $0x122] sm:$0xff]
    %v656 = vld [vmem:[%s246 + $0x12a] sm:$0xff]
    %v657 = vld [vmem:[%s246 + $0x13a] sm:$0xff]
    %v658 = vld [vmem:[%s246 + $0x142] sm:$0xff]
    %v659 = vld [vmem:[%s246 + $0x152] sm:$0xff]
    %v660 = vld [vmem:[%s246 + $0x15a] sm:$0xff]
    %v661 = vld [vmem:[%s246 + $0x16a] sm:$0xff]
    %v662 = vld [vmem:[%s246 + $0x172] sm:$0xff]
    %v663 = vld [vmem:[%s246 + $0x1b2] sm:$0xff]
    %v664 = vld [vmem:[%s246 + $0x1ba] sm:$0xff]
    %v665 = vld [vmem:[%s246 + $0x1ca] sm:$0xff]
    %v666 = vld [vmem:[%s246 + $0x1d2] sm:$0xff]
    %v667 = vld [vmem:[%s246 + $0x1e2] sm:$0xff]
    %v668 = vld [vmem:[%s246 + $0x1ea] sm:$0xff]
    %v669 = vld [vmem:[%s246 + $0x1fa] sm:$0xff]
    %v670 = vld [vmem:[%s246 + $0x202] sm:$0xff]
    %v671 = vld [vmem:[%s246 + $0x212] sm:$0xff]
    %v672 = vld [vmem:[%s246 + $0x21a] sm:$0xff]
    %v673 = vld [vmem:[%s246 + $0x22a] sm:$0xff]
    %v674 = vld [vmem:[%s246 + $0x232] sm:$0xff]
    %v675 = vld [vmem:[%s246 + $0x242] sm:$0xff]
    %v676 = vld [vmem:[%s246 + $0x24a] sm:$0xff]
    %v677 = vld [vmem:[%s246 + $0x25a] sm:$0xff]
    %v678 = vld [vmem:[%s246 + $0x262] sm:$0xff]
    %v679 = vld [vmem:[%s246 + $0x272] sm:$0xff]
    %v680 = vld [vmem:[%s246 + $0x27a] sm:$0xff]
    %v681 = vld [vmem:[%s246 + $0x28a] sm:$0xff]
    %v682 = vld [vmem:[%s246 + $0x292] sm:$0xff]
    %v683 = vld [vmem:[%s246 + $0x2a2] sm:$0xff]
    %v684 = vld [vmem:[%s246 + $0x2aa] sm:$0xff]
    %v685 = vld [vmem:[%s246 + $0x2ba] sm:$0xff]
    %v686 = vld [vmem:[%s246 + $0x2c2] sm:$0xff]
    %v687 = vld [vmem:[%s246 + $0x2d2] sm:$0xff]
    %v688 = vld [vmem:[%s246 + $0x2da] sm:$0xff]
    %v689 = vld [vmem:[%s246 + $0x2ea] sm:$0xff]
    %v690 = vld [vmem:[%s246 + $0x2f2] sm:$0xff]
    %v691 = vld [vmem:[%s246 + $0x302] sm:$0xff]
    %v692 = vld [vmem:[%s246 + $0x30a] sm:$0xff]
    %v693 = vld [vmem:[%s246 + $0x31a] sm:$0xff]
    %v694 = vld [vmem:[%s246 + $0x322] sm:$0xff]
    %s695 = scalar_lea.vmem [#allocation2], 48
    %v696 = vld [vmem:[%s695] sm:$0xff]
    %v697 = vld [vmem:[%s695 + $0x8] sm:$0xff]
    %v698 = vld [vmem:[%s695 + $0x18] sm:$0xff]
    %v699 = vld [vmem:[%s695 + $0x20] sm:$0xff]
    %v700 = vld [vmem:[%s695 + $0x30] sm:$0xff]
    %v701 = vld [vmem:[%s695 + $0x38] sm:$0xff]
    %v702 = vld [vmem:[%s695 + $0x48] sm:$0xff]
    %v703 = vld [vmem:[%s695 + $0x50] sm:$0xff]
    %v704 = vld [vmem:[%s695 + $0x60] sm:$0xff]
    %v705 = vld [vmem:[%s695 + $0x68] sm:$0xff]
    %v706 = vld [vmem:[%s695 + $0x78] sm:$0xff]
    %v707 = vld [vmem:[%s695 + $0x80] sm:$0xff]
    %v708 = vld [vmem:[%s695 + $0x90] sm:$0xff]
    %v709 = vld [vmem:[%s695 + $0x98] sm:$0xff]
    %v710 = vld [vmem:[%s695 + $0xa8] sm:$0xff]
    %v711 = vld [vmem:[%s695 + $0xb0] sm:$0xff]
    %v712 = vld [vmem:[%s695 + $0xc0] sm:$0xff]
    %v713 = vld [vmem:[%s695 + $0xc8] sm:$0xff]
    %v714 = vld [vmem:[%s695 + $0xd8] sm:$0xff]
    %v715 = vld [vmem:[%s695 + $0xe0] sm:$0xff]
    %v716 = vld [vmem:[%s695 + $0xf0] sm:$0xff]
    %v717 = vld [vmem:[%s695 + $0xf8] sm:$0xff]
    %v718 = vld [vmem:[%s695 + $0x108] sm:$0xff]
    %v719 = vld [vmem:[%s695 + $0x110] sm:$0xff]
    %v720 = vld [vmem:[%s695 + $0x120] sm:$0xff]
    %v721 = vld [vmem:[%s695 + $0x128] sm:$0xff]
    %v722 = vld [vmem:[%s695 + $0x138] sm:$0xff]
    %v723 = vld [vmem:[%s695 + $0x140] sm:$0xff]
    %v724 = vld [vmem:[%s695 + $0x150] sm:$0xff]
    %v725 = vld [vmem:[%s695 + $0x158] sm:$0xff]
    %v726 = vld [vmem:[%s695 + $0x168] sm:$0xff]
    %v727 = vld [vmem:[%s695 + $0x170] sm:$0xff]
    %v728 = vld [vmem:[%s695 + $0x1b0] sm:$0xff]
    %v729 = vld [vmem:[%s695 + $0x1b8] sm:$0xff]
    %v730 = vld [vmem:[%s695 + $0x1c8] sm:$0xff]
    %v731 = vld [vmem:[%s695 + $0x1d0] sm:$0xff]
    %v732 = vld [vmem:[%s695 + $0x1e0] sm:$0xff]
    %v733 = vld [vmem:[%s695 + $0x1e8] sm:$0xff]
    %v734 = vld [vmem:[%s695 + $0x1f8] sm:$0xff]
    %v735 = vld [vmem:[%s695 + $0x200] sm:$0xff]
    %v736 = vld [vmem:[%s695 + $0x210] sm:$0xff]
    %v737 = vld [vmem:[%s695 + $0x218] sm:$0xff]
    %v738 = vld [vmem:[%s695 + $0x228] sm:$0xff]
    %v739 = vld [vmem:[%s695 + $0x230] sm:$0xff]
    %v740 = vld [vmem:[%s695 + $0x240] sm:$0xff]
    %v741 = vld [vmem:[%s695 + $0x248] sm:$0xff]
    %v742 = vld [vmem:[%s695 + $0x258] sm:$0xff]
    %v743 = vld [vmem:[%s695 + $0x260] sm:$0xff]
    %v744 = vld [vmem:[%s695 + $0x270] sm:$0xff]
    %v745 = vld [vmem:[%s695 + $0x278] sm:$0xff]
    %v746 = vld [vmem:[%s695 + $0x288] sm:$0xff]
    %v747 = vld [vmem:[%s695 + $0x290] sm:$0xff]
    %v748 = vld [vmem:[%s695 + $0x2a0] sm:$0xff]
    %v749 = vld [vmem:[%s695 + $0x2a8] sm:$0xff]
    %v750 = vld [vmem:[%s695 + $0x2b8] sm:$0xff]
    %v751 = vld [vmem:[%s695 + $0x2c0] sm:$0xff]
    %v752 = vld [vmem:[%s695 + $0x2d0] sm:$0xff]
    %v753 = vld [vmem:[%s695 + $0x2d8] sm:$0xff]
    %v754 = vld [vmem:[%s695 + $0x2e8] sm:$0xff]
    %v755 = vld [vmem:[%s695 + $0x2f0] sm:$0xff]
    %v756 = vld [vmem:[%s695 + $0x300] sm:$0xff]
    %v757 = vld [vmem:[%s695 + $0x308] sm:$0xff]
    %v758 = vld [vmem:[%s695 + $0x318] sm:$0xff]
    %v759 = vld [vmem:[%s695 + $0x320] sm:$0xff]
    %v760 = vld [vmem:[%s695 + $0x1] sm:$0xff]
    %v761 = vld [vmem:[%s695 + $0x9] sm:$0xff]
    %v762 = vld [vmem:[%s695 + $0x19] sm:$0xff]
    %v763 = vld [vmem:[%s695 + $0x21] sm:$0xff]
    %v764 = vld [vmem:[%s695 + $0x31] sm:$0xff]
    %v765 = vld [vmem:[%s695 + $0x39] sm:$0xff]
    %v766 = vld [vmem:[%s695 + $0x49] sm:$0xff]
    %v767 = vld [vmem:[%s695 + $0x51] sm:$0xff]
    %v768 = vld [vmem:[%s695 + $0x61] sm:$0xff]
    %v769 = vld [vmem:[%s695 + $0x69] sm:$0xff]
    %v770 = vld [vmem:[%s695 + $0x79] sm:$0xff]
    %v771 = vld [vmem:[%s695 + $0x81] sm:$0xff]
    %v772 = vld [vmem:[%s695 + $0x91] sm:$0xff]
    %v773 = vld [vmem:[%s695 + $0x99] sm:$0xff]
    %v774 = vld [vmem:[%s695 + $0xa9] sm:$0xff]
    %v775 = vld [vmem:[%s695 + $0xb1] sm:$0xff]
    %v776 = vld [vmem:[%s695 + $0xc1] sm:$0xff]
    %v777 = vld [vmem:[%s695 + $0xc9] sm:$0xff]
    %v778 = vld [vmem:[%s695 + $0xd9] sm:$0xff]
    %v779 = vld [vmem:[%s695 + $0xe1] sm:$0xff]
    %v780 = vld [vmem:[%s695 + $0xf1] sm:$0xff]
    %v781 = vld [vmem:[%s695 + $0xf9] sm:$0xff]
    %v782 = vld [vmem:[%s695 + $0x109] sm:$0xff]
    %v783 = vld [vmem:[%s695 + $0x111] sm:$0xff]
    %v784 = vld [vmem:[%s695 + $0x121] sm:$0xff]
    %v785 = vld [vmem:[%s695 + $0x129] sm:$0xff]
    %v786 = vld [vmem:[%s695 + $0x139] sm:$0xff]
    %v787 = vld [vmem:[%s695 + $0x141] sm:$0xff]
    %v788 = vld [vmem:[%s695 + $0x151] sm:$0xff]
    %v789 = vld [vmem:[%s695 + $0x159] sm:$0xff]
    %v790 = vld [vmem:[%s695 + $0x169] sm:$0xff]
    %v791 = vld [vmem:[%s695 + $0x171] sm:$0xff]
    %v792 = vld [vmem:[%s695 + $0x1b1] sm:$0xff]
    %v793 = vld [vmem:[%s695 + $0x1b9] sm:$0xff]
    %v794 = vld [vmem:[%s695 + $0x1c9] sm:$0xff]
    %v795 = vld [vmem:[%s695 + $0x1d1] sm:$0xff]
    %v796 = vld [vmem:[%s695 + $0x1e1] sm:$0xff]
    %v797 = vld [vmem:[%s695 + $0x1e9] sm:$0xff]
    %v798 = vld [vmem:[%s695 + $0x1f9] sm:$0xff]
    %v799 = vld [vmem:[%s695 + $0x201] sm:$0xff]
    %v800 = vld [vmem:[%s695 + $0x211] sm:$0xff]
    %v801 = vld [vmem:[%s695 + $0x219] sm:$0xff]
    %v802 = vld [vmem:[%s695 + $0x229] sm:$0xff]
    %v803 = vld [vmem:[%s695 + $0x231] sm:$0xff]
    %v804 = vld [vmem:[%s695 + $0x241] sm:$0xff]
    %v805 = vld [vmem:[%s695 + $0x249] sm:$0xff]
    %v806 = vld [vmem:[%s695 + $0x259] sm:$0xff]
    %v807 = vld [vmem:[%s695 + $0x261] sm:$0xff]
    %v808 = vld [vmem:[%s695 + $0x271] sm:$0xff]
    %v809 = vld [vmem:[%s695 + $0x279] sm:$0xff]
    %v810 = vld [vmem:[%s695 + $0x289] sm:$0xff]
    %v811 = vld [vmem:[%s695 + $0x291] sm:$0xff]
    %v812 = vld [vmem:[%s695 + $0x2a1] sm:$0xff]
    %v813 = vld [vmem:[%s695 + $0x2a9] sm:$0xff]
    %v814 = vld [vmem:[%s695 + $0x2b9] sm:$0xff]
    %v815 = vld [vmem:[%s695 + $0x2c1] sm:$0xff]
    %v816 = vld [vmem:[%s695 + $0x2d1] sm:$0xff]
    %v817 = vld [vmem:[%s695 + $0x2d9] sm:$0xff]
    %v818 = vld [vmem:[%s695 + $0x2e9] sm:$0xff]
    %v819 = vld [vmem:[%s695 + $0x2f1] sm:$0xff]
    %v820 = vld [vmem:[%s695 + $0x301] sm:$0xff]
    %v821 = vld [vmem:[%s695 + $0x309] sm:$0xff]
    %v822 = vld [vmem:[%s695 + $0x319] sm:$0xff]
    %v823 = vld [vmem:[%s695 + $0x321] sm:$0xff]
    %v824 = vld [vmem:[%s695 + $0x2] sm:$0xff]
    %v825 = vld [vmem:[%s695 + $0xa] sm:$0xff]
    %v826 = vld [vmem:[%s695 + $0x1a] sm:$0xff]
    %v827 = vld [vmem:[%s695 + $0x22] sm:$0xff]
    %v828 = vld [vmem:[%s695 + $0x32] sm:$0xff]
    %v829 = vld [vmem:[%s695 + $0x3a] sm:$0xff]
    %v830 = vld [vmem:[%s695 + $0x4a] sm:$0xff]
    %v831 = vld [vmem:[%s695 + $0x52] sm:$0xff]
    %v832 = vld [vmem:[%s695 + $0x62] sm:$0xff]
    %v833 = vld [vmem:[%s695 + $0x6a] sm:$0xff]
    %v834 = vld [vmem:[%s695 + $0x7a] sm:$0xff]
    %v835 = vld [vmem:[%s695 + $0x82] sm:$0xff]
    %v836 = vld [vmem:[%s695 + $0x92] sm:$0xff]
    %v837 = vld [vmem:[%s695 + $0x9a] sm:$0xff]
    %v838 = vld [vmem:[%s695 + $0xaa] sm:$0xff]
    %v839 = vld [vmem:[%s695 + $0xb2] sm:$0xff]
    %v840 = vld [vmem:[%s695 + $0xc2] sm:$0xff]
    %v841 = vld [vmem:[%s695 + $0xca] sm:$0xff]
    %v842 = vld [vmem:[%s695 + $0xda] sm:$0xff]
    %v843 = vld [vmem:[%s695 + $0xe2] sm:$0xff]
    %v844 = vld [vmem:[%s695 + $0xf2] sm:$0xff]
    %v845 = vld [vmem:[%s695 + $0xfa] sm:$0xff]
    %v846 = vld [vmem:[%s695 + $0x10a] sm:$0xff]
    %v847 = vld [vmem:[%s695 + $0x112] sm:$0xff]
    %v848 = vld [vmem:[%s695 + $0x122] sm:$0xff]
    %v849 = vld [vmem:[%s695 + $0x12a] sm:$0xff]
    %v850 = vld [vmem:[%s695 + $0x13a] sm:$0xff]
    %v851 = vld [vmem:[%s695 + $0x142] sm:$0xff]
    %v852 = vld [vmem:[%s695 + $0x152] sm:$0xff]
    %v853 = vld [vmem:[%s695 + $0x15a] sm:$0xff]
    %v854 = vld [vmem:[%s695 + $0x16a] sm:$0xff]
    %v855 = vld [vmem:[%s695 + $0x172] sm:$0xff]
    %v856 = vld [vmem:[%s695 + $0x1b2] sm:$0xff]
    %v857 = vld [vmem:[%s695 + $0x1ba] sm:$0xff]
    %v858 = vld [vmem:[%s695 + $0x1ca] sm:$0xff]
    %v859 = vld [vmem:[%s695 + $0x1d2] sm:$0xff]
    %v860 = vld [vmem:[%s695 + $0x1e2] sm:$0xff]
    %v861 = vld [vmem:[%s695 + $0x1ea] sm:$0xff]
    %v862 = vld [vmem:[%s695 + $0x1fa] sm:$0xff]
    %v863 = vld [vmem:[%s695 + $0x202] sm:$0xff]
    %v864 = vld [vmem:[%s695 + $0x212] sm:$0xff]
    %v865 = vld [vmem:[%s695 + $0x21a] sm:$0xff]
    %v866 = vld [vmem:[%s695 + $0x22a] sm:$0xff]
    %v867 = vld [vmem:[%s695 + $0x232] sm:$0xff]
    %v868 = vld [vmem:[%s695 + $0x242] sm:$0xff]
    %v869 = vld [vmem:[%s695 + $0x24a] sm:$0xff]
    %v870 = vld [vmem:[%s695 + $0x25a] sm:$0xff]
    %v871 = vld [vmem:[%s695 + $0x262] sm:$0xff]
    %v872 = vld [vmem:[%s695 + $0x272] sm:$0xff]
    %v873 = vld [vmem:[%s695 + $0x27a] sm:$0xff]
    %v874 = vld [vmem:[%s695 + $0x28a] sm:$0xff]
    %v875 = vld [vmem:[%s695 + $0x292] sm:$0xff]
    %v876 = vld [vmem:[%s695 + $0x2a2] sm:$0xff]
    %v877 = vld [vmem:[%s695 + $0x2aa] sm:$0xff]
    %v878 = vld [vmem:[%s695 + $0x2ba] sm:$0xff]
    %v879 = vld [vmem:[%s695 + $0x2c2] sm:$0xff]
    %v880 = vld [vmem:[%s695 + $0x2d2] sm:$0xff]
    %v881 = vld [vmem:[%s695 + $0x2da] sm:$0xff]
    %v882 = vld [vmem:[%s695 + $0x2ea] sm:$0xff]
    %v883 = vld [vmem:[%s695 + $0x2f2] sm:$0xff]
    %v884 = vld [vmem:[%s695 + $0x302] sm:$0xff]
    %v885 = vld [vmem:[%s695 + $0x30a] sm:$0xff]
    %v886 = vld [vmem:[%s695 + $0x31a] sm:$0xff]
    %v887 = vld [vmem:[%s695 + $0x322] sm:$0xff]
    %v888 = vld [vmem:[#allocation6] sm:$0xff]
    %v889 = vld [vmem:[#allocation6 + $0x8] sm:$0xff]
    %v890 = vld [vmem:[#allocation6 + $0x10] sm:$0xff]
    %v891 = vld [vmem:[#allocation6 + $0x18] sm:$0xff]
    %v892 = vld [vmem:[#allocation6 + $0x20] sm:$0xff]
    %v893 = vld [vmem:[#allocation6 + $0x28] sm:$0xff]
    %v894 = vld [vmem:[#allocation6 + $0x30] sm:$0xff]
    %v895 = vld [vmem:[#allocation6 + $0x38] sm:$0xff]
    %v896 = vld [vmem:[#allocation6 + $0x40] sm:$0xff]
    %v897 = vld [vmem:[#allocation6 + $0x48] sm:$0xff]
    %v898 = vld [vmem:[#allocation6 + $0x50] sm:$0xff]
    %v899 = vld [vmem:[#allocation6 + $0x58] sm:$0xff]
    %v900 = vld [vmem:[#allocation6 + $0x60] sm:$0xff]
    %v901 = vld [vmem:[#allocation6 + $0x68] sm:$0xff]
    %v902 = vld [vmem:[#allocation6 + $0x70] sm:$0xff]
    %v903 = vld [vmem:[#allocation6 + $0x78] sm:$0xff]
    %v904 = vld [vmem:[#allocation6 + $0x80] sm:$0xff]
    %v905 = vld [vmem:[#allocation6 + $0x88] sm:$0xff]
    %v906 = vld [vmem:[#allocation6 + $0x90] sm:$0xff]
    %v907 = vld [vmem:[#allocation6 + $0x98] sm:$0xff]
    %v908 = vld [vmem:[#allocation6 + $0xa0] sm:$0xff]
    %v909 = vld [vmem:[#allocation6 + $0xa8] sm:$0xff]
    %v910 = vld [vmem:[#allocation6 + $0xb0] sm:$0xff]
    %v911 = vld [vmem:[#allocation6 + $0xb8] sm:$0xff]
    %v912 = vld [vmem:[#allocation6 + $0xc0] sm:$0xff]
    %v913 = vld [vmem:[#allocation6 + $0xc8] sm:$0xff]
    %v914 = vld [vmem:[#allocation6 + $0xd0] sm:$0xff]
    %v915 = vld [vmem:[#allocation6 + $0xd8] sm:$0xff]
    %v916 = vld [vmem:[#allocation6 + $0xe0] sm:$0xff]
    %v917 = vld [vmem:[#allocation6 + $0xe8] sm:$0xff]
    %v918 = vld [vmem:[#allocation6 + $0xf0] sm:$0xff]
    %v919 = vld [vmem:[#allocation6 + $0xf8] sm:$0xff]
    %v920 = vld [vmem:[#allocation6 + $0x100] sm:$0xff]
    %v921 = vld [vmem:[#allocation6 + $0x108] sm:$0xff]
    %v922 = vld [vmem:[#allocation6 + $0x110] sm:$0xff]
    %v923 = vld [vmem:[#allocation6 + $0x118] sm:$0xff]
    %v924 = vld [vmem:[#allocation6 + $0x120] sm:$0xff]
    %v925 = vld [vmem:[#allocation6 + $0x128] sm:$0xff]
    %v926 = vld [vmem:[#allocation6 + $0x130] sm:$0xff]
    %v927 = vld [vmem:[#allocation6 + $0x138] sm:$0xff]
    %v928 = vld [vmem:[#allocation6 + $0x140] sm:$0xff]
    %v929 = vld [vmem:[#allocation6 + $0x148] sm:$0xff]
    %v930 = vld [vmem:[#allocation6 + $0x150] sm:$0xff]
    %v931 = vld [vmem:[#allocation6 + $0x158] sm:$0xff]
    %v932 = vld [vmem:[#allocation6 + $0x160] sm:$0xff]
    %v933 = vld [vmem:[#allocation6 + $0x168] sm:$0xff]
    %v934 = vld [vmem:[#allocation6 + $0x170] sm:$0xff]
    %v935 = vld [vmem:[#allocation6 + $0x178] sm:$0xff]
    %v936 = vld [vmem:[#allocation6 + $0x180] sm:$0xff]
    %v937 = vld [vmem:[#allocation6 + $0x188] sm:$0xff]
    %v938 = vld [vmem:[#allocation6 + $0x190] sm:$0xff]
    %v939 = vld [vmem:[#allocation6 + $0x198] sm:$0xff]
    %v940 = vld [vmem:[#allocation6 + $0x1a0] sm:$0xff]
    %v941 = vld [vmem:[#allocation6 + $0x1a8] sm:$0xff]
    %v942 = vld [vmem:[#allocation6 + $0x1b0] sm:$0xff]
    %v943 = vld [vmem:[#allocation6 + $0x1b8] sm:$0xff]
    %v944 = vld [vmem:[#allocation6 + $0x1c0] sm:$0xff]
    %v945 = vld [vmem:[#allocation6 + $0x1c8] sm:$0xff]
    %v946 = vld [vmem:[#allocation6 + $0x1d0] sm:$0xff]
    %v947 = vld [vmem:[#allocation6 + $0x1d8] sm:$0xff]
    %v948 = vld [vmem:[#allocation6 + $0x1e0] sm:$0xff]
    %v949 = vld [vmem:[#allocation6 + $0x1e8] sm:$0xff]
    %v950 = vld [vmem:[#allocation6 + $0x1f0] sm:$0xff]
    %v951 = vld [vmem:[#allocation6 + $0x1f8] sm:$0xff]
    %v952 = vld [vmem:[#allocation6 + $0x200] sm:$0xff]
    %v953 = vld [vmem:[#allocation6 + $0x208] sm:$0xff]
    %v954 = vld [vmem:[#allocation6 + $0x210] sm:$0xff]
    %v955 = vld [vmem:[#allocation6 + $0x218] sm:$0xff]
    %v956 = vld [vmem:[#allocation6 + $0x220] sm:$0xff]
    %v957 = vld [vmem:[#allocation6 + $0x228] sm:$0xff]
    %v958 = vld [vmem:[#allocation6 + $0x230] sm:$0xff]
    %v959 = vld [vmem:[#allocation6 + $0x238] sm:$0xff]
    %v960 = vld [vmem:[#allocation6 + $0x240] sm:$0xff]
    %v961 = vld [vmem:[#allocation6 + $0x248] sm:$0xff]
    %v962 = vld [vmem:[#allocation6 + $0x250] sm:$0xff]
    %v963 = vld [vmem:[#allocation6 + $0x258] sm:$0xff]
    %v964 = vld [vmem:[#allocation6 + $0x260] sm:$0xff]
    %v965 = vld [vmem:[#allocation6 + $0x268] sm:$0xff]
    %v966 = vld [vmem:[#allocation6 + $0x270] sm:$0xff]
    %v967 = vld [vmem:[#allocation6 + $0x278] sm:$0xff]
    %v968 = vld [vmem:[#allocation6 + $0x280] sm:$0xff]
    %v969 = vld [vmem:[#allocation6 + $0x288] sm:$0xff]
    %v970 = vld [vmem:[#allocation6 + $0x290] sm:$0xff]
    %v971 = vld [vmem:[#allocation6 + $0x298] sm:$0xff]
    %v972 = vld [vmem:[#allocation6 + $0x2a0] sm:$0xff]
    %v973 = vld [vmem:[#allocation6 + $0x2a8] sm:$0xff]
    %v974 = vld [vmem:[#allocation6 + $0x2b0] sm:$0xff]
    %v975 = vld [vmem:[#allocation6 + $0x2b8] sm:$0xff]
    %v976 = vld [vmem:[#allocation6 + $0x2c0] sm:$0xff]
    %v977 = vld [vmem:[#allocation6 + $0x2c8] sm:$0xff]
    %v978 = vld [vmem:[#allocation6 + $0x2d0] sm:$0xff]
    %v979 = vld [vmem:[#allocation6 + $0x2d8] sm:$0xff]
    %v980 = vld [vmem:[#allocation6 + $0x2e0] sm:$0xff]
    %v981 = vld [vmem:[#allocation6 + $0x2e8] sm:$0xff]
    %v982 = vld [vmem:[#allocation6 + $0x2f0] sm:$0xff]
    %v983 = vld [vmem:[#allocation6 + $0x2f8] sm:$0xff]
    %v984 = vld [vmem:[#allocation6 + $0x300] sm:$0xff]
    %v985 = vld [vmem:[#allocation6 + $0x308] sm:$0xff]
    %v986 = vld [vmem:[#allocation6 + $0x310] sm:$0xff]
    %v987 = vld [vmem:[#allocation6 + $0x318] sm:$0xff]
    %v988 = vld [vmem:[#allocation6 + $0x320] sm:$0xff]
    %v989 = vld [vmem:[#allocation6 + $0x328] sm:$0xff]
    %v990 = vld [vmem:[#allocation6 + $0x330] sm:$0xff]
    %v991 = vld [vmem:[#allocation6 + $0x338] sm:$0xff]
    %v992 = vld [vmem:[#allocation6 + $0x340] sm:$0xff]
    %v993 = vld [vmem:[#allocation6 + $0x348] sm:$0xff]
    %v994 = vld [vmem:[#allocation6 + $0x350] sm:$0xff]
    %v995 = vld [vmem:[#allocation6 + $0x358] sm:$0xff]
    %v996 = vld [vmem:[#allocation6 + $0x360] sm:$0xff]
    %v997 = vld [vmem:[#allocation6 + $0x368] sm:$0xff]
    %v998 = vld [vmem:[#allocation6 + $0x370] sm:$0xff]
    %v999 = vld [vmem:[#allocation6 + $0x378] sm:$0xff]
    %v1000 = vld [vmem:[#allocation6 + $0x380] sm:$0xff]
    %v1001 = vld [vmem:[#allocation6 + $0x388] sm:$0xff]
    %v1002 = vld [vmem:[#allocation6 + $0x390] sm:$0xff]
    %v1003 = vld [vmem:[#allocation6 + $0x398] sm:$0xff]
    %v1004 = vld [vmem:[#allocation6 + $0x3a0] sm:$0xff]
    %v1005 = vld [vmem:[#allocation6 + $0x3a8] sm:$0xff]
    %v1006 = vld [vmem:[#allocation6 + $0x3b0] sm:$0xff]
    %v1007 = vld [vmem:[#allocation6 + $0x3b8] sm:$0xff]
    %v1008 = vld [vmem:[#allocation6 + $0x3c0] sm:$0xff]
    %v1009 = vld [vmem:[#allocation6 + $0x3c8] sm:$0xff]
    %v1010 = vld [vmem:[#allocation6 + $0x3d0] sm:$0xff]
    %v1011 = vld [vmem:[#allocation6 + $0x3d8] sm:$0xff]
    %v1012 = vld [vmem:[#allocation6 + $0x3e0] sm:$0xff]
    %v1013 = vld [vmem:[#allocation6 + $0x3e8] sm:$0xff]
    %v1014 = vld [vmem:[#allocation6 + $0x3f0] sm:$0xff]
    %v1015 = vld [vmem:[#allocation6 + $0x3f8] sm:$0xff]
    %v1016 = vld [vmem:[#allocation6 + $0x400] sm:$0xff]
    %v1017 = vld [vmem:[#allocation6 + $0x408] sm:$0xff]
    %v1018 = vld [vmem:[#allocation6 + $0x410] sm:$0xff]
    %v1019 = vld [vmem:[#allocation6 + $0x418] sm:$0xff]
    %v1020 = vld [vmem:[#allocation6 + $0x420] sm:$0xff]
    %v1021 = vld [vmem:[#allocation6 + $0x428] sm:$0xff]
    %v1022 = vld [vmem:[#allocation6 + $0x430] sm:$0xff]
    %v1023 = vld [vmem:[#allocation6 + $0x438] sm:$0xff]
    %v1024 = vld [vmem:[#allocation6 + $0x440] sm:$0xff]
    %v1025 = vld [vmem:[#allocation6 + $0x448] sm:$0xff]
    %v1026 = vld [vmem:[#allocation6 + $0x450] sm:$0xff]
    %v1027 = vld [vmem:[#allocation6 + $0x458] sm:$0xff]
    %v1028 = vld [vmem:[#allocation6 + $0x460] sm:$0xff]
    %v1029 = vld [vmem:[#allocation6 + $0x468] sm:$0xff]
    %v1030 = vld [vmem:[#allocation6 + $0x470] sm:$0xff]
    %v1031 = vld [vmem:[#allocation6 + $0x478] sm:$0xff]
    %1032 = vmatpush.msra.mxu0 %v903
    %1033 = vmatpush.msra.mxu0 %v902
    %1034 = vmatpush.msra.mxu0 %v901
    %1035 = vmatpush.msra.mxu0 %v900
    %1036 = vmatpush.msra.mxu0 %v899
    %1037 = vmatpush.msra.mxu0 %v898
    %1038 = vmatpush.msra.mxu0 %v897
    %1039 = vmatpush.msra.mxu0 %v896
    %1040 = vmatpush.msra.mxu0 %v895
    %1041 = vmatpush.msra.mxu0 %v894
    %1042 = vmatpush.msra.mxu0 %v893
    %1043 = vmatpush.msra.mxu0 %v892
    %1044 = vmatpush.msra.mxu0 %v891
    %1045 = vmatpush.msra.mxu0 %v890
    %1046 = vmatpush.msra.mxu0 %v889
    %1047 = vmatpush.msra.mxu0 %v888
    %1048 = vmatmul.f32.gmra.mxu0 %v311
    %v1049 = vpop.f32.mrf.mxu0
    %v1050 = vadd.f32 0.0, %v1049
    %1051 = vmatmul.f32.gmra.mxu0 %v312
    %v1052 = vpop.f32.mrf.mxu0
    %v1053 = vadd.f32 0.0, %v1052
    %1054 = vmatmul.f32.gmra.mxu0 %v313
    %v1055 = vpop.f32.mrf.mxu0
    %v1056 = vadd.f32 0.0, %v1055
    %1057 = vmatmul.f32.gmra.mxu0 %v314
    %v1058 = vpop.f32.mrf.mxu0
    %v1059 = vadd.f32 0.0, %v1058
    %1060 = vmatmul.f32.gmra.mxu0 %v315
    %v1061 = vpop.f32.mrf.mxu0
    %v1062 = vadd.f32 0.0, %v1061
    %1063 = vmatmul.f32.gmra.mxu0 %v316
    %v1064 = vpop.f32.mrf.mxu0
    %v1065 = vadd.f32 0.0, %v1064
    %1066 = vmatmul.f32.gmra.mxu0 %v317
    %v1067 = vpop.f32.mrf.mxu0
    %v1068 = vadd.f32 0.0, %v1067
    %1069 = vmatmul.f32.gmra.mxu0 %v318
    %v1070 = vpop.f32.mrf.mxu0
    %v1071 = vadd.f32 0.0, %v1070
    %1072 = vmatmul.f32.gmra.mxu0 %v319
    %v1073 = vpop.f32.mrf.mxu0
    %v1074 = vadd.f32 0.0, %v1073
    %1075 = vmatmul.f32.gmra.mxu0 %v320
    %v1076 = vpop.f32.mrf.mxu0
    %v1077 = vadd.f32 0.0, %v1076
    %1078 = vmatmul.f32.gmra.mxu0 %v321
    %v1079 = vpop.f32.mrf.mxu0
    %v1080 = vadd.f32 0.0, %v1079
    %1081 = vmatmul.f32.gmra.mxu0 %v322
    %v1082 = vpop.f32.mrf.mxu0
    %v1083 = vadd.f32 0.0, %v1082
    %1084 = vmatmul.f32.gmra.mxu0 %v323
    %v1085 = vpop.f32.mrf.mxu0
    %v1086 = vadd.f32 0.0, %v1085
    %1087 = vmatmul.f32.gmra.mxu0 %v324
    %v1088 = vpop.f32.mrf.mxu0
    %v1089 = vadd.f32 0.0, %v1088
    %1090 = vmatmul.f32.gmra.mxu0 %v325
    %v1091 = vpop.f32.mrf.mxu0
    %v1092 = vadd.f32 0.0, %v1091
    %1093 = vmatmul.f32.gmra.mxu0 %v326
    %v1094 = vpop.f32.mrf.mxu0
    %v1095 = vadd.f32 0.0, %v1094
    %1096 = vmatmul.f32.gmra.mxu0 %v327
    %v1097 = vpop.f32.mrf.mxu0
    %v1098 = vadd.f32 0.0, %v1097
    %1099 = vmatmul.f32.gmra.mxu0 %v328
    %v1100 = vpop.f32.mrf.mxu0
    %v1101 = vadd.f32 0.0, %v1100
    %1102 = vmatmul.f32.gmra.mxu0 %v329
    %v1103 = vpop.f32.mrf.mxu0
    %v1104 = vadd.f32 0.0, %v1103
    %1105 = vmatmul.f32.gmra.mxu0 %v330
    %v1106 = vpop.f32.mrf.mxu0
    %v1107 = vadd.f32 0.0, %v1106
    %1108 = vmatmul.f32.gmra.mxu0 %v331
    %v1109 = vpop.f32.mrf.mxu0
    %v1110 = vadd.f32 0.0, %v1109
    %1111 = vmatmul.f32.gmra.mxu0 %v332
    %v1112 = vpop.f32.mrf.mxu0
    %v1113 = vadd.f32 0.0, %v1112
    %1114 = vmatmul.f32.gmra.mxu0 %v333
    %v1115 = vpop.f32.mrf.mxu0
    %v1116 = vadd.f32 0.0, %v1115
    %1117 = vmatmul.f32.gmra.mxu0 %v334
    %v1118 = vpop.f32.mrf.mxu0
    %v1119 = vadd.f32 0.0, %v1118
    %1120 = vmatmul.f32.gmra.mxu0 %v335
    %v1121 = vpop.f32.mrf.mxu0
    %v1122 = vadd.f32 0.0, %v1121
    %1123 = vmatmul.f32.gmra.mxu0 %v336
    %v1124 = vpop.f32.mrf.mxu0
    %v1125 = vadd.f32 0.0, %v1124
    %1126 = vmatmul.f32.gmra.mxu0 %v337
    %v1127 = vpop.f32.mrf.mxu0
    %v1128 = vadd.f32 0.0, %v1127
    %1129 = vmatmul.f32.gmra.mxu0 %v338
    %v1130 = vpop.f32.mrf.mxu0
    %v1131 = vadd.f32 0.0, %v1130
    %1132 = vmatmul.f32.gmra.mxu0 %v339
    %v1133 = vpop.f32.mrf.mxu0
    %v1134 = vadd.f32 0.0, %v1133
    %1135 = vmatmul.f32.gmra.mxu0 %v340
    %v1136 = vpop.f32.mrf.mxu0
    %v1137 = vadd.f32 0.0, %v1136
    %1138 = vmatmul.f32.gmra.mxu0 %v341
    %v1139 = vpop.f32.mrf.mxu0
    %v1140 = vadd.f32 0.0, %v1139
    %1141 = vmatmul.f32.gmra.mxu0 %v342
    %v1142 = vpop.f32.mrf.mxu0
    %v1143 = vadd.f32 0.0, %v1142
    %1144 = vmatmul.f32.gmra.mxu0 %v343
    %v1145 = vpop.f32.mrf.mxu0
    %v1146 = vadd.f32 0.0, %v1145
    %1147 = vmatmul.f32.gmra.mxu0 %v344
    %v1148 = vpop.f32.mrf.mxu0
    %v1149 = vadd.f32 0.0, %v1148
    %1150 = vmatmul.f32.gmra.mxu0 %v345
    %v1151 = vpop.f32.mrf.mxu0
    %v1152 = vadd.f32 0.0, %v1151
    %1153 = vmatmul.f32.gmra.mxu0 %v346
    %v1154 = vpop.f32.mrf.mxu0
    %v1155 = vadd.f32 0.0, %v1154
    %1156 = vmatmul.f32.gmra.mxu0 %v347
    %v1157 = vpop.f32.mrf.mxu0
    %v1158 = vadd.f32 0.0, %v1157
    %1159 = vmatmul.f32.gmra.mxu0 %v348
    %v1160 = vpop.f32.mrf.mxu0
    %v1161 = vadd.f32 0.0, %v1160
    %1162 = vmatmul.f32.gmra.mxu0 %v349
    %v1163 = vpop.f32.mrf.mxu0
    %v1164 = vadd.f32 0.0, %v1163
    %1165 = vmatmul.f32.gmra.mxu0 %v350
    %v1166 = vpop.f32.mrf.mxu0
    %v1167 = vadd.f32 0.0, %v1166
    %1168 = vmatmul.f32.gmra.mxu0 %v351
    %v1169 = vpop.f32.mrf.mxu0
    %v1170 = vadd.f32 0.0, %v1169
    %1171 = vmatmul.f32.gmra.mxu0 %v352
    %v1172 = vpop.f32.mrf.mxu0
    %v1173 = vadd.f32 0.0, %v1172
    %1174 = vmatmul.f32.gmra.mxu0 %v353
    %v1175 = vpop.f32.mrf.mxu0
    %v1176 = vadd.f32 0.0, %v1175
    %1177 = vmatmul.f32.gmra.mxu0 %v354
    %v1178 = vpop.f32.mrf.mxu0
    %v1179 = vadd.f32 0.0, %v1178
    %1180 = vmatmul.f32.gmra.mxu0 %v355
    %v1181 = vpop.f32.mrf.mxu0
    %v1182 = vadd.f32 0.0, %v1181
    %1183 = vmatmul.f32.gmra.mxu0 %v356
    %v1184 = vpop.f32.mrf.mxu0
    %v1185 = vadd.f32 0.0, %v1184
    %1186 = vmatmul.f32.gmra.mxu0 %v357
    %v1187 = vpop.f32.mrf.mxu0
    %v1188 = vadd.f32 0.0, %v1187
    %1189 = vmatmul.f32.gmra.mxu0 %v358
    %v1190 = vpop.f32.mrf.mxu0
    %v1191 = vadd.f32 0.0, %v1190
    %1192 = vmatmul.f32.gmra.mxu0 %v359
    %v1193 = vpop.f32.mrf.mxu0
    %v1194 = vadd.f32 0.0, %v1193
    %1195 = vmatmul.f32.gmra.mxu0 %v360
    %v1196 = vpop.f32.mrf.mxu0
    %v1197 = vadd.f32 0.0, %v1196
    %1198 = vmatmul.f32.gmra.mxu0 %v361
    %v1199 = vpop.f32.mrf.mxu0
    %v1200 = vadd.f32 0.0, %v1199
    %1201 = vmatmul.f32.gmra.mxu0 %v362
    %v1202 = vpop.f32.mrf.mxu0
    %v1203 = vadd.f32 0.0, %v1202
    %1204 = vmatmul.f32.gmra.mxu0 %v363
    %v1205 = vpop.f32.mrf.mxu0
    %v1206 = vadd.f32 0.0, %v1205
    %1207 = vmatmul.f32.gmra.mxu0 %v364
    %v1208 = vpop.f32.mrf.mxu0
    %v1209 = vadd.f32 0.0, %v1208
    %1210 = vmatmul.f32.gmra.mxu0 %v365
    %v1211 = vpop.f32.mrf.mxu0
    %v1212 = vadd.f32 0.0, %v1211
    %1213 = vmatmul.f32.gmra.mxu0 %v366
    %v1214 = vpop.f32.mrf.mxu0
    %v1215 = vadd.f32 0.0, %v1214
    %1216 = vmatmul.f32.gmra.mxu0 %v367
    %v1217 = vpop.f32.mrf.mxu0
    %v1218 = vadd.f32 0.0, %v1217
    %1219 = vmatmul.f32.gmra.mxu0 %v368
    %v1220 = vpop.f32.mrf.mxu0
    %v1221 = vadd.f32 0.0, %v1220
    %1222 = vmatmul.f32.gmra.mxu0 %v369
    %v1223 = vpop.f32.mrf.mxu0
    %v1224 = vadd.f32 0.0, %v1223
    %1225 = vmatmul.f32.gmra.mxu0 %v370
    %v1226 = vpop.f32.mrf.mxu0
    %v1227 = vadd.f32 0.0, %v1226
    %1228 = vmatmul.f32.gmra.mxu0 %v371
    %v1229 = vpop.f32.mrf.mxu0
    %v1230 = vadd.f32 0.0, %v1229
    %1231 = vmatmul.f32.gmra.mxu0 %v372
    %v1232 = vpop.f32.mrf.mxu0
    %v1233 = vadd.f32 0.0, %v1232
    %1234 = vmatmul.f32.gmra.mxu0 %v373
    %v1235 = vpop.f32.mrf.mxu0
    %v1236 = vadd.f32 0.0, %v1235
    %1237 = vmatmul.f32.gmra.mxu0 %v374
    %v1238 = vpop.f32.mrf.mxu0
    %v1239 = vadd.f32 0.0, %v1238
    %1240 = vdwg.mxu0
    %1241 = vmatpush.msra.mxu0 %v919
    %1242 = vmatpush.msra.mxu0 %v918
    %1243 = vmatpush.msra.mxu0 %v917
    %1244 = vmatpush.msra.mxu0 %v916
    %1245 = vmatpush.msra.mxu0 %v915
    %1246 = vmatpush.msra.mxu0 %v914
    %1247 = vmatpush.msra.mxu0 %v913
    %1248 = vmatpush.msra.mxu0 %v912
    %1249 = vmatpush.msra.mxu0 %v911
    %1250 = vmatpush.msra.mxu0 %v910
    %1251 = vmatpush.msra.mxu0 %v909
    %1252 = vmatpush.msra.mxu0 %v908
    %1253 = vmatpush.msra.mxu0 %v907
    %1254 = vmatpush.msra.mxu0 %v906
    %1255 = vmatpush.msra.mxu0 %v905
    %1256 = vmatpush.msra.mxu0 %v904
    %1257 = vmatmul.f32.gmra.mxu0 %v375
    %v1258 = vpop.f32.mrf.mxu0
    %v1259 = vadd.f32 %v1050, %v1258
    %1260 = vmatmul.f32.gmra.mxu0 %v376
    %v1261 = vpop.f32.mrf.mxu0
    %v1262 = vadd.f32 %v1053, %v1261
    %1263 = vmatmul.f32.gmra.mxu0 %v377
    %v1264 = vpop.f32.mrf.mxu0
    %v1265 = vadd.f32 %v1056, %v1264
    %1266 = vmatmul.f32.gmra.mxu0 %v378
    %v1267 = vpop.f32.mrf.mxu0
    %v1268 = vadd.f32 %v1059, %v1267
    %1269 = vmatmul.f32.gmra.mxu0 %v379
    %v1270 = vpop.f32.mrf.mxu0
    %v1271 = vadd.f32 %v1062, %v1270
    %1272 = vmatmul.f32.gmra.mxu0 %v380
    %v1273 = vpop.f32.mrf.mxu0
    %v1274 = vadd.f32 %v1065, %v1273
    %1275 = vmatmul.f32.gmra.mxu0 %v381
    %v1276 = vpop.f32.mrf.mxu0
    %v1277 = vadd.f32 %v1068, %v1276
    %1278 = vmatmul.f32.gmra.mxu0 %v382
    %v1279 = vpop.f32.mrf.mxu0
    %v1280 = vadd.f32 %v1071, %v1279
    %1281 = vmatmul.f32.gmra.mxu0 %v383
    %v1282 = vpop.f32.mrf.mxu0
    %v1283 = vadd.f32 %v1074, %v1282
    %1284 = vmatmul.f32.gmra.mxu0 %v384
    %v1285 = vpop.f32.mrf.mxu0
    %v1286 = vadd.f32 %v1077, %v1285
    %1287 = vmatmul.f32.gmra.mxu0 %v385
    %v1288 = vpop.f32.mrf.mxu0
    %v1289 = vadd.f32 %v1080, %v1288
    %1290 = vmatmul.f32.gmra.mxu0 %v386
    %v1291 = vpop.f32.mrf.mxu0
    %v1292 = vadd.f32 %v1083, %v1291
    %1293 = vmatmul.f32.gmra.mxu0 %v387
    %v1294 = vpop.f32.mrf.mxu0
    %v1295 = vadd.f32 %v1086, %v1294
    %1296 = vmatmul.f32.gmra.mxu0 %v388
    %v1297 = vpop.f32.mrf.mxu0
    %v1298 = vadd.f32 %v1089, %v1297
    %1299 = vmatmul.f32.gmra.mxu0 %v389
    %v1300 = vpop.f32.mrf.mxu0
    %v1301 = vadd.f32 %v1092, %v1300
    %1302 = vmatmul.f32.gmra.mxu0 %v390
    %v1303 = vpop.f32.mrf.mxu0
    %v1304 = vadd.f32 %v1095, %v1303
    %1305 = vmatmul.f32.gmra.mxu0 %v391
    %v1306 = vpop.f32.mrf.mxu0
    %v1307 = vadd.f32 %v1098, %v1306
    %1308 = vmatmul.f32.gmra.mxu0 %v392
    %v1309 = vpop.f32.mrf.mxu0
    %v1310 = vadd.f32 %v1101, %v1309
    %1311 = vmatmul.f32.gmra.mxu0 %v393
    %v1312 = vpop.f32.mrf.mxu0
    %v1313 = vadd.f32 %v1104, %v1312
    %1314 = vmatmul.f32.gmra.mxu0 %v394
    %v1315 = vpop.f32.mrf.mxu0
    %v1316 = vadd.f32 %v1107, %v1315
    %1317 = vmatmul.f32.gmra.mxu0 %v395
    %v1318 = vpop.f32.mrf.mxu0
    %v1319 = vadd.f32 %v1110, %v1318
    %1320 = vmatmul.f32.gmra.mxu0 %v396
    %v1321 = vpop.f32.mrf.mxu0
    %v1322 = vadd.f32 %v1113, %v1321
    %1323 = vmatmul.f32.gmra.mxu0 %v397
    %v1324 = vpop.f32.mrf.mxu0
    %v1325 = vadd.f32 %v1116, %v1324
    %1326 = vmatmul.f32.gmra.mxu0 %v398
    %v1327 = vpop.f32.mrf.mxu0
    %v1328 = vadd.f32 %v1119, %v1327
    %1329 = vmatmul.f32.gmra.mxu0 %v399
    %v1330 = vpop.f32.mrf.mxu0
    %v1331 = vadd.f32 %v1122, %v1330
    %1332 = vmatmul.f32.gmra.mxu0 %v400
    %v1333 = vpop.f32.mrf.mxu0
    %v1334 = vadd.f32 %v1125, %v1333
    %1335 = vmatmul.f32.gmra.mxu0 %v401
    %v1336 = vpop.f32.mrf.mxu0
    %v1337 = vadd.f32 %v1128, %v1336
    %1338 = vmatmul.f32.gmra.mxu0 %v402
    %v1339 = vpop.f32.mrf.mxu0
    %v1340 = vadd.f32 %v1131, %v1339
    %1341 = vmatmul.f32.gmra.mxu0 %v403
    %v1342 = vpop.f32.mrf.mxu0
    %v1343 = vadd.f32 %v1134, %v1342
    %1344 = vmatmul.f32.gmra.mxu0 %v404
    %v1345 = vpop.f32.mrf.mxu0
    %v1346 = vadd.f32 %v1137, %v1345
    %1347 = vmatmul.f32.gmra.mxu0 %v405
    %v1348 = vpop.f32.mrf.mxu0
    %v1349 = vadd.f32 %v1140, %v1348
    %1350 = vmatmul.f32.gmra.mxu0 %v406
    %v1351 = vpop.f32.mrf.mxu0
    %v1352 = vadd.f32 %v1143, %v1351
    %1353 = vmatmul.f32.gmra.mxu0 %v407
    %v1354 = vpop.f32.mrf.mxu0
    %v1355 = vadd.f32 %v1146, %v1354
    %1356 = vmatmul.f32.gmra.mxu0 %v408
    %v1357 = vpop.f32.mrf.mxu0
    %v1358 = vadd.f32 %v1149, %v1357
    %1359 = vmatmul.f32.gmra.mxu0 %v409
    %v1360 = vpop.f32.mrf.mxu0
    %v1361 = vadd.f32 %v1152, %v1360
    %1362 = vmatmul.f32.gmra.mxu0 %v410
    %v1363 = vpop.f32.mrf.mxu0
    %v1364 = vadd.f32 %v1155, %v1363
    %1365 = vmatmul.f32.gmra.mxu0 %v411
    %v1366 = vpop.f32.mrf.mxu0
    %v1367 = vadd.f32 %v1158, %v1366
    %1368 = vmatmul.f32.gmra.mxu0 %v412
    %v1369 = vpop.f32.mrf.mxu0
    %v1370 = vadd.f32 %v1161, %v1369
    %1371 = vmatmul.f32.gmra.mxu0 %v413
    %v1372 = vpop.f32.mrf.mxu0
    %v1373 = vadd.f32 %v1164, %v1372
    %1374 = vmatmul.f32.gmra.mxu0 %v414
    %v1375 = vpop.f32.mrf.mxu0
    %v1376 = vadd.f32 %v1167, %v1375
    %1377 = vmatmul.f32.gmra.mxu0 %v415
    %v1378 = vpop.f32.mrf.mxu0
    %v1379 = vadd.f32 %v1170, %v1378
    %1380 = vmatmul.f32.gmra.mxu0 %v416
    %v1381 = vpop.f32.mrf.mxu0
    %v1382 = vadd.f32 %v1173, %v1381
    %1383 = vmatmul.f32.gmra.mxu0 %v417
    %v1384 = vpop.f32.mrf.mxu0
    %v1385 = vadd.f32 %v1176, %v1384
    %1386 = vmatmul.f32.gmra.mxu0 %v418
    %v1387 = vpop.f32.mrf.mxu0
    %v1388 = vadd.f32 %v1179, %v1387
    %1389 = vmatmul.f32.gmra.mxu0 %v419
    %v1390 = vpop.f32.mrf.mxu0
    %v1391 = vadd.f32 %v1182, %v1390
    %1392 = vmatmul.f32.gmra.mxu0 %v420
    %v1393 = vpop.f32.mrf.mxu0
    %v1394 = vadd.f32 %v1185, %v1393
    %1395 = vmatmul.f32.gmra.mxu0 %v421
    %v1396 = vpop.f32.mrf.mxu0
    %v1397 = vadd.f32 %v1188, %v1396
    %1398 = vmatmul.f32.gmra.mxu0 %v422
    %v1399 = vpop.f32.mrf.mxu0
    %v1400 = vadd.f32 %v1191, %v1399
    %1401 = vmatmul.f32.gmra.mxu0 %v423
    %v1402 = vpop.f32.mrf.mxu0
    %v1403 = vadd.f32 %v1194, %v1402
    %1404 = vmatmul.f32.gmra.mxu0 %v424
    %v1405 = vpop.f32.mrf.mxu0
    %v1406 = vadd.f32 %v1197, %v1405
    %1407 = vmatmul.f32.gmra.mxu0 %v425
    %v1408 = vpop.f32.mrf.mxu0
    %v1409 = vadd.f32 %v1200, %v1408
    %1410 = vmatmul.f32.gmra.mxu0 %v426
    %v1411 = vpop.f32.mrf.mxu0
    %v1412 = vadd.f32 %v1203, %v1411
    %1413 = vmatmul.f32.gmra.mxu0 %v427
    %v1414 = vpop.f32.mrf.mxu0
    %v1415 = vadd.f32 %v1206, %v1414
    %1416 = vmatmul.f32.gmra.mxu0 %v428
    %v1417 = vpop.f32.mrf.mxu0
    %v1418 = vadd.f32 %v1209, %v1417
    %1419 = vmatmul.f32.gmra.mxu0 %v429
    %v1420 = vpop.f32.mrf.mxu0
    %v1421 = vadd.f32 %v1212, %v1420
    %1422 = vmatmul.f32.gmra.mxu0 %v430
    %v1423 = vpop.f32.mrf.mxu0
    %v1424 = vadd.f32 %v1215, %v1423
    %1425 = vmatmul.f32.gmra.mxu0 %v431
    %v1426 = vpop.f32.mrf.mxu0
    %v1427 = vadd.f32 %v1218, %v1426
    %1428 = vmatmul.f32.gmra.mxu0 %v432
    %v1429 = vpop.f32.mrf.mxu0
    %v1430 = vadd.f32 %v1221, %v1429
    %1431 = vmatmul.f32.gmra.mxu0 %v433
    %v1432 = vpop.f32.mrf.mxu0
    %v1433 = vadd.f32 %v1224, %v1432
    %1434 = vmatmul.f32.gmra.mxu0 %v434
    %v1435 = vpop.f32.mrf.mxu0
    %v1436 = vadd.f32 %v1227, %v1435
    %1437 = vmatmul.f32.gmra.mxu0 %v435
    %v1438 = vpop.f32.mrf.mxu0
    %v1439 = vadd.f32 %v1230, %v1438
    %1440 = vmatmul.f32.gmra.mxu0 %v436
    %v1441 = vpop.f32.mrf.mxu0
    %v1442 = vadd.f32 %v1233, %v1441
    %1443 = vmatmul.f32.gmra.mxu0 %v437
    %v1444 = vpop.f32.mrf.mxu0
    %v1445 = vadd.f32 %v1236, %v1444
    %1446 = vmatmul.f32.gmra.mxu0 %v438
    %v1447 = vpop.f32.mrf.mxu0
    %v1448 = vadd.f32 %v1239, %v1447
    %1449 = vdwg.mxu0
    %1450 = vmatpush.msra.mxu0 %v935
    %1451 = vmatpush.msra.mxu0 %v934
    %1452 = vmatpush.msra.mxu0 %v933
    %1453 = vmatpush.msra.mxu0 %v932
    %1454 = vmatpush.msra.mxu0 %v931
    %1455 = vmatpush.msra.mxu0 %v930
    %1456 = vmatpush.msra.mxu0 %v929
    %1457 = vmatpush.msra.mxu0 %v928
    %1458 = vmatpush.msra.mxu0 %v927
    %1459 = vmatpush.msra.mxu0 %v926
    %1460 = vmatpush.msra.mxu0 %v925
    %1461 = vmatpush.msra.mxu0 %v924
    %1462 = vmatpush.msra.mxu0 %v923
    %1463 = vmatpush.msra.mxu0 %v922
    %1464 = vmatpush.msra.mxu0 %v921
    %1465 = vmatpush.msra.mxu0 %v920
    %1466 = vmatmul.f32.gmra.mxu0 %v439
    %v1467 = vpop.f32.mrf.mxu0
    %v1468 = vadd.f32 %v1259, %v1467
    %1469 = vmatmul.f32.gmra.mxu0 %v440
    %v1470 = vpop.f32.mrf.mxu0
    %v1471 = vadd.f32 %v1262, %v1470
    %1472 = vmatmul.f32.gmra.mxu0 %v441
    %v1473 = vpop.f32.mrf.mxu0
    %v1474 = vadd.f32 %v1265, %v1473
    %1475 = vmatmul.f32.gmra.mxu0 %v442
    %v1476 = vpop.f32.mrf.mxu0
    %v1477 = vadd.f32 %v1268, %v1476
    %1478 = vmatmul.f32.gmra.mxu0 %v443
    %v1479 = vpop.f32.mrf.mxu0
    %v1480 = vadd.f32 %v1271, %v1479
    %1481 = vmatmul.f32.gmra.mxu0 %v444
    %v1482 = vpop.f32.mrf.mxu0
    %v1483 = vadd.f32 %v1274, %v1482
    %1484 = vmatmul.f32.gmra.mxu0 %v445
    %v1485 = vpop.f32.mrf.mxu0
    %v1486 = vadd.f32 %v1277, %v1485
    %1487 = vmatmul.f32.gmra.mxu0 %v446
    %v1488 = vpop.f32.mrf.mxu0
    %v1489 = vadd.f32 %v1280, %v1488
    %1490 = vmatmul.f32.gmra.mxu0 %v447
    %v1491 = vpop.f32.mrf.mxu0
    %v1492 = vadd.f32 %v1283, %v1491
    %1493 = vmatmul.f32.gmra.mxu0 %v448
    %v1494 = vpop.f32.mrf.mxu0
    %v1495 = vadd.f32 %v1286, %v1494
    %1496 = vmatmul.f32.gmra.mxu0 %v449
    %v1497 = vpop.f32.mrf.mxu0
    %v1498 = vadd.f32 %v1289, %v1497
    %1499 = vmatmul.f32.gmra.mxu0 %v450
    %v1500 = vpop.f32.mrf.mxu0
    %v1501 = vadd.f32 %v1292, %v1500
    %1502 = vmatmul.f32.gmra.mxu0 %v451
    %v1503 = vpop.f32.mrf.mxu0
    %v1504 = vadd.f32 %v1295, %v1503
    %1505 = vmatmul.f32.gmra.mxu0 %v452
    %v1506 = vpop.f32.mrf.mxu0
    %v1507 = vadd.f32 %v1298, %v1506
    %1508 = vmatmul.f32.gmra.mxu0 %v453
    %v1509 = vpop.f32.mrf.mxu0
    %v1510 = vadd.f32 %v1301, %v1509
    %1511 = vmatmul.f32.gmra.mxu0 %v454
    %v1512 = vpop.f32.mrf.mxu0
    %v1513 = vadd.f32 %v1304, %v1512
    %1514 = vmatmul.f32.gmra.mxu0 %v455
    %v1515 = vpop.f32.mrf.mxu0
    %v1516 = vadd.f32 %v1307, %v1515
    %1517 = vmatmul.f32.gmra.mxu0 %v456
    %v1518 = vpop.f32.mrf.mxu0
    %v1519 = vadd.f32 %v1310, %v1518
    %1520 = vmatmul.f32.gmra.mxu0 %v457
    %v1521 = vpop.f32.mrf.mxu0
    %v1522 = vadd.f32 %v1313, %v1521
    %1523 = vmatmul.f32.gmra.mxu0 %v458
    %v1524 = vpop.f32.mrf.mxu0
    %v1525 = vadd.f32 %v1316, %v1524
    %1526 = vmatmul.f32.gmra.mxu0 %v459
    %v1527 = vpop.f32.mrf.mxu0
    %v1528 = vadd.f32 %v1319, %v1527
    %1529 = vmatmul.f32.gmra.mxu0 %v460
    %v1530 = vpop.f32.mrf.mxu0
    %v1531 = vadd.f32 %v1322, %v1530
    %1532 = vmatmul.f32.gmra.mxu0 %v461
    %v1533 = vpop.f32.mrf.mxu0
    %v1534 = vadd.f32 %v1325, %v1533
    %1535 = vmatmul.f32.gmra.mxu0 %v462
    %v1536 = vpop.f32.mrf.mxu0
    %v1537 = vadd.f32 %v1328, %v1536
    %1538 = vmatmul.f32.gmra.mxu0 %v463
    %v1539 = vpop.f32.mrf.mxu0
    %v1540 = vadd.f32 %v1331, %v1539
    %1541 = vmatmul.f32.gmra.mxu0 %v464
    %v1542 = vpop.f32.mrf.mxu0
    %v1543 = vadd.f32 %v1334, %v1542
    %1544 = vmatmul.f32.gmra.mxu0 %v465
    %v1545 = vpop.f32.mrf.mxu0
    %v1546 = vadd.f32 %v1337, %v1545
    %1547 = vmatmul.f32.gmra.mxu0 %v466
    %v1548 = vpop.f32.mrf.mxu0
    %v1549 = vadd.f32 %v1340, %v1548
    %1550 = vmatmul.f32.gmra.mxu0 %v467
    %v1551 = vpop.f32.mrf.mxu0
    %v1552 = vadd.f32 %v1343, %v1551
    %1553 = vmatmul.f32.gmra.mxu0 %v468
    %v1554 = vpop.f32.mrf.mxu0
    %v1555 = vadd.f32 %v1346, %v1554
    %1556 = vmatmul.f32.gmra.mxu0 %v469
    %v1557 = vpop.f32.mrf.mxu0
    %v1558 = vadd.f32 %v1349, %v1557
    %1559 = vmatmul.f32.gmra.mxu0 %v470
    %v1560 = vpop.f32.mrf.mxu0
    %v1561 = vadd.f32 %v1352, %v1560
    %1562 = vmatmul.f32.gmra.mxu0 %v471
    %v1563 = vpop.f32.mrf.mxu0
    %v1564 = vadd.f32 %v1355, %v1563
    %1565 = vmatmul.f32.gmra.mxu0 %v472
    %v1566 = vpop.f32.mrf.mxu0
    %v1567 = vadd.f32 %v1358, %v1566
    %1568 = vmatmul.f32.gmra.mxu0 %v473
    %v1569 = vpop.f32.mrf.mxu0
    %v1570 = vadd.f32 %v1361, %v1569
    %1571 = vmatmul.f32.gmra.mxu0 %v474
    %v1572 = vpop.f32.mrf.mxu0
    %v1573 = vadd.f32 %v1364, %v1572
    %1574 = vmatmul.f32.gmra.mxu0 %v475
    %v1575 = vpop.f32.mrf.mxu0
    %v1576 = vadd.f32 %v1367, %v1575
    %1577 = vmatmul.f32.gmra.mxu0 %v476
    %v1578 = vpop.f32.mrf.mxu0
    %v1579 = vadd.f32 %v1370, %v1578
    %1580 = vmatmul.f32.gmra.mxu0 %v477
    %v1581 = vpop.f32.mrf.mxu0
    %v1582 = vadd.f32 %v1373, %v1581
    %1583 = vmatmul.f32.gmra.mxu0 %v478
    %v1584 = vpop.f32.mrf.mxu0
    %v1585 = vadd.f32 %v1376, %v1584
    %1586 = vmatmul.f32.gmra.mxu0 %v479
    %v1587 = vpop.f32.mrf.mxu0
    %v1588 = vadd.f32 %v1379, %v1587
    %1589 = vmatmul.f32.gmra.mxu0 %v480
    %v1590 = vpop.f32.mrf.mxu0
    %v1591 = vadd.f32 %v1382, %v1590
    %1592 = vmatmul.f32.gmra.mxu0 %v481
    %v1593 = vpop.f32.mrf.mxu0
    %v1594 = vadd.f32 %v1385, %v1593
    %1595 = vmatmul.f32.gmra.mxu0 %v482
    %v1596 = vpop.f32.mrf.mxu0
    %v1597 = vadd.f32 %v1388, %v1596
    %1598 = vmatmul.f32.gmra.mxu0 %v483
    %v1599 = vpop.f32.mrf.mxu0
    %v1600 = vadd.f32 %v1391, %v1599
    %1601 = vmatmul.f32.gmra.mxu0 %v484
    %v1602 = vpop.f32.mrf.mxu0
    %v1603 = vadd.f32 %v1394, %v1602
    %1604 = vmatmul.f32.gmra.mxu0 %v485
    %v1605 = vpop.f32.mrf.mxu0
    %v1606 = vadd.f32 %v1397, %v1605
    %1607 = vmatmul.f32.gmra.mxu0 %v486
    %v1608 = vpop.f32.mrf.mxu0
    %v1609 = vadd.f32 %v1400, %v1608
    %1610 = vmatmul.f32.gmra.mxu0 %v487
    %v1611 = vpop.f32.mrf.mxu0
    %v1612 = vadd.f32 %v1403, %v1611
    %1613 = vmatmul.f32.gmra.mxu0 %v488
    %v1614 = vpop.f32.mrf.mxu0
    %v1615 = vadd.f32 %v1406, %v1614
    %1616 = vmatmul.f32.gmra.mxu0 %v489
    %v1617 = vpop.f32.mrf.mxu0
    %v1618 = vadd.f32 %v1409, %v1617
    %1619 = vmatmul.f32.gmra.mxu0 %v490
    %v1620 = vpop.f32.mrf.mxu0
    %v1621 = vadd.f32 %v1412, %v1620
    %1622 = vmatmul.f32.gmra.mxu0 %v491
    %v1623 = vpop.f32.mrf.mxu0
    %v1624 = vadd.f32 %v1415, %v1623
    %1625 = vmatmul.f32.gmra.mxu0 %v492
    %v1626 = vpop.f32.mrf.mxu0
    %v1627 = vadd.f32 %v1418, %v1626
    %1628 = vmatmul.f32.gmra.mxu0 %v493
    %v1629 = vpop.f32.mrf.mxu0
    %v1630 = vadd.f32 %v1421, %v1629
    %1631 = vmatmul.f32.gmra.mxu0 %v494
    %v1632 = vpop.f32.mrf.mxu0
    %v1633 = vadd.f32 %v1424, %v1632
    %1634 = vmatmul.f32.gmra.mxu0 %v495
    %v1635 = vpop.f32.mrf.mxu0
    %v1636 = vadd.f32 %v1427, %v1635
    %1637 = vmatmul.f32.gmra.mxu0 %v496
    %v1638 = vpop.f32.mrf.mxu0
    %v1639 = vadd.f32 %v1430, %v1638
    %1640 = vmatmul.f32.gmra.mxu0 %v497
    %v1641 = vpop.f32.mrf.mxu0
    %v1642 = vadd.f32 %v1433, %v1641
    %1643 = vmatmul.f32.gmra.mxu0 %v498
    %v1644 = vpop.f32.mrf.mxu0
    %v1645 = vadd.f32 %v1436, %v1644
    %1646 = vmatmul.f32.gmra.mxu0 %v499
    %v1647 = vpop.f32.mrf.mxu0
    %v1648 = vadd.f32 %v1439, %v1647
    %1649 = vmatmul.f32.gmra.mxu0 %v500
    %v1650 = vpop.f32.mrf.mxu0
    %v1651 = vadd.f32 %v1442, %v1650
    %1652 = vmatmul.f32.gmra.mxu0 %v501
    %v1653 = vpop.f32.mrf.mxu0
    %v1654 = vadd.f32 %v1445, %v1653
    %1655 = vmatmul.f32.gmra.mxu0 %v502
    %v1656 = vpop.f32.mrf.mxu0
    %v1657 = vadd.f32 %v1448, %v1656
    %1658 = vdwg.mxu0
    %1659 = vmatpush.msra.mxu0 %v951
    %1660 = vmatpush.msra.mxu0 %v950
    %1661 = vmatpush.msra.mxu0 %v949
    %1662 = vmatpush.msra.mxu0 %v948
    %1663 = vmatpush.msra.mxu0 %v947
    %1664 = vmatpush.msra.mxu0 %v946
    %1665 = vmatpush.msra.mxu0 %v945
    %1666 = vmatpush.msra.mxu0 %v944
    %1667 = vmatpush.msra.mxu0 %v943
    %1668 = vmatpush.msra.mxu0 %v942
    %1669 = vmatpush.msra.mxu0 %v941
    %1670 = vmatpush.msra.mxu0 %v940
    %1671 = vmatpush.msra.mxu0 %v939
    %1672 = vmatpush.msra.mxu0 %v938
    %1673 = vmatpush.msra.mxu0 %v937
    %1674 = vmatpush.msra.mxu0 %v936
    %1675 = vmatmul.f32.gmra.mxu0 %v503
    %v1676 = vpop.f32.mrf.mxu0
    %v1677 = vadd.f32 %v1468, %v1676
    %1678 = vmatmul.f32.gmra.mxu0 %v504
    %v1679 = vpop.f32.mrf.mxu0
    %v1680 = vadd.f32 %v1471, %v1679
    %1681 = vmatmul.f32.gmra.mxu0 %v505
    %v1682 = vpop.f32.mrf.mxu0
    %v1683 = vadd.f32 %v1474, %v1682
    %1684 = vmatmul.f32.gmra.mxu0 %v506
    %v1685 = vpop.f32.mrf.mxu0
    %v1686 = vadd.f32 %v1477, %v1685
    %1687 = vmatmul.f32.gmra.mxu0 %v507
    %v1688 = vpop.f32.mrf.mxu0
    %v1689 = vadd.f32 %v1480, %v1688
    %1690 = vmatmul.f32.gmra.mxu0 %v508
    %v1691 = vpop.f32.mrf.mxu0
    %v1692 = vadd.f32 %v1483, %v1691
    %1693 = vmatmul.f32.gmra.mxu0 %v509
    %v1694 = vpop.f32.mrf.mxu0
    %v1695 = vadd.f32 %v1486, %v1694
    %1696 = vmatmul.f32.gmra.mxu0 %v510
    %v1697 = vpop.f32.mrf.mxu0
    %v1698 = vadd.f32 %v1489, %v1697
    %1699 = vmatmul.f32.gmra.mxu0 %v511
    %v1700 = vpop.f32.mrf.mxu0
    %v1701 = vadd.f32 %v1492, %v1700
    %1702 = vmatmul.f32.gmra.mxu0 %v512
    %v1703 = vpop.f32.mrf.mxu0
    %v1704 = vadd.f32 %v1495, %v1703
    %1705 = vmatmul.f32.gmra.mxu0 %v513
    %v1706 = vpop.f32.mrf.mxu0
    %v1707 = vadd.f32 %v1498, %v1706
    %1708 = vmatmul.f32.gmra.mxu0 %v514
    %v1709 = vpop.f32.mrf.mxu0
    %v1710 = vadd.f32 %v1501, %v1709
    %1711 = vmatmul.f32.gmra.mxu0 %v515
    %v1712 = vpop.f32.mrf.mxu0
    %v1713 = vadd.f32 %v1504, %v1712
    %1714 = vmatmul.f32.gmra.mxu0 %v516
    %v1715 = vpop.f32.mrf.mxu0
    %v1716 = vadd.f32 %v1507, %v1715
    %1717 = vmatmul.f32.gmra.mxu0 %v517
    %v1718 = vpop.f32.mrf.mxu0
    %v1719 = vadd.f32 %v1510, %v1718
    %1720 = vmatmul.f32.gmra.mxu0 %v518
    %v1721 = vpop.f32.mrf.mxu0
    %v1722 = vadd.f32 %v1513, %v1721
    %1723 = vmatmul.f32.gmra.mxu0 %v519
    %v1724 = vpop.f32.mrf.mxu0
    %v1725 = vadd.f32 %v1516, %v1724
    %1726 = vmatmul.f32.gmra.mxu0 %v520
    %v1727 = vpop.f32.mrf.mxu0
    %v1728 = vadd.f32 %v1519, %v1727
    %1729 = vmatmul.f32.gmra.mxu0 %v521
    %v1730 = vpop.f32.mrf.mxu0
    %v1731 = vadd.f32 %v1522, %v1730
    %1732 = vmatmul.f32.gmra.mxu0 %v522
    %v1733 = vpop.f32.mrf.mxu0
    %v1734 = vadd.f32 %v1525, %v1733
    %1735 = vmatmul.f32.gmra.mxu0 %v523
    %v1736 = vpop.f32.mrf.mxu0
    %v1737 = vadd.f32 %v1528, %v1736
    %1738 = vmatmul.f32.gmra.mxu0 %v524
    %v1739 = vpop.f32.mrf.mxu0
    %v1740 = vadd.f32 %v1531, %v1739
    %1741 = vmatmul.f32.gmra.mxu0 %v525
    %v1742 = vpop.f32.mrf.mxu0
    %v1743 = vadd.f32 %v1534, %v1742
    %1744 = vmatmul.f32.gmra.mxu0 %v526
    %v1745 = vpop.f32.mrf.mxu0
    %v1746 = vadd.f32 %v1537, %v1745
    %1747 = vmatmul.f32.gmra.mxu0 %v527
    %v1748 = vpop.f32.mrf.mxu0
    %v1749 = vadd.f32 %v1540, %v1748
    %1750 = vmatmul.f32.gmra.mxu0 %v528
    %v1751 = vpop.f32.mrf.mxu0
    %v1752 = vadd.f32 %v1543, %v1751
    %1753 = vmatmul.f32.gmra.mxu0 %v529
    %v1754 = vpop.f32.mrf.mxu0
    %v1755 = vadd.f32 %v1546, %v1754
    %1756 = vmatmul.f32.gmra.mxu0 %v530
    %v1757 = vpop.f32.mrf.mxu0
    %v1758 = vadd.f32 %v1549, %v1757
    %1759 = vmatmul.f32.gmra.mxu0 %v531
    %v1760 = vpop.f32.mrf.mxu0
    %v1761 = vadd.f32 %v1552, %v1760
    %1762 = vmatmul.f32.gmra.mxu0 %v532
    %v1763 = vpop.f32.mrf.mxu0
    %v1764 = vadd.f32 %v1555, %v1763
    %1765 = vmatmul.f32.gmra.mxu0 %v533
    %v1766 = vpop.f32.mrf.mxu0
    %v1767 = vadd.f32 %v1558, %v1766
    %1768 = vmatmul.f32.gmra.mxu0 %v534
    %v1769 = vpop.f32.mrf.mxu0
    %v1770 = vadd.f32 %v1561, %v1769
    %1771 = vmatmul.f32.gmra.mxu0 %v535
    %v1772 = vpop.f32.mrf.mxu0
    %v1773 = vadd.f32 %v1564, %v1772
    %1774 = vmatmul.f32.gmra.mxu0 %v536
    %v1775 = vpop.f32.mrf.mxu0
    %v1776 = vadd.f32 %v1567, %v1775
    %1777 = vmatmul.f32.gmra.mxu0 %v537
    %v1778 = vpop.f32.mrf.mxu0
    %v1779 = vadd.f32 %v1570, %v1778
    %1780 = vmatmul.f32.gmra.mxu0 %v538
    %v1781 = vpop.f32.mrf.mxu0
    %v1782 = vadd.f32 %v1573, %v1781
    %1783 = vmatmul.f32.gmra.mxu0 %v539
    %v1784 = vpop.f32.mrf.mxu0
    %v1785 = vadd.f32 %v1576, %v1784
    %1786 = vmatmul.f32.gmra.mxu0 %v540
    %v1787 = vpop.f32.mrf.mxu0
    %v1788 = vadd.f32 %v1579, %v1787
    %1789 = vmatmul.f32.gmra.mxu0 %v541
    %v1790 = vpop.f32.mrf.mxu0
    %v1791 = vadd.f32 %v1582, %v1790
    %1792 = vmatmul.f32.gmra.mxu0 %v542
    %v1793 = vpop.f32.mrf.mxu0
    %v1794 = vadd.f32 %v1585, %v1793
    %1795 = vmatmul.f32.gmra.mxu0 %v543
    %v1796 = vpop.f32.mrf.mxu0
    %v1797 = vadd.f32 %v1588, %v1796
    %1798 = vmatmul.f32.gmra.mxu0 %v544
    %v1799 = vpop.f32.mrf.mxu0
    %v1800 = vadd.f32 %v1591, %v1799
    %1801 = vmatmul.f32.gmra.mxu0 %v545
    %v1802 = vpop.f32.mrf.mxu0
    %v1803 = vadd.f32 %v1594, %v1802
    %1804 = vmatmul.f32.gmra.mxu0 %v546
    %v1805 = vpop.f32.mrf.mxu0
    %v1806 = vadd.f32 %v1597, %v1805
    %1807 = vmatmul.f32.gmra.mxu0 %v547
    %v1808 = vpop.f32.mrf.mxu0
    %v1809 = vadd.f32 %v1600, %v1808
    %1810 = vmatmul.f32.gmra.mxu0 %v548
    %v1811 = vpop.f32.mrf.mxu0
    %v1812 = vadd.f32 %v1603, %v1811
    %1813 = vmatmul.f32.gmra.mxu0 %v549
    %v1814 = vpop.f32.mrf.mxu0
    %v1815 = vadd.f32 %v1606, %v1814
    %1816 = vmatmul.f32.gmra.mxu0 %v550
    %v1817 = vpop.f32.mrf.mxu0
    %v1818 = vadd.f32 %v1609, %v1817
    %1819 = vmatmul.f32.gmra.mxu0 %v551
    %v1820 = vpop.f32.mrf.mxu0
    %v1821 = vadd.f32 %v1612, %v1820
    %1822 = vmatmul.f32.gmra.mxu0 %v552
    %v1823 = vpop.f32.mrf.mxu0
    %v1824 = vadd.f32 %v1615, %v1823
    %1825 = vmatmul.f32.gmra.mxu0 %v553
    %v1826 = vpop.f32.mrf.mxu0
    %v1827 = vadd.f32 %v1618, %v1826
    %1828 = vmatmul.f32.gmra.mxu0 %v554
    %v1829 = vpop.f32.mrf.mxu0
    %v1830 = vadd.f32 %v1621, %v1829
    %1831 = vmatmul.f32.gmra.mxu0 %v555
    %v1832 = vpop.f32.mrf.mxu0
    %v1833 = vadd.f32 %v1624, %v1832
    %1834 = vmatmul.f32.gmra.mxu0 %v556
    %v1835 = vpop.f32.mrf.mxu0
    %v1836 = vadd.f32 %v1627, %v1835
    %1837 = vmatmul.f32.gmra.mxu0 %v557
    %v1838 = vpop.f32.mrf.mxu0
    %v1839 = vadd.f32 %v1630, %v1838
    %1840 = vmatmul.f32.gmra.mxu0 %v558
    %v1841 = vpop.f32.mrf.mxu0
    %v1842 = vadd.f32 %v1633, %v1841
    %1843 = vmatmul.f32.gmra.mxu0 %v559
    %v1844 = vpop.f32.mrf.mxu0
    %v1845 = vadd.f32 %v1636, %v1844
    %1846 = vmatmul.f32.gmra.mxu0 %v560
    %v1847 = vpop.f32.mrf.mxu0
    %v1848 = vadd.f32 %v1639, %v1847
    %1849 = vmatmul.f32.gmra.mxu0 %v561
    %v1850 = vpop.f32.mrf.mxu0
    %v1851 = vadd.f32 %v1642, %v1850
    %1852 = vmatmul.f32.gmra.mxu0 %v562
    %v1853 = vpop.f32.mrf.mxu0
    %v1854 = vadd.f32 %v1645, %v1853
    %1855 = vmatmul.f32.gmra.mxu0 %v563
    %v1856 = vpop.f32.mrf.mxu0
    %v1857 = vadd.f32 %v1648, %v1856
    %1858 = vmatmul.f32.gmra.mxu0 %v564
    %v1859 = vpop.f32.mrf.mxu0
    %v1860 = vadd.f32 %v1651, %v1859
    %1861 = vmatmul.f32.gmra.mxu0 %v565
    %v1862 = vpop.f32.mrf.mxu0
    %v1863 = vadd.f32 %v1654, %v1862
    %1864 = vmatmul.f32.gmra.mxu0 %v566
    %v1865 = vpop.f32.mrf.mxu0
    %v1866 = vadd.f32 %v1657, %v1865
    %1867 = vdwg.mxu0
    %1868 = vmatpush.msra.mxu0 %v967
    %1869 = vmatpush.msra.mxu0 %v966
    %1870 = vmatpush.msra.mxu0 %v965
    %1871 = vmatpush.msra.mxu0 %v964
    %1872 = vmatpush.msra.mxu0 %v963
    %1873 = vmatpush.msra.mxu0 %v962
    %1874 = vmatpush.msra.mxu0 %v961
    %1875 = vmatpush.msra.mxu0 %v960
    %1876 = vmatpush.msra.mxu0 %v959
    %1877 = vmatpush.msra.mxu0 %v958
    %1878 = vmatpush.msra.mxu0 %v957
    %1879 = vmatpush.msra.mxu0 %v956
    %1880 = vmatpush.msra.mxu0 %v955
    %1881 = vmatpush.msra.mxu0 %v954
    %1882 = vmatpush.msra.mxu0 %v953
    %1883 = vmatpush.msra.mxu0 %v952
    %1884 = vmatmul.f32.gmra.mxu0 %v567
    %v1885 = vpop.f32.mrf.mxu0
    %v1886 = vadd.f32 %v1677, %v1885
    %1887 = vmatmul.f32.gmra.mxu0 %v568
    %v1888 = vpop.f32.mrf.mxu0
    %v1889 = vadd.f32 %v1680, %v1888
    %1890 = vmatmul.f32.gmra.mxu0 %v569
    %v1891 = vpop.f32.mrf.mxu0
    %v1892 = vadd.f32 %v1683, %v1891
    %1893 = vmatmul.f32.gmra.mxu0 %v570
    %v1894 = vpop.f32.mrf.mxu0
    %v1895 = vadd.f32 %v1686, %v1894
    %1896 = vmatmul.f32.gmra.mxu0 %v571
    %v1897 = vpop.f32.mrf.mxu0
    %v1898 = vadd.f32 %v1689, %v1897
    %1899 = vmatmul.f32.gmra.mxu0 %v572
    %v1900 = vpop.f32.mrf.mxu0
    %v1901 = vadd.f32 %v1692, %v1900
    %1902 = vmatmul.f32.gmra.mxu0 %v573
    %v1903 = vpop.f32.mrf.mxu0
    %v1904 = vadd.f32 %v1695, %v1903
    %1905 = vmatmul.f32.gmra.mxu0 %v574
    %v1906 = vpop.f32.mrf.mxu0
    %v1907 = vadd.f32 %v1698, %v1906
    %1908 = vmatmul.f32.gmra.mxu0 %v575
    %v1909 = vpop.f32.mrf.mxu0
    %v1910 = vadd.f32 %v1701, %v1909
    %1911 = vmatmul.f32.gmra.mxu0 %v576
    %v1912 = vpop.f32.mrf.mxu0
    %v1913 = vadd.f32 %v1704, %v1912
    %1914 = vmatmul.f32.gmra.mxu0 %v577
    %v1915 = vpop.f32.mrf.mxu0
    %v1916 = vadd.f32 %v1707, %v1915
    %1917 = vmatmul.f32.gmra.mxu0 %v578
    %v1918 = vpop.f32.mrf.mxu0
    %v1919 = vadd.f32 %v1710, %v1918
    %1920 = vmatmul.f32.gmra.mxu0 %v579
    %v1921 = vpop.f32.mrf.mxu0
    %v1922 = vadd.f32 %v1713, %v1921
    %1923 = vmatmul.f32.gmra.mxu0 %v580
    %v1924 = vpop.f32.mrf.mxu0
    %v1925 = vadd.f32 %v1716, %v1924
    %1926 = vmatmul.f32.gmra.mxu0 %v581
    %v1927 = vpop.f32.mrf.mxu0
    %v1928 = vadd.f32 %v1719, %v1927
    %1929 = vmatmul.f32.gmra.mxu0 %v582
    %v1930 = vpop.f32.mrf.mxu0
    %v1931 = vadd.f32 %v1722, %v1930
    %1932 = vmatmul.f32.gmra.mxu0 %v583
    %v1933 = vpop.f32.mrf.mxu0
    %v1934 = vadd.f32 %v1725, %v1933
    %1935 = vmatmul.f32.gmra.mxu0 %v584
    %v1936 = vpop.f32.mrf.mxu0
    %v1937 = vadd.f32 %v1728, %v1936
    %1938 = vmatmul.f32.gmra.mxu0 %v585
    %v1939 = vpop.f32.mrf.mxu0
    %v1940 = vadd.f32 %v1731, %v1939
    %1941 = vmatmul.f32.gmra.mxu0 %v586
    %v1942 = vpop.f32.mrf.mxu0
    %v1943 = vadd.f32 %v1734, %v1942
    %1944 = vmatmul.f32.gmra.mxu0 %v587
    %v1945 = vpop.f32.mrf.mxu0
    %v1946 = vadd.f32 %v1737, %v1945
    %1947 = vmatmul.f32.gmra.mxu0 %v588
    %v1948 = vpop.f32.mrf.mxu0
    %v1949 = vadd.f32 %v1740, %v1948
    %1950 = vmatmul.f32.gmra.mxu0 %v589
    %v1951 = vpop.f32.mrf.mxu0
    %v1952 = vadd.f32 %v1743, %v1951
    %1953 = vmatmul.f32.gmra.mxu0 %v590
    %v1954 = vpop.f32.mrf.mxu0
    %v1955 = vadd.f32 %v1746, %v1954
    %1956 = vmatmul.f32.gmra.mxu0 %v591
    %v1957 = vpop.f32.mrf.mxu0
    %v1958 = vadd.f32 %v1749, %v1957
    %1959 = vmatmul.f32.gmra.mxu0 %v592
    %v1960 = vpop.f32.mrf.mxu0
    %v1961 = vadd.f32 %v1752, %v1960
    %1962 = vmatmul.f32.gmra.mxu0 %v593
    %v1963 = vpop.f32.mrf.mxu0
    %v1964 = vadd.f32 %v1755, %v1963
    %1965 = vmatmul.f32.gmra.mxu0 %v594
    %v1966 = vpop.f32.mrf.mxu0
    %v1967 = vadd.f32 %v1758, %v1966
    %1968 = vmatmul.f32.gmra.mxu0 %v595
    %v1969 = vpop.f32.mrf.mxu0
    %v1970 = vadd.f32 %v1761, %v1969
    %1971 = vmatmul.f32.gmra.mxu0 %v596
    %v1972 = vpop.f32.mrf.mxu0
    %v1973 = vadd.f32 %v1764, %v1972
    %1974 = vmatmul.f32.gmra.mxu0 %v597
    %v1975 = vpop.f32.mrf.mxu0
    %v1976 = vadd.f32 %v1767, %v1975
    %1977 = vmatmul.f32.gmra.mxu0 %v598
    %v1978 = vpop.f32.mrf.mxu0
    %v1979 = vadd.f32 %v1770, %v1978
    %1980 = vmatmul.f32.gmra.mxu0 %v599
    %v1981 = vpop.f32.mrf.mxu0
    %v1982 = vadd.f32 %v1773, %v1981
    %1983 = vmatmul.f32.gmra.mxu0 %v600
    %v1984 = vpop.f32.mrf.mxu0
    %v1985 = vadd.f32 %v1776, %v1984
    %1986 = vmatmul.f32.gmra.mxu0 %v601
    %v1987 = vpop.f32.mrf.mxu0
    %v1988 = vadd.f32 %v1779, %v1987
    %1989 = vmatmul.f32.gmra.mxu0 %v602
    %v1990 = vpop.f32.mrf.mxu0
    %v1991 = vadd.f32 %v1782, %v1990
    %1992 = vmatmul.f32.gmra.mxu0 %v603
    %v1993 = vpop.f32.mrf.mxu0
    %v1994 = vadd.f32 %v1785, %v1993
    %1995 = vmatmul.f32.gmra.mxu0 %v604
    %v1996 = vpop.f32.mrf.mxu0
    %v1997 = vadd.f32 %v1788, %v1996
    %1998 = vmatmul.f32.gmra.mxu0 %v605
    %v1999 = vpop.f32.mrf.mxu0
    %v2000 = vadd.f32 %v1791, %v1999
    %2001 = vmatmul.f32.gmra.mxu0 %v606
    %v2002 = vpop.f32.mrf.mxu0
    %v2003 = vadd.f32 %v1794, %v2002
    %2004 = vmatmul.f32.gmra.mxu0 %v607
    %v2005 = vpop.f32.mrf.mxu0
    %v2006 = vadd.f32 %v1797, %v2005
    %2007 = vmatmul.f32.gmra.mxu0 %v608
    %v2008 = vpop.f32.mrf.mxu0
    %v2009 = vadd.f32 %v1800, %v2008
    %2010 = vmatmul.f32.gmra.mxu0 %v609
    %v2011 = vpop.f32.mrf.mxu0
    %v2012 = vadd.f32 %v1803, %v2011
    %2013 = vmatmul.f32.gmra.mxu0 %v610
    %v2014 = vpop.f32.mrf.mxu0
    %v2015 = vadd.f32 %v1806, %v2014
    %2016 = vmatmul.f32.gmra.mxu0 %v611
    %v2017 = vpop.f32.mrf.mxu0
    %v2018 = vadd.f32 %v1809, %v2017
    %2019 = vmatmul.f32.gmra.mxu0 %v612
    %v2020 = vpop.f32.mrf.mxu0
    %v2021 = vadd.f32 %v1812, %v2020
    %2022 = vmatmul.f32.gmra.mxu0 %v613
    %v2023 = vpop.f32.mrf.mxu0
    %v2024 = vadd.f32 %v1815, %v2023
    %2025 = vmatmul.f32.gmra.mxu0 %v614
    %v2026 = vpop.f32.mrf.mxu0
    %v2027 = vadd.f32 %v1818, %v2026
    %2028 = vmatmul.f32.gmra.mxu0 %v615
    %v2029 = vpop.f32.mrf.mxu0
    %v2030 = vadd.f32 %v1821, %v2029
    %2031 = vmatmul.f32.gmra.mxu0 %v616
    %v2032 = vpop.f32.mrf.mxu0
    %v2033 = vadd.f32 %v1824, %v2032
    %2034 = vmatmul.f32.gmra.mxu0 %v617
    %v2035 = vpop.f32.mrf.mxu0
    %v2036 = vadd.f32 %v1827, %v2035
    %2037 = vmatmul.f32.gmra.mxu0 %v618
    %v2038 = vpop.f32.mrf.mxu0
    %v2039 = vadd.f32 %v1830, %v2038
    %2040 = vmatmul.f32.gmra.mxu0 %v619
    %v2041 = vpop.f32.mrf.mxu0
    %v2042 = vadd.f32 %v1833, %v2041
    %2043 = vmatmul.f32.gmra.mxu0 %v620
    %v2044 = vpop.f32.mrf.mxu0
    %v2045 = vadd.f32 %v1836, %v2044
    %2046 = vmatmul.f32.gmra.mxu0 %v621
    %v2047 = vpop.f32.mrf.mxu0
    %v2048 = vadd.f32 %v1839, %v2047
    %2049 = vmatmul.f32.gmra.mxu0 %v622
    %v2050 = vpop.f32.mrf.mxu0
    %v2051 = vadd.f32 %v1842, %v2050
    %2052 = vmatmul.f32.gmra.mxu0 %v623
    %v2053 = vpop.f32.mrf.mxu0
    %v2054 = vadd.f32 %v1845, %v2053
    %2055 = vmatmul.f32.gmra.mxu0 %v624
    %v2056 = vpop.f32.mrf.mxu0
    %v2057 = vadd.f32 %v1848, %v2056
    %2058 = vmatmul.f32.gmra.mxu0 %v625
    %v2059 = vpop.f32.mrf.mxu0
    %v2060 = vadd.f32 %v1851, %v2059
    %2061 = vmatmul.f32.gmra.mxu0 %v626
    %v2062 = vpop.f32.mrf.mxu0
    %v2063 = vadd.f32 %v1854, %v2062
    %2064 = vmatmul.f32.gmra.mxu0 %v627
    %v2065 = vpop.f32.mrf.mxu0
    %v2066 = vadd.f32 %v1857, %v2065
    %2067 = vmatmul.f32.gmra.mxu0 %v628
    %v2068 = vpop.f32.mrf.mxu0
    %v2069 = vadd.f32 %v1860, %v2068
    %2070 = vmatmul.f32.gmra.mxu0 %v629
    %v2071 = vpop.f32.mrf.mxu0
    %v2072 = vadd.f32 %v1863, %v2071
    %2073 = vmatmul.f32.gmra.mxu0 %v630
    %v2074 = vpop.f32.mrf.mxu0
    %v2075 = vadd.f32 %v1866, %v2074
    %2076 = vdwg.mxu0
    %2077 = vmatpush.msra.mxu0 %v983
    %2078 = vmatpush.msra.mxu0 %v982
    %2079 = vmatpush.msra.mxu0 %v981
    %2080 = vmatpush.msra.mxu0 %v980
    %2081 = vmatpush.msra.mxu0 %v979
    %2082 = vmatpush.msra.mxu0 %v978
    %2083 = vmatpush.msra.mxu0 %v977
    %2084 = vmatpush.msra.mxu0 %v976
    %2085 = vmatpush.msra.mxu0 %v975
    %2086 = vmatpush.msra.mxu0 %v974
    %2087 = vmatpush.msra.mxu0 %v973
    %2088 = vmatpush.msra.mxu0 %v972
    %2089 = vmatpush.msra.mxu0 %v971
    %2090 = vmatpush.msra.mxu0 %v970
    %2091 = vmatpush.msra.mxu0 %v969
    %2092 = vmatpush.msra.mxu0 %v968
    %2093 = vmatmul.f32.gmra.mxu0 %v631
    %v2094 = vpop.f32.mrf.mxu0
    %v2095 = vadd.f32 %v1886, %v2094
    %2096 = vmatmul.f32.gmra.mxu0 %v632
    %v2097 = vpop.f32.mrf.mxu0
    %v2098 = vadd.f32 %v1889, %v2097
    %2099 = vmatmul.f32.gmra.mxu0 %v633
    %v2100 = vpop.f32.mrf.mxu0
    %v2101 = vadd.f32 %v1892, %v2100
    %2102 = vmatmul.f32.gmra.mxu0 %v634
    %v2103 = vpop.f32.mrf.mxu0
    %v2104 = vadd.f32 %v1895, %v2103
    %2105 = vmatmul.f32.gmra.mxu0 %v635
    %v2106 = vpop.f32.mrf.mxu0
    %v2107 = vadd.f32 %v1898, %v2106
    %2108 = vmatmul.f32.gmra.mxu0 %v636
    %v2109 = vpop.f32.mrf.mxu0
    %v2110 = vadd.f32 %v1901, %v2109
    %2111 = vmatmul.f32.gmra.mxu0 %v637
    %v2112 = vpop.f32.mrf.mxu0
    %v2113 = vadd.f32 %v1904, %v2112
    %2114 = vmatmul.f32.gmra.mxu0 %v638
    %v2115 = vpop.f32.mrf.mxu0
    %v2116 = vadd.f32 %v1907, %v2115
    %2117 = vmatmul.f32.gmra.mxu0 %v639
    %v2118 = vpop.f32.mrf.mxu0
    %v2119 = vadd.f32 %v1910, %v2118
    %2120 = vmatmul.f32.gmra.mxu0 %v640
    %v2121 = vpop.f32.mrf.mxu0
    %v2122 = vadd.f32 %v1913, %v2121
    %2123 = vmatmul.f32.gmra.mxu0 %v641
    %v2124 = vpop.f32.mrf.mxu0
    %v2125 = vadd.f32 %v1916, %v2124
    %2126 = vmatmul.f32.gmra.mxu0 %v642
    %v2127 = vpop.f32.mrf.mxu0
    %v2128 = vadd.f32 %v1919, %v2127
    %2129 = vmatmul.f32.gmra.mxu0 %v643
    %v2130 = vpop.f32.mrf.mxu0
    %v2131 = vadd.f32 %v1922, %v2130
    %2132 = vmatmul.f32.gmra.mxu0 %v644
    %v2133 = vpop.f32.mrf.mxu0
    %v2134 = vadd.f32 %v1925, %v2133
    %2135 = vmatmul.f32.gmra.mxu0 %v645
    %v2136 = vpop.f32.mrf.mxu0
    %v2137 = vadd.f32 %v1928, %v2136
    %2138 = vmatmul.f32.gmra.mxu0 %v646
    %v2139 = vpop.f32.mrf.mxu0
    %v2140 = vadd.f32 %v1931, %v2139
    %2141 = vmatmul.f32.gmra.mxu0 %v647
    %v2142 = vpop.f32.mrf.mxu0
    %v2143 = vadd.f32 %v1934, %v2142
    %2144 = vmatmul.f32.gmra.mxu0 %v648
    %v2145 = vpop.f32.mrf.mxu0
    %v2146 = vadd.f32 %v1937, %v2145
    %2147 = vmatmul.f32.gmra.mxu0 %v649
    %v2148 = vpop.f32.mrf.mxu0
    %v2149 = vadd.f32 %v1940, %v2148
    %2150 = vmatmul.f32.gmra.mxu0 %v650
    %v2151 = vpop.f32.mrf.mxu0
    %v2152 = vadd.f32 %v1943, %v2151
    %2153 = vmatmul.f32.gmra.mxu0 %v651
    %v2154 = vpop.f32.mrf.mxu0
    %v2155 = vadd.f32 %v1946, %v2154
    %2156 = vmatmul.f32.gmra.mxu0 %v652
    %v2157 = vpop.f32.mrf.mxu0
    %v2158 = vadd.f32 %v1949, %v2157
    %2159 = vmatmul.f32.gmra.mxu0 %v653
    %v2160 = vpop.f32.mrf.mxu0
    %v2161 = vadd.f32 %v1952, %v2160
    %2162 = vmatmul.f32.gmra.mxu0 %v654
    %v2163 = vpop.f32.mrf.mxu0
    %v2164 = vadd.f32 %v1955, %v2163
    %2165 = vmatmul.f32.gmra.mxu0 %v655
    %v2166 = vpop.f32.mrf.mxu0
    %v2167 = vadd.f32 %v1958, %v2166
    %2168 = vmatmul.f32.gmra.mxu0 %v656
    %v2169 = vpop.f32.mrf.mxu0
    %v2170 = vadd.f32 %v1961, %v2169
    %2171 = vmatmul.f32.gmra.mxu0 %v657
    %v2172 = vpop.f32.mrf.mxu0
    %v2173 = vadd.f32 %v1964, %v2172
    %2174 = vmatmul.f32.gmra.mxu0 %v658
    %v2175 = vpop.f32.mrf.mxu0
    %v2176 = vadd.f32 %v1967, %v2175
    %2177 = vmatmul.f32.gmra.mxu0 %v659
    %v2178 = vpop.f32.mrf.mxu0
    %v2179 = vadd.f32 %v1970, %v2178
    %2180 = vmatmul.f32.gmra.mxu0 %v660
    %v2181 = vpop.f32.mrf.mxu0
    %v2182 = vadd.f32 %v1973, %v2181
    %2183 = vmatmul.f32.gmra.mxu0 %v661
    %v2184 = vpop.f32.mrf.mxu0
    %v2185 = vadd.f32 %v1976, %v2184
    %2186 = vmatmul.f32.gmra.mxu0 %v662
    %v2187 = vpop.f32.mrf.mxu0
    %v2188 = vadd.f32 %v1979, %v2187
    %2189 = vmatmul.f32.gmra.mxu0 %v663
    %v2190 = vpop.f32.mrf.mxu0
    %v2191 = vadd.f32 %v1982, %v2190
    %2192 = vmatmul.f32.gmra.mxu0 %v664
    %v2193 = vpop.f32.mrf.mxu0
    %v2194 = vadd.f32 %v1985, %v2193
    %2195 = vmatmul.f32.gmra.mxu0 %v665
    %v2196 = vpop.f32.mrf.mxu0
    %v2197 = vadd.f32 %v1988, %v2196
    %2198 = vmatmul.f32.gmra.mxu0 %v666
    %v2199 = vpop.f32.mrf.mxu0
    %v2200 = vadd.f32 %v1991, %v2199
    %2201 = vmatmul.f32.gmra.mxu0 %v667
    %v2202 = vpop.f32.mrf.mxu0
    %v2203 = vadd.f32 %v1994, %v2202
    %2204 = vmatmul.f32.gmra.mxu0 %v668
    %v2205 = vpop.f32.mrf.mxu0
    %v2206 = vadd.f32 %v1997, %v2205
    %2207 = vmatmul.f32.gmra.mxu0 %v669
    %v2208 = vpop.f32.mrf.mxu0
    %v2209 = vadd.f32 %v2000, %v2208
    %2210 = vmatmul.f32.gmra.mxu0 %v670
    %v2211 = vpop.f32.mrf.mxu0
    %v2212 = vadd.f32 %v2003, %v2211
    %2213 = vmatmul.f32.gmra.mxu0 %v671
    %v2214 = vpop.f32.mrf.mxu0
    %v2215 = vadd.f32 %v2006, %v2214
    %2216 = vmatmul.f32.gmra.mxu0 %v672
    %v2217 = vpop.f32.mrf.mxu0
    %v2218 = vadd.f32 %v2009, %v2217
    %2219 = vmatmul.f32.gmra.mxu0 %v673
    %v2220 = vpop.f32.mrf.mxu0
    %v2221 = vadd.f32 %v2012, %v2220
    %2222 = vmatmul.f32.gmra.mxu0 %v674
    %v2223 = vpop.f32.mrf.mxu0
    %v2224 = vadd.f32 %v2015, %v2223
    %2225 = vmatmul.f32.gmra.mxu0 %v675
    %v2226 = vpop.f32.mrf.mxu0
    %v2227 = vadd.f32 %v2018, %v2226
    %2228 = vmatmul.f32.gmra.mxu0 %v676
    %v2229 = vpop.f32.mrf.mxu0
    %v2230 = vadd.f32 %v2021, %v2229
    %2231 = vmatmul.f32.gmra.mxu0 %v677
    %v2232 = vpop.f32.mrf.mxu0
    %v2233 = vadd.f32 %v2024, %v2232
    %2234 = vmatmul.f32.gmra.mxu0 %v678
    %v2235 = vpop.f32.mrf.mxu0
    %v2236 = vadd.f32 %v2027, %v2235
    %2237 = vmatmul.f32.gmra.mxu0 %v679
    %v2238 = vpop.f32.mrf.mxu0
    %v2239 = vadd.f32 %v2030, %v2238
    %2240 = vmatmul.f32.gmra.mxu0 %v680
    %v2241 = vpop.f32.mrf.mxu0
    %v2242 = vadd.f32 %v2033, %v2241
    %2243 = vmatmul.f32.gmra.mxu0 %v681
    %v2244 = vpop.f32.mrf.mxu0
    %v2245 = vadd.f32 %v2036, %v2244
    %2246 = vmatmul.f32.gmra.mxu0 %v682
    %v2247 = vpop.f32.mrf.mxu0
    %v2248 = vadd.f32 %v2039, %v2247
    %2249 = vmatmul.f32.gmra.mxu0 %v683
    %v2250 = vpop.f32.mrf.mxu0
    %v2251 = vadd.f32 %v2042, %v2250
    %2252 = vmatmul.f32.gmra.mxu0 %v684
    %v2253 = vpop.f32.mrf.mxu0
    %v2254 = vadd.f32 %v2045, %v2253
    %2255 = vmatmul.f32.gmra.mxu0 %v685
    %v2256 = vpop.f32.mrf.mxu0
    %v2257 = vadd.f32 %v2048, %v2256
    %2258 = vmatmul.f32.gmra.mxu0 %v686
    %v2259 = vpop.f32.mrf.mxu0
    %v2260 = vadd.f32 %v2051, %v2259
    %2261 = vmatmul.f32.gmra.mxu0 %v687
    %v2262 = vpop.f32.mrf.mxu0
    %v2263 = vadd.f32 %v2054, %v2262
    %2264 = vmatmul.f32.gmra.mxu0 %v688
    %v2265 = vpop.f32.mrf.mxu0
    %v2266 = vadd.f32 %v2057, %v2265
    %2267 = vmatmul.f32.gmra.mxu0 %v689
    %v2268 = vpop.f32.mrf.mxu0
    %v2269 = vadd.f32 %v2060, %v2268
    %2270 = vmatmul.f32.gmra.mxu0 %v690
    %v2271 = vpop.f32.mrf.mxu0
    %v2272 = vadd.f32 %v2063, %v2271
    %2273 = vmatmul.f32.gmra.mxu0 %v691
    %v2274 = vpop.f32.mrf.mxu0
    %v2275 = vadd.f32 %v2066, %v2274
    %2276 = vmatmul.f32.gmra.mxu0 %v692
    %v2277 = vpop.f32.mrf.mxu0
    %v2278 = vadd.f32 %v2069, %v2277
    %2279 = vmatmul.f32.gmra.mxu0 %v693
    %v2280 = vpop.f32.mrf.mxu0
    %v2281 = vadd.f32 %v2072, %v2280
    %2282 = vmatmul.f32.gmra.mxu0 %v694
    %v2283 = vpop.f32.mrf.mxu0
    %v2284 = vadd.f32 %v2075, %v2283
    %2285 = vdwg.mxu0
    %2286 = vmatpush.msra.mxu0 %v999
    %2287 = vmatpush.msra.mxu0 %v998
    %2288 = vmatpush.msra.mxu0 %v997
    %2289 = vmatpush.msra.mxu0 %v996
    %2290 = vmatpush.msra.mxu0 %v995
    %2291 = vmatpush.msra.mxu0 %v994
    %2292 = vmatpush.msra.mxu0 %v993
    %2293 = vmatpush.msra.mxu0 %v992
    %2294 = vmatpush.msra.mxu0 %v991
    %2295 = vmatpush.msra.mxu0 %v990
    %2296 = vmatpush.msra.mxu0 %v989
    %2297 = vmatpush.msra.mxu0 %v988
    %2298 = vmatpush.msra.mxu0 %v987
    %2299 = vmatpush.msra.mxu0 %v986
    %2300 = vmatpush.msra.mxu0 %v985
    %2301 = vmatpush.msra.mxu0 %v984
    %2302 = vmatmul.f32.gmra.mxu0 %v696
    %v2303 = vpop.f32.mrf.mxu0
    %v2304 = vadd.f32 %v2095, %v2303
    %2305 = vmatmul.f32.gmra.mxu0 %v697
    %v2306 = vpop.f32.mrf.mxu0
    %v2307 = vadd.f32 %v2098, %v2306
    %2308 = vmatmul.f32.gmra.mxu0 %v698
    %v2309 = vpop.f32.mrf.mxu0
    %v2310 = vadd.f32 %v2101, %v2309
    %2311 = vmatmul.f32.gmra.mxu0 %v699
    %v2312 = vpop.f32.mrf.mxu0
    %v2313 = vadd.f32 %v2104, %v2312
    %2314 = vmatmul.f32.gmra.mxu0 %v700
    %v2315 = vpop.f32.mrf.mxu0
    %v2316 = vadd.f32 %v2107, %v2315
    %2317 = vmatmul.f32.gmra.mxu0 %v701
    %v2318 = vpop.f32.mrf.mxu0
    %v2319 = vadd.f32 %v2110, %v2318
    %2320 = vmatmul.f32.gmra.mxu0 %v702
    %v2321 = vpop.f32.mrf.mxu0
    %v2322 = vadd.f32 %v2113, %v2321
    %2323 = vmatmul.f32.gmra.mxu0 %v703
    %v2324 = vpop.f32.mrf.mxu0
    %v2325 = vadd.f32 %v2116, %v2324
    %2326 = vmatmul.f32.gmra.mxu0 %v704
    %v2327 = vpop.f32.mrf.mxu0
    %v2328 = vadd.f32 %v2119, %v2327
    %2329 = vmatmul.f32.gmra.mxu0 %v705
    %v2330 = vpop.f32.mrf.mxu0
    %v2331 = vadd.f32 %v2122, %v2330
    %2332 = vmatmul.f32.gmra.mxu0 %v706
    %v2333 = vpop.f32.mrf.mxu0
    %v2334 = vadd.f32 %v2125, %v2333
    %2335 = vmatmul.f32.gmra.mxu0 %v707
    %v2336 = vpop.f32.mrf.mxu0
    %v2337 = vadd.f32 %v2128, %v2336
    %2338 = vmatmul.f32.gmra.mxu0 %v708
    %v2339 = vpop.f32.mrf.mxu0
    %v2340 = vadd.f32 %v2131, %v2339
    %2341 = vmatmul.f32.gmra.mxu0 %v709
    %v2342 = vpop.f32.mrf.mxu0
    %v2343 = vadd.f32 %v2134, %v2342
    %2344 = vmatmul.f32.gmra.mxu0 %v710
    %v2345 = vpop.f32.mrf.mxu0
    %v2346 = vadd.f32 %v2137, %v2345
    %2347 = vmatmul.f32.gmra.mxu0 %v711
    %v2348 = vpop.f32.mrf.mxu0
    %v2349 = vadd.f32 %v2140, %v2348
    %2350 = vmatmul.f32.gmra.mxu0 %v712
    %v2351 = vpop.f32.mrf.mxu0
    %v2352 = vadd.f32 %v2143, %v2351
    %2353 = vmatmul.f32.gmra.mxu0 %v713
    %v2354 = vpop.f32.mrf.mxu0
    %v2355 = vadd.f32 %v2146, %v2354
    %2356 = vmatmul.f32.gmra.mxu0 %v714
    %v2357 = vpop.f32.mrf.mxu0
    %v2358 = vadd.f32 %v2149, %v2357
    %2359 = vmatmul.f32.gmra.mxu0 %v715
    %v2360 = vpop.f32.mrf.mxu0
    %v2361 = vadd.f32 %v2152, %v2360
    %2362 = vmatmul.f32.gmra.mxu0 %v716
    %v2363 = vpop.f32.mrf.mxu0
    %v2364 = vadd.f32 %v2155, %v2363
    %2365 = vmatmul.f32.gmra.mxu0 %v717
    %v2366 = vpop.f32.mrf.mxu0
    %v2367 = vadd.f32 %v2158, %v2366
    %2368 = vmatmul.f32.gmra.mxu0 %v718
    %v2369 = vpop.f32.mrf.mxu0
    %v2370 = vadd.f32 %v2161, %v2369
    %2371 = vmatmul.f32.gmra.mxu0 %v719
    %v2372 = vpop.f32.mrf.mxu0
    %v2373 = vadd.f32 %v2164, %v2372
    %2374 = vmatmul.f32.gmra.mxu0 %v720
    %v2375 = vpop.f32.mrf.mxu0
    %v2376 = vadd.f32 %v2167, %v2375
    %2377 = vmatmul.f32.gmra.mxu0 %v721
    %v2378 = vpop.f32.mrf.mxu0
    %v2379 = vadd.f32 %v2170, %v2378
    %2380 = vmatmul.f32.gmra.mxu0 %v722
    %v2381 = vpop.f32.mrf.mxu0
    %v2382 = vadd.f32 %v2173, %v2381
    %2383 = vmatmul.f32.gmra.mxu0 %v723
    %v2384 = vpop.f32.mrf.mxu0
    %v2385 = vadd.f32 %v2176, %v2384
    %2386 = vmatmul.f32.gmra.mxu0 %v724
    %v2387 = vpop.f32.mrf.mxu0
    %v2388 = vadd.f32 %v2179, %v2387
    %2389 = vmatmul.f32.gmra.mxu0 %v725
    %v2390 = vpop.f32.mrf.mxu0
    %v2391 = vadd.f32 %v2182, %v2390
    %2392 = vmatmul.f32.gmra.mxu0 %v726
    %v2393 = vpop.f32.mrf.mxu0
    %v2394 = vadd.f32 %v2185, %v2393
    %2395 = vmatmul.f32.gmra.mxu0 %v727
    %v2396 = vpop.f32.mrf.mxu0
    %v2397 = vadd.f32 %v2188, %v2396
    %2398 = vmatmul.f32.gmra.mxu0 %v728
    %v2399 = vpop.f32.mrf.mxu0
    %v2400 = vadd.f32 %v2191, %v2399
    %2401 = vmatmul.f32.gmra.mxu0 %v729
    %v2402 = vpop.f32.mrf.mxu0
    %v2403 = vadd.f32 %v2194, %v2402
    %2404 = vmatmul.f32.gmra.mxu0 %v730
    %v2405 = vpop.f32.mrf.mxu0
    %v2406 = vadd.f32 %v2197, %v2405
    %2407 = vmatmul.f32.gmra.mxu0 %v731
    %v2408 = vpop.f32.mrf.mxu0
    %v2409 = vadd.f32 %v2200, %v2408
    %2410 = vmatmul.f32.gmra.mxu0 %v732
    %v2411 = vpop.f32.mrf.mxu0
    %v2412 = vadd.f32 %v2203, %v2411
    %2413 = vmatmul.f32.gmra.mxu0 %v733
    %v2414 = vpop.f32.mrf.mxu0
    %v2415 = vadd.f32 %v2206, %v2414
    %2416 = vmatmul.f32.gmra.mxu0 %v734
    %v2417 = vpop.f32.mrf.mxu0
    %v2418 = vadd.f32 %v2209, %v2417
    %2419 = vmatmul.f32.gmra.mxu0 %v735
    %v2420 = vpop.f32.mrf.mxu0
    %v2421 = vadd.f32 %v2212, %v2420
    %2422 = vmatmul.f32.gmra.mxu0 %v736
    %v2423 = vpop.f32.mrf.mxu0
    %v2424 = vadd.f32 %v2215, %v2423
    %2425 = vmatmul.f32.gmra.mxu0 %v737
    %v2426 = vpop.f32.mrf.mxu0
    %v2427 = vadd.f32 %v2218, %v2426
    %2428 = vmatmul.f32.gmra.mxu0 %v738
    %v2429 = vpop.f32.mrf.mxu0
    %v2430 = vadd.f32 %v2221, %v2429
    %2431 = vmatmul.f32.gmra.mxu0 %v739
    %v2432 = vpop.f32.mrf.mxu0
    %v2433 = vadd.f32 %v2224, %v2432
    %2434 = vmatmul.f32.gmra.mxu0 %v740
    %v2435 = vpop.f32.mrf.mxu0
    %v2436 = vadd.f32 %v2227, %v2435
    %2437 = vmatmul.f32.gmra.mxu0 %v741
    %v2438 = vpop.f32.mrf.mxu0
    %v2439 = vadd.f32 %v2230, %v2438
    %2440 = vmatmul.f32.gmra.mxu0 %v742
    %v2441 = vpop.f32.mrf.mxu0
    %v2442 = vadd.f32 %v2233, %v2441
    %2443 = vmatmul.f32.gmra.mxu0 %v743
    %v2444 = vpop.f32.mrf.mxu0
    %v2445 = vadd.f32 %v2236, %v2444
    %2446 = vmatmul.f32.gmra.mxu0 %v744
    %v2447 = vpop.f32.mrf.mxu0
    %v2448 = vadd.f32 %v2239, %v2447
    %2449 = vmatmul.f32.gmra.mxu0 %v745
    %v2450 = vpop.f32.mrf.mxu0
    %v2451 = vadd.f32 %v2242, %v2450
    %2452 = vmatmul.f32.gmra.mxu0 %v746
    %v2453 = vpop.f32.mrf.mxu0
    %v2454 = vadd.f32 %v2245, %v2453
    %2455 = vmatmul.f32.gmra.mxu0 %v747
    %v2456 = vpop.f32.mrf.mxu0
    %v2457 = vadd.f32 %v2248, %v2456
    %2458 = vmatmul.f32.gmra.mxu0 %v748
    %v2459 = vpop.f32.mrf.mxu0
    %v2460 = vadd.f32 %v2251, %v2459
    %2461 = vmatmul.f32.gmra.mxu0 %v749
    %v2462 = vpop.f32.mrf.mxu0
    %v2463 = vadd.f32 %v2254, %v2462
    %2464 = vmatmul.f32.gmra.mxu0 %v750
    %v2465 = vpop.f32.mrf.mxu0
    %v2466 = vadd.f32 %v2257, %v2465
    %2467 = vmatmul.f32.gmra.mxu0 %v751
    %v2468 = vpop.f32.mrf.mxu0
    %v2469 = vadd.f32 %v2260, %v2468
    %2470 = vmatmul.f32.gmra.mxu0 %v752
    %v2471 = vpop.f32.mrf.mxu0
    %v2472 = vadd.f32 %v2263, %v2471
    %2473 = vmatmul.f32.gmra.mxu0 %v753
    %v2474 = vpop.f32.mrf.mxu0
    %v2475 = vadd.f32 %v2266, %v2474
    %2476 = vmatmul.f32.gmra.mxu0 %v754
    %v2477 = vpop.f32.mrf.mxu0
    %v2478 = vadd.f32 %v2269, %v2477
    %2479 = vmatmul.f32.gmra.mxu0 %v755
    %v2480 = vpop.f32.mrf.mxu0
    %v2481 = vadd.f32 %v2272, %v2480
    %2482 = vmatmul.f32.gmra.mxu0 %v756
    %v2483 = vpop.f32.mrf.mxu0
    %v2484 = vadd.f32 %v2275, %v2483
    %2485 = vmatmul.f32.gmra.mxu0 %v757
    %v2486 = vpop.f32.mrf.mxu0
    %v2487 = vadd.f32 %v2278, %v2486
    %2488 = vmatmul.f32.gmra.mxu0 %v758
    %v2489 = vpop.f32.mrf.mxu0
    %v2490 = vadd.f32 %v2281, %v2489
    %2491 = vmatmul.f32.gmra.mxu0 %v759
    %v2492 = vpop.f32.mrf.mxu0
    %v2493 = vadd.f32 %v2284, %v2492
    %2494 = vdwg.mxu0
    %2495 = vmatpush.msra.mxu0 %v1015
    %2496 = vmatpush.msra.mxu0 %v1014
    %2497 = vmatpush.msra.mxu0 %v1013
    %2498 = vmatpush.msra.mxu0 %v1012
    %2499 = vmatpush.msra.mxu0 %v1011
    %2500 = vmatpush.msra.mxu0 %v1010
    %2501 = vmatpush.msra.mxu0 %v1009
    %2502 = vmatpush.msra.mxu0 %v1008
    %2503 = vmatpush.msra.mxu0 %v1007
    %2504 = vmatpush.msra.mxu0 %v1006
    %2505 = vmatpush.msra.mxu0 %v1005
    %2506 = vmatpush.msra.mxu0 %v1004
    %2507 = vmatpush.msra.mxu0 %v1003
    %2508 = vmatpush.msra.mxu0 %v1002
    %2509 = vmatpush.msra.mxu0 %v1001
    %2510 = vmatpush.msra.mxu0 %v1000
    %2511 = vmatmul.f32.gmra.mxu0 %v760
    %v2512 = vpop.f32.mrf.mxu0
    %v2513 = vadd.f32 %v2304, %v2512
    %2514 = vmatmul.f32.gmra.mxu0 %v761
    %v2515 = vpop.f32.mrf.mxu0
    %v2516 = vadd.f32 %v2307, %v2515
    %2517 = vmatmul.f32.gmra.mxu0 %v762
    %v2518 = vpop.f32.mrf.mxu0
    %v2519 = vadd.f32 %v2310, %v2518
    %2520 = vmatmul.f32.gmra.mxu0 %v763
    %v2521 = vpop.f32.mrf.mxu0
    %v2522 = vadd.f32 %v2313, %v2521
    %2523 = vmatmul.f32.gmra.mxu0 %v764
    %v2524 = vpop.f32.mrf.mxu0
    %v2525 = vadd.f32 %v2316, %v2524
    %2526 = vmatmul.f32.gmra.mxu0 %v765
    %v2527 = vpop.f32.mrf.mxu0
    %v2528 = vadd.f32 %v2319, %v2527
    %2529 = vmatmul.f32.gmra.mxu0 %v766
    %v2530 = vpop.f32.mrf.mxu0
    %v2531 = vadd.f32 %v2322, %v2530
    %2532 = vmatmul.f32.gmra.mxu0 %v767
    %v2533 = vpop.f32.mrf.mxu0
    %v2534 = vadd.f32 %v2325, %v2533
    %2535 = vmatmul.f32.gmra.mxu0 %v768
    %v2536 = vpop.f32.mrf.mxu0
    %v2537 = vadd.f32 %v2328, %v2536
    %2538 = vmatmul.f32.gmra.mxu0 %v769
    %v2539 = vpop.f32.mrf.mxu0
    %v2540 = vadd.f32 %v2331, %v2539
    %2541 = vmatmul.f32.gmra.mxu0 %v770
    %v2542 = vpop.f32.mrf.mxu0
    %v2543 = vadd.f32 %v2334, %v2542
    %2544 = vmatmul.f32.gmra.mxu0 %v771
    %v2545 = vpop.f32.mrf.mxu0
    %v2546 = vadd.f32 %v2337, %v2545
    %2547 = vmatmul.f32.gmra.mxu0 %v772
    %v2548 = vpop.f32.mrf.mxu0
    %v2549 = vadd.f32 %v2340, %v2548
    %2550 = vmatmul.f32.gmra.mxu0 %v773
    %v2551 = vpop.f32.mrf.mxu0
    %v2552 = vadd.f32 %v2343, %v2551
    %2553 = vmatmul.f32.gmra.mxu0 %v774
    %v2554 = vpop.f32.mrf.mxu0
    %v2555 = vadd.f32 %v2346, %v2554
    %2556 = vmatmul.f32.gmra.mxu0 %v775
    %v2557 = vpop.f32.mrf.mxu0
    %v2558 = vadd.f32 %v2349, %v2557
    %2559 = vmatmul.f32.gmra.mxu0 %v776
    %v2560 = vpop.f32.mrf.mxu0
    %v2561 = vadd.f32 %v2352, %v2560
    %2562 = vmatmul.f32.gmra.mxu0 %v777
    %v2563 = vpop.f32.mrf.mxu0
    %v2564 = vadd.f32 %v2355, %v2563
    %2565 = vmatmul.f32.gmra.mxu0 %v778
    %v2566 = vpop.f32.mrf.mxu0
    %v2567 = vadd.f32 %v2358, %v2566
    %2568 = vmatmul.f32.gmra.mxu0 %v779
    %v2569 = vpop.f32.mrf.mxu0
    %v2570 = vadd.f32 %v2361, %v2569
    %2571 = vmatmul.f32.gmra.mxu0 %v780
    %v2572 = vpop.f32.mrf.mxu0
    %v2573 = vadd.f32 %v2364, %v2572
    %2574 = vmatmul.f32.gmra.mxu0 %v781
    %v2575 = vpop.f32.mrf.mxu0
    %v2576 = vadd.f32 %v2367, %v2575
    %2577 = vmatmul.f32.gmra.mxu0 %v782
    %v2578 = vpop.f32.mrf.mxu0
    %v2579 = vadd.f32 %v2370, %v2578
    %2580 = vmatmul.f32.gmra.mxu0 %v783
    %v2581 = vpop.f32.mrf.mxu0
    %v2582 = vadd.f32 %v2373, %v2581
    %2583 = vmatmul.f32.gmra.mxu0 %v784
    %v2584 = vpop.f32.mrf.mxu0
    %v2585 = vadd.f32 %v2376, %v2584
    %2586 = vmatmul.f32.gmra.mxu0 %v785
    %v2587 = vpop.f32.mrf.mxu0
    %v2588 = vadd.f32 %v2379, %v2587
    %2589 = vmatmul.f32.gmra.mxu0 %v786
    %v2590 = vpop.f32.mrf.mxu0
    %v2591 = vadd.f32 %v2382, %v2590
    %2592 = vmatmul.f32.gmra.mxu0 %v787
    %v2593 = vpop.f32.mrf.mxu0
    %v2594 = vadd.f32 %v2385, %v2593
    %2595 = vmatmul.f32.gmra.mxu0 %v788
    %v2596 = vpop.f32.mrf.mxu0
    %v2597 = vadd.f32 %v2388, %v2596
    %2598 = vmatmul.f32.gmra.mxu0 %v789
    %v2599 = vpop.f32.mrf.mxu0
    %v2600 = vadd.f32 %v2391, %v2599
    %2601 = vmatmul.f32.gmra.mxu0 %v790
    %v2602 = vpop.f32.mrf.mxu0
    %v2603 = vadd.f32 %v2394, %v2602
    %2604 = vmatmul.f32.gmra.mxu0 %v791
    %v2605 = vpop.f32.mrf.mxu0
    %v2606 = vadd.f32 %v2397, %v2605
    %2607 = vmatmul.f32.gmra.mxu0 %v792
    %v2608 = vpop.f32.mrf.mxu0
    %v2609 = vadd.f32 %v2400, %v2608
    %2610 = vmatmul.f32.gmra.mxu0 %v793
    %v2611 = vpop.f32.mrf.mxu0
    %v2612 = vadd.f32 %v2403, %v2611
    %2613 = vmatmul.f32.gmra.mxu0 %v794
    %v2614 = vpop.f32.mrf.mxu0
    %v2615 = vadd.f32 %v2406, %v2614
    %2616 = vmatmul.f32.gmra.mxu0 %v795
    %v2617 = vpop.f32.mrf.mxu0
    %v2618 = vadd.f32 %v2409, %v2617
    %2619 = vmatmul.f32.gmra.mxu0 %v796
    %v2620 = vpop.f32.mrf.mxu0
    %v2621 = vadd.f32 %v2412, %v2620
    %2622 = vmatmul.f32.gmra.mxu0 %v797
    %v2623 = vpop.f32.mrf.mxu0
    %v2624 = vadd.f32 %v2415, %v2623
    %2625 = vmatmul.f32.gmra.mxu0 %v798
    %v2626 = vpop.f32.mrf.mxu0
    %v2627 = vadd.f32 %v2418, %v2626
    %2628 = vmatmul.f32.gmra.mxu0 %v799
    %v2629 = vpop.f32.mrf.mxu0
    %v2630 = vadd.f32 %v2421, %v2629
    %2631 = vmatmul.f32.gmra.mxu0 %v800
    %v2632 = vpop.f32.mrf.mxu0
    %v2633 = vadd.f32 %v2424, %v2632
    %2634 = vmatmul.f32.gmra.mxu0 %v801
    %v2635 = vpop.f32.mrf.mxu0
    %v2636 = vadd.f32 %v2427, %v2635
    %2637 = vmatmul.f32.gmra.mxu0 %v802
    %v2638 = vpop.f32.mrf.mxu0
    %v2639 = vadd.f32 %v2430, %v2638
    %2640 = vmatmul.f32.gmra.mxu0 %v803
    %v2641 = vpop.f32.mrf.mxu0
    %v2642 = vadd.f32 %v2433, %v2641
    %2643 = vmatmul.f32.gmra.mxu0 %v804
    %v2644 = vpop.f32.mrf.mxu0
    %v2645 = vadd.f32 %v2436, %v2644
    %2646 = vmatmul.f32.gmra.mxu0 %v805
    %v2647 = vpop.f32.mrf.mxu0
    %v2648 = vadd.f32 %v2439, %v2647
    %2649 = vmatmul.f32.gmra.mxu0 %v806
    %v2650 = vpop.f32.mrf.mxu0
    %v2651 = vadd.f32 %v2442, %v2650
    %2652 = vmatmul.f32.gmra.mxu0 %v807
    %v2653 = vpop.f32.mrf.mxu0
    %v2654 = vadd.f32 %v2445, %v2653
    %2655 = vmatmul.f32.gmra.mxu0 %v808
    %v2656 = vpop.f32.mrf.mxu0
    %v2657 = vadd.f32 %v2448, %v2656
    %2658 = vmatmul.f32.gmra.mxu0 %v809
    %v2659 = vpop.f32.mrf.mxu0
    %v2660 = vadd.f32 %v2451, %v2659
    %2661 = vmatmul.f32.gmra.mxu0 %v810
    %v2662 = vpop.f32.mrf.mxu0
    %v2663 = vadd.f32 %v2454, %v2662
    %2664 = vmatmul.f32.gmra.mxu0 %v811
    %v2665 = vpop.f32.mrf.mxu0
    %v2666 = vadd.f32 %v2457, %v2665
    %2667 = vmatmul.f32.gmra.mxu0 %v812
    %v2668 = vpop.f32.mrf.mxu0
    %v2669 = vadd.f32 %v2460, %v2668
    %2670 = vmatmul.f32.gmra.mxu0 %v813
    %v2671 = vpop.f32.mrf.mxu0
    %v2672 = vadd.f32 %v2463, %v2671
    %2673 = vmatmul.f32.gmra.mxu0 %v814
    %v2674 = vpop.f32.mrf.mxu0
    %v2675 = vadd.f32 %v2466, %v2674
    %2676 = vmatmul.f32.gmra.mxu0 %v815
    %v2677 = vpop.f32.mrf.mxu0
    %v2678 = vadd.f32 %v2469, %v2677
    %2679 = vmatmul.f32.gmra.mxu0 %v816
    %v2680 = vpop.f32.mrf.mxu0
    %v2681 = vadd.f32 %v2472, %v2680
    %2682 = vmatmul.f32.gmra.mxu0 %v817
    %v2683 = vpop.f32.mrf.mxu0
    %v2684 = vadd.f32 %v2475, %v2683
    %2685 = vmatmul.f32.gmra.mxu0 %v818
    %v2686 = vpop.f32.mrf.mxu0
    %v2687 = vadd.f32 %v2478, %v2686
    %2688 = vmatmul.f32.gmra.mxu0 %v819
    %v2689 = vpop.f32.mrf.mxu0
    %v2690 = vadd.f32 %v2481, %v2689
    %2691 = vmatmul.f32.gmra.mxu0 %v820
    %v2692 = vpop.f32.mrf.mxu0
    %v2693 = vadd.f32 %v2484, %v2692
    %2694 = vmatmul.f32.gmra.mxu0 %v821
    %v2695 = vpop.f32.mrf.mxu0
    %v2696 = vadd.f32 %v2487, %v2695
    %2697 = vmatmul.f32.gmra.mxu0 %v822
    %v2698 = vpop.f32.mrf.mxu0
    %v2699 = vadd.f32 %v2490, %v2698
    %2700 = vmatmul.f32.gmra.mxu0 %v823
    %v2701 = vpop.f32.mrf.mxu0
    %v2702 = vadd.f32 %v2493, %v2701
    %2703 = vdwg.mxu0
    %2704 = vmatpush.msra.mxu0 %v1031
    %2705 = vmatpush.msra.mxu0 %v1030
    %2706 = vmatpush.msra.mxu0 %v1029
    %2707 = vmatpush.msra.mxu0 %v1028
    %2708 = vmatpush.msra.mxu0 %v1027
    %2709 = vmatpush.msra.mxu0 %v1026
    %2710 = vmatpush.msra.mxu0 %v1025
    %2711 = vmatpush.msra.mxu0 %v1024
    %2712 = vmatpush.msra.mxu0 %v1023
    %2713 = vmatpush.msra.mxu0 %v1022
    %2714 = vmatpush.msra.mxu0 %v1021
    %2715 = vmatpush.msra.mxu0 %v1020
    %2716 = vmatpush.msra.mxu0 %v1019
    %2717 = vmatpush.msra.mxu0 %v1018
    %2718 = vmatpush.msra.mxu0 %v1017
    %2719 = vmatpush.msra.mxu0 %v1016
    %2720 = vmatmul.f32.gmra.mxu0 %v824
    %v2721 = vpop.f32.mrf.mxu0
    %v2722 = vadd.f32 %v2513, %v2721
    %2723 = vmatmul.f32.gmra.mxu0 %v825
    %v2724 = vpop.f32.mrf.mxu0
    %v2725 = vadd.f32 %v2516, %v2724
    %2726 = vmatmul.f32.gmra.mxu0 %v826
    %v2727 = vpop.f32.mrf.mxu0
    %v2728 = vadd.f32 %v2519, %v2727
    %2729 = vmatmul.f32.gmra.mxu0 %v827
    %v2730 = vpop.f32.mrf.mxu0
    %v2731 = vadd.f32 %v2522, %v2730
    %2732 = vmatmul.f32.gmra.mxu0 %v828
    %v2733 = vpop.f32.mrf.mxu0
    %v2734 = vadd.f32 %v2525, %v2733
    %2735 = vmatmul.f32.gmra.mxu0 %v829
    %v2736 = vpop.f32.mrf.mxu0
    %v2737 = vadd.f32 %v2528, %v2736
    %2738 = vmatmul.f32.gmra.mxu0 %v830
    %v2739 = vpop.f32.mrf.mxu0
    %v2740 = vadd.f32 %v2531, %v2739
    %2741 = vmatmul.f32.gmra.mxu0 %v831
    %v2742 = vpop.f32.mrf.mxu0
    %v2743 = vadd.f32 %v2534, %v2742
    %2744 = vmatmul.f32.gmra.mxu0 %v832
    %v2745 = vpop.f32.mrf.mxu0
    %v2746 = vadd.f32 %v2537, %v2745
    %2747 = vmatmul.f32.gmra.mxu0 %v833
    %v2748 = vpop.f32.mrf.mxu0
    %v2749 = vadd.f32 %v2540, %v2748
    %2750 = vmatmul.f32.gmra.mxu0 %v834
    %v2751 = vpop.f32.mrf.mxu0
    %v2752 = vadd.f32 %v2543, %v2751
    %2753 = vmatmul.f32.gmra.mxu0 %v835
    %v2754 = vpop.f32.mrf.mxu0
    %v2755 = vadd.f32 %v2546, %v2754
    %2756 = vmatmul.f32.gmra.mxu0 %v836
    %v2757 = vpop.f32.mrf.mxu0
    %v2758 = vadd.f32 %v2549, %v2757
    %2759 = vmatmul.f32.gmra.mxu0 %v837
    %v2760 = vpop.f32.mrf.mxu0
    %v2761 = vadd.f32 %v2552, %v2760
    %2762 = vmatmul.f32.gmra.mxu0 %v838
    %v2763 = vpop.f32.mrf.mxu0
    %v2764 = vadd.f32 %v2555, %v2763
    %2765 = vmatmul.f32.gmra.mxu0 %v839
    %v2766 = vpop.f32.mrf.mxu0
    %v2767 = vadd.f32 %v2558, %v2766
    %2768 = vmatmul.f32.gmra.mxu0 %v840
    %v2769 = vpop.f32.mrf.mxu0
    %v2770 = vadd.f32 %v2561, %v2769
    %2771 = vmatmul.f32.gmra.mxu0 %v841
    %v2772 = vpop.f32.mrf.mxu0
    %v2773 = vadd.f32 %v2564, %v2772
    %2774 = vmatmul.f32.gmra.mxu0 %v842
    %v2775 = vpop.f32.mrf.mxu0
    %v2776 = vadd.f32 %v2567, %v2775
    %2777 = vmatmul.f32.gmra.mxu0 %v843
    %v2778 = vpop.f32.mrf.mxu0
    %v2779 = vadd.f32 %v2570, %v2778
    %2780 = vmatmul.f32.gmra.mxu0 %v844
    %v2781 = vpop.f32.mrf.mxu0
    %v2782 = vadd.f32 %v2573, %v2781
    %2783 = vmatmul.f32.gmra.mxu0 %v845
    %v2784 = vpop.f32.mrf.mxu0
    %v2785 = vadd.f32 %v2576, %v2784
    %2786 = vmatmul.f32.gmra.mxu0 %v846
    %v2787 = vpop.f32.mrf.mxu0
    %v2788 = vadd.f32 %v2579, %v2787
    %2789 = vmatmul.f32.gmra.mxu0 %v847
    %v2790 = vpop.f32.mrf.mxu0
    %v2791 = vadd.f32 %v2582, %v2790
    %2792 = vmatmul.f32.gmra.mxu0 %v848
    %v2793 = vpop.f32.mrf.mxu0
    %v2794 = vadd.f32 %v2585, %v2793
    %2795 = vmatmul.f32.gmra.mxu0 %v849
    %v2796 = vpop.f32.mrf.mxu0
    %v2797 = vadd.f32 %v2588, %v2796
    %2798 = vmatmul.f32.gmra.mxu0 %v850
    %v2799 = vpop.f32.mrf.mxu0
    %v2800 = vadd.f32 %v2591, %v2799
    %2801 = vmatmul.f32.gmra.mxu0 %v851
    %v2802 = vpop.f32.mrf.mxu0
    %v2803 = vadd.f32 %v2594, %v2802
    %2804 = vmatmul.f32.gmra.mxu0 %v852
    %v2805 = vpop.f32.mrf.mxu0
    %v2806 = vadd.f32 %v2597, %v2805
    %2807 = vmatmul.f32.gmra.mxu0 %v853
    %v2808 = vpop.f32.mrf.mxu0
    %v2809 = vadd.f32 %v2600, %v2808
    %2810 = vmatmul.f32.gmra.mxu0 %v854
    %v2811 = vpop.f32.mrf.mxu0
    %v2812 = vadd.f32 %v2603, %v2811
    %2813 = vmatmul.f32.gmra.mxu0 %v855
    %v2814 = vpop.f32.mrf.mxu0
    %v2815 = vadd.f32 %v2606, %v2814
    %2816 = vmatmul.f32.gmra.mxu0 %v856
    %v2817 = vpop.f32.mrf.mxu0
    %v2818 = vadd.f32 %v2609, %v2817
    %2819 = vmatmul.f32.gmra.mxu0 %v857
    %v2820 = vpop.f32.mrf.mxu0
    %v2821 = vadd.f32 %v2612, %v2820
    %2822 = vmatmul.f32.gmra.mxu0 %v858
    %v2823 = vpop.f32.mrf.mxu0
    %v2824 = vadd.f32 %v2615, %v2823
    %2825 = vmatmul.f32.gmra.mxu0 %v859
    %v2826 = vpop.f32.mrf.mxu0
    %v2827 = vadd.f32 %v2618, %v2826
    %2828 = vmatmul.f32.gmra.mxu0 %v860
    %v2829 = vpop.f32.mrf.mxu0
    %v2830 = vadd.f32 %v2621, %v2829
    %2831 = vmatmul.f32.gmra.mxu0 %v861
    %v2832 = vpop.f32.mrf.mxu0
    %v2833 = vadd.f32 %v2624, %v2832
    %2834 = vmatmul.f32.gmra.mxu0 %v862
    %v2835 = vpop.f32.mrf.mxu0
    %v2836 = vadd.f32 %v2627, %v2835
    %2837 = vmatmul.f32.gmra.mxu0 %v863
    %v2838 = vpop.f32.mrf.mxu0
    %v2839 = vadd.f32 %v2630, %v2838
    %2840 = vmatmul.f32.gmra.mxu0 %v864
    %v2841 = vpop.f32.mrf.mxu0
    %v2842 = vadd.f32 %v2633, %v2841
    %2843 = vmatmul.f32.gmra.mxu0 %v865
    %v2844 = vpop.f32.mrf.mxu0
    %v2845 = vadd.f32 %v2636, %v2844
    %2846 = vmatmul.f32.gmra.mxu0 %v866
    %v2847 = vpop.f32.mrf.mxu0
    %v2848 = vadd.f32 %v2639, %v2847
    %2849 = vmatmul.f32.gmra.mxu0 %v867
    %v2850 = vpop.f32.mrf.mxu0
    %v2851 = vadd.f32 %v2642, %v2850
    %2852 = vmatmul.f32.gmra.mxu0 %v868
    %v2853 = vpop.f32.mrf.mxu0
    %v2854 = vadd.f32 %v2645, %v2853
    %2855 = vmatmul.f32.gmra.mxu0 %v869
    %v2856 = vpop.f32.mrf.mxu0
    %v2857 = vadd.f32 %v2648, %v2856
    %2858 = vmatmul.f32.gmra.mxu0 %v870
    %v2859 = vpop.f32.mrf.mxu0
    %v2860 = vadd.f32 %v2651, %v2859
    %2861 = vmatmul.f32.gmra.mxu0 %v871
    %v2862 = vpop.f32.mrf.mxu0
    %v2863 = vadd.f32 %v2654, %v2862
    %2864 = vmatmul.f32.gmra.mxu0 %v872
    %v2865 = vpop.f32.mrf.mxu0
    %v2866 = vadd.f32 %v2657, %v2865
    %2867 = vmatmul.f32.gmra.mxu0 %v873
    %v2868 = vpop.f32.mrf.mxu0
    %v2869 = vadd.f32 %v2660, %v2868
    %2870 = vmatmul.f32.gmra.mxu0 %v874
    %v2871 = vpop.f32.mrf.mxu0
    %v2872 = vadd.f32 %v2663, %v2871
    %2873 = vmatmul.f32.gmra.mxu0 %v875
    %v2874 = vpop.f32.mrf.mxu0
    %v2875 = vadd.f32 %v2666, %v2874
    %2876 = vmatmul.f32.gmra.mxu0 %v876
    %v2877 = vpop.f32.mrf.mxu0
    %v2878 = vadd.f32 %v2669, %v2877
    %2879 = vmatmul.f32.gmra.mxu0 %v877
    %v2880 = vpop.f32.mrf.mxu0
    %v2881 = vadd.f32 %v2672, %v2880
    %2882 = vmatmul.f32.gmra.mxu0 %v878
    %v2883 = vpop.f32.mrf.mxu0
    %v2884 = vadd.f32 %v2675, %v2883
    %2885 = vmatmul.f32.gmra.mxu0 %v879
    %v2886 = vpop.f32.mrf.mxu0
    %v2887 = vadd.f32 %v2678, %v2886
    %2888 = vmatmul.f32.gmra.mxu0 %v880
    %v2889 = vpop.f32.mrf.mxu0
    %v2890 = vadd.f32 %v2681, %v2889
    %2891 = vmatmul.f32.gmra.mxu0 %v881
    %v2892 = vpop.f32.mrf.mxu0
    %v2893 = vadd.f32 %v2684, %v2892
    %2894 = vmatmul.f32.gmra.mxu0 %v882
    %v2895 = vpop.f32.mrf.mxu0
    %v2896 = vadd.f32 %v2687, %v2895
    %2897 = vmatmul.f32.gmra.mxu0 %v883
    %v2898 = vpop.f32.mrf.mxu0
    %v2899 = vadd.f32 %v2690, %v2898
    %2900 = vmatmul.f32.gmra.mxu0 %v884
    %v2901 = vpop.f32.mrf.mxu0
    %v2902 = vadd.f32 %v2693, %v2901
    %2903 = vmatmul.f32.gmra.mxu0 %v885
    %v2904 = vpop.f32.mrf.mxu0
    %v2905 = vadd.f32 %v2696, %v2904
    %2906 = vmatmul.f32.gmra.mxu0 %v886
    %v2907 = vpop.f32.mrf.mxu0
    %v2908 = vadd.f32 %v2699, %v2907
    %2909 = vmatmul.f32.gmra.mxu0 %v887
    %v2910 = vpop.f32.mrf.mxu0
    %v2911 = vadd.f32 %v2702, %v2910
    %2912 = vdwg.mxu0
    %v2913 = vadd.f32 %v2722, %v2725
    %v2914 = vadd.f32 %v2913, %v2728
    %v2915 = vadd.f32 %v2914, %v2731
    %v2916 = vadd.f32 %v2915, %v2734
    %v2917 = vadd.f32 %v2916, %v2737
    %v2918 = vadd.f32 %v2917, %v2740
    %v2919 = vadd.f32 %v2918, %v2743
    %v2920 = vadd.f32 %v2919, %v2746
    %v2921 = vadd.f32 %v2920, %v2749
    %v2922 = vadd.f32 %v2921, %v2752
    %v2923 = vadd.f32 %v2922, %v2755
    %v2924 = vadd.f32 %v2923, %v2758
    %v2925 = vadd.f32 %v2924, %v2761
    %v2926 = vadd.f32 %v2925, %v2764
    %v2927 = vadd.f32 %v2926, %v2767
    %v2928 = vadd.f32 %v2927, %v2770
    %v2929 = vadd.f32 %v2928, %v2773
    %v2930 = vadd.f32 %v2929, %v2776
    %v2931 = vadd.f32 %v2930, %v2779
    %v2932 = vadd.f32 %v2931, %v2782
    %v2933 = vadd.f32 %v2932, %v2785
    %v2934 = vadd.f32 %v2933, %v2788
    %v2935 = vadd.f32 %v2934, %v2791
    %v2936 = vadd.f32 %v2935, %v2794
    %v2937 = vadd.f32 %v2936, %v2797
    %v2938 = vadd.f32 %v2937, %v2800
    %v2939 = vadd.f32 %v2938, %v2803
    %v2940 = vadd.f32 %v2939, %v2806
    %v2941 = vadd.f32 %v2940, %v2809
    %v2942 = vadd.f32 %v2941, %v2812
    %v2943 = vadd.f32 %v2942, %v2815
    %v2944 = vadd.f32 %v2943, %v2818
    %v2945 = vadd.f32 %v2944, %v2821
    %v2946 = vadd.f32 %v2945, %v2824
    %v2947 = vadd.f32 %v2946, %v2827
    %v2948 = vadd.f32 %v2947, %v2830
    %v2949 = vadd.f32 %v2948, %v2833
    %v2950 = vadd.f32 %v2949, %v2836
    %v2951 = vadd.f32 %v2950, %v2839
    %v2952 = vadd.f32 %v2951, %v2842
    %v2953 = vadd.f32 %v2952, %v2845
    %v2954 = vadd.f32 %v2953, %v2848
    %v2955 = vadd.f32 %v2954, %v2851
    %v2956 = vadd.f32 %v2955, %v2854
    %v2957 = vadd.f32 %v2956, %v2857
    %v2958 = vadd.f32 %v2957, %v2860
    %v2959 = vadd.f32 %v2958, %v2863
    %v2960 = vadd.f32 %v2959, %v2866
    %v2961 = vadd.f32 %v2960, %v2869
    %v2962 = vadd.f32 %v2961, %v2872
    %v2963 = vadd.f32 %v2962, %v2875
    %v2964 = vadd.f32 %v2963, %v2878
    %v2965 = vadd.f32 %v2964, %v2881
    %v2966 = vadd.f32 %v2965, %v2884
    %v2967 = vadd.f32 %v2966, %v2887
    %v2968 = vadd.f32 %v2967, %v2890
    %v2969 = vadd.f32 %v2968, %v2893
    %v2970 = vadd.f32 %v2969, %v2896
    %v2971 = vadd.f32 %v2970, %v2899
    %v2972 = vadd.f32 %v2971, %v2902
    %v2973 = vadd.f32 %v2972, %v2905
    %v2974 = vadd.f32 %v2973, %v2908
    %v2975 = vadd.f32 %v2974, %v2911
    %v2976 = vrot.slane %v2975, 4
    %v2977 = vadd.f32 %v2975, %v2976
    %v2978 = vrot.slane %v2977, 2
    %v2979 = vadd.f32 %v2977, %v2978
    %v2980 = vrot.slane %v2979, 1
    %v2981 = vadd.f32 %v2979, %v2980
    %v2982 = vrcp.pop 512.0
    %v2983 = vmul.f32 512.0, %v2982
    %v2984 = vsub.f32 1.0, %v2983
    %v2985 = vmul.f32 %v2982, %v2984
    %v2986 = vadd.f32 %v2982, %v2985
    %vm2987 = vweird.f32 %v2982
    %v2988 = vsel %vm2987, %v2982, %v2986
    %v2989 = vmul.f32 %v2981, %v2988
    %v2990 = vsub.f32 %v2722, %v2989
    %v2991 = vsub.f32 %v2725, %v2989
    %v2992 = vsub.f32 %v2728, %v2989
    %v2993 = vsub.f32 %v2731, %v2989
    %v2994 = vsub.f32 %v2734, %v2989
    %v2995 = vsub.f32 %v2737, %v2989
    %v2996 = vsub.f32 %v2740, %v2989
    %v2997 = vsub.f32 %v2743, %v2989
    %v2998 = vsub.f32 %v2746, %v2989
    %v2999 = vsub.f32 %v2749, %v2989
    %v3000 = vsub.f32 %v2752, %v2989
    %v3001 = vsub.f32 %v2755, %v2989
    %v3002 = vsub.f32 %v2758, %v2989
    %v3003 = vsub.f32 %v2761, %v2989
    %v3004 = vsub.f32 %v2764, %v2989
    %v3005 = vsub.f32 %v2767, %v2989
    %v3006 = vsub.f32 %v2770, %v2989
    %v3007 = vsub.f32 %v2773, %v2989
    %v3008 = vsub.f32 %v2776, %v2989
    %v3009 = vsub.f32 %v2779, %v2989
    %v3010 = vsub.f32 %v2782, %v2989
    %v3011 = vsub.f32 %v2785, %v2989
    %v3012 = vsub.f32 %v2788, %v2989
    %v3013 = vsub.f32 %v2791, %v2989
    %v3014 = vsub.f32 %v2794, %v2989
    %v3015 = vsub.f32 %v2797, %v2989
    %v3016 = vsub.f32 %v2800, %v2989
    %v3017 = vsub.f32 %v2803, %v2989
    %v3018 = vsub.f32 %v2806, %v2989
    %v3019 = vsub.f32 %v2809, %v2989
    %v3020 = vsub.f32 %v2812, %v2989
    %v3021 = vsub.f32 %v2815, %v2989
    %v3022 = vsub.f32 %v2818, %v2989
    %v3023 = vsub.f32 %v2821, %v2989
    %v3024 = vsub.f32 %v2824, %v2989
    %v3025 = vsub.f32 %v2827, %v2989
    %v3026 = vsub.f32 %v2830, %v2989
    %v3027 = vsub.f32 %v2833, %v2989
    %v3028 = vsub.f32 %v2836, %v2989
    %v3029 = vsub.f32 %v2839, %v2989
    %v3030 = vsub.f32 %v2842, %v2989
    %v3031 = vsub.f32 %v2845, %v2989
    %v3032 = vsub.f32 %v2848, %v2989
    %v3033 = vsub.f32 %v2851, %v2989
    %v3034 = vsub.f32 %v2854, %v2989
    %v3035 = vsub.f32 %v2857, %v2989
    %v3036 = vsub.f32 %v2860, %v2989
    %v3037 = vsub.f32 %v2863, %v2989
    %v3038 = vsub.f32 %v2866, %v2989
    %v3039 = vsub.f32 %v2869, %v2989
    %v3040 = vsub.f32 %v2872, %v2989
    %v3041 = vsub.f32 %v2875, %v2989
    %v3042 = vsub.f32 %v2878, %v2989
    %v3043 = vsub.f32 %v2881, %v2989
    %v3044 = vsub.f32 %v2884, %v2989
    %v3045 = vsub.f32 %v2887, %v2989
    %v3046 = vsub.f32 %v2890, %v2989
    %v3047 = vsub.f32 %v2893, %v2989
    %v3048 = vsub.f32 %v2896, %v2989
    %v3049 = vsub.f32 %v2899, %v2989
    %v3050 = vsub.f32 %v2902, %v2989
    %v3051 = vsub.f32 %v2905, %v2989
    %v3052 = vsub.f32 %v2908, %v2989
    %v3053 = vsub.f32 %v2911, %v2989
    %v3054 = vmul.f32 %v2990, %v2990
    %v3055 = vmul.f32 %v2991, %v2991
    %v3056 = vmul.f32 %v2992, %v2992
    %v3057 = vmul.f32 %v2993, %v2993
    %v3058 = vmul.f32 %v2994, %v2994
    %v3059 = vmul.f32 %v2995, %v2995
    %v3060 = vmul.f32 %v2996, %v2996
    %v3061 = vmul.f32 %v2997, %v2997
    %v3062 = vmul.f32 %v2998, %v2998
    %v3063 = vmul.f32 %v2999, %v2999
    %v3064 = vmul.f32 %v3000, %v3000
    %v3065 = vmul.f32 %v3001, %v3001
    %v3066 = vmul.f32 %v3002, %v3002
    %v3067 = vmul.f32 %v3003, %v3003
    %v3068 = vmul.f32 %v3004, %v3004
    %v3069 = vmul.f32 %v3005, %v3005
    %v3070 = vmul.f32 %v3006, %v3006
    %v3071 = vmul.f32 %v3007, %v3007
    %v3072 = vmul.f32 %v3008, %v3008
    %v3073 = vmul.f32 %v3009, %v3009
    %v3074 = vmul.f32 %v3010, %v3010
    %v3075 = vmul.f32 %v3011, %v3011
    %v3076 = vmul.f32 %v3012, %v3012
    %v3077 = vmul.f32 %v3013, %v3013
    %v3078 = vmul.f32 %v3014, %v3014
    %v3079 = vmul.f32 %v3015, %v3015
    %v3080 = vmul.f32 %v3016, %v3016
    %v3081 = vmul.f32 %v3017, %v3017
    %v3082 = vmul.f32 %v3018, %v3018
    %v3083 = vmul.f32 %v3019, %v3019
    %v3084 = vmul.f32 %v3020, %v3020
    %v3085 = vmul.f32 %v3021, %v3021
    %v3086 = vmul.f32 %v3022, %v3022
    %v3087 = vmul.f32 %v3023, %v3023
    %v3088 = vmul.f32 %v3024, %v3024
    %v3089 = vmul.f32 %v3025, %v3025
    %v3090 = vmul.f32 %v3026, %v3026
    %v3091 = vmul.f32 %v3027, %v3027
    %v3092 = vmul.f32 %v3028, %v3028
    %v3093 = vmul.f32 %v3029, %v3029
    %v3094 = vmul.f32 %v3030, %v3030
    %v3095 = vmul.f32 %v3031, %v3031
    %v3096 = vmul.f32 %v3032, %v3032
    %v3097 = vmul.f32 %v3033, %v3033
    %v3098 = vmul.f32 %v3034, %v3034
    %v3099 = vmul.f32 %v3035, %v3035
    %v3100 = vmul.f32 %v3036, %v3036
    %v3101 = vmul.f32 %v3037, %v3037
    %v3102 = vmul.f32 %v3038, %v3038
    %v3103 = vmul.f32 %v3039, %v3039
    %v3104 = vmul.f32 %v3040, %v3040
    %v3105 = vmul.f32 %v3041, %v3041
    %v3106 = vmul.f32 %v3042, %v3042
    %v3107 = vmul.f32 %v3043, %v3043
    %v3108 = vmul.f32 %v3044, %v3044
    %v3109 = vmul.f32 %v3045, %v3045
    %v3110 = vmul.f32 %v3046, %v3046
    %v3111 = vmul.f32 %v3047, %v3047
    %v3112 = vmul.f32 %v3048, %v3048
    %v3113 = vmul.f32 %v3049, %v3049
    %v3114 = vmul.f32 %v3050, %v3050
    %v3115 = vmul.f32 %v3051, %v3051
    %v3116 = vmul.f32 %v3052, %v3052
    %v3117 = vmul.f32 %v3053, %v3053
    %v3118 = vadd.f32 %v3054, %v3055
    %v3119 = vadd.f32 %v3118, %v3056
    %v3120 = vadd.f32 %v3119, %v3057
    %v3121 = vadd.f32 %v3120, %v3058
    %v3122 = vadd.f32 %v3121, %v3059
    %v3123 = vadd.f32 %v3122, %v3060
    %v3124 = vadd.f32 %v3123, %v3061
    %v3125 = vadd.f32 %v3124, %v3062
    %v3126 = vadd.f32 %v3125, %v3063
    %v3127 = vadd.f32 %v3126, %v3064
    %v3128 = vadd.f32 %v3127, %v3065
    %v3129 = vadd.f32 %v3128, %v3066
    %v3130 = vadd.f32 %v3129, %v3067
    %v3131 = vadd.f32 %v3130, %v3068
    %v3132 = vadd.f32 %v3131, %v3069
    %v3133 = vadd.f32 %v3132, %v3070
    %v3134 = vadd.f32 %v3133, %v3071
    %v3135 = vadd.f32 %v3134, %v3072
    %v3136 = vadd.f32 %v3135, %v3073
    %v3137 = vadd.f32 %v3136, %v3074
    %v3138 = vadd.f32 %v3137, %v3075
    %v3139 = vadd.f32 %v3138, %v3076
    %v3140 = vadd.f32 %v3139, %v3077
    %v3141 = vadd.f32 %v3140, %v3078
    %v3142 = vadd.f32 %v3141, %v3079
    %v3143 = vadd.f32 %v3142, %v3080
    %v3144 = vadd.f32 %v3143, %v3081
    %v3145 = vadd.f32 %v3144, %v3082
    %v3146 = vadd.f32 %v3145, %v3083
    %v3147 = vadd.f32 %v3146, %v3084
    %v3148 = vadd.f32 %v3147, %v3085
    %v3149 = vadd.f32 %v3148, %v3086
    %v3150 = vadd.f32 %v3149, %v3087
    %v3151 = vadd.f32 %v3150, %v3088
    %v3152 = vadd.f32 %v3151, %v3089
    %v3153 = vadd.f32 %v3152, %v3090
    %v3154 = vadd.f32 %v3153, %v3091
    %v3155 = vadd.f32 %v3154, %v3092
    %v3156 = vadd.f32 %v3155, %v3093
    %v3157 = vadd.f32 %v3156, %v3094
    %v3158 = vadd.f32 %v3157, %v3095
    %v3159 = vadd.f32 %v3158, %v3096
    %v3160 = vadd.f32 %v3159, %v3097
    %v3161 = vadd.f32 %v3160, %v3098
    %v3162 = vadd.f32 %v3161, %v3099
    %v3163 = vadd.f32 %v3162, %v3100
    %v3164 = vadd.f32 %v3163, %v3101
    %v3165 = vadd.f32 %v3164, %v3102
    %v3166 = vadd.f32 %v3165, %v3103
    %v3167 = vadd.f32 %v3166, %v3104
    %v3168 = vadd.f32 %v3167, %v3105
    %v3169 = vadd.f32 %v3168, %v3106
    %v3170 = vadd.f32 %v3169, %v3107
    %v3171 = vadd.f32 %v3170, %v3108
    %v3172 = vadd.f32 %v3171, %v3109
    %v3173 = vadd.f32 %v3172, %v3110
    %v3174 = vadd.f32 %v3173, %v3111
    %v3175 = vadd.f32 %v3174, %v3112
    %v3176 = vadd.f32 %v3175, %v3113
    %v3177 = vadd.f32 %v3176, %v3114
    %v3178 = vadd.f32 %v3177, %v3115
    %v3179 = vadd.f32 %v3178, %v3116
    %v3180 = vadd.f32 %v3179, %v3117
    %v3181 = vrot.slane %v3180, 4
    %v3182 = vadd.f32 %v3180, %v3181
    %v3183 = vrot.slane %v3182, 2
    %v3184 = vadd.f32 %v3182, %v3183
    %v3185 = vrot.slane %v3184, 1
    %v3186 = vadd.f32 %v3184, %v3185
    %v3187 = vmul.f32 %v3186, %v2988
    %v3188 = vadd.f32 %v3187, 1e-05
    %v3189 = vrsqrt.pop %v3188
    %v3190 = vmul.f32 %v3189, %v3188
    %v3191 = vmul.f32 %v3190, %v3189
    %v3192 = vmul.f32 0.5, %v3191
    %v3193 = vsub.f32 1.5, %v3192
    %v3194 = vmul.f32 %v3189, %v3193
    %vm3195 = vweird.f32 %v3188
    %vm3196 = vweird.f32 %v3189
    %vm3197 = vmor %vm3195, %vm3196
    %v3198 = vsel %vm3197, %v3189, %v3194
    %v3199 = vmul.f32 %v2990, %v3198
    %v3200 = vmul.f32 %v2991, %v3198
    %v3201 = vmul.f32 %v2992, %v3198
    %v3202 = vmul.f32 %v2993, %v3198
    %v3203 = vmul.f32 %v2994, %v3198
    %v3204 = vmul.f32 %v2995, %v3198
    %v3205 = vmul.f32 %v2996, %v3198
    %v3206 = vmul.f32 %v2997, %v3198
    %v3207 = vmul.f32 %v2998, %v3198
    %v3208 = vmul.f32 %v2999, %v3198
    %v3209 = vmul.f32 %v3000, %v3198
    %v3210 = vmul.f32 %v3001, %v3198
    %v3211 = vmul.f32 %v3002, %v3198
    %v3212 = vmul.f32 %v3003, %v3198
    %v3213 = vmul.f32 %v3004, %v3198
    %v3214 = vmul.f32 %v3005, %v3198
    %v3215 = vmul.f32 %v3006, %v3198
    %v3216 = vmul.f32 %v3007, %v3198
    %v3217 = vmul.f32 %v3008, %v3198
    %v3218 = vmul.f32 %v3009, %v3198
    %v3219 = vmul.f32 %v3010, %v3198
    %v3220 = vmul.f32 %v3011, %v3198
    %v3221 = vmul.f32 %v3012, %v3198
    %v3222 = vmul.f32 %v3013, %v3198
    %v3223 = vmul.f32 %v3014, %v3198
    %v3224 = vmul.f32 %v3015, %v3198
    %v3225 = vmul.f32 %v3016, %v3198
    %v3226 = vmul.f32 %v3017, %v3198
    %v3227 = vmul.f32 %v3018, %v3198
    %v3228 = vmul.f32 %v3019, %v3198
    %v3229 = vmul.f32 %v3020, %v3198
    %v3230 = vmul.f32 %v3021, %v3198
    %v3231 = vmul.f32 %v3022, %v3198
    %v3232 = vmul.f32 %v3023, %v3198
    %v3233 = vmul.f32 %v3024, %v3198
    %v3234 = vmul.f32 %v3025, %v3198
    %v3235 = vmul.f32 %v3026, %v3198
    %v3236 = vmul.f32 %v3027, %v3198
    %v3237 = vmul.f32 %v3028, %v3198
    %v3238 = vmul.f32 %v3029, %v3198
    %v3239 = vmul.f32 %v3030, %v3198
    %v3240 = vmul.f32 %v3031, %v3198
    %v3241 = vmul.f32 %v3032, %v3198
    %v3242 = vmul.f32 %v3033, %v3198
    %v3243 = vmul.f32 %v3034, %v3198
    %v3244 = vmul.f32 %v3035, %v3198
    %v3245 = vmul.f32 %v3036, %v3198
    %v3246 = vmul.f32 %v3037, %v3198
    %v3247 = vmul.f32 %v3038, %v3198
    %v3248 = vmul.f32 %v3039, %v3198
    %v3249 = vmul.f32 %v3040, %v3198
    %v3250 = vmul.f32 %v3041, %v3198
    %v3251 = vmul.f32 %v3042, %v3198
    %v3252 = vmul.f32 %v3043, %v3198
    %v3253 = vmul.f32 %v3044, %v3198
    %v3254 = vmul.f32 %v3045, %v3198
    %v3255 = vmul.f32 %v3046, %v3198
    %v3256 = vmul.f32 %v3047, %v3198
    %v3257 = vmul.f32 %v3048, %v3198
    %v3258 = vmul.f32 %v3049, %v3198
    %v3259 = vmul.f32 %v3050, %v3198
    %v3260 = vmul.f32 %v3051, %v3198
    %v3261 = vmul.f32 %v3052, %v3198
    %v3262 = vmul.f32 %v3053, %v3198
    %v3263 = vld [vmem:[%s3] sm:$0x1]
    %v3265 = vperm.slane %v3263, 0
    %v3267 = vmul.f32 %v3199, %v3265
    %v3268 = vmul.f32 %v3200, %v3265
    %v3269 = vmul.f32 %v3201, %v3265
    %v3270 = vmul.f32 %v3202, %v3265
    %v3271 = vmul.f32 %v3203, %v3265
    %v3272 = vmul.f32 %v3204, %v3265
    %v3273 = vmul.f32 %v3205, %v3265
    %v3274 = vmul.f32 %v3206, %v3265
    %v3275 = vmul.f32 %v3207, %v3265
    %v3276 = vmul.f32 %v3208, %v3265
    %v3277 = vmul.f32 %v3209, %v3265
    %v3278 = vmul.f32 %v3210, %v3265
    %v3279 = vmul.f32 %v3211, %v3265
    %v3280 = vmul.f32 %v3212, %v3265
    %v3281 = vmul.f32 %v3213, %v3265
    %v3282 = vmul.f32 %v3214, %v3265
    %v3283 = vmul.f32 %v3215, %v3265
    %v3284 = vmul.f32 %v3216, %v3265
    %v3285 = vmul.f32 %v3217, %v3265
    %v3286 = vmul.f32 %v3218, %v3265
    %v3287 = vmul.f32 %v3219, %v3265
    %v3288 = vmul.f32 %v3220, %v3265
    %v3289 = vmul.f32 %v3221, %v3265
    %v3290 = vmul.f32 %v3222, %v3265
    %v3291 = vmul.f32 %v3223, %v3265
    %v3292 = vmul.f32 %v3224, %v3265
    %v3293 = vmul.f32 %v3225, %v3265
    %v3294 = vmul.f32 %v3226, %v3265
    %v3295 = vmul.f32 %v3227, %v3265
    %v3296 = vmul.f32 %v3228, %v3265
    %v3297 = vmul.f32 %v3229, %v3265
    %v3298 = vmul.f32 %v3230, %v3265
    %v3299 = vmul.f32 %v3231, %v3265
    %v3300 = vmul.f32 %v3232, %v3265
    %v3301 = vmul.f32 %v3233, %v3265
    %v3302 = vmul.f32 %v3234, %v3265
    %v3303 = vmul.f32 %v3235, %v3265
    %v3304 = vmul.f32 %v3236, %v3265
    %v3305 = vmul.f32 %v3237, %v3265
    %v3306 = vmul.f32 %v3238, %v3265
    %v3307 = vmul.f32 %v3239, %v3265
    %v3308 = vmul.f32 %v3240, %v3265
    %v3309 = vmul.f32 %v3241, %v3265
    %v3310 = vmul.f32 %v3242, %v3265
    %v3311 = vmul.f32 %v3243, %v3265
    %v3312 = vmul.f32 %v3244, %v3265
    %v3313 = vmul.f32 %v3245, %v3265
    %v3314 = vmul.f32 %v3246, %v3265
    %v3315 = vmul.f32 %v3247, %v3265
    %v3316 = vmul.f32 %v3248, %v3265
    %v3317 = vmul.f32 %v3249, %v3265
    %v3318 = vmul.f32 %v3250, %v3265
    %v3319 = vmul.f32 %v3251, %v3265
    %v3320 = vmul.f32 %v3252, %v3265
    %v3321 = vmul.f32 %v3253, %v3265
    %v3322 = vmul.f32 %v3254, %v3265
    %v3323 = vmul.f32 %v3255, %v3265
    %v3324 = vmul.f32 %v3256, %v3265
    %v3325 = vmul.f32 %v3257, %v3265
    %v3326 = vmul.f32 %v3258, %v3265
    %v3327 = vmul.f32 %v3259, %v3265
    %v3328 = vmul.f32 %v3260, %v3265
    %v3329 = vmul.f32 %v3261, %v3265
    %v3330 = vmul.f32 %v3262, %v3265
    %v3331 = vld [vmem:[%s4] sm:$0x1]
    %v3333 = vperm.slane %v3331, 0
    %v3335 = vadd.f32 %v3267, %v3333
    %v3336 = vadd.f32 %v3268, %v3333
    %v3337 = vadd.f32 %v3269, %v3333
    %v3338 = vadd.f32 %v3270, %v3333
    %v3339 = vadd.f32 %v3271, %v3333
    %v3340 = vadd.f32 %v3272, %v3333
    %v3341 = vadd.f32 %v3273, %v3333
    %v3342 = vadd.f32 %v3274, %v3333
    %v3343 = vadd.f32 %v3275, %v3333
    %v3344 = vadd.f32 %v3276, %v3333
    %v3345 = vadd.f32 %v3277, %v3333
    %v3346 = vadd.f32 %v3278, %v3333
    %v3347 = vadd.f32 %v3279, %v3333
    %v3348 = vadd.f32 %v3280, %v3333
    %v3349 = vadd.f32 %v3281, %v3333
    %v3350 = vadd.f32 %v3282, %v3333
    %v3351 = vadd.f32 %v3283, %v3333
    %v3352 = vadd.f32 %v3284, %v3333
    %v3353 = vadd.f32 %v3285, %v3333
    %v3354 = vadd.f32 %v3286, %v3333
    %v3355 = vadd.f32 %v3287, %v3333
    %v3356 = vadd.f32 %v3288, %v3333
    %v3357 = vadd.f32 %v3289, %v3333
    %v3358 = vadd.f32 %v3290, %v3333
    %v3359 = vadd.f32 %v3291, %v3333
    %v3360 = vadd.f32 %v3292, %v3333
    %v3361 = vadd.f32 %v3293, %v3333
    %v3362 = vadd.f32 %v3294, %v3333
    %v3363 = vadd.f32 %v3295, %v3333
    %v3364 = vadd.f32 %v3296, %v3333
    %v3365 = vadd.f32 %v3297, %v3333
    %v3366 = vadd.f32 %v3298, %v3333
    %v3367 = vadd.f32 %v3299, %v3333
    %v3368 = vadd.f32 %v3300, %v3333
    %v3369 = vadd.f32 %v3301, %v3333
    %v3370 = vadd.f32 %v3302, %v3333
    %v3371 = vadd.f32 %v3303, %v3333
    %v3372 = vadd.f32 %v3304, %v3333
    %v3373 = vadd.f32 %v3305, %v3333
    %v3374 = vadd.f32 %v3306, %v3333
    %v3375 = vadd.f32 %v3307, %v3333
    %v3376 = vadd.f32 %v3308, %v3333
    %v3377 = vadd.f32 %v3309, %v3333
    %v3378 = vadd.f32 %v3310, %v3333
    %v3379 = vadd.f32 %v3311, %v3333
    %v3380 = vadd.f32 %v3312, %v3333
    %v3381 = vadd.f32 %v3313, %v3333
    %v3382 = vadd.f32 %v3314, %v3333
    %v3383 = vadd.f32 %v3315, %v3333
    %v3384 = vadd.f32 %v3316, %v3333
    %v3385 = vadd.f32 %v3317, %v3333
    %v3386 = vadd.f32 %v3318, %v3333
    %v3387 = vadd.f32 %v3319, %v3333
    %v3388 = vadd.f32 %v3320, %v3333
    %v3389 = vadd.f32 %v3321, %v3333
    %v3390 = vadd.f32 %v3322, %v3333
    %v3391 = vadd.f32 %v3323, %v3333
    %v3392 = vadd.f32 %v3324, %v3333
    %v3393 = vadd.f32 %v3325, %v3333
    %v3394 = vadd.f32 %v3326, %v3333
    %v3395 = vadd.f32 %v3327, %v3333
    %v3396 = vadd.f32 %v3328, %v3333
    %v3397 = vadd.f32 %v3329, %v3333
    %v3398 = vadd.f32 %v3330, %v3333
    %v3399 = vmax.f32 %v3335, 0.0
    %v3400 = vmax.f32 %v3336, 0.0
    %v3401 = vmax.f32 %v3337, 0.0
    %v3402 = vmax.f32 %v3338, 0.0
    %v3403 = vmax.f32 %v3339, 0.0
    %v3404 = vmax.f32 %v3340, 0.0
    %v3405 = vmax.f32 %v3341, 0.0
    %v3406 = vmax.f32 %v3342, 0.0
    %v3407 = vmax.f32 %v3343, 0.0
    %v3408 = vmax.f32 %v3344, 0.0
    %v3409 = vmax.f32 %v3345, 0.0
    %v3410 = vmax.f32 %v3346, 0.0
    %v3411 = vmax.f32 %v3347, 0.0
    %v3412 = vmax.f32 %v3348, 0.0
    %v3413 = vmax.f32 %v3349, 0.0
    %v3414 = vmax.f32 %v3350, 0.0
    %v3415 = vmax.f32 %v3351, 0.0
    %v3416 = vmax.f32 %v3352, 0.0
    %v3417 = vmax.f32 %v3353, 0.0
    %v3418 = vmax.f32 %v3354, 0.0
    %v3419 = vmax.f32 %v3355, 0.0
    %v3420 = vmax.f32 %v3356, 0.0
    %v3421 = vmax.f32 %v3357, 0.0
    %v3422 = vmax.f32 %v3358, 0.0
    %v3423 = vmax.f32 %v3359, 0.0
    %v3424 = vmax.f32 %v3360, 0.0
    %v3425 = vmax.f32 %v3361, 0.0
    %v3426 = vmax.f32 %v3362, 0.0
    %v3427 = vmax.f32 %v3363, 0.0
    %v3428 = vmax.f32 %v3364, 0.0
    %v3429 = vmax.f32 %v3365, 0.0
    %v3430 = vmax.f32 %v3366, 0.0
    %v3431 = vmax.f32 %v3367, 0.0
    %v3432 = vmax.f32 %v3368, 0.0
    %v3433 = vmax.f32 %v3369, 0.0
    %v3434 = vmax.f32 %v3370, 0.0
    %v3435 = vmax.f32 %v3371, 0.0
    %v3436 = vmax.f32 %v3372, 0.0
    %v3437 = vmax.f32 %v3373, 0.0
    %v3438 = vmax.f32 %v3374, 0.0
    %v3439 = vmax.f32 %v3375, 0.0
    %v3440 = vmax.f32 %v3376, 0.0
    %v3441 = vmax.f32 %v3377, 0.0
    %v3442 = vmax.f32 %v3378, 0.0
    %v3443 = vmax.f32 %v3379, 0.0
    %v3444 = vmax.f32 %v3380, 0.0
    %v3445 = vmax.f32 %v3381, 0.0
    %v3446 = vmax.f32 %v3382, 0.0
    %v3447 = vmax.f32 %v3383, 0.0
    %v3448 = vmax.f32 %v3384, 0.0
    %v3449 = vmax.f32 %v3385, 0.0
    %v3450 = vmax.f32 %v3386, 0.0
    %v3451 = vmax.f32 %v3387, 0.0
    %v3452 = vmax.f32 %v3388, 0.0
    %v3453 = vmax.f32 %v3389, 0.0
    %v3454 = vmax.f32 %v3390, 0.0
    %v3455 = vmax.f32 %v3391, 0.0
    %v3456 = vmax.f32 %v3392, 0.0
    %v3457 = vmax.f32 %v3393, 0.0
    %v3458 = vmax.f32 %v3394, 0.0
    %v3459 = vmax.f32 %v3395, 0.0
    %v3460 = vmax.f32 %v3396, 0.0
    %v3461 = vmax.f32 %v3397, 0.0
    %v3462 = vmax.f32 %v3398, 0.0
    %3463 = vst [vmem:[%s246 + $0x1] sm:$0xff] %v3399
    %3464 = vst [vmem:[%s246 + $0x9] sm:$0xff] %v3400
    %3465 = vst [vmem:[%s246 + $0x19] sm:$0xff] %v3401
    %3466 = vst [vmem:[%s246 + $0x21] sm:$0xff] %v3402
    %3467 = vst [vmem:[%s246 + $0x31] sm:$0xff] %v3403
    %3468 = vst [vmem:[%s246 + $0x39] sm:$0xff] %v3404
    %3469 = vst [vmem:[%s246 + $0x49] sm:$0xff] %v3405
    %3470 = vst [vmem:[%s246 + $0x51] sm:$0xff] %v3406
    %3471 = vst [vmem:[%s246 + $0x61] sm:$0xff] %v3407
    %3472 = vst [vmem:[%s246 + $0x69] sm:$0xff] %v3408
    %3473 = vst [vmem:[%s246 + $0x79] sm:$0xff] %v3409
    %3474 = vst [vmem:[%s246 + $0x81] sm:$0xff] %v3410
    %3475 = vst [vmem:[%s246 + $0x91] sm:$0xff] %v3411
    %3476 = vst [vmem:[%s246 + $0x99] sm:$0xff] %v3412
    %3477 = vst [vmem:[%s246 + $0xa9] sm:$0xff] %v3413
    %3478 = vst [vmem:[%s246 + $0xb1] sm:$0xff] %v3414
    %3479 = vst [vmem:[%s246 + $0xc1] sm:$0xff] %v3415
    %3480 = vst [vmem:[%s246 + $0xc9] sm:$0xff] %v3416
    %3481 = vst [vmem:[%s246 + $0xd9] sm:$0xff] %v3417
    %3482 = vst [vmem:[%s246 + $0xe1] sm:$0xff] %v3418
    %3483 = vst [vmem:[%s246 + $0xf1] sm:$0xff] %v3419
    %3484 = vst [vmem:[%s246 + $0xf9] sm:$0xff] %v3420
    %3485 = vst [vmem:[%s246 + $0x109] sm:$0xff] %v3421
    %3486 = vst [vmem:[%s246 + $0x111] sm:$0xff] %v3422
    %3487 = vst [vmem:[%s246 + $0x121] sm:$0xff] %v3423
    %3488 = vst [vmem:[%s246 + $0x129] sm:$0xff] %v3424
    %3489 = vst [vmem:[%s246 + $0x139] sm:$0xff] %v3425
    %3490 = vst [vmem:[%s246 + $0x141] sm:$0xff] %v3426
    %3491 = vst [vmem:[%s246 + $0x151] sm:$0xff] %v3427
    %3492 = vst [vmem:[%s246 + $0x159] sm:$0xff] %v3428
    %3493 = vst [vmem:[%s246 + $0x169] sm:$0xff] %v3429
    %3494 = vst [vmem:[%s246 + $0x171] sm:$0xff] %v3430
    %3495 = vst [vmem:[%s246 + $0x1b1] sm:$0xff] %v3431
    %3496 = vst [vmem:[%s246 + $0x1b9] sm:$0xff] %v3432
    %3497 = vst [vmem:[%s246 + $0x1c9] sm:$0xff] %v3433
    %3498 = vst [vmem:[%s246 + $0x1d1] sm:$0xff] %v3434
    %3499 = vst [vmem:[%s246 + $0x1e1] sm:$0xff] %v3435
    %3500 = vst [vmem:[%s246 + $0x1e9] sm:$0xff] %v3436
    %3501 = vst [vmem:[%s246 + $0x1f9] sm:$0xff] %v3437
    %3502 = vst [vmem:[%s246 + $0x201] sm:$0xff] %v3438
    %3503 = vst [vmem:[%s246 + $0x211] sm:$0xff] %v3439
    %3504 = vst [vmem:[%s246 + $0x219] sm:$0xff] %v3440
    %3505 = vst [vmem:[%s246 + $0x229] sm:$0xff] %v3441
    %3506 = vst [vmem:[%s246 + $0x231] sm:$0xff] %v3442
    %3507 = vst [vmem:[%s246 + $0x241] sm:$0xff] %v3443
    %3508 = vst [vmem:[%s246 + $0x249] sm:$0xff] %v3444
    %3509 = vst [vmem:[%s246 + $0x259] sm:$0xff] %v3445
    %3510 = vst [vmem:[%s246 + $0x261] sm:$0xff] %v3446
    %3511 = vst [vmem:[%s246 + $0x271] sm:$0xff] %v3447
    %3512 = vst [vmem:[%s246 + $0x279] sm:$0xff] %v3448
    %3513 = vst [vmem:[%s246 + $0x289] sm:$0xff] %v3449
    %3514 = vst [vmem:[%s246 + $0x291] sm:$0xff] %v3450
    %3515 = vst [vmem:[%s246 + $0x2a1] sm:$0xff] %v3451
    %3516 = vst [vmem:[%s246 + $0x2a9] sm:$0xff] %v3452
    %3517 = vst [vmem:[%s246 + $0x2b9] sm:$0xff] %v3453
    %3518 = vst [vmem:[%s246 + $0x2c1] sm:$0xff] %v3454
    %3519 = vst [vmem:[%s246 + $0x2d1] sm:$0xff] %v3455
    %3520 = vst [vmem:[%s246 + $0x2d9] sm:$0xff] %v3456
    %3521 = vst [vmem:[%s246 + $0x2e9] sm:$0xff] %v3457
    %3522 = vst [vmem:[%s246 + $0x2f1] sm:$0xff] %v3458
    %3523 = vst [vmem:[%s246 + $0x301] sm:$0xff] %v3459
    %3524 = vst [vmem:[%s246 + $0x309] sm:$0xff] %v3460
    %3525 = vst [vmem:[%s246 + $0x319] sm:$0xff] %v3461
    %3526 = vst [vmem:[%s246 + $0x321] sm:$0xff] %v3462
    %v3527 = vld [vmem:[#allocation2] sm:$0xff]
    %v3528 = vld [vmem:[#allocation2 + $0x8] sm:$0xff]
    %v3529 = vld [vmem:[#allocation2 + $0x18] sm:$0xff]
    %v3530 = vld [vmem:[#allocation2 + $0x20] sm:$0xff]
    %v3531 = vld [vmem:[#allocation2 + $0x30] sm:$0xff]
    %v3532 = vld [vmem:[#allocation2 + $0x38] sm:$0xff]
    %v3533 = vld [vmem:[#allocation2 + $0x48] sm:$0xff]
    %v3534 = vld [vmem:[#allocation2 + $0x50] sm:$0xff]
    %v3535 = vld [vmem:[#allocation2 + $0x60] sm:$0xff]
    %v3536 = vld [vmem:[#allocation2 + $0x68] sm:$0xff]
    %v3537 = vld [vmem:[#allocation2 + $0x78] sm:$0xff]
    %v3538 = vld [vmem:[#allocation2 + $0x80] sm:$0xff]
    %v3539 = vld [vmem:[#allocation2 + $0x90] sm:$0xff]
    %v3540 = vld [vmem:[#allocation2 + $0x98] sm:$0xff]
    %v3541 = vld [vmem:[#allocation2 + $0xa8] sm:$0xff]
    %v3542 = vld [vmem:[#allocation2 + $0xb0] sm:$0xff]
    %v3543 = vld [vmem:[#allocation2 + $0xc0] sm:$0xff]
    %v3544 = vld [vmem:[#allocation2 + $0xc8] sm:$0xff]
    %v3545 = vld [vmem:[#allocation2 + $0xd8] sm:$0xff]
    %v3546 = vld [vmem:[#allocation2 + $0xe0] sm:$0xff]
    %v3547 = vld [vmem:[#allocation2 + $0xf0] sm:$0xff]
    %v3548 = vld [vmem:[#allocation2 + $0xf8] sm:$0xff]
    %v3549 = vld [vmem:[#allocation2 + $0x108] sm:$0xff]
    %v3550 = vld [vmem:[#allocation2 + $0x110] sm:$0xff]
    %v3551 = vld [vmem:[#allocation2 + $0x120] sm:$0xff]
    %v3552 = vld [vmem:[#allocation2 + $0x128] sm:$0xff]
    %v3553 = vld [vmem:[#allocation2 + $0x138] sm:$0xff]
    %v3554 = vld [vmem:[#allocation2 + $0x140] sm:$0xff]
    %v3555 = vld [vmem:[#allocation2 + $0x150] sm:$0xff]
    %v3556 = vld [vmem:[#allocation2 + $0x158] sm:$0xff]
    %v3557 = vld [vmem:[#allocation2 + $0x168] sm:$0xff]
    %v3558 = vld [vmem:[#allocation2 + $0x170] sm:$0xff]
    %v3559 = vld [vmem:[#allocation2 + $0x1b0] sm:$0xff]
    %v3560 = vld [vmem:[#allocation2 + $0x1b8] sm:$0xff]
    %v3561 = vld [vmem:[#allocation2 + $0x1c8] sm:$0xff]
    %v3562 = vld [vmem:[#allocation2 + $0x1d0] sm:$0xff]
    %v3563 = vld [vmem:[#allocation2 + $0x1e0] sm:$0xff]
    %v3564 = vld [vmem:[#allocation2 + $0x1e8] sm:$0xff]
    %v3565 = vld [vmem:[#allocation2 + $0x1f8] sm:$0xff]
    %v3566 = vld [vmem:[#allocation2 + $0x200] sm:$0xff]
    %v3567 = vld [vmem:[#allocation2 + $0x210] sm:$0xff]
    %v3568 = vld [vmem:[#allocation2 + $0x218] sm:$0xff]
    %v3569 = vld [vmem:[#allocation2 + $0x228] sm:$0xff]
    %v3570 = vld [vmem:[#allocation2 + $0x230] sm:$0xff]
    %v3571 = vld [vmem:[#allocation2 + $0x240] sm:$0xff]
    %v3572 = vld [vmem:[#allocation2 + $0x248] sm:$0xff]
    %v3573 = vld [vmem:[#allocation2 + $0x258] sm:$0xff]
    %v3574 = vld [vmem:[#allocation2 + $0x260] sm:$0xff]
    %v3575 = vld [vmem:[#allocation2 + $0x270] sm:$0xff]
    %v3576 = vld [vmem:[#allocation2 + $0x278] sm:$0xff]
    %v3577 = vld [vmem:[#allocation2 + $0x288] sm:$0xff]
    %v3578 = vld [vmem:[#allocation2 + $0x290] sm:$0xff]
    %v3579 = vld [vmem:[#allocation2 + $0x2a0] sm:$0xff]
    %v3580 = vld [vmem:[#allocation2 + $0x2a8] sm:$0xff]
    %v3581 = vld [vmem:[#allocation2 + $0x2b8] sm:$0xff]
    %v3582 = vld [vmem:[#allocation2 + $0x2c0] sm:$0xff]
    %v3583 = vld [vmem:[#allocation2 + $0x2d0] sm:$0xff]
    %v3584 = vld [vmem:[#allocation2 + $0x2d8] sm:$0xff]
    %v3585 = vld [vmem:[#allocation2 + $0x2e8] sm:$0xff]
    %v3586 = vld [vmem:[#allocation2 + $0x2f0] sm:$0xff]
    %v3587 = vld [vmem:[#allocation2 + $0x300] sm:$0xff]
    %v3588 = vld [vmem:[#allocation2 + $0x308] sm:$0xff]
    %v3589 = vld [vmem:[#allocation2 + $0x318] sm:$0xff]
    %v3590 = vld [vmem:[#allocation2 + $0x320] sm:$0xff]
    %v3591 = vld [vmem:[#allocation2 + $0x1] sm:$0xff]
    %v3592 = vld [vmem:[#allocation2 + $0x9] sm:$0xff]
    %v3593 = vld [vmem:[#allocation2 + $0x19] sm:$0xff]
    %v3594 = vld [vmem:[#allocation2 + $0x21] sm:$0xff]
    %v3595 = vld [vmem:[#allocation2 + $0x31] sm:$0xff]
    %v3596 = vld [vmem:[#allocation2 + $0x39] sm:$0xff]
    %v3597 = vld [vmem:[#allocation2 + $0x49] sm:$0xff]
    %v3598 = vld [vmem:[#allocation2 + $0x51] sm:$0xff]
    %v3599 = vld [vmem:[#allocation2 + $0x61] sm:$0xff]
    %v3600 = vld [vmem:[#allocation2 + $0x69] sm:$0xff]
    %v3601 = vld [vmem:[#allocation2 + $0x79] sm:$0xff]
    %v3602 = vld [vmem:[#allocation2 + $0x81] sm:$0xff]
    %v3603 = vld [vmem:[#allocation2 + $0x91] sm:$0xff]
    %v3604 = vld [vmem:[#allocation2 + $0x99] sm:$0xff]
    %v3605 = vld [vmem:[#allocation2 + $0xa9] sm:$0xff]
    %v3606 = vld [vmem:[#allocation2 + $0xb1] sm:$0xff]
    %v3607 = vld [vmem:[#allocation2 + $0xc1] sm:$0xff]
    %v3608 = vld [vmem:[#allocation2 + $0xc9] sm:$0xff]
    %v3609 = vld [vmem:[#allocation2 + $0xd9] sm:$0xff]
    %v3610 = vld [vmem:[#allocation2 + $0xe1] sm:$0xff]
    %v3611 = vld [vmem:[#allocation2 + $0xf1] sm:$0xff]
    %v3612 = vld [vmem:[#allocation2 + $0xf9] sm:$0xff]
    %v3613 = vld [vmem:[#allocation2 + $0x109] sm:$0xff]
    %v3614 = vld [vmem:[#allocation2 + $0x111] sm:$0xff]
    %v3615 = vld [vmem:[#allocation2 + $0x121] sm:$0xff]
    %v3616 = vld [vmem:[#allocation2 + $0x129] sm:$0xff]
    %v3617 = vld [vmem:[#allocation2 + $0x139] sm:$0xff]
    %v3618 = vld [vmem:[#allocation2 + $0x141] sm:$0xff]
    %v3619 = vld [vmem:[#allocation2 + $0x151] sm:$0xff]
    %v3620 = vld [vmem:[#allocation2 + $0x159] sm:$0xff]
    %v3621 = vld [vmem:[#allocation2 + $0x169] sm:$0xff]
    %v3622 = vld [vmem:[#allocation2 + $0x171] sm:$0xff]
    %v3623 = vld [vmem:[#allocation2 + $0x1b1] sm:$0xff]
    %v3624 = vld [vmem:[#allocation2 + $0x1b9] sm:$0xff]
    %v3625 = vld [vmem:[#allocation2 + $0x1c9] sm:$0xff]
    %v3626 = vld [vmem:[#allocation2 + $0x1d1] sm:$0xff]
    %v3627 = vld [vmem:[#allocation2 + $0x1e1] sm:$0xff]
    %v3628 = vld [vmem:[#allocation2 + $0x1e9] sm:$0xff]
    %v3629 = vld [vmem:[#allocation2 + $0x1f9] sm:$0xff]
    %v3630 = vld [vmem:[#allocation2 + $0x201] sm:$0xff]
    %v3631 = vld [vmem:[#allocation2 + $0x211] sm:$0xff]
    %v3632 = vld [vmem:[#allocation2 + $0x219] sm:$0xff]
    %v3633 = vld [vmem:[#allocation2 + $0x229] sm:$0xff]
    %v3634 = vld [vmem:[#allocation2 + $0x231] sm:$0xff]
    %v3635 = vld [vmem:[#allocation2 + $0x241] sm:$0xff]
    %v3636 = vld [vmem:[#allocation2 + $0x249] sm:$0xff]
    %v3637 = vld [vmem:[#allocation2 + $0x259] sm:$0xff]
    %v3638 = vld [vmem:[#allocation2 + $0x261] sm:$0xff]
    %v3639 = vld [vmem:[#allocation2 + $0x271] sm:$0xff]
    %v3640 = vld [vmem:[#allocation2 + $0x279] sm:$0xff]
    %v3641 = vld [vmem:[#allocation2 + $0x289] sm:$0xff]
    %v3642 = vld [vmem:[#allocation2 + $0x291] sm:$0xff]
    %v3643 = vld [vmem:[#allocation2 + $0x2a1] sm:$0xff]
    %v3644 = vld [vmem:[#allocation2 + $0x2a9] sm:$0xff]
    %v3645 = vld [vmem:[#allocation2 + $0x2b9] sm:$0xff]
    %v3646 = vld [vmem:[#allocation2 + $0x2c1] sm:$0xff]
    %v3647 = vld [vmem:[#allocation2 + $0x2d1] sm:$0xff]
    %v3648 = vld [vmem:[#allocation2 + $0x2d9] sm:$0xff]
    %v3649 = vld [vmem:[#allocation2 + $0x2e9] sm:$0xff]
    %v3650 = vld [vmem:[#allocation2 + $0x2f1] sm:$0xff]
    %v3651 = vld [vmem:[#allocation2 + $0x301] sm:$0xff]
    %v3652 = vld [vmem:[#allocation2 + $0x309] sm:$0xff]
    %v3653 = vld [vmem:[#allocation2 + $0x319] sm:$0xff]
    %v3654 = vld [vmem:[#allocation2 + $0x321] sm:$0xff]
    %v3655 = vld [vmem:[#allocation2 + $0x2] sm:$0xff]
    %v3656 = vld [vmem:[#allocation2 + $0xa] sm:$0xff]
    %v3657 = vld [vmem:[#allocation2 + $0x1a] sm:$0xff]
    %v3658 = vld [vmem:[#allocation2 + $0x22] sm:$0xff]
    %v3659 = vld [vmem:[#allocation2 + $0x32] sm:$0xff]
    %v3660 = vld [vmem:[#allocation2 + $0x3a] sm:$0xff]
    %v3661 = vld [vmem:[#allocation2 + $0x4a] sm:$0xff]
    %v3662 = vld [vmem:[#allocation2 + $0x52] sm:$0xff]
    %v3663 = vld [vmem:[#allocation2 + $0x62] sm:$0xff]
    %v3664 = vld [vmem:[#allocation2 + $0x6a] sm:$0xff]
    %v3665 = vld [vmem:[#allocation2 + $0x7a] sm:$0xff]
    %v3666 = vld [vmem:[#allocation2 + $0x82] sm:$0xff]
    %v3667 = vld [vmem:[#allocation2 + $0x92] sm:$0xff]
    %v3668 = vld [vmem:[#allocation2 + $0x9a] sm:$0xff]
    %v3669 = vld [vmem:[#allocation2 + $0xaa] sm:$0xff]
    %v3670 = vld [vmem:[#allocation2 + $0xb2] sm:$0xff]
    %v3671 = vld [vmem:[#allocation2 + $0xc2] sm:$0xff]
    %v3672 = vld [vmem:[#allocation2 + $0xca] sm:$0xff]
    %v3673 = vld [vmem:[#allocation2 + $0xda] sm:$0xff]
    %v3674 = vld [vmem:[#allocation2 + $0xe2] sm:$0xff]
    %v3675 = vld [vmem:[#allocation2 + $0xf2] sm:$0xff]
    %v3676 = vld [vmem:[#allocation2 + $0xfa] sm:$0xff]
    %v3677 = vld [vmem:[#allocation2 + $0x10a] sm:$0xff]
    %v3678 = vld [vmem:[#allocation2 + $0x112] sm:$0xff]
    %v3679 = vld [vmem:[#allocation2 + $0x122] sm:$0xff]
    %v3680 = vld [vmem:[#allocation2 + $0x12a] sm:$0xff]
    %v3681 = vld [vmem:[#allocation2 + $0x13a] sm:$0xff]
    %v3682 = vld [vmem:[#allocation2 + $0x142] sm:$0xff]
    %v3683 = vld [vmem:[#allocation2 + $0x152] sm:$0xff]
    %v3684 = vld [vmem:[#allocation2 + $0x15a] sm:$0xff]
    %v3685 = vld [vmem:[#allocation2 + $0x16a] sm:$0xff]
    %v3686 = vld [vmem:[#allocation2 + $0x172] sm:$0xff]
    %v3687 = vld [vmem:[#allocation2 + $0x1b2] sm:$0xff]
    %v3688 = vld [vmem:[#allocation2 + $0x1ba] sm:$0xff]
    %v3689 = vld [vmem:[#allocation2 + $0x1ca] sm:$0xff]
    %v3690 = vld [vmem:[#allocation2 + $0x1d2] sm:$0xff]
    %v3691 = vld [vmem:[#allocation2 + $0x1e2] sm:$0xff]
    %v3692 = vld [vmem:[#allocation2 + $0x1ea] sm:$0xff]
    %v3693 = vld [vmem:[#allocation2 + $0x1fa] sm:$0xff]
    %v3694 = vld [vmem:[#allocation2 + $0x202] sm:$0xff]
    %v3695 = vld [vmem:[#allocation2 + $0x212] sm:$0xff]
    %v3696 = vld [vmem:[#allocation2 + $0x21a] sm:$0xff]
    %v3697 = vld [vmem:[#allocation2 + $0x22a] sm:$0xff]
    %v3698 = vld [vmem:[#allocation2 + $0x232] sm:$0xff]
    %v3699 = vld [vmem:[#allocation2 + $0x242] sm:$0xff]
    %v3700 = vld [vmem:[#allocation2 + $0x24a] sm:$0xff]
    %v3701 = vld [vmem:[#allocation2 + $0x25a] sm:$0xff]
    %v3702 = vld [vmem:[#allocation2 + $0x262] sm:$0xff]
    %v3703 = vld [vmem:[#allocation2 + $0x272] sm:$0xff]
    %v3704 = vld [vmem:[#allocation2 + $0x27a] sm:$0xff]
    %v3705 = vld [vmem:[#allocation2 + $0x28a] sm:$0xff]
    %v3706 = vld [vmem:[#allocation2 + $0x292] sm:$0xff]
    %v3707 = vld [vmem:[#allocation2 + $0x2a2] sm:$0xff]
    %v3708 = vld [vmem:[#allocation2 + $0x2aa] sm:$0xff]
    %v3709 = vld [vmem:[#allocation2 + $0x2ba] sm:$0xff]
    %v3710 = vld [vmem:[#allocation2 + $0x2c2] sm:$0xff]
    %v3711 = vld [vmem:[#allocation2 + $0x2d2] sm:$0xff]
    %v3712 = vld [vmem:[#allocation2 + $0x2da] sm:$0xff]
    %v3713 = vld [vmem:[#allocation2 + $0x2ea] sm:$0xff]
    %v3714 = vld [vmem:[#allocation2 + $0x2f2] sm:$0xff]
    %v3715 = vld [vmem:[#allocation2 + $0x302] sm:$0xff]
    %v3716 = vld [vmem:[#allocation2 + $0x30a] sm:$0xff]
    %v3717 = vld [vmem:[#allocation2 + $0x31a] sm:$0xff]
    %v3718 = vld [vmem:[#allocation2 + $0x322] sm:$0xff]
    %v3719 = vld [vmem:[%s246] sm:$0xff]
    %v3720 = vld [vmem:[%s246 + $0x8] sm:$0xff]
    %v3721 = vld [vmem:[%s246 + $0x18] sm:$0xff]
    %v3722 = vld [vmem:[%s246 + $0x20] sm:$0xff]
    %v3723 = vld [vmem:[%s246 + $0x30] sm:$0xff]
    %v3724 = vld [vmem:[%s246 + $0x38] sm:$0xff]
    %v3725 = vld [vmem:[%s246 + $0x48] sm:$0xff]
    %v3726 = vld [vmem:[%s246 + $0x50] sm:$0xff]
    %v3727 = vld [vmem:[%s246 + $0x60] sm:$0xff]
    %v3728 = vld [vmem:[%s246 + $0x68] sm:$0xff]
    %v3729 = vld [vmem:[%s246 + $0x78] sm:$0xff]
    %v3730 = vld [vmem:[%s246 + $0x80] sm:$0xff]
    %v3731 = vld [vmem:[%s246 + $0x90] sm:$0xff]
    %v3732 = vld [vmem:[%s246 + $0x98] sm:$0xff]
    %v3733 = vld [vmem:[%s246 + $0xa8] sm:$0xff]
    %v3734 = vld [vmem:[%s246 + $0xb0] sm:$0xff]
    %v3735 = vld [vmem:[%s246 + $0xc0] sm:$0xff]
    %v3736 = vld [vmem:[%s246 + $0xc8] sm:$0xff]
    %v3737 = vld [vmem:[%s246 + $0xd8] sm:$0xff]
    %v3738 = vld [vmem:[%s246 + $0xe0] sm:$0xff]
    %v3739 = vld [vmem:[%s246 + $0xf0] sm:$0xff]
    %v3740 = vld [vmem:[%s246 + $0xf8] sm:$0xff]
    %v3741 = vld [vmem:[%s246 + $0x108] sm:$0xff]
    %v3742 = vld [vmem:[%s246 + $0x110] sm:$0xff]
    %v3743 = vld [vmem:[%s246 + $0x120] sm:$0xff]
    %v3744 = vld [vmem:[%s246 + $0x128] sm:$0xff]
    %v3745 = vld [vmem:[%s246 + $0x138] sm:$0xff]
    %v3746 = vld [vmem:[%s246 + $0x140] sm:$0xff]
    %v3747 = vld [vmem:[%s246 + $0x150] sm:$0xff]
    %v3748 = vld [vmem:[%s246 + $0x158] sm:$0xff]
    %v3749 = vld [vmem:[%s246 + $0x168] sm:$0xff]
    %v3750 = vld [vmem:[%s246 + $0x170] sm:$0xff]
    %v3751 = vld [vmem:[%s246 + $0x1b0] sm:$0xff]
    %v3752 = vld [vmem:[%s246 + $0x1b8] sm:$0xff]
    %v3753 = vld [vmem:[%s246 + $0x1c8] sm:$0xff]
    %v3754 = vld [vmem:[%s246 + $0x1d0] sm:$0xff]
    %v3755 = vld [vmem:[%s246 + $0x1e0] sm:$0xff]
    %v3756 = vld [vmem:[%s246 + $0x1e8] sm:$0xff]
    %v3757 = vld [vmem:[%s246 + $0x1f8] sm:$0xff]
    %v3758 = vld [vmem:[%s246 + $0x200] sm:$0xff]
    %v3759 = vld [vmem:[%s246 + $0x210] sm:$0xff]
    %v3760 = vld [vmem:[%s246 + $0x218] sm:$0xff]
    %v3761 = vld [vmem:[%s246 + $0x228] sm:$0xff]
    %v3762 = vld [vmem:[%s246 + $0x230] sm:$0xff]
    %v3763 = vld [vmem:[%s246 + $0x240] sm:$0xff]
    %v3764 = vld [vmem:[%s246 + $0x248] sm:$0xff]
    %v3765 = vld [vmem:[%s246 + $0x258] sm:$0xff]
    %v3766 = vld [vmem:[%s246 + $0x260] sm:$0xff]
    %v3767 = vld [vmem:[%s246 + $0x270] sm:$0xff]
    %v3768 = vld [vmem:[%s246 + $0x278] sm:$0xff]
    %v3769 = vld [vmem:[%s246 + $0x288] sm:$0xff]
    %v3770 = vld [vmem:[%s246 + $0x290] sm:$0xff]
    %v3771 = vld [vmem:[%s246 + $0x2a0] sm:$0xff]
    %v3772 = vld [vmem:[%s246 + $0x2a8] sm:$0xff]
    %v3773 = vld [vmem:[%s246 + $0x2b8] sm:$0xff]
    %v3774 = vld [vmem:[%s246 + $0x2c0] sm:$0xff]
    %v3775 = vld [vmem:[%s246 + $0x2d0] sm:$0xff]
    %v3776 = vld [vmem:[%s246 + $0x2d8] sm:$0xff]
    %v3777 = vld [vmem:[%s246 + $0x2e8] sm:$0xff]
    %v3778 = vld [vmem:[%s246 + $0x2f0] sm:$0xff]
    %v3779 = vld [vmem:[%s246 + $0x300] sm:$0xff]
    %v3780 = vld [vmem:[%s246 + $0x308] sm:$0xff]
    %v3781 = vld [vmem:[%s246 + $0x318] sm:$0xff]
    %v3782 = vld [vmem:[%s246 + $0x320] sm:$0xff]
    %v3783 = vld [vmem:[%s246 + $0x1] sm:$0xff]
    %v3784 = vld [vmem:[%s246 + $0x9] sm:$0xff]
    %v3785 = vld [vmem:[%s246 + $0x19] sm:$0xff]
    %v3786 = vld [vmem:[%s246 + $0x21] sm:$0xff]
    %v3787 = vld [vmem:[%s246 + $0x31] sm:$0xff]
    %v3788 = vld [vmem:[%s246 + $0x39] sm:$0xff]
    %v3789 = vld [vmem:[%s246 + $0x49] sm:$0xff]
    %v3790 = vld [vmem:[%s246 + $0x51] sm:$0xff]
    %v3791 = vld [vmem:[%s246 + $0x61] sm:$0xff]
    %v3792 = vld [vmem:[%s246 + $0x69] sm:$0xff]
    %v3793 = vld [vmem:[%s246 + $0x79] sm:$0xff]
    %v3794 = vld [vmem:[%s246 + $0x81] sm:$0xff]
    %v3795 = vld [vmem:[%s246 + $0x91] sm:$0xff]
    %v3796 = vld [vmem:[%s246 + $0x99] sm:$0xff]
    %v3797 = vld [vmem:[%s246 + $0xa9] sm:$0xff]
    %v3798 = vld [vmem:[%s246 + $0xb1] sm:$0xff]
    %v3799 = vld [vmem:[%s246 + $0xc1] sm:$0xff]
    %v3800 = vld [vmem:[%s246 + $0xc9] sm:$0xff]
    %v3801 = vld [vmem:[%s246 + $0xd9] sm:$0xff]
    %v3802 = vld [vmem:[%s246 + $0xe1] sm:$0xff]
    %v3803 = vld [vmem:[%s246 + $0xf1] sm:$0xff]
    %v3804 = vld [vmem:[%s246 + $0xf9] sm:$0xff]
    %v3805 = vld [vmem:[%s246 + $0x109] sm:$0xff]
    %v3806 = vld [vmem:[%s246 + $0x111] sm:$0xff]
    %v3807 = vld [vmem:[%s246 + $0x121] sm:$0xff]
    %v3808 = vld [vmem:[%s246 + $0x129] sm:$0xff]
    %v3809 = vld [vmem:[%s246 + $0x139] sm:$0xff]
    %v3810 = vld [vmem:[%s246 + $0x141] sm:$0xff]
    %v3811 = vld [vmem:[%s246 + $0x151] sm:$0xff]
    %v3812 = vld [vmem:[%s246 + $0x159] sm:$0xff]
    %v3813 = vld [vmem:[%s246 + $0x169] sm:$0xff]
    %v3814 = vld [vmem:[%s246 + $0x171] sm:$0xff]
    %v3815 = vld [vmem:[%s246 + $0x1b1] sm:$0xff]
    %v3816 = vld [vmem:[%s246 + $0x1b9] sm:$0xff]
    %v3817 = vld [vmem:[%s246 + $0x1c9] sm:$0xff]
    %v3818 = vld [vmem:[%s246 + $0x1d1] sm:$0xff]
    %v3819 = vld [vmem:[%s246 + $0x1e1] sm:$0xff]
    %v3820 = vld [vmem:[%s246 + $0x1e9] sm:$0xff]
    %v3821 = vld [vmem:[%s246 + $0x1f9] sm:$0xff]
    %v3822 = vld [vmem:[%s246 + $0x201] sm:$0xff]
    %v3823 = vld [vmem:[%s246 + $0x211] sm:$0xff]
    %v3824 = vld [vmem:[%s246 + $0x219] sm:$0xff]
    %v3825 = vld [vmem:[%s246 + $0x229] sm:$0xff]
    %v3826 = vld [vmem:[%s246 + $0x231] sm:$0xff]
    %v3827 = vld [vmem:[%s246 + $0x241] sm:$0xff]
    %v3828 = vld [vmem:[%s246 + $0x249] sm:$0xff]
    %v3829 = vld [vmem:[%s246 + $0x259] sm:$0xff]
    %v3830 = vld [vmem:[%s246 + $0x261] sm:$0xff]
    %v3831 = vld [vmem:[%s246 + $0x271] sm:$0xff]
    %v3832 = vld [vmem:[%s246 + $0x279] sm:$0xff]
    %v3833 = vld [vmem:[%s246 + $0x289] sm:$0xff]
    %v3834 = vld [vmem:[%s246 + $0x291] sm:$0xff]
    %v3835 = vld [vmem:[%s246 + $0x2a1] sm:$0xff]
    %v3836 = vld [vmem:[%s246 + $0x2a9] sm:$0xff]
    %v3837 = vld [vmem:[%s246 + $0x2b9] sm:$0xff]
    %v3838 = vld [vmem:[%s246 + $0x2c1] sm:$0xff]
    %v3839 = vld [vmem:[%s246 + $0x2d1] sm:$0xff]
    %v3840 = vld [vmem:[%s246 + $0x2d9] sm:$0xff]
    %v3841 = vld [vmem:[%s246 + $0x2e9] sm:$0xff]
    %v3842 = vld [vmem:[%s246 + $0x2f1] sm:$0xff]
    %v3843 = vld [vmem:[%s246 + $0x301] sm:$0xff]
    %v3844 = vld [vmem:[%s246 + $0x309] sm:$0xff]
    %v3845 = vld [vmem:[%s246 + $0x319] sm:$0xff]
    %v3846 = vld [vmem:[%s246 + $0x321] sm:$0xff]
    %v3847 = vld [vmem:[%s246 + $0x2] sm:$0xff]
    %v3848 = vld [vmem:[%s246 + $0xa] sm:$0xff]
    %v3849 = vld [vmem:[%s246 + $0x1a] sm:$0xff]
    %v3850 = vld [vmem:[%s246 + $0x22] sm:$0xff]
    %v3851 = vld [vmem:[%s246 + $0x32] sm:$0xff]
    %v3852 = vld [vmem:[%s246 + $0x3a] sm:$0xff]
    %v3853 = vld [vmem:[%s246 + $0x4a] sm:$0xff]
    %v3854 = vld [vmem:[%s246 + $0x52] sm:$0xff]
    %v3855 = vld [vmem:[%s246 + $0x62] sm:$0xff]
    %v3856 = vld [vmem:[%s246 + $0x6a] sm:$0xff]
    %v3857 = vld [vmem:[%s246 + $0x7a] sm:$0xff]
    %v3858 = vld [vmem:[%s246 + $0x82] sm:$0xff]
    %v3859 = vld [vmem:[%s246 + $0x92] sm:$0xff]
    %v3860 = vld [vmem:[%s246 + $0x9a] sm:$0xff]
    %v3861 = vld [vmem:[%s246 + $0xaa] sm:$0xff]
    %v3862 = vld [vmem:[%s246 + $0xb2] sm:$0xff]
    %v3863 = vld [vmem:[%s246 + $0xc2] sm:$0xff]
    %v3864 = vld [vmem:[%s246 + $0xca] sm:$0xff]
    %v3865 = vld [vmem:[%s246 + $0xda] sm:$0xff]
    %v3866 = vld [vmem:[%s246 + $0xe2] sm:$0xff]
    %v3867 = vld [vmem:[%s246 + $0xf2] sm:$0xff]
    %v3868 = vld [vmem:[%s246 + $0xfa] sm:$0xff]
    %v3869 = vld [vmem:[%s246 + $0x10a] sm:$0xff]
    %v3870 = vld [vmem:[%s246 + $0x112] sm:$0xff]
    %v3871 = vld [vmem:[%s246 + $0x122] sm:$0xff]
    %v3872 = vld [vmem:[%s246 + $0x12a] sm:$0xff]
    %v3873 = vld [vmem:[%s246 + $0x13a] sm:$0xff]
    %v3874 = vld [vmem:[%s246 + $0x142] sm:$0xff]
    %v3875 = vld [vmem:[%s246 + $0x152] sm:$0xff]
    %v3876 = vld [vmem:[%s246 + $0x15a] sm:$0xff]
    %v3877 = vld [vmem:[%s246 + $0x16a] sm:$0xff]
    %v3878 = vld [vmem:[%s246 + $0x172] sm:$0xff]
    %v3879 = vld [vmem:[%s246 + $0x1b2] sm:$0xff]
    %v3880 = vld [vmem:[%s246 + $0x1ba] sm:$0xff]
    %v3881 = vld [vmem:[%s246 + $0x1ca] sm:$0xff]
    %v3882 = vld [vmem:[%s246 + $0x1d2] sm:$0xff]
    %v3883 = vld [vmem:[%s246 + $0x1e2] sm:$0xff]
    %v3884 = vld [vmem:[%s246 + $0x1ea] sm:$0xff]
    %v3885 = vld [vmem:[%s246 + $0x1fa] sm:$0xff]
    %v3886 = vld [vmem:[%s246 + $0x202] sm:$0xff]
    %v3887 = vld [vmem:[%s246 + $0x212] sm:$0xff]
    %v3888 = vld [vmem:[%s246 + $0x21a] sm:$0xff]
    %v3889 = vld [vmem:[%s246 + $0x22a] sm:$0xff]
    %v3890 = vld [vmem:[%s246 + $0x232] sm:$0xff]
    %v3891 = vld [vmem:[%s246 + $0x242] sm:$0xff]
    %v3892 = vld [vmem:[%s246 + $0x24a] sm:$0xff]
    %v3893 = vld [vmem:[%s246 + $0x25a] sm:$0xff]
    %v3894 = vld [vmem:[%s246 + $0x262] sm:$0xff]
    %v3895 = vld [vmem:[%s246 + $0x272] sm:$0xff]
    %v3896 = vld [vmem:[%s246 + $0x27a] sm:$0xff]
    %v3897 = vld [vmem:[%s246 + $0x28a] sm:$0xff]
    %v3898 = vld [vmem:[%s246 + $0x292] sm:$0xff]
    %v3899 = vld [vmem:[%s246 + $0x2a2] sm:$0xff]
    %v3900 = vld [vmem:[%s246 + $0x2aa] sm:$0xff]
    %v3901 = vld [vmem:[%s246 + $0x2ba] sm:$0xff]
    %v3902 = vld [vmem:[%s246 + $0x2c2] sm:$0xff]
    %v3903 = vld [vmem:[%s246 + $0x2d2] sm:$0xff]
    %v3904 = vld [vmem:[%s246 + $0x2da] sm:$0xff]
    %v3905 = vld [vmem:[%s246 + $0x2ea] sm:$0xff]
    %v3906 = vld [vmem:[%s246 + $0x2f2] sm:$0xff]
    %v3907 = vld [vmem:[%s246 + $0x302] sm:$0xff]
    %v3908 = vld [vmem:[%s246 + $0x30a] sm:$0xff]
    %v3909 = vld [vmem:[%s246 + $0x31a] sm:$0xff]
    %v3910 = vld [vmem:[%s246 + $0x322] sm:$0xff]
    %v3911 = vld [vmem:[%s695] sm:$0xff]
    %v3912 = vld [vmem:[%s695 + $0x8] sm:$0xff]
    %v3913 = vld [vmem:[%s695 + $0x18] sm:$0xff]
    %v3914 = vld [vmem:[%s695 + $0x20] sm:$0xff]
    %v3915 = vld [vmem:[%s695 + $0x30] sm:$0xff]
    %v3916 = vld [vmem:[%s695 + $0x38] sm:$0xff]
    %v3917 = vld [vmem:[%s695 + $0x48] sm:$0xff]
    %v3918 = vld [vmem:[%s695 + $0x50] sm:$0xff]
    %v3919 = vld [vmem:[%s695 + $0x60] sm:$0xff]
    %v3920 = vld [vmem:[%s695 + $0x68] sm:$0xff]
    %v3921 = vld [vmem:[%s695 + $0x78] sm:$0xff]
    %v3922 = vld [vmem:[%s695 + $0x80] sm:$0xff]
    %v3923 = vld [vmem:[%s695 + $0x90] sm:$0xff]
    %v3924 = vld [vmem:[%s695 + $0x98] sm:$0xff]
    %v3925 = vld [vmem:[%s695 + $0xa8] sm:$0xff]
    %v3926 = vld [vmem:[%s695 + $0xb0] sm:$0xff]
    %v3927 = vld [vmem:[%s695 + $0xc0] sm:$0xff]
    %v3928 = vld [vmem:[%s695 + $0xc8] sm:$0xff]
    %v3929 = vld [vmem:[%s695 + $0xd8] sm:$0xff]
    %v3930 = vld [vmem:[%s695 + $0xe0] sm:$0xff]
    %v3931 = vld [vmem:[%s695 + $0xf0] sm:$0xff]
    %v3932 = vld [vmem:[%s695 + $0xf8] sm:$0xff]
    %v3933 = vld [vmem:[%s695 + $0x108] sm:$0xff]
    %v3934 = vld [vmem:[%s695 + $0x110] sm:$0xff]
    %v3935 = vld [vmem:[%s695 + $0x120] sm:$0xff]
    %v3936 = vld [vmem:[%s695 + $0x128] sm:$0xff]
    %v3937 = vld [vmem:[%s695 + $0x138] sm:$0xff]
    %v3938 = vld [vmem:[%s695 + $0x140] sm:$0xff]
    %v3939 = vld [vmem:[%s695 + $0x150] sm:$0xff]
    %v3940 = vld [vmem:[%s695 + $0x158] sm:$0xff]
    %v3941 = vld [vmem:[%s695 + $0x168] sm:$0xff]
    %v3942 = vld [vmem:[%s695 + $0x170] sm:$0xff]
    %v3943 = vld [vmem:[%s695 + $0x1b0] sm:$0xff]
    %v3944 = vld [vmem:[%s695 + $0x1b8] sm:$0xff]
    %v3945 = vld [vmem:[%s695 + $0x1c8] sm:$0xff]
    %v3946 = vld [vmem:[%s695 + $0x1d0] sm:$0xff]
    %v3947 = vld [vmem:[%s695 + $0x1e0] sm:$0xff]
    %v3948 = vld [vmem:[%s695 + $0x1e8] sm:$0xff]
    %v3949 = vld [vmem:[%s695 + $0x1f8] sm:$0xff]
    %v3950 = vld [vmem:[%s695 + $0x200] sm:$0xff]
    %v3951 = vld [vmem:[%s695 + $0x210] sm:$0xff]
    %v3952 = vld [vmem:[%s695 + $0x218] sm:$0xff]
    %v3953 = vld [vmem:[%s695 + $0x228] sm:$0xff]
    %v3954 = vld [vmem:[%s695 + $0x230] sm:$0xff]
    %v3955 = vld [vmem:[%s695 + $0x240] sm:$0xff]
    %v3956 = vld [vmem:[%s695 + $0x248] sm:$0xff]
    %v3957 = vld [vmem:[%s695 + $0x258] sm:$0xff]
    %v3958 = vld [vmem:[%s695 + $0x260] sm:$0xff]
    %v3959 = vld [vmem:[%s695 + $0x270] sm:$0xff]
    %v3960 = vld [vmem:[%s695 + $0x278] sm:$0xff]
    %v3961 = vld [vmem:[%s695 + $0x288] sm:$0xff]
    %v3962 = vld [vmem:[%s695 + $0x290] sm:$0xff]
    %v3963 = vld [vmem:[%s695 + $0x2a0] sm:$0xff]
    %v3964 = vld [vmem:[%s695 + $0x2a8] sm:$0xff]
    %v3965 = vld [vmem:[%s695 + $0x2b8] sm:$0xff]
    %v3966 = vld [vmem:[%s695 + $0x2c0] sm:$0xff]
    %v3967 = vld [vmem:[%s695 + $0x2d0] sm:$0xff]
    %v3968 = vld [vmem:[%s695 + $0x2d8] sm:$0xff]
    %v3969 = vld [vmem:[%s695 + $0x2e8] sm:$0xff]
    %v3970 = vld [vmem:[%s695 + $0x2f0] sm:$0xff]
    %v3971 = vld [vmem:[%s695 + $0x300] sm:$0xff]
    %v3972 = vld [vmem:[%s695 + $0x308] sm:$0xff]
    %v3973 = vld [vmem:[%s695 + $0x318] sm:$0xff]
    %v3974 = vld [vmem:[%s695 + $0x320] sm:$0xff]
    %v3975 = vld [vmem:[%s695 + $0x1] sm:$0xff]
    %v3976 = vld [vmem:[%s695 + $0x9] sm:$0xff]
    %v3977 = vld [vmem:[%s695 + $0x19] sm:$0xff]
    %v3978 = vld [vmem:[%s695 + $0x21] sm:$0xff]
    %v3979 = vld [vmem:[%s695 + $0x31] sm:$0xff]
    %v3980 = vld [vmem:[%s695 + $0x39] sm:$0xff]
    %v3981 = vld [vmem:[%s695 + $0x49] sm:$0xff]
    %v3982 = vld [vmem:[%s695 + $0x51] sm:$0xff]
    %v3983 = vld [vmem:[%s695 + $0x61] sm:$0xff]
    %v3984 = vld [vmem:[%s695 + $0x69] sm:$0xff]
    %v3985 = vld [vmem:[%s695 + $0x79] sm:$0xff]
    %v3986 = vld [vmem:[%s695 + $0x81] sm:$0xff]
    %v3987 = vld [vmem:[%s695 + $0x91] sm:$0xff]
    %v3988 = vld [vmem:[%s695 + $0x99] sm:$0xff]
    %v3989 = vld [vmem:[%s695 + $0xa9] sm:$0xff]
    %v3990 = vld [vmem:[%s695 + $0xb1] sm:$0xff]
    %v3991 = vld [vmem:[%s695 + $0xc1] sm:$0xff]
    %v3992 = vld [vmem:[%s695 + $0xc9] sm:$0xff]
    %v3993 = vld [vmem:[%s695 + $0xd9] sm:$0xff]
    %v3994 = vld [vmem:[%s695 + $0xe1] sm:$0xff]
    %v3995 = vld [vmem:[%s695 + $0xf1] sm:$0xff]
    %v3996 = vld [vmem:[%s695 + $0xf9] sm:$0xff]
    %v3997 = vld [vmem:[%s695 + $0x109] sm:$0xff]
    %v3998 = vld [vmem:[%s695 + $0x111] sm:$0xff]
    %v3999 = vld [vmem:[%s695 + $0x121] sm:$0xff]
    %v4000 = vld [vmem:[%s695 + $0x129] sm:$0xff]
    %v4001 = vld [vmem:[%s695 + $0x139] sm:$0xff]
    %v4002 = vld [vmem:[%s695 + $0x141] sm:$0xff]
    %v4003 = vld [vmem:[%s695 + $0x151] sm:$0xff]
    %v4004 = vld [vmem:[%s695 + $0x159] sm:$0xff]
    %v4005 = vld [vmem:[%s695 + $0x169] sm:$0xff]
    %v4006 = vld [vmem:[%s695 + $0x171] sm:$0xff]
    %v4007 = vld [vmem:[%s695 + $0x1b1] sm:$0xff]
    %v4008 = vld [vmem:[%s695 + $0x1b9] sm:$0xff]
    %v4009 = vld [vmem:[%s695 + $0x1c9] sm:$0xff]
    %v4010 = vld [vmem:[%s695 + $0x1d1] sm:$0xff]
    %v4011 = vld [vmem:[%s695 + $0x1e1] sm:$0xff]
    %v4012 = vld [vmem:[%s695 + $0x1e9] sm:$0xff]
    %v4013 = vld [vmem:[%s695 + $0x1f9] sm:$0xff]
    %v4014 = vld [vmem:[%s695 + $0x201] sm:$0xff]
    %v4015 = vld [vmem:[%s695 + $0x211] sm:$0xff]
    %v4016 = vld [vmem:[%s695 + $0x219] sm:$0xff]
    %v4017 = vld [vmem:[%s695 + $0x229] sm:$0xff]
    %v4018 = vld [vmem:[%s695 + $0x231] sm:$0xff]
    %v4019 = vld [vmem:[%s695 + $0x241] sm:$0xff]
    %v4020 = vld [vmem:[%s695 + $0x249] sm:$0xff]
    %v4021 = vld [vmem:[%s695 + $0x259] sm:$0xff]
    %v4022 = vld [vmem:[%s695 + $0x261] sm:$0xff]
    %v4023 = vld [vmem:[%s695 + $0x271] sm:$0xff]
    %v4024 = vld [vmem:[%s695 + $0x279] sm:$0xff]
    %v4025 = vld [vmem:[%s695 + $0x289] sm:$0xff]
    %v4026 = vld [vmem:[%s695 + $0x291] sm:$0xff]
    %v4027 = vld [vmem:[%s695 + $0x2a1] sm:$0xff]
    %v4028 = vld [vmem:[%s695 + $0x2a9] sm:$0xff]
    %v4029 = vld [vmem:[%s695 + $0x2b9] sm:$0xff]
    %v4030 = vld [vmem:[%s695 + $0x2c1] sm:$0xff]
    %v4031 = vld [vmem:[%s695 + $0x2d1] sm:$0xff]
    %v4032 = vld [vmem:[%s695 + $0x2d9] sm:$0xff]
    %v4033 = vld [vmem:[%s695 + $0x2e9] sm:$0xff]
    %v4034 = vld [vmem:[%s695 + $0x2f1] sm:$0xff]
    %v4035 = vld [vmem:[%s695 + $0x301] sm:$0xff]
    %v4036 = vld [vmem:[%s695 + $0x309] sm:$0xff]
    %v4037 = vld [vmem:[%s695 + $0x319] sm:$0xff]
    %v4038 = vld [vmem:[%s695 + $0x321] sm:$0xff]
    %v4039 = vld [vmem:[%s695 + $0x2] sm:$0xff]
    %v4040 = vld [vmem:[%s695 + $0xa] sm:$0xff]
    %v4041 = vld [vmem:[%s695 + $0x1a] sm:$0xff]
    %v4042 = vld [vmem:[%s695 + $0x22] sm:$0xff]
    %v4043 = vld [vmem:[%s695 + $0x32] sm:$0xff]
    %v4044 = vld [vmem:[%s695 + $0x3a] sm:$0xff]
    %v4045 = vld [vmem:[%s695 + $0x4a] sm:$0xff]
    %v4046 = vld [vmem:[%s695 + $0x52] sm:$0xff]
    %v4047 = vld [vmem:[%s695 + $0x62] sm:$0xff]
    %v4048 = vld [vmem:[%s695 + $0x6a] sm:$0xff]
    %v4049 = vld [vmem:[%s695 + $0x7a] sm:$0xff]
    %v4050 = vld [vmem:[%s695 + $0x82] sm:$0xff]
    %v4051 = vld [vmem:[%s695 + $0x92] sm:$0xff]
    %v4052 = vld [vmem:[%s695 + $0x9a] sm:$0xff]
    %v4053 = vld [vmem:[%s695 + $0xaa] sm:$0xff]
    %v4054 = vld [vmem:[%s695 + $0xb2] sm:$0xff]
    %v4055 = vld [vmem:[%s695 + $0xc2] sm:$0xff]
    %v4056 = vld [vmem:[%s695 + $0xca] sm:$0xff]
    %v4057 = vld [vmem:[%s695 + $0xda] sm:$0xff]
    %v4058 = vld [vmem:[%s695 + $0xe2] sm:$0xff]
    %v4059 = vld [vmem:[%s695 + $0xf2] sm:$0xff]
    %v4060 = vld [vmem:[%s695 + $0xfa] sm:$0xff]
    %v4061 = vld [vmem:[%s695 + $0x10a] sm:$0xff]
    %v4062 = vld [vmem:[%s695 + $0x112] sm:$0xff]
    %v4063 = vld [vmem:[%s695 + $0x122] sm:$0xff]
    %v4064 = vld [vmem:[%s695 + $0x12a] sm:$0xff]
    %v4065 = vld [vmem:[%s695 + $0x13a] sm:$0xff]
    %v4066 = vld [vmem:[%s695 + $0x142] sm:$0xff]
    %v4067 = vld [vmem:[%s695 + $0x152] sm:$0xff]
    %v4068 = vld [vmem:[%s695 + $0x15a] sm:$0xff]
    %v4069 = vld [vmem:[%s695 + $0x16a] sm:$0xff]
    %v4070 = vld [vmem:[%s695 + $0x172] sm:$0xff]
    %v4071 = vld [vmem:[%s695 + $0x1b2] sm:$0xff]
    %v4072 = vld [vmem:[%s695 + $0x1ba] sm:$0xff]
    %v4073 = vld [vmem:[%s695 + $0x1ca] sm:$0xff]
    %v4074 = vld [vmem:[%s695 + $0x1d2] sm:$0xff]
    %v4075 = vld [vmem:[%s695 + $0x1e2] sm:$0xff]
    %v4076 = vld [vmem:[%s695 + $0x1ea] sm:$0xff]
    %v4077 = vld [vmem:[%s695 + $0x1fa] sm:$0xff]
    %v4078 = vld [vmem:[%s695 + $0x202] sm:$0xff]
    %v4079 = vld [vmem:[%s695 + $0x212] sm:$0xff]
    %v4080 = vld [vmem:[%s695 + $0x21a] sm:$0xff]
    %v4081 = vld [vmem:[%s695 + $0x22a] sm:$0xff]
    %v4082 = vld [vmem:[%s695 + $0x232] sm:$0xff]
    %v4083 = vld [vmem:[%s695 + $0x242] sm:$0xff]
    %v4084 = vld [vmem:[%s695 + $0x24a] sm:$0xff]
    %v4085 = vld [vmem:[%s695 + $0x25a] sm:$0xff]
    %v4086 = vld [vmem:[%s695 + $0x262] sm:$0xff]
    %v4087 = vld [vmem:[%s695 + $0x272] sm:$0xff]
    %v4088 = vld [vmem:[%s695 + $0x27a] sm:$0xff]
    %v4089 = vld [vmem:[%s695 + $0x28a] sm:$0xff]
    %v4090 = vld [vmem:[%s695 + $0x292] sm:$0xff]
    %v4091 = vld [vmem:[%s695 + $0x2a2] sm:$0xff]
    %v4092 = vld [vmem:[%s695 + $0x2aa] sm:$0xff]
    %v4093 = vld [vmem:[%s695 + $0x2ba] sm:$0xff]
    %v4094 = vld [vmem:[%s695 + $0x2c2] sm:$0xff]
    %v4095 = vld [vmem:[%s695 + $0x2d2] sm:$0xff]
    %v4096 = vld [vmem:[%s695 + $0x2da] sm:$0xff]
    %v4097 = vld [vmem:[%s695 + $0x2ea] sm:$0xff]
    %v4098 = vld [vmem:[%s695 + $0x2f2] sm:$0xff]
    %v4099 = vld [vmem:[%s695 + $0x302] sm:$0xff]
    %v4100 = vld [vmem:[%s695 + $0x30a] sm:$0xff]
    %v4101 = vld [vmem:[%s695 + $0x31a] sm:$0xff]
    %v4102 = vld [vmem:[%s695 + $0x322] sm:$0xff]
    %v4103 = vld [vmem:[#allocation8] sm:$0xff]
    %v4104 = vld [vmem:[#allocation8 + $0x8] sm:$0xff]
    %v4105 = vld [vmem:[#allocation8 + $0x10] sm:$0xff]
    %v4106 = vld [vmem:[#allocation8 + $0x18] sm:$0xff]
    %v4107 = vld [vmem:[#allocation8 + $0x20] sm:$0xff]
    %v4108 = vld [vmem:[#allocation8 + $0x28] sm:$0xff]
    %v4109 = vld [vmem:[#allocation8 + $0x30] sm:$0xff]
    %v4110 = vld [vmem:[#allocation8 + $0x38] sm:$0xff]
    %v4111 = vld [vmem:[#allocation8 + $0x40] sm:$0xff]
    %v4112 = vld [vmem:[#allocation8 + $0x48] sm:$0xff]
    %v4113 = vld [vmem:[#allocation8 + $0x50] sm:$0xff]
    %v4114 = vld [vmem:[#allocation8 + $0x58] sm:$0xff]
    %v4115 = vld [vmem:[#allocation8 + $0x60] sm:$0xff]
    %v4116 = vld [vmem:[#allocation8 + $0x68] sm:$0xff]
    %v4117 = vld [vmem:[#allocation8 + $0x70] sm:$0xff]
    %v4118 = vld [vmem:[#allocation8 + $0x78] sm:$0xff]
    %v4119 = vld [vmem:[#allocation8 + $0x80] sm:$0xff]
    %v4120 = vld [vmem:[#allocation8 + $0x88] sm:$0xff]
    %v4121 = vld [vmem:[#allocation8 + $0x90] sm:$0xff]
    %v4122 = vld [vmem:[#allocation8 + $0x98] sm:$0xff]
    %v4123 = vld [vmem:[#allocation8 + $0xa0] sm:$0xff]
    %v4124 = vld [vmem:[#allocation8 + $0xa8] sm:$0xff]
    %v4125 = vld [vmem:[#allocation8 + $0xb0] sm:$0xff]
    %v4126 = vld [vmem:[#allocation8 + $0xb8] sm:$0xff]
    %v4127 = vld [vmem:[#allocation8 + $0xc0] sm:$0xff]
    %v4128 = vld [vmem:[#allocation8 + $0xc8] sm:$0xff]
    %v4129 = vld [vmem:[#allocation8 + $0xd0] sm:$0xff]
    %v4130 = vld [vmem:[#allocation8 + $0xd8] sm:$0xff]
    %v4131 = vld [vmem:[#allocation8 + $0xe0] sm:$0xff]
    %v4132 = vld [vmem:[#allocation8 + $0xe8] sm:$0xff]
    %v4133 = vld [vmem:[#allocation8 + $0xf0] sm:$0xff]
    %v4134 = vld [vmem:[#allocation8 + $0xf8] sm:$0xff]
    %v4135 = vld [vmem:[#allocation8 + $0x100] sm:$0xff]
    %v4136 = vld [vmem:[#allocation8 + $0x108] sm:$0xff]
    %v4137 = vld [vmem:[#allocation8 + $0x110] sm:$0xff]
    %v4138 = vld [vmem:[#allocation8 + $0x118] sm:$0xff]
    %v4139 = vld [vmem:[#allocation8 + $0x120] sm:$0xff]
    %v4140 = vld [vmem:[#allocation8 + $0x128] sm:$0xff]
    %v4141 = vld [vmem:[#allocation8 + $0x130] sm:$0xff]
    %v4142 = vld [vmem:[#allocation8 + $0x138] sm:$0xff]
    %v4143 = vld [vmem:[#allocation8 + $0x140] sm:$0xff]
    %v4144 = vld [vmem:[#allocation8 + $0x148] sm:$0xff]
    %v4145 = vld [vmem:[#allocation8 + $0x150] sm:$0xff]
    %v4146 = vld [vmem:[#allocation8 + $0x158] sm:$0xff]
    %v4147 = vld [vmem:[#allocation8 + $0x160] sm:$0xff]
    %v4148 = vld [vmem:[#allocation8 + $0x168] sm:$0xff]
    %v4149 = vld [vmem:[#allocation8 + $0x170] sm:$0xff]
    %v4150 = vld [vmem:[#allocation8 + $0x178] sm:$0xff]
    %v4151 = vld [vmem:[#allocation8 + $0x180] sm:$0xff]
    %v4152 = vld [vmem:[#allocation8 + $0x188] sm:$0xff]
    %v4153 = vld [vmem:[#allocation8 + $0x190] sm:$0xff]
    %v4154 = vld [vmem:[#allocation8 + $0x198] sm:$0xff]
    %v4155 = vld [vmem:[#allocation8 + $0x1a0] sm:$0xff]
    %v4156 = vld [vmem:[#allocation8 + $0x1a8] sm:$0xff]
    %v4157 = vld [vmem:[#allocation8 + $0x1b0] sm:$0xff]
    %v4158 = vld [vmem:[#allocation8 + $0x1b8] sm:$0xff]
    %v4159 = vld [vmem:[#allocation8 + $0x1c0] sm:$0xff]
    %v4160 = vld [vmem:[#allocation8 + $0x1c8] sm:$0xff]
    %v4161 = vld [vmem:[#allocation8 + $0x1d0] sm:$0xff]
    %v4162 = vld [vmem:[#allocation8 + $0x1d8] sm:$0xff]
    %v4163 = vld [vmem:[#allocation8 + $0x1e0] sm:$0xff]
    %v4164 = vld [vmem:[#allocation8 + $0x1e8] sm:$0xff]
    %v4165 = vld [vmem:[#allocation8 + $0x1f0] sm:$0xff]
    %v4166 = vld [vmem:[#allocation8 + $0x1f8] sm:$0xff]
    %v4167 = vld [vmem:[#allocation8 + $0x200] sm:$0xff]
    %v4168 = vld [vmem:[#allocation8 + $0x208] sm:$0xff]
    %v4169 = vld [vmem:[#allocation8 + $0x210] sm:$0xff]
    %v4170 = vld [vmem:[#allocation8 + $0x218] sm:$0xff]
    %v4171 = vld [vmem:[#allocation8 + $0x220] sm:$0xff]
    %v4172 = vld [vmem:[#allocation8 + $0x228] sm:$0xff]
    %v4173 = vld [vmem:[#allocation8 + $0x230] sm:$0xff]
    %v4174 = vld [vmem:[#allocation8 + $0x238] sm:$0xff]
    %v4175 = vld [vmem:[#allocation8 + $0x240] sm:$0xff]
    %v4176 = vld [vmem:[#allocation8 + $0x248] sm:$0xff]
    %v4177 = vld [vmem:[#allocation8 + $0x250] sm:$0xff]
    %v4178 = vld [vmem:[#allocation8 + $0x258] sm:$0xff]
    %v4179 = vld [vmem:[#allocation8 + $0x260] sm:$0xff]
    %v4180 = vld [vmem:[#allocation8 + $0x268] sm:$0xff]
    %v4181 = vld [vmem:[#allocation8 + $0x270] sm:$0xff]
    %v4182 = vld [vmem:[#allocation8 + $0x278] sm:$0xff]
    %v4183 = vld [vmem:[#allocation8 + $0x280] sm:$0xff]
    %v4184 = vld [vmem:[#allocation8 + $0x288] sm:$0xff]
    %v4185 = vld [vmem:[#allocation8 + $0x290] sm:$0xff]
    %v4186 = vld [vmem:[#allocation8 + $0x298] sm:$0xff]
    %v4187 = vld [vmem:[#allocation8 + $0x2a0] sm:$0xff]
    %v4188 = vld [vmem:[#allocation8 + $0x2a8] sm:$0xff]
    %v4189 = vld [vmem:[#allocation8 + $0x2b0] sm:$0xff]
    %v4190 = vld [vmem:[#allocation8 + $0x2b8] sm:$0xff]
    %v4191 = vld [vmem:[#allocation8 + $0x2c0] sm:$0xff]
    %v4192 = vld [vmem:[#allocation8 + $0x2c8] sm:$0xff]
    %v4193 = vld [vmem:[#allocation8 + $0x2d0] sm:$0xff]
    %v4194 = vld [vmem:[#allocation8 + $0x2d8] sm:$0xff]
    %v4195 = vld [vmem:[#allocation8 + $0x2e0] sm:$0xff]
    %v4196 = vld [vmem:[#allocation8 + $0x2e8] sm:$0xff]
    %v4197 = vld [vmem:[#allocation8 + $0x2f0] sm:$0xff]
    %v4198 = vld [vmem:[#allocation8 + $0x2f8] sm:$0xff]
    %v4199 = vld [vmem:[#allocation8 + $0x300] sm:$0xff]
    %v4200 = vld [vmem:[#allocation8 + $0x308] sm:$0xff]
    %v4201 = vld [vmem:[#allocation8 + $0x310] sm:$0xff]
    %v4202 = vld [vmem:[#allocation8 + $0x318] sm:$0xff]
    %v4203 = vld [vmem:[#allocation8 + $0x320] sm:$0xff]
    %v4204 = vld [vmem:[#allocation8 + $0x328] sm:$0xff]
    %v4205 = vld [vmem:[#allocation8 + $0x330] sm:$0xff]
    %v4206 = vld [vmem:[#allocation8 + $0x338] sm:$0xff]
    %v4207 = vld [vmem:[#allocation8 + $0x340] sm:$0xff]
    %v4208 = vld [vmem:[#allocation8 + $0x348] sm:$0xff]
    %v4209 = vld [vmem:[#allocation8 + $0x350] sm:$0xff]
    %v4210 = vld [vmem:[#allocation8 + $0x358] sm:$0xff]
    %v4211 = vld [vmem:[#allocation8 + $0x360] sm:$0xff]
    %v4212 = vld [vmem:[#allocation8 + $0x368] sm:$0xff]
    %v4213 = vld [vmem:[#allocation8 + $0x370] sm:$0xff]
    %v4214 = vld [vmem:[#allocation8 + $0x378] sm:$0xff]
    %v4215 = vld [vmem:[#allocation8 + $0x380] sm:$0xff]
    %v4216 = vld [vmem:[#allocation8 + $0x388] sm:$0xff]
    %v4217 = vld [vmem:[#allocation8 + $0x390] sm:$0xff]
    %v4218 = vld [vmem:[#allocation8 + $0x398] sm:$0xff]
    %v4219 = vld [vmem:[#allocation8 + $0x3a0] sm:$0xff]
    %v4220 = vld [vmem:[#allocation8 + $0x3a8] sm:$0xff]
    %v4221 = vld [vmem:[#allocation8 + $0x3b0] sm:$0xff]
    %v4222 = vld [vmem:[#allocation8 + $0x3b8] sm:$0xff]
    %v4223 = vld [vmem:[#allocation8 + $0x3c0] sm:$0xff]
    %v4224 = vld [vmem:[#allocation8 + $0x3c8] sm:$0xff]
    %v4225 = vld [vmem:[#allocation8 + $0x3d0] sm:$0xff]
    %v4226 = vld [vmem:[#allocation8 + $0x3d8] sm:$0xff]
    %v4227 = vld [vmem:[#allocation8 + $0x3e0] sm:$0xff]
    %v4228 = vld [vmem:[#allocation8 + $0x3e8] sm:$0xff]
    %v4229 = vld [vmem:[#allocation8 + $0x3f0] sm:$0xff]
    %v4230 = vld [vmem:[#allocation8 + $0x3f8] sm:$0xff]
    %v4231 = vld [vmem:[#allocation8 + $0x400] sm:$0xff]
    %v4232 = vld [vmem:[#allocation8 + $0x408] sm:$0xff]
    %v4233 = vld [vmem:[#allocation8 + $0x410] sm:$0xff]
    %v4234 = vld [vmem:[#allocation8 + $0x418] sm:$0xff]
    %v4235 = vld [vmem:[#allocation8 + $0x420] sm:$0xff]
    %v4236 = vld [vmem:[#allocation8 + $0x428] sm:$0xff]
    %v4237 = vld [vmem:[#allocation8 + $0x430] sm:$0xff]
    %v4238 = vld [vmem:[#allocation8 + $0x438] sm:$0xff]
    %v4239 = vld [vmem:[#allocation8 + $0x440] sm:$0xff]
    %v4240 = vld [vmem:[#allocation8 + $0x448] sm:$0xff]
    %v4241 = vld [vmem:[#allocation8 + $0x450] sm:$0xff]
    %v4242 = vld [vmem:[#allocation8 + $0x458] sm:$0xff]
    %v4243 = vld [vmem:[#allocation8 + $0x460] sm:$0xff]
    %v4244 = vld [vmem:[#allocation8 + $0x468] sm:$0xff]
    %v4245 = vld [vmem:[#allocation8 + $0x470] sm:$0xff]
    %v4246 = vld [vmem:[#allocation8 + $0x478] sm:$0xff]
    %4247 = vmatpush.msra.mxu0 %v4118
    %4248 = vmatpush.msra.mxu0 %v4117
    %4249 = vmatpush.msra.mxu0 %v4116
    %4250 = vmatpush.msra.mxu0 %v4115
    %4251 = vmatpush.msra.mxu0 %v4114
    %4252 = vmatpush.msra.mxu0 %v4113
    %4253 = vmatpush.msra.mxu0 %v4112
    %4254 = vmatpush.msra.mxu0 %v4111
    %4255 = vmatpush.msra.mxu0 %v4110
    %4256 = vmatpush.msra.mxu0 %v4109
    %4257 = vmatpush.msra.mxu0 %v4108
    %4258 = vmatpush.msra.mxu0 %v4107
    %4259 = vmatpush.msra.mxu0 %v4106
    %4260 = vmatpush.msra.mxu0 %v4105
    %4261 = vmatpush.msra.mxu0 %v4104
    %4262 = vmatpush.msra.mxu0 %v4103
    %4263 = vmatmul.f32.gmra.mxu0 %v3527
    %v4264 = vpop.f32.mrf.mxu0
    %v4265 = vadd.f32 0.0, %v4264
    %4266 = vmatmul.f32.gmra.mxu0 %v3528
    %v4267 = vpop.f32.mrf.mxu0
    %v4268 = vadd.f32 0.0, %v4267
    %4269 = vmatmul.f32.gmra.mxu0 %v3529
    %v4270 = vpop.f32.mrf.mxu0
    %v4271 = vadd.f32 0.0, %v4270
    %4272 = vmatmul.f32.gmra.mxu0 %v3530
    %v4273 = vpop.f32.mrf.mxu0
    %v4274 = vadd.f32 0.0, %v4273
    %4275 = vmatmul.f32.gmra.mxu0 %v3531
    %v4276 = vpop.f32.mrf.mxu0
    %v4277 = vadd.f32 0.0, %v4276
    %4278 = vmatmul.f32.gmra.mxu0 %v3532
    %v4279 = vpop.f32.mrf.mxu0
    %v4280 = vadd.f32 0.0, %v4279
    %4281 = vmatmul.f32.gmra.mxu0 %v3533
    %v4282 = vpop.f32.mrf.mxu0
    %v4283 = vadd.f32 0.0, %v4282
    %4284 = vmatmul.f32.gmra.mxu0 %v3534
    %v4285 = vpop.f32.mrf.mxu0
    %v4286 = vadd.f32 0.0, %v4285
    %4287 = vmatmul.f32.gmra.mxu0 %v3535
    %v4288 = vpop.f32.mrf.mxu0
    %v4289 = vadd.f32 0.0, %v4288
    %4290 = vmatmul.f32.gmra.mxu0 %v3536
    %v4291 = vpop.f32.mrf.mxu0
    %v4292 = vadd.f32 0.0, %v4291
    %4293 = vmatmul.f32.gmra.mxu0 %v3537
    %v4294 = vpop.f32.mrf.mxu0
    %v4295 = vadd.f32 0.0, %v4294
    %4296 = vmatmul.f32.gmra.mxu0 %v3538
    %v4297 = vpop.f32.mrf.mxu0
    %v4298 = vadd.f32 0.0, %v4297
    %4299 = vmatmul.f32.gmra.mxu0 %v3539
    %v4300 = vpop.f32.mrf.mxu0
    %v4301 = vadd.f32 0.0, %v4300
    %4302 = vmatmul.f32.gmra.mxu0 %v3540
    %v4303 = vpop.f32.mrf.mxu0
    %v4304 = vadd.f32 0.0, %v4303
    %4305 = vmatmul.f32.gmra.mxu0 %v3541
    %v4306 = vpop.f32.mrf.mxu0
    %v4307 = vadd.f32 0.0, %v4306
    %4308 = vmatmul.f32.gmra.mxu0 %v3542
    %v4309 = vpop.f32.mrf.mxu0
    %v4310 = vadd.f32 0.0, %v4309
    %4311 = vmatmul.f32.gmra.mxu0 %v3543
    %v4312 = vpop.f32.mrf.mxu0
    %v4313 = vadd.f32 0.0, %v4312
    %4314 = vmatmul.f32.gmra.mxu0 %v3544
    %v4315 = vpop.f32.mrf.mxu0
    %v4316 = vadd.f32 0.0, %v4315
    %4317 = vmatmul.f32.gmra.mxu0 %v3545
    %v4318 = vpop.f32.mrf.mxu0
    %v4319 = vadd.f32 0.0, %v4318
    %4320 = vmatmul.f32.gmra.mxu0 %v3546
    %v4321 = vpop.f32.mrf.mxu0
    %v4322 = vadd.f32 0.0, %v4321
    %4323 = vmatmul.f32.gmra.mxu0 %v3547
    %v4324 = vpop.f32.mrf.mxu0
    %v4325 = vadd.f32 0.0, %v4324
    %4326 = vmatmul.f32.gmra.mxu0 %v3548
    %v4327 = vpop.f32.mrf.mxu0
    %v4328 = vadd.f32 0.0, %v4327
    %4329 = vmatmul.f32.gmra.mxu0 %v3549
    %v4330 = vpop.f32.mrf.mxu0
    %v4331 = vadd.f32 0.0, %v4330
    %4332 = vmatmul.f32.gmra.mxu0 %v3550
    %v4333 = vpop.f32.mrf.mxu0
    %v4334 = vadd.f32 0.0, %v4333
    %4335 = vmatmul.f32.gmra.mxu0 %v3551
    %v4336 = vpop.f32.mrf.mxu0
    %v4337 = vadd.f32 0.0, %v4336
    %4338 = vmatmul.f32.gmra.mxu0 %v3552
    %v4339 = vpop.f32.mrf.mxu0
    %v4340 = vadd.f32 0.0, %v4339
    %4341 = vmatmul.f32.gmra.mxu0 %v3553
    %v4342 = vpop.f32.mrf.mxu0
    %v4343 = vadd.f32 0.0, %v4342
    %4344 = vmatmul.f32.gmra.mxu0 %v3554
    %v4345 = vpop.f32.mrf.mxu0
    %v4346 = vadd.f32 0.0, %v4345
    %4347 = vmatmul.f32.gmra.mxu0 %v3555
    %v4348 = vpop.f32.mrf.mxu0
    %v4349 = vadd.f32 0.0, %v4348
    %4350 = vmatmul.f32.gmra.mxu0 %v3556
    %v4351 = vpop.f32.mrf.mxu0
    %v4352 = vadd.f32 0.0, %v4351
    %4353 = vmatmul.f32.gmra.mxu0 %v3557
    %v4354 = vpop.f32.mrf.mxu0
    %v4355 = vadd.f32 0.0, %v4354
    %4356 = vmatmul.f32.gmra.mxu0 %v3558
    %v4357 = vpop.f32.mrf.mxu0
    %v4358 = vadd.f32 0.0, %v4357
    %4359 = vmatmul.f32.gmra.mxu0 %v3559
    %v4360 = vpop.f32.mrf.mxu0
    %v4361 = vadd.f32 0.0, %v4360
    %4362 = vmatmul.f32.gmra.mxu0 %v3560
    %v4363 = vpop.f32.mrf.mxu0
    %v4364 = vadd.f32 0.0, %v4363
    %4365 = vmatmul.f32.gmra.mxu0 %v3561
    %v4366 = vpop.f32.mrf.mxu0
    %v4367 = vadd.f32 0.0, %v4366
    %4368 = vmatmul.f32.gmra.mxu0 %v3562
    %v4369 = vpop.f32.mrf.mxu0
    %v4370 = vadd.f32 0.0, %v4369
    %4371 = vmatmul.f32.gmra.mxu0 %v3563
    %v4372 = vpop.f32.mrf.mxu0
    %v4373 = vadd.f32 0.0, %v4372
    %4374 = vmatmul.f32.gmra.mxu0 %v3564
    %v4375 = vpop.f32.mrf.mxu0
    %v4376 = vadd.f32 0.0, %v4375
    %4377 = vmatmul.f32.gmra.mxu0 %v3565
    %v4378 = vpop.f32.mrf.mxu0
    %v4379 = vadd.f32 0.0, %v4378
    %4380 = vmatmul.f32.gmra.mxu0 %v3566
    %v4381 = vpop.f32.mrf.mxu0
    %v4382 = vadd.f32 0.0, %v4381
    %4383 = vmatmul.f32.gmra.mxu0 %v3567
    %v4384 = vpop.f32.mrf.mxu0
    %v4385 = vadd.f32 0.0, %v4384
    %4386 = vmatmul.f32.gmra.mxu0 %v3568
    %v4387 = vpop.f32.mrf.mxu0
    %v4388 = vadd.f32 0.0, %v4387
    %4389 = vmatmul.f32.gmra.mxu0 %v3569
    %v4390 = vpop.f32.mrf.mxu0
    %v4391 = vadd.f32 0.0, %v4390
    %4392 = vmatmul.f32.gmra.mxu0 %v3570
    %v4393 = vpop.f32.mrf.mxu0
    %v4394 = vadd.f32 0.0, %v4393
    %4395 = vmatmul.f32.gmra.mxu0 %v3571
    %v4396 = vpop.f32.mrf.mxu0
    %v4397 = vadd.f32 0.0, %v4396
    %4398 = vmatmul.f32.gmra.mxu0 %v3572
    %v4399 = vpop.f32.mrf.mxu0
    %v4400 = vadd.f32 0.0, %v4399
    %4401 = vmatmul.f32.gmra.mxu0 %v3573
    %v4402 = vpop.f32.mrf.mxu0
    %v4403 = vadd.f32 0.0, %v4402
    %4404 = vmatmul.f32.gmra.mxu0 %v3574
    %v4405 = vpop.f32.mrf.mxu0
    %v4406 = vadd.f32 0.0, %v4405
    %4407 = vmatmul.f32.gmra.mxu0 %v3575
    %v4408 = vpop.f32.mrf.mxu0
    %v4409 = vadd.f32 0.0, %v4408
    %4410 = vmatmul.f32.gmra.mxu0 %v3576
    %v4411 = vpop.f32.mrf.mxu0
    %v4412 = vadd.f32 0.0, %v4411
    %4413 = vmatmul.f32.gmra.mxu0 %v3577
    %v4414 = vpop.f32.mrf.mxu0
    %v4415 = vadd.f32 0.0, %v4414
    %4416 = vmatmul.f32.gmra.mxu0 %v3578
    %v4417 = vpop.f32.mrf.mxu0
    %v4418 = vadd.f32 0.0, %v4417
    %4419 = vmatmul.f32.gmra.mxu0 %v3579
    %v4420 = vpop.f32.mrf.mxu0
    %v4421 = vadd.f32 0.0, %v4420
    %4422 = vmatmul.f32.gmra.mxu0 %v3580
    %v4423 = vpop.f32.mrf.mxu0
    %v4424 = vadd.f32 0.0, %v4423
    %4425 = vmatmul.f32.gmra.mxu0 %v3581
    %v4426 = vpop.f32.mrf.mxu0
    %v4427 = vadd.f32 0.0, %v4426
    %4428 = vmatmul.f32.gmra.mxu0 %v3582
    %v4429 = vpop.f32.mrf.mxu0
    %v4430 = vadd.f32 0.0, %v4429
    %4431 = vmatmul.f32.gmra.mxu0 %v3583
    %v4432 = vpop.f32.mrf.mxu0
    %v4433 = vadd.f32 0.0, %v4432
    %4434 = vmatmul.f32.gmra.mxu0 %v3584
    %v4435 = vpop.f32.mrf.mxu0
    %v4436 = vadd.f32 0.0, %v4435
    %4437 = vmatmul.f32.gmra.mxu0 %v3585
    %v4438 = vpop.f32.mrf.mxu0
    %v4439 = vadd.f32 0.0, %v4438
    %4440 = vmatmul.f32.gmra.mxu0 %v3586
    %v4441 = vpop.f32.mrf.mxu0
    %v4442 = vadd.f32 0.0, %v4441
    %4443 = vmatmul.f32.gmra.mxu0 %v3587
    %v4444 = vpop.f32.mrf.mxu0
    %v4445 = vadd.f32 0.0, %v4444
    %4446 = vmatmul.f32.gmra.mxu0 %v3588
    %v4447 = vpop.f32.mrf.mxu0
    %v4448 = vadd.f32 0.0, %v4447
    %4449 = vmatmul.f32.gmra.mxu0 %v3589
    %v4450 = vpop.f32.mrf.mxu0
    %v4451 = vadd.f32 0.0, %v4450
    %4452 = vmatmul.f32.gmra.mxu0 %v3590
    %v4453 = vpop.f32.mrf.mxu0
    %v4454 = vadd.f32 0.0, %v4453
    %4455 = vdwg.mxu0
    %4456 = vmatpush.msra.mxu0 %v4134
    %4457 = vmatpush.msra.mxu0 %v4133
    %4458 = vmatpush.msra.mxu0 %v4132
    %4459 = vmatpush.msra.mxu0 %v4131
    %4460 = vmatpush.msra.mxu0 %v4130
    %4461 = vmatpush.msra.mxu0 %v4129
    %4462 = vmatpush.msra.mxu0 %v4128
    %4463 = vmatpush.msra.mxu0 %v4127
    %4464 = vmatpush.msra.mxu0 %v4126
    %4465 = vmatpush.msra.mxu0 %v4125
    %4466 = vmatpush.msra.mxu0 %v4124
    %4467 = vmatpush.msra.mxu0 %v4123
    %4468 = vmatpush.msra.mxu0 %v4122
    %4469 = vmatpush.msra.mxu0 %v4121
    %4470 = vmatpush.msra.mxu0 %v4120
    %4471 = vmatpush.msra.mxu0 %v4119
    %4472 = vmatmul.f32.gmra.mxu0 %v3591
    %v4473 = vpop.f32.mrf.mxu0
    %v4474 = vadd.f32 %v4265, %v4473
    %4475 = vmatmul.f32.gmra.mxu0 %v3592
    %v4476 = vpop.f32.mrf.mxu0
    %v4477 = vadd.f32 %v4268, %v4476
    %4478 = vmatmul.f32.gmra.mxu0 %v3593
    %v4479 = vpop.f32.mrf.mxu0
    %v4480 = vadd.f32 %v4271, %v4479
    %4481 = vmatmul.f32.gmra.mxu0 %v3594
    %v4482 = vpop.f32.mrf.mxu0
    %v4483 = vadd.f32 %v4274, %v4482
    %4484 = vmatmul.f32.gmra.mxu0 %v3595
    %v4485 = vpop.f32.mrf.mxu0
    %v4486 = vadd.f32 %v4277, %v4485
    %4487 = vmatmul.f32.gmra.mxu0 %v3596
    %v4488 = vpop.f32.mrf.mxu0
    %v4489 = vadd.f32 %v4280, %v4488
    %4490 = vmatmul.f32.gmra.mxu0 %v3597
    %v4491 = vpop.f32.mrf.mxu0
    %v4492 = vadd.f32 %v4283, %v4491
    %4493 = vmatmul.f32.gmra.mxu0 %v3598
    %v4494 = vpop.f32.mrf.mxu0
    %v4495 = vadd.f32 %v4286, %v4494
    %4496 = vmatmul.f32.gmra.mxu0 %v3599
    %v4497 = vpop.f32.mrf.mxu0
    %v4498 = vadd.f32 %v4289, %v4497
    %4499 = vmatmul.f32.gmra.mxu0 %v3600
    %v4500 = vpop.f32.mrf.mxu0
    %v4501 = vadd.f32 %v4292, %v4500
    %4502 = vmatmul.f32.gmra.mxu0 %v3601
    %v4503 = vpop.f32.mrf.mxu0
    %v4504 = vadd.f32 %v4295, %v4503
    %4505 = vmatmul.f32.gmra.mxu0 %v3602
    %v4506 = vpop.f32.mrf.mxu0
    %v4507 = vadd.f32 %v4298, %v4506
    %4508 = vmatmul.f32.gmra.mxu0 %v3603
    %v4509 = vpop.f32.mrf.mxu0
    %v4510 = vadd.f32 %v4301, %v4509
    %4511 = vmatmul.f32.gmra.mxu0 %v3604
    %v4512 = vpop.f32.mrf.mxu0
    %v4513 = vadd.f32 %v4304, %v4512
    %4514 = vmatmul.f32.gmra.mxu0 %v3605
    %v4515 = vpop.f32.mrf.mxu0
    %v4516 = vadd.f32 %v4307, %v4515
    %4517 = vmatmul.f32.gmra.mxu0 %v3606
    %v4518 = vpop.f32.mrf.mxu0
    %v4519 = vadd.f32 %v4310, %v4518
    %4520 = vmatmul.f32.gmra.mxu0 %v3607
    %v4521 = vpop.f32.mrf.mxu0
    %v4522 = vadd.f32 %v4313, %v4521
    %4523 = vmatmul.f32.gmra.mxu0 %v3608
    %v4524 = vpop.f32.mrf.mxu0
    %v4525 = vadd.f32 %v4316, %v4524
    %4526 = vmatmul.f32.gmra.mxu0 %v3609
    %v4527 = vpop.f32.mrf.mxu0
    %v4528 = vadd.f32 %v4319, %v4527
    %4529 = vmatmul.f32.gmra.mxu0 %v3610
    %v4530 = vpop.f32.mrf.mxu0
    %v4531 = vadd.f32 %v4322, %v4530
    %4532 = vmatmul.f32.gmra.mxu0 %v3611
    %v4533 = vpop.f32.mrf.mxu0
    %v4534 = vadd.f32 %v4325, %v4533
    %4535 = vmatmul.f32.gmra.mxu0 %v3612
    %v4536 = vpop.f32.mrf.mxu0
    %v4537 = vadd.f32 %v4328, %v4536
    %4538 = vmatmul.f32.gmra.mxu0 %v3613
    %v4539 = vpop.f32.mrf.mxu0
    %v4540 = vadd.f32 %v4331, %v4539
    %4541 = vmatmul.f32.gmra.mxu0 %v3614
    %v4542 = vpop.f32.mrf.mxu0
    %v4543 = vadd.f32 %v4334, %v4542
    %4544 = vmatmul.f32.gmra.mxu0 %v3615
    %v4545 = vpop.f32.mrf.mxu0
    %v4546 = vadd.f32 %v4337, %v4545
    %4547 = vmatmul.f32.gmra.mxu0 %v3616
    %v4548 = vpop.f32.mrf.mxu0
    %v4549 = vadd.f32 %v4340, %v4548
    %4550 = vmatmul.f32.gmra.mxu0 %v3617
    %v4551 = vpop.f32.mrf.mxu0
    %v4552 = vadd.f32 %v4343, %v4551
    %4553 = vmatmul.f32.gmra.mxu0 %v3618
    %v4554 = vpop.f32.mrf.mxu0
    %v4555 = vadd.f32 %v4346, %v4554
    %4556 = vmatmul.f32.gmra.mxu0 %v3619
    %v4557 = vpop.f32.mrf.mxu0
    %v4558 = vadd.f32 %v4349, %v4557
    %4559 = vmatmul.f32.gmra.mxu0 %v3620
    %v4560 = vpop.f32.mrf.mxu0
    %v4561 = vadd.f32 %v4352, %v4560
    %4562 = vmatmul.f32.gmra.mxu0 %v3621
    %v4563 = vpop.f32.mrf.mxu0
    %v4564 = vadd.f32 %v4355, %v4563
    %4565 = vmatmul.f32.gmra.mxu0 %v3622
    %v4566 = vpop.f32.mrf.mxu0
    %v4567 = vadd.f32 %v4358, %v4566
    %4568 = vmatmul.f32.gmra.mxu0 %v3623
    %v4569 = vpop.f32.mrf.mxu0
    %v4570 = vadd.f32 %v4361, %v4569
    %4571 = vmatmul.f32.gmra.mxu0 %v3624
    %v4572 = vpop.f32.mrf.mxu0
    %v4573 = vadd.f32 %v4364, %v4572
    %4574 = vmatmul.f32.gmra.mxu0 %v3625
    %v4575 = vpop.f32.mrf.mxu0
    %v4576 = vadd.f32 %v4367, %v4575
    %4577 = vmatmul.f32.gmra.mxu0 %v3626
    %v4578 = vpop.f32.mrf.mxu0
    %v4579 = vadd.f32 %v4370, %v4578
    %4580 = vmatmul.f32.gmra.mxu0 %v3627
    %v4581 = vpop.f32.mrf.mxu0
    %v4582 = vadd.f32 %v4373, %v4581
    %4583 = vmatmul.f32.gmra.mxu0 %v3628
    %v4584 = vpop.f32.mrf.mxu0
    %v4585 = vadd.f32 %v4376, %v4584
    %4586 = vmatmul.f32.gmra.mxu0 %v3629
    %v4587 = vpop.f32.mrf.mxu0
    %v4588 = vadd.f32 %v4379, %v4587
    %4589 = vmatmul.f32.gmra.mxu0 %v3630
    %v4590 = vpop.f32.mrf.mxu0
    %v4591 = vadd.f32 %v4382, %v4590
    %4592 = vmatmul.f32.gmra.mxu0 %v3631
    %v4593 = vpop.f32.mrf.mxu0
    %v4594 = vadd.f32 %v4385, %v4593
    %4595 = vmatmul.f32.gmra.mxu0 %v3632
    %v4596 = vpop.f32.mrf.mxu0
    %v4597 = vadd.f32 %v4388, %v4596
    %4598 = vmatmul.f32.gmra.mxu0 %v3633
    %v4599 = vpop.f32.mrf.mxu0
    %v4600 = vadd.f32 %v4391, %v4599
    %4601 = vmatmul.f32.gmra.mxu0 %v3634
    %v4602 = vpop.f32.mrf.mxu0
    %v4603 = vadd.f32 %v4394, %v4602
    %4604 = vmatmul.f32.gmra.mxu0 %v3635
    %v4605 = vpop.f32.mrf.mxu0
    %v4606 = vadd.f32 %v4397, %v4605
    %4607 = vmatmul.f32.gmra.mxu0 %v3636
    %v4608 = vpop.f32.mrf.mxu0
    %v4609 = vadd.f32 %v4400, %v4608
    %4610 = vmatmul.f32.gmra.mxu0 %v3637
    %v4611 = vpop.f32.mrf.mxu0
    %v4612 = vadd.f32 %v4403, %v4611
    %4613 = vmatmul.f32.gmra.mxu0 %v3638
    %v4614 = vpop.f32.mrf.mxu0
    %v4615 = vadd.f32 %v4406, %v4614
    %4616 = vmatmul.f32.gmra.mxu0 %v3639
    %v4617 = vpop.f32.mrf.mxu0
    %v4618 = vadd.f32 %v4409, %v4617
    %4619 = vmatmul.f32.gmra.mxu0 %v3640
    %v4620 = vpop.f32.mrf.mxu0
    %v4621 = vadd.f32 %v4412, %v4620
    %4622 = vmatmul.f32.gmra.mxu0 %v3641
    %v4623 = vpop.f32.mrf.mxu0
    %v4624 = vadd.f32 %v4415, %v4623
    %4625 = vmatmul.f32.gmra.mxu0 %v3642
    %v4626 = vpop.f32.mrf.mxu0
    %v4627 = vadd.f32 %v4418, %v4626
    %4628 = vmatmul.f32.gmra.mxu0 %v3643
    %v4629 = vpop.f32.mrf.mxu0
    %v4630 = vadd.f32 %v4421, %v4629
    %4631 = vmatmul.f32.gmra.mxu0 %v3644
    %v4632 = vpop.f32.mrf.mxu0
    %v4633 = vadd.f32 %v4424, %v4632
    %4634 = vmatmul.f32.gmra.mxu0 %v3645
    %v4635 = vpop.f32.mrf.mxu0
    %v4636 = vadd.f32 %v4427, %v4635
    %4637 = vmatmul.f32.gmra.mxu0 %v3646
    %v4638 = vpop.f32.mrf.mxu0
    %v4639 = vadd.f32 %v4430, %v4638
    %4640 = vmatmul.f32.gmra.mxu0 %v3647
    %v4641 = vpop.f32.mrf.mxu0
    %v4642 = vadd.f32 %v4433, %v4641
    %4643 = vmatmul.f32.gmra.mxu0 %v3648
    %v4644 = vpop.f32.mrf.mxu0
    %v4645 = vadd.f32 %v4436, %v4644
    %4646 = vmatmul.f32.gmra.mxu0 %v3649
    %v4647 = vpop.f32.mrf.mxu0
    %v4648 = vadd.f32 %v4439, %v4647
    %4649 = vmatmul.f32.gmra.mxu0 %v3650
    %v4650 = vpop.f32.mrf.mxu0
    %v4651 = vadd.f32 %v4442, %v4650
    %4652 = vmatmul.f32.gmra.mxu0 %v3651
    %v4653 = vpop.f32.mrf.mxu0
    %v4654 = vadd.f32 %v4445, %v4653
    %4655 = vmatmul.f32.gmra.mxu0 %v3652
    %v4656 = vpop.f32.mrf.mxu0
    %v4657 = vadd.f32 %v4448, %v4656
    %4658 = vmatmul.f32.gmra.mxu0 %v3653
    %v4659 = vpop.f32.mrf.mxu0
    %v4660 = vadd.f32 %v4451, %v4659
    %4661 = vmatmul.f32.gmra.mxu0 %v3654
    %v4662 = vpop.f32.mrf.mxu0
    %v4663 = vadd.f32 %v4454, %v4662
    %4664 = vdwg.mxu0
    %4665 = vmatpush.msra.mxu0 %v4150
    %4666 = vmatpush.msra.mxu0 %v4149
    %4667 = vmatpush.msra.mxu0 %v4148
    %4668 = vmatpush.msra.mxu0 %v4147
    %4669 = vmatpush.msra.mxu0 %v4146
    %4670 = vmatpush.msra.mxu0 %v4145
    %4671 = vmatpush.msra.mxu0 %v4144
    %4672 = vmatpush.msra.mxu0 %v4143
    %4673 = vmatpush.msra.mxu0 %v4142
    %4674 = vmatpush.msra.mxu0 %v4141
    %4675 = vmatpush.msra.mxu0 %v4140
    %4676 = vmatpush.msra.mxu0 %v4139
    %4677 = vmatpush.msra.mxu0 %v4138
    %4678 = vmatpush.msra.mxu0 %v4137
    %4679 = vmatpush.msra.mxu0 %v4136
    %4680 = vmatpush.msra.mxu0 %v4135
    %4681 = vmatmul.f32.gmra.mxu0 %v3655
    %v4682 = vpop.f32.mrf.mxu0
    %v4683 = vadd.f32 %v4474, %v4682
    %4684 = vmatmul.f32.gmra.mxu0 %v3656
    %v4685 = vpop.f32.mrf.mxu0
    %v4686 = vadd.f32 %v4477, %v4685
    %4687 = vmatmul.f32.gmra.mxu0 %v3657
    %v4688 = vpop.f32.mrf.mxu0
    %v4689 = vadd.f32 %v4480, %v4688
    %4690 = vmatmul.f32.gmra.mxu0 %v3658
    %v4691 = vpop.f32.mrf.mxu0
    %v4692 = vadd.f32 %v4483, %v4691
    %4693 = vmatmul.f32.gmra.mxu0 %v3659
    %v4694 = vpop.f32.mrf.mxu0
    %v4695 = vadd.f32 %v4486, %v4694
    %4696 = vmatmul.f32.gmra.mxu0 %v3660
    %v4697 = vpop.f32.mrf.mxu0
    %v4698 = vadd.f32 %v4489, %v4697
    %4699 = vmatmul.f32.gmra.mxu0 %v3661
    %v4700 = vpop.f32.mrf.mxu0
    %v4701 = vadd.f32 %v4492, %v4700
    %4702 = vmatmul.f32.gmra.mxu0 %v3662
    %v4703 = vpop.f32.mrf.mxu0
    %v4704 = vadd.f32 %v4495, %v4703
    %4705 = vmatmul.f32.gmra.mxu0 %v3663
    %v4706 = vpop.f32.mrf.mxu0
    %v4707 = vadd.f32 %v4498, %v4706
    %4708 = vmatmul.f32.gmra.mxu0 %v3664
    %v4709 = vpop.f32.mrf.mxu0
    %v4710 = vadd.f32 %v4501, %v4709
    %4711 = vmatmul.f32.gmra.mxu0 %v3665
    %v4712 = vpop.f32.mrf.mxu0
    %v4713 = vadd.f32 %v4504, %v4712
    %4714 = vmatmul.f32.gmra.mxu0 %v3666
    %v4715 = vpop.f32.mrf.mxu0
    %v4716 = vadd.f32 %v4507, %v4715
    %4717 = vmatmul.f32.gmra.mxu0 %v3667
    %v4718 = vpop.f32.mrf.mxu0
    %v4719 = vadd.f32 %v4510, %v4718
    %4720 = vmatmul.f32.gmra.mxu0 %v3668
    %v4721 = vpop.f32.mrf.mxu0
    %v4722 = vadd.f32 %v4513, %v4721
    %4723 = vmatmul.f32.gmra.mxu0 %v3669
    %v4724 = vpop.f32.mrf.mxu0
    %v4725 = vadd.f32 %v4516, %v4724
    %4726 = vmatmul.f32.gmra.mxu0 %v3670
    %v4727 = vpop.f32.mrf.mxu0
    %v4728 = vadd.f32 %v4519, %v4727
    %4729 = vmatmul.f32.gmra.mxu0 %v3671
    %v4730 = vpop.f32.mrf.mxu0
    %v4731 = vadd.f32 %v4522, %v4730
    %4732 = vmatmul.f32.gmra.mxu0 %v3672
    %v4733 = vpop.f32.mrf.mxu0
    %v4734 = vadd.f32 %v4525, %v4733
    %4735 = vmatmul.f32.gmra.mxu0 %v3673
    %v4736 = vpop.f32.mrf.mxu0
    %v4737 = vadd.f32 %v4528, %v4736
    %4738 = vmatmul.f32.gmra.mxu0 %v3674
    %v4739 = vpop.f32.mrf.mxu0
    %v4740 = vadd.f32 %v4531, %v4739
    %4741 = vmatmul.f32.gmra.mxu0 %v3675
    %v4742 = vpop.f32.mrf.mxu0
    %v4743 = vadd.f32 %v4534, %v4742
    %4744 = vmatmul.f32.gmra.mxu0 %v3676
    %v4745 = vpop.f32.mrf.mxu0
    %v4746 = vadd.f32 %v4537, %v4745
    %4747 = vmatmul.f32.gmra.mxu0 %v3677
    %v4748 = vpop.f32.mrf.mxu0
    %v4749 = vadd.f32 %v4540, %v4748
    %4750 = vmatmul.f32.gmra.mxu0 %v3678
    %v4751 = vpop.f32.mrf.mxu0
    %v4752 = vadd.f32 %v4543, %v4751
    %4753 = vmatmul.f32.gmra.mxu0 %v3679
    %v4754 = vpop.f32.mrf.mxu0
    %v4755 = vadd.f32 %v4546, %v4754
    %4756 = vmatmul.f32.gmra.mxu0 %v3680
    %v4757 = vpop.f32.mrf.mxu0
    %v4758 = vadd.f32 %v4549, %v4757
    %4759 = vmatmul.f32.gmra.mxu0 %v3681
    %v4760 = vpop.f32.mrf.mxu0
    %v4761 = vadd.f32 %v4552, %v4760
    %4762 = vmatmul.f32.gmra.mxu0 %v3682
    %v4763 = vpop.f32.mrf.mxu0
    %v4764 = vadd.f32 %v4555, %v4763
    %4765 = vmatmul.f32.gmra.mxu0 %v3683
    %v4766 = vpop.f32.mrf.mxu0
    %v4767 = vadd.f32 %v4558, %v4766
    %4768 = vmatmul.f32.gmra.mxu0 %v3684
    %v4769 = vpop.f32.mrf.mxu0
    %v4770 = vadd.f32 %v4561, %v4769
    %4771 = vmatmul.f32.gmra.mxu0 %v3685
    %v4772 = vpop.f32.mrf.mxu0
    %v4773 = vadd.f32 %v4564, %v4772
    %4774 = vmatmul.f32.gmra.mxu0 %v3686
    %v4775 = vpop.f32.mrf.mxu0
    %v4776 = vadd.f32 %v4567, %v4775
    %4777 = vmatmul.f32.gmra.mxu0 %v3687
    %v4778 = vpop.f32.mrf.mxu0
    %v4779 = vadd.f32 %v4570, %v4778
    %4780 = vmatmul.f32.gmra.mxu0 %v3688
    %v4781 = vpop.f32.mrf.mxu0
    %v4782 = vadd.f32 %v4573, %v4781
    %4783 = vmatmul.f32.gmra.mxu0 %v3689
    %v4784 = vpop.f32.mrf.mxu0
    %v4785 = vadd.f32 %v4576, %v4784
    %4786 = vmatmul.f32.gmra.mxu0 %v3690
    %v4787 = vpop.f32.mrf.mxu0
    %v4788 = vadd.f32 %v4579, %v4787
    %4789 = vmatmul.f32.gmra.mxu0 %v3691
    %v4790 = vpop.f32.mrf.mxu0
    %v4791 = vadd.f32 %v4582, %v4790
    %4792 = vmatmul.f32.gmra.mxu0 %v3692
    %v4793 = vpop.f32.mrf.mxu0
    %v4794 = vadd.f32 %v4585, %v4793
    %4795 = vmatmul.f32.gmra.mxu0 %v3693
    %v4796 = vpop.f32.mrf.mxu0
    %v4797 = vadd.f32 %v4588, %v4796
    %4798 = vmatmul.f32.gmra.mxu0 %v3694
    %v4799 = vpop.f32.mrf.mxu0
    %v4800 = vadd.f32 %v4591, %v4799
    %4801 = vmatmul.f32.gmra.mxu0 %v3695
    %v4802 = vpop.f32.mrf.mxu0
    %v4803 = vadd.f32 %v4594, %v4802
    %4804 = vmatmul.f32.gmra.mxu0 %v3696
    %v4805 = vpop.f32.mrf.mxu0
    %v4806 = vadd.f32 %v4597, %v4805
    %4807 = vmatmul.f32.gmra.mxu0 %v3697
    %v4808 = vpop.f32.mrf.mxu0
    %v4809 = vadd.f32 %v4600, %v4808
    %4810 = vmatmul.f32.gmra.mxu0 %v3698
    %v4811 = vpop.f32.mrf.mxu0
    %v4812 = vadd.f32 %v4603, %v4811
    %4813 = vmatmul.f32.gmra.mxu0 %v3699
    %v4814 = vpop.f32.mrf.mxu0
    %v4815 = vadd.f32 %v4606, %v4814
    %4816 = vmatmul.f32.gmra.mxu0 %v3700
    %v4817 = vpop.f32.mrf.mxu0
    %v4818 = vadd.f32 %v4609, %v4817
    %4819 = vmatmul.f32.gmra.mxu0 %v3701
    %v4820 = vpop.f32.mrf.mxu0
    %v4821 = vadd.f32 %v4612, %v4820
    %4822 = vmatmul.f32.gmra.mxu0 %v3702
    %v4823 = vpop.f32.mrf.mxu0
    %v4824 = vadd.f32 %v4615, %v4823
    %4825 = vmatmul.f32.gmra.mxu0 %v3703
    %v4826 = vpop.f32.mrf.mxu0
    %v4827 = vadd.f32 %v4618, %v4826
    %4828 = vmatmul.f32.gmra.mxu0 %v3704
    %v4829 = vpop.f32.mrf.mxu0
    %v4830 = vadd.f32 %v4621, %v4829
    %4831 = vmatmul.f32.gmra.mxu0 %v3705
    %v4832 = vpop.f32.mrf.mxu0
    %v4833 = vadd.f32 %v4624, %v4832
    %4834 = vmatmul.f32.gmra.mxu0 %v3706
    %v4835 = vpop.f32.mrf.mxu0
    %v4836 = vadd.f32 %v4627, %v4835
    %4837 = vmatmul.f32.gmra.mxu0 %v3707
    %v4838 = vpop.f32.mrf.mxu0
    %v4839 = vadd.f32 %v4630, %v4838
    %4840 = vmatmul.f32.gmra.mxu0 %v3708
    %v4841 = vpop.f32.mrf.mxu0
    %v4842 = vadd.f32 %v4633, %v4841
    %4843 = vmatmul.f32.gmra.mxu0 %v3709
    %v4844 = vpop.f32.mrf.mxu0
    %v4845 = vadd.f32 %v4636, %v4844
    %4846 = vmatmul.f32.gmra.mxu0 %v3710
    %v4847 = vpop.f32.mrf.mxu0
    %v4848 = vadd.f32 %v4639, %v4847
    %4849 = vmatmul.f32.gmra.mxu0 %v3711
    %v4850 = vpop.f32.mrf.mxu0
    %v4851 = vadd.f32 %v4642, %v4850
    %4852 = vmatmul.f32.gmra.mxu0 %v3712
    %v4853 = vpop.f32.mrf.mxu0
    %v4854 = vadd.f32 %v4645, %v4853
    %4855 = vmatmul.f32.gmra.mxu0 %v3713
    %v4856 = vpop.f32.mrf.mxu0
    %v4857 = vadd.f32 %v4648, %v4856
    %4858 = vmatmul.f32.gmra.mxu0 %v3714
    %v4859 = vpop.f32.mrf.mxu0
    %v4860 = vadd.f32 %v4651, %v4859
    %4861 = vmatmul.f32.gmra.mxu0 %v3715
    %v4862 = vpop.f32.mrf.mxu0
    %v4863 = vadd.f32 %v4654, %v4862
    %4864 = vmatmul.f32.gmra.mxu0 %v3716
    %v4865 = vpop.f32.mrf.mxu0
    %v4866 = vadd.f32 %v4657, %v4865
    %4867 = vmatmul.f32.gmra.mxu0 %v3717
    %v4868 = vpop.f32.mrf.mxu0
    %v4869 = vadd.f32 %v4660, %v4868
    %4870 = vmatmul.f32.gmra.mxu0 %v3718
    %v4871 = vpop.f32.mrf.mxu0
    %v4872 = vadd.f32 %v4663, %v4871
    %4873 = vdwg.mxu0
    %4874 = vmatpush.msra.mxu0 %v4166
    %4875 = vmatpush.msra.mxu0 %v4165
    %4876 = vmatpush.msra.mxu0 %v4164
    %4877 = vmatpush.msra.mxu0 %v4163
    %4878 = vmatpush.msra.mxu0 %v4162
    %4879 = vmatpush.msra.mxu0 %v4161
    %4880 = vmatpush.msra.mxu0 %v4160
    %4881 = vmatpush.msra.mxu0 %v4159
    %4882 = vmatpush.msra.mxu0 %v4158
    %4883 = vmatpush.msra.mxu0 %v4157
    %4884 = vmatpush.msra.mxu0 %v4156
    %4885 = vmatpush.msra.mxu0 %v4155
    %4886 = vmatpush.msra.mxu0 %v4154
    %4887 = vmatpush.msra.mxu0 %v4153
    %4888 = vmatpush.msra.mxu0 %v4152
    %4889 = vmatpush.msra.mxu0 %v4151
    %4890 = vmatmul.f32.gmra.mxu0 %v3719
    %v4891 = vpop.f32.mrf.mxu0
    %v4892 = vadd.f32 %v4683, %v4891
    %4893 = vmatmul.f32.gmra.mxu0 %v3720
    %v4894 = vpop.f32.mrf.mxu0
    %v4895 = vadd.f32 %v4686, %v4894
    %4896 = vmatmul.f32.gmra.mxu0 %v3721
    %v4897 = vpop.f32.mrf.mxu0
    %v4898 = vadd.f32 %v4689, %v4897
    %4899 = vmatmul.f32.gmra.mxu0 %v3722
    %v4900 = vpop.f32.mrf.mxu0
    %v4901 = vadd.f32 %v4692, %v4900
    %4902 = vmatmul.f32.gmra.mxu0 %v3723
    %v4903 = vpop.f32.mrf.mxu0
    %v4904 = vadd.f32 %v4695, %v4903
    %4905 = vmatmul.f32.gmra.mxu0 %v3724
    %v4906 = vpop.f32.mrf.mxu0
    %v4907 = vadd.f32 %v4698, %v4906
    %4908 = vmatmul.f32.gmra.mxu0 %v3725
    %v4909 = vpop.f32.mrf.mxu0
    %v4910 = vadd.f32 %v4701, %v4909
    %4911 = vmatmul.f32.gmra.mxu0 %v3726
    %v4912 = vpop.f32.mrf.mxu0
    %v4913 = vadd.f32 %v4704, %v4912
    %4914 = vmatmul.f32.gmra.mxu0 %v3727
    %v4915 = vpop.f32.mrf.mxu0
    %v4916 = vadd.f32 %v4707, %v4915
    %4917 = vmatmul.f32.gmra.mxu0 %v3728
    %v4918 = vpop.f32.mrf.mxu0
    %v4919 = vadd.f32 %v4710, %v4918
    %4920 = vmatmul.f32.gmra.mxu0 %v3729
    %v4921 = vpop.f32.mrf.mxu0
    %v4922 = vadd.f32 %v4713, %v4921
    %4923 = vmatmul.f32.gmra.mxu0 %v3730
    %v4924 = vpop.f32.mrf.mxu0
    %v4925 = vadd.f32 %v4716, %v4924
    %4926 = vmatmul.f32.gmra.mxu0 %v3731
    %v4927 = vpop.f32.mrf.mxu0
    %v4928 = vadd.f32 %v4719, %v4927
    %4929 = vmatmul.f32.gmra.mxu0 %v3732
    %v4930 = vpop.f32.mrf.mxu0
    %v4931 = vadd.f32 %v4722, %v4930
    %4932 = vmatmul.f32.gmra.mxu0 %v3733
    %v4933 = vpop.f32.mrf.mxu0
    %v4934 = vadd.f32 %v4725, %v4933
    %4935 = vmatmul.f32.gmra.mxu0 %v3734
    %v4936 = vpop.f32.mrf.mxu0
    %v4937 = vadd.f32 %v4728, %v4936
    %4938 = vmatmul.f32.gmra.mxu0 %v3735
    %v4939 = vpop.f32.mrf.mxu0
    %v4940 = vadd.f32 %v4731, %v4939
    %4941 = vmatmul.f32.gmra.mxu0 %v3736
    %v4942 = vpop.f32.mrf.mxu0
    %v4943 = vadd.f32 %v4734, %v4942
    %4944 = vmatmul.f32.gmra.mxu0 %v3737
    %v4945 = vpop.f32.mrf.mxu0
    %v4946 = vadd.f32 %v4737, %v4945
    %4947 = vmatmul.f32.gmra.mxu0 %v3738
    %v4948 = vpop.f32.mrf.mxu0
    %v4949 = vadd.f32 %v4740, %v4948
    %4950 = vmatmul.f32.gmra.mxu0 %v3739
    %v4951 = vpop.f32.mrf.mxu0
    %v4952 = vadd.f32 %v4743, %v4951
    %4953 = vmatmul.f32.gmra.mxu0 %v3740
    %v4954 = vpop.f32.mrf.mxu0
    %v4955 = vadd.f32 %v4746, %v4954
    %4956 = vmatmul.f32.gmra.mxu0 %v3741
    %v4957 = vpop.f32.mrf.mxu0
    %v4958 = vadd.f32 %v4749, %v4957
    %4959 = vmatmul.f32.gmra.mxu0 %v3742
    %v4960 = vpop.f32.mrf.mxu0
    %v4961 = vadd.f32 %v4752, %v4960
    %4962 = vmatmul.f32.gmra.mxu0 %v3743
    %v4963 = vpop.f32.mrf.mxu0
    %v4964 = vadd.f32 %v4755, %v4963
    %4965 = vmatmul.f32.gmra.mxu0 %v3744
    %v4966 = vpop.f32.mrf.mxu0
    %v4967 = vadd.f32 %v4758, %v4966
    %4968 = vmatmul.f32.gmra.mxu0 %v3745
    %v4969 = vpop.f32.mrf.mxu0
    %v4970 = vadd.f32 %v4761, %v4969
    %4971 = vmatmul.f32.gmra.mxu0 %v3746
    %v4972 = vpop.f32.mrf.mxu0
    %v4973 = vadd.f32 %v4764, %v4972
    %4974 = vmatmul.f32.gmra.mxu0 %v3747
    %v4975 = vpop.f32.mrf.mxu0
    %v4976 = vadd.f32 %v4767, %v4975
    %4977 = vmatmul.f32.gmra.mxu0 %v3748
    %v4978 = vpop.f32.mrf.mxu0
    %v4979 = vadd.f32 %v4770, %v4978
    %4980 = vmatmul.f32.gmra.mxu0 %v3749
    %v4981 = vpop.f32.mrf.mxu0
    %v4982 = vadd.f32 %v4773, %v4981
    %4983 = vmatmul.f32.gmra.mxu0 %v3750
    %v4984 = vpop.f32.mrf.mxu0
    %v4985 = vadd.f32 %v4776, %v4984
    %4986 = vmatmul.f32.gmra.mxu0 %v3751
    %v4987 = vpop.f32.mrf.mxu0
    %v4988 = vadd.f32 %v4779, %v4987
    %4989 = vmatmul.f32.gmra.mxu0 %v3752
    %v4990 = vpop.f32.mrf.mxu0
    %v4991 = vadd.f32 %v4782, %v4990
    %4992 = vmatmul.f32.gmra.mxu0 %v3753
    %v4993 = vpop.f32.mrf.mxu0
    %v4994 = vadd.f32 %v4785, %v4993
    %4995 = vmatmul.f32.gmra.mxu0 %v3754
    %v4996 = vpop.f32.mrf.mxu0
    %v4997 = vadd.f32 %v4788, %v4996
    %4998 = vmatmul.f32.gmra.mxu0 %v3755
    %v4999 = vpop.f32.mrf.mxu0
    %v5000 = vadd.f32 %v4791, %v4999
    %5001 = vmatmul.f32.gmra.mxu0 %v3756
    %v5002 = vpop.f32.mrf.mxu0
    %v5003 = vadd.f32 %v4794, %v5002
    %5004 = vmatmul.f32.gmra.mxu0 %v3757
    %v5005 = vpop.f32.mrf.mxu0
    %v5006 = vadd.f32 %v4797, %v5005
    %5007 = vmatmul.f32.gmra.mxu0 %v3758
    %v5008 = vpop.f32.mrf.mxu0
    %v5009 = vadd.f32 %v4800, %v5008
    %5010 = vmatmul.f32.gmra.mxu0 %v3759
    %v5011 = vpop.f32.mrf.mxu0
    %v5012 = vadd.f32 %v4803, %v5011
    %5013 = vmatmul.f32.gmra.mxu0 %v3760
    %v5014 = vpop.f32.mrf.mxu0
    %v5015 = vadd.f32 %v4806, %v5014
    %5016 = vmatmul.f32.gmra.mxu0 %v3761
    %v5017 = vpop.f32.mrf.mxu0
    %v5018 = vadd.f32 %v4809, %v5017
    %5019 = vmatmul.f32.gmra.mxu0 %v3762
    %v5020 = vpop.f32.mrf.mxu0
    %v5021 = vadd.f32 %v4812, %v5020
    %5022 = vmatmul.f32.gmra.mxu0 %v3763
    %v5023 = vpop.f32.mrf.mxu0
    %v5024 = vadd.f32 %v4815, %v5023
    %5025 = vmatmul.f32.gmra.mxu0 %v3764
    %v5026 = vpop.f32.mrf.mxu0
    %v5027 = vadd.f32 %v4818, %v5026
    %5028 = vmatmul.f32.gmra.mxu0 %v3765
    %v5029 = vpop.f32.mrf.mxu0
    %v5030 = vadd.f32 %v4821, %v5029
    %5031 = vmatmul.f32.gmra.mxu0 %v3766
    %v5032 = vpop.f32.mrf.mxu0
    %v5033 = vadd.f32 %v4824, %v5032
    %5034 = vmatmul.f32.gmra.mxu0 %v3767
    %v5035 = vpop.f32.mrf.mxu0
    %v5036 = vadd.f32 %v4827, %v5035
    %5037 = vmatmul.f32.gmra.mxu0 %v3768
    %v5038 = vpop.f32.mrf.mxu0
    %v5039 = vadd.f32 %v4830, %v5038
    %5040 = vmatmul.f32.gmra.mxu0 %v3769
    %v5041 = vpop.f32.mrf.mxu0
    %v5042 = vadd.f32 %v4833, %v5041
    %5043 = vmatmul.f32.gmra.mxu0 %v3770
    %v5044 = vpop.f32.mrf.mxu0
    %v5045 = vadd.f32 %v4836, %v5044
    %5046 = vmatmul.f32.gmra.mxu0 %v3771
    %v5047 = vpop.f32.mrf.mxu0
    %v5048 = vadd.f32 %v4839, %v5047
    %5049 = vmatmul.f32.gmra.mxu0 %v3772
    %v5050 = vpop.f32.mrf.mxu0
    %v5051 = vadd.f32 %v4842, %v5050
    %5052 = vmatmul.f32.gmra.mxu0 %v3773
    %v5053 = vpop.f32.mrf.mxu0
    %v5054 = vadd.f32 %v4845, %v5053
    %5055 = vmatmul.f32.gmra.mxu0 %v3774
    %v5056 = vpop.f32.mrf.mxu0
    %v5057 = vadd.f32 %v4848, %v5056
    %5058 = vmatmul.f32.gmra.mxu0 %v3775
    %v5059 = vpop.f32.mrf.mxu0
    %v5060 = vadd.f32 %v4851, %v5059
    %5061 = vmatmul.f32.gmra.mxu0 %v3776
    %v5062 = vpop.f32.mrf.mxu0
    %v5063 = vadd.f32 %v4854, %v5062
    %5064 = vmatmul.f32.gmra.mxu0 %v3777
    %v5065 = vpop.f32.mrf.mxu0
    %v5066 = vadd.f32 %v4857, %v5065
    %5067 = vmatmul.f32.gmra.mxu0 %v3778
    %v5068 = vpop.f32.mrf.mxu0
    %v5069 = vadd.f32 %v4860, %v5068
    %5070 = vmatmul.f32.gmra.mxu0 %v3779
    %v5071 = vpop.f32.mrf.mxu0
    %v5072 = vadd.f32 %v4863, %v5071
    %5073 = vmatmul.f32.gmra.mxu0 %v3780
    %v5074 = vpop.f32.mrf.mxu0
    %v5075 = vadd.f32 %v4866, %v5074
    %5076 = vmatmul.f32.gmra.mxu0 %v3781
    %v5077 = vpop.f32.mrf.mxu0
    %v5078 = vadd.f32 %v4869, %v5077
    %5079 = vmatmul.f32.gmra.mxu0 %v3782
    %v5080 = vpop.f32.mrf.mxu0
    %v5081 = vadd.f32 %v4872, %v5080
    %5082 = vdwg.mxu0
    %5083 = vmatpush.msra.mxu0 %v4182
    %5084 = vmatpush.msra.mxu0 %v4181
    %5085 = vmatpush.msra.mxu0 %v4180
    %5086 = vmatpush.msra.mxu0 %v4179
    %5087 = vmatpush.msra.mxu0 %v4178
    %5088 = vmatpush.msra.mxu0 %v4177
    %5089 = vmatpush.msra.mxu0 %v4176
    %5090 = vmatpush.msra.mxu0 %v4175
    %5091 = vmatpush.msra.mxu0 %v4174
    %5092 = vmatpush.msra.mxu0 %v4173
    %5093 = vmatpush.msra.mxu0 %v4172
    %5094 = vmatpush.msra.mxu0 %v4171
    %5095 = vmatpush.msra.mxu0 %v4170
    %5096 = vmatpush.msra.mxu0 %v4169
    %5097 = vmatpush.msra.mxu0 %v4168
    %5098 = vmatpush.msra.mxu0 %v4167
    %5099 = vmatmul.f32.gmra.mxu0 %v3783
    %v5100 = vpop.f32.mrf.mxu0
    %v5101 = vadd.f32 %v4892, %v5100
    %5102 = vmatmul.f32.gmra.mxu0 %v3784
    %v5103 = vpop.f32.mrf.mxu0
    %v5104 = vadd.f32 %v4895, %v5103
    %5105 = vmatmul.f32.gmra.mxu0 %v3785
    %v5106 = vpop.f32.mrf.mxu0
    %v5107 = vadd.f32 %v4898, %v5106
    %5108 = vmatmul.f32.gmra.mxu0 %v3786
    %v5109 = vpop.f32.mrf.mxu0
    %v5110 = vadd.f32 %v4901, %v5109
    %5111 = vmatmul.f32.gmra.mxu0 %v3787
    %v5112 = vpop.f32.mrf.mxu0
    %v5113 = vadd.f32 %v4904, %v5112
    %5114 = vmatmul.f32.gmra.mxu0 %v3788
    %v5115 = vpop.f32.mrf.mxu0
    %v5116 = vadd.f32 %v4907, %v5115
    %5117 = vmatmul.f32.gmra.mxu0 %v3789
    %v5118 = vpop.f32.mrf.mxu0
    %v5119 = vadd.f32 %v4910, %v5118
    %5120 = vmatmul.f32.gmra.mxu0 %v3790
    %v5121 = vpop.f32.mrf.mxu0
    %v5122 = vadd.f32 %v4913, %v5121
    %5123 = vmatmul.f32.gmra.mxu0 %v3791
    %v5124 = vpop.f32.mrf.mxu0
    %v5125 = vadd.f32 %v4916, %v5124
    %5126 = vmatmul.f32.gmra.mxu0 %v3792
    %v5127 = vpop.f32.mrf.mxu0
    %v5128 = vadd.f32 %v4919, %v5127
    %5129 = vmatmul.f32.gmra.mxu0 %v3793
    %v5130 = vpop.f32.mrf.mxu0
    %v5131 = vadd.f32 %v4922, %v5130
    %5132 = vmatmul.f32.gmra.mxu0 %v3794
    %v5133 = vpop.f32.mrf.mxu0
    %v5134 = vadd.f32 %v4925, %v5133
    %5135 = vmatmul.f32.gmra.mxu0 %v3795
    %v5136 = vpop.f32.mrf.mxu0
    %v5137 = vadd.f32 %v4928, %v5136
    %5138 = vmatmul.f32.gmra.mxu0 %v3796
    %v5139 = vpop.f32.mrf.mxu0
    %v5140 = vadd.f32 %v4931, %v5139
    %5141 = vmatmul.f32.gmra.mxu0 %v3797
    %v5142 = vpop.f32.mrf.mxu0
    %v5143 = vadd.f32 %v4934, %v5142
    %5144 = vmatmul.f32.gmra.mxu0 %v3798
    %v5145 = vpop.f32.mrf.mxu0
    %v5146 = vadd.f32 %v4937, %v5145
    %5147 = vmatmul.f32.gmra.mxu0 %v3799
    %v5148 = vpop.f32.mrf.mxu0
    %v5149 = vadd.f32 %v4940, %v5148
    %5150 = vmatmul.f32.gmra.mxu0 %v3800
    %v5151 = vpop.f32.mrf.mxu0
    %v5152 = vadd.f32 %v4943, %v5151
    %5153 = vmatmul.f32.gmra.mxu0 %v3801
    %v5154 = vpop.f32.mrf.mxu0
    %v5155 = vadd.f32 %v4946, %v5154
    %5156 = vmatmul.f32.gmra.mxu0 %v3802
    %v5157 = vpop.f32.mrf.mxu0
    %v5158 = vadd.f32 %v4949, %v5157
    %5159 = vmatmul.f32.gmra.mxu0 %v3803
    %v5160 = vpop.f32.mrf.mxu0
    %v5161 = vadd.f32 %v4952, %v5160
    %5162 = vmatmul.f32.gmra.mxu0 %v3804
    %v5163 = vpop.f32.mrf.mxu0
    %v5164 = vadd.f32 %v4955, %v5163
    %5165 = vmatmul.f32.gmra.mxu0 %v3805
    %v5166 = vpop.f32.mrf.mxu0
    %v5167 = vadd.f32 %v4958, %v5166
    %5168 = vmatmul.f32.gmra.mxu0 %v3806
    %v5169 = vpop.f32.mrf.mxu0
    %v5170 = vadd.f32 %v4961, %v5169
    %5171 = vmatmul.f32.gmra.mxu0 %v3807
    %v5172 = vpop.f32.mrf.mxu0
    %v5173 = vadd.f32 %v4964, %v5172
    %5174 = vmatmul.f32.gmra.mxu0 %v3808
    %v5175 = vpop.f32.mrf.mxu0
    %v5176 = vadd.f32 %v4967, %v5175
    %5177 = vmatmul.f32.gmra.mxu0 %v3809
    %v5178 = vpop.f32.mrf.mxu0
    %v5179 = vadd.f32 %v4970, %v5178
    %5180 = vmatmul.f32.gmra.mxu0 %v3810
    %v5181 = vpop.f32.mrf.mxu0
    %v5182 = vadd.f32 %v4973, %v5181
    %5183 = vmatmul.f32.gmra.mxu0 %v3811
    %v5184 = vpop.f32.mrf.mxu0
    %v5185 = vadd.f32 %v4976, %v5184
    %5186 = vmatmul.f32.gmra.mxu0 %v3812
    %v5187 = vpop.f32.mrf.mxu0
    %v5188 = vadd.f32 %v4979, %v5187
    %5189 = vmatmul.f32.gmra.mxu0 %v3813
    %v5190 = vpop.f32.mrf.mxu0
    %v5191 = vadd.f32 %v4982, %v5190
    %5192 = vmatmul.f32.gmra.mxu0 %v3814
    %v5193 = vpop.f32.mrf.mxu0
    %v5194 = vadd.f32 %v4985, %v5193
    %5195 = vmatmul.f32.gmra.mxu0 %v3815
    %v5196 = vpop.f32.mrf.mxu0
    %v5197 = vadd.f32 %v4988, %v5196
    %5198 = vmatmul.f32.gmra.mxu0 %v3816
    %v5199 = vpop.f32.mrf.mxu0
    %v5200 = vadd.f32 %v4991, %v5199
    %5201 = vmatmul.f32.gmra.mxu0 %v3817
    %v5202 = vpop.f32.mrf.mxu0
    %v5203 = vadd.f32 %v4994, %v5202
    %5204 = vmatmul.f32.gmra.mxu0 %v3818
    %v5205 = vpop.f32.mrf.mxu0
    %v5206 = vadd.f32 %v4997, %v5205
    %5207 = vmatmul.f32.gmra.mxu0 %v3819
    %v5208 = vpop.f32.mrf.mxu0
    %v5209 = vadd.f32 %v5000, %v5208
    %5210 = vmatmul.f32.gmra.mxu0 %v3820
    %v5211 = vpop.f32.mrf.mxu0
    %v5212 = vadd.f32 %v5003, %v5211
    %5213 = vmatmul.f32.gmra.mxu0 %v3821
    %v5214 = vpop.f32.mrf.mxu0
    %v5215 = vadd.f32 %v5006, %v5214
    %5216 = vmatmul.f32.gmra.mxu0 %v3822
    %v5217 = vpop.f32.mrf.mxu0
    %v5218 = vadd.f32 %v5009, %v5217
    %5219 = vmatmul.f32.gmra.mxu0 %v3823
    %v5220 = vpop.f32.mrf.mxu0
    %v5221 = vadd.f32 %v5012, %v5220
    %5222 = vmatmul.f32.gmra.mxu0 %v3824
    %v5223 = vpop.f32.mrf.mxu0
    %v5224 = vadd.f32 %v5015, %v5223
    %5225 = vmatmul.f32.gmra.mxu0 %v3825
    %v5226 = vpop.f32.mrf.mxu0
    %v5227 = vadd.f32 %v5018, %v5226
    %5228 = vmatmul.f32.gmra.mxu0 %v3826
    %v5229 = vpop.f32.mrf.mxu0
    %v5230 = vadd.f32 %v5021, %v5229
    %5231 = vmatmul.f32.gmra.mxu0 %v3827
    %v5232 = vpop.f32.mrf.mxu0
    %v5233 = vadd.f32 %v5024, %v5232
    %5234 = vmatmul.f32.gmra.mxu0 %v3828
    %v5235 = vpop.f32.mrf.mxu0
    %v5236 = vadd.f32 %v5027, %v5235
    %5237 = vmatmul.f32.gmra.mxu0 %v3829
    %v5238 = vpop.f32.mrf.mxu0
    %v5239 = vadd.f32 %v5030, %v5238
    %5240 = vmatmul.f32.gmra.mxu0 %v3830
    %v5241 = vpop.f32.mrf.mxu0
    %v5242 = vadd.f32 %v5033, %v5241
    %5243 = vmatmul.f32.gmra.mxu0 %v3831
    %v5244 = vpop.f32.mrf.mxu0
    %v5245 = vadd.f32 %v5036, %v5244
    %5246 = vmatmul.f32.gmra.mxu0 %v3832
    %v5247 = vpop.f32.mrf.mxu0
    %v5248 = vadd.f32 %v5039, %v5247
    %5249 = vmatmul.f32.gmra.mxu0 %v3833
    %v5250 = vpop.f32.mrf.mxu0
    %v5251 = vadd.f32 %v5042, %v5250
    %5252 = vmatmul.f32.gmra.mxu0 %v3834
    %v5253 = vpop.f32.mrf.mxu0
    %v5254 = vadd.f32 %v5045, %v5253
    %5255 = vmatmul.f32.gmra.mxu0 %v3835
    %v5256 = vpop.f32.mrf.mxu0
    %v5257 = vadd.f32 %v5048, %v5256
    %5258 = vmatmul.f32.gmra.mxu0 %v3836
    %v5259 = vpop.f32.mrf.mxu0
    %v5260 = vadd.f32 %v5051, %v5259
    %5261 = vmatmul.f32.gmra.mxu0 %v3837
    %v5262 = vpop.f32.mrf.mxu0
    %v5263 = vadd.f32 %v5054, %v5262
    %5264 = vmatmul.f32.gmra.mxu0 %v3838
    %v5265 = vpop.f32.mrf.mxu0
    %v5266 = vadd.f32 %v5057, %v5265
    %5267 = vmatmul.f32.gmra.mxu0 %v3839
    %v5268 = vpop.f32.mrf.mxu0
    %v5269 = vadd.f32 %v5060, %v5268
    %5270 = vmatmul.f32.gmra.mxu0 %v3840
    %v5271 = vpop.f32.mrf.mxu0
    %v5272 = vadd.f32 %v5063, %v5271
    %5273 = vmatmul.f32.gmra.mxu0 %v3841
    %v5274 = vpop.f32.mrf.mxu0
    %v5275 = vadd.f32 %v5066, %v5274
    %5276 = vmatmul.f32.gmra.mxu0 %v3842
    %v5277 = vpop.f32.mrf.mxu0
    %v5278 = vadd.f32 %v5069, %v5277
    %5279 = vmatmul.f32.gmra.mxu0 %v3843
    %v5280 = vpop.f32.mrf.mxu0
    %v5281 = vadd.f32 %v5072, %v5280
    %5282 = vmatmul.f32.gmra.mxu0 %v3844
    %v5283 = vpop.f32.mrf.mxu0
    %v5284 = vadd.f32 %v5075, %v5283
    %5285 = vmatmul.f32.gmra.mxu0 %v3845
    %v5286 = vpop.f32.mrf.mxu0
    %v5287 = vadd.f32 %v5078, %v5286
    %5288 = vmatmul.f32.gmra.mxu0 %v3846
    %v5289 = vpop.f32.mrf.mxu0
    %v5290 = vadd.f32 %v5081, %v5289
    %5291 = vdwg.mxu0
    %5292 = vmatpush.msra.mxu0 %v4198
    %5293 = vmatpush.msra.mxu0 %v4197
    %5294 = vmatpush.msra.mxu0 %v4196
    %5295 = vmatpush.msra.mxu0 %v4195
    %5296 = vmatpush.msra.mxu0 %v4194
    %5297 = vmatpush.msra.mxu0 %v4193
    %5298 = vmatpush.msra.mxu0 %v4192
    %5299 = vmatpush.msra.mxu0 %v4191
    %5300 = vmatpush.msra.mxu0 %v4190
    %5301 = vmatpush.msra.mxu0 %v4189
    %5302 = vmatpush.msra.mxu0 %v4188
    %5303 = vmatpush.msra.mxu0 %v4187
    %5304 = vmatpush.msra.mxu0 %v4186
    %5305 = vmatpush.msra.mxu0 %v4185
    %5306 = vmatpush.msra.mxu0 %v4184
    %5307 = vmatpush.msra.mxu0 %v4183
    %5308 = vmatmul.f32.gmra.mxu0 %v3847
    %v5309 = vpop.f32.mrf.mxu0
    %v5310 = vadd.f32 %v5101, %v5309
    %5311 = vmatmul.f32.gmra.mxu0 %v3848
    %v5312 = vpop.f32.mrf.mxu0
    %v5313 = vadd.f32 %v5104, %v5312
    %5314 = vmatmul.f32.gmra.mxu0 %v3849
    %v5315 = vpop.f32.mrf.mxu0
    %v5316 = vadd.f32 %v5107, %v5315
    %5317 = vmatmul.f32.gmra.mxu0 %v3850
    %v5318 = vpop.f32.mrf.mxu0
    %v5319 = vadd.f32 %v5110, %v5318
    %5320 = vmatmul.f32.gmra.mxu0 %v3851
    %v5321 = vpop.f32.mrf.mxu0
    %v5322 = vadd.f32 %v5113, %v5321
    %5323 = vmatmul.f32.gmra.mxu0 %v3852
    %v5324 = vpop.f32.mrf.mxu0
    %v5325 = vadd.f32 %v5116, %v5324
    %5326 = vmatmul.f32.gmra.mxu0 %v3853
    %v5327 = vpop.f32.mrf.mxu0
    %v5328 = vadd.f32 %v5119, %v5327
    %5329 = vmatmul.f32.gmra.mxu0 %v3854
    %v5330 = vpop.f32.mrf.mxu0
    %v5331 = vadd.f32 %v5122, %v5330
    %5332 = vmatmul.f32.gmra.mxu0 %v3855
    %v5333 = vpop.f32.mrf.mxu0
    %v5334 = vadd.f32 %v5125, %v5333
    %5335 = vmatmul.f32.gmra.mxu0 %v3856
    %v5336 = vpop.f32.mrf.mxu0
    %v5337 = vadd.f32 %v5128, %v5336
    %5338 = vmatmul.f32.gmra.mxu0 %v3857
    %v5339 = vpop.f32.mrf.mxu0
    %v5340 = vadd.f32 %v5131, %v5339
    %5341 = vmatmul.f32.gmra.mxu0 %v3858
    %v5342 = vpop.f32.mrf.mxu0
    %v5343 = vadd.f32 %v5134, %v5342
    %5344 = vmatmul.f32.gmra.mxu0 %v3859
    %v5345 = vpop.f32.mrf.mxu0
    %v5346 = vadd.f32 %v5137, %v5345
    %5347 = vmatmul.f32.gmra.mxu0 %v3860
    %v5348 = vpop.f32.mrf.mxu0
    %v5349 = vadd.f32 %v5140, %v5348
    %5350 = vmatmul.f32.gmra.mxu0 %v3861
    %v5351 = vpop.f32.mrf.mxu0
    %v5352 = vadd.f32 %v5143, %v5351
    %5353 = vmatmul.f32.gmra.mxu0 %v3862
    %v5354 = vpop.f32.mrf.mxu0
    %v5355 = vadd.f32 %v5146, %v5354
    %5356 = vmatmul.f32.gmra.mxu0 %v3863
    %v5357 = vpop.f32.mrf.mxu0
    %v5358 = vadd.f32 %v5149, %v5357
    %5359 = vmatmul.f32.gmra.mxu0 %v3864
    %v5360 = vpop.f32.mrf.mxu0
    %v5361 = vadd.f32 %v5152, %v5360
    %5362 = vmatmul.f32.gmra.mxu0 %v3865
    %v5363 = vpop.f32.mrf.mxu0
    %v5364 = vadd.f32 %v5155, %v5363
    %5365 = vmatmul.f32.gmra.mxu0 %v3866
    %v5366 = vpop.f32.mrf.mxu0
    %v5367 = vadd.f32 %v5158, %v5366
    %5368 = vmatmul.f32.gmra.mxu0 %v3867
    %v5369 = vpop.f32.mrf.mxu0
    %v5370 = vadd.f32 %v5161, %v5369
    %5371 = vmatmul.f32.gmra.mxu0 %v3868
    %v5372 = vpop.f32.mrf.mxu0
    %v5373 = vadd.f32 %v5164, %v5372
    %5374 = vmatmul.f32.gmra.mxu0 %v3869
    %v5375 = vpop.f32.mrf.mxu0
    %v5376 = vadd.f32 %v5167, %v5375
    %5377 = vmatmul.f32.gmra.mxu0 %v3870
    %v5378 = vpop.f32.mrf.mxu0
    %v5379 = vadd.f32 %v5170, %v5378
    %5380 = vmatmul.f32.gmra.mxu0 %v3871
    %v5381 = vpop.f32.mrf.mxu0
    %v5382 = vadd.f32 %v5173, %v5381
    %5383 = vmatmul.f32.gmra.mxu0 %v3872
    %v5384 = vpop.f32.mrf.mxu0
    %v5385 = vadd.f32 %v5176, %v5384
    %5386 = vmatmul.f32.gmra.mxu0 %v3873
    %v5387 = vpop.f32.mrf.mxu0
    %v5388 = vadd.f32 %v5179, %v5387
    %5389 = vmatmul.f32.gmra.mxu0 %v3874
    %v5390 = vpop.f32.mrf.mxu0
    %v5391 = vadd.f32 %v5182, %v5390
    %5392 = vmatmul.f32.gmra.mxu0 %v3875
    %v5393 = vpop.f32.mrf.mxu0
    %v5394 = vadd.f32 %v5185, %v5393
    %5395 = vmatmul.f32.gmra.mxu0 %v3876
    %v5396 = vpop.f32.mrf.mxu0
    %v5397 = vadd.f32 %v5188, %v5396
    %5398 = vmatmul.f32.gmra.mxu0 %v3877
    %v5399 = vpop.f32.mrf.mxu0
    %v5400 = vadd.f32 %v5191, %v5399
    %5401 = vmatmul.f32.gmra.mxu0 %v3878
    %v5402 = vpop.f32.mrf.mxu0
    %v5403 = vadd.f32 %v5194, %v5402
    %5404 = vmatmul.f32.gmra.mxu0 %v3879
    %v5405 = vpop.f32.mrf.mxu0
    %v5406 = vadd.f32 %v5197, %v5405
    %5407 = vmatmul.f32.gmra.mxu0 %v3880
    %v5408 = vpop.f32.mrf.mxu0
    %v5409 = vadd.f32 %v5200, %v5408
    %5410 = vmatmul.f32.gmra.mxu0 %v3881
    %v5411 = vpop.f32.mrf.mxu0
    %v5412 = vadd.f32 %v5203, %v5411
    %5413 = vmatmul.f32.gmra.mxu0 %v3882
    %v5414 = vpop.f32.mrf.mxu0
    %v5415 = vadd.f32 %v5206, %v5414
    %5416 = vmatmul.f32.gmra.mxu0 %v3883
    %v5417 = vpop.f32.mrf.mxu0
    %v5418 = vadd.f32 %v5209, %v5417
    %5419 = vmatmul.f32.gmra.mxu0 %v3884
    %v5420 = vpop.f32.mrf.mxu0
    %v5421 = vadd.f32 %v5212, %v5420
    %5422 = vmatmul.f32.gmra.mxu0 %v3885
    %v5423 = vpop.f32.mrf.mxu0
    %v5424 = vadd.f32 %v5215, %v5423
    %5425 = vmatmul.f32.gmra.mxu0 %v3886
    %v5426 = vpop.f32.mrf.mxu0
    %v5427 = vadd.f32 %v5218, %v5426
    %5428 = vmatmul.f32.gmra.mxu0 %v3887
    %v5429 = vpop.f32.mrf.mxu0
    %v5430 = vadd.f32 %v5221, %v5429
    %5431 = vmatmul.f32.gmra.mxu0 %v3888
    %v5432 = vpop.f32.mrf.mxu0
    %v5433 = vadd.f32 %v5224, %v5432
    %5434 = vmatmul.f32.gmra.mxu0 %v3889
    %v5435 = vpop.f32.mrf.mxu0
    %v5436 = vadd.f32 %v5227, %v5435
    %5437 = vmatmul.f32.gmra.mxu0 %v3890
    %v5438 = vpop.f32.mrf.mxu0
    %v5439 = vadd.f32 %v5230, %v5438
    %5440 = vmatmul.f32.gmra.mxu0 %v3891
    %v5441 = vpop.f32.mrf.mxu0
    %v5442 = vadd.f32 %v5233, %v5441
    %5443 = vmatmul.f32.gmra.mxu0 %v3892
    %v5444 = vpop.f32.mrf.mxu0
    %v5445 = vadd.f32 %v5236, %v5444
    %5446 = vmatmul.f32.gmra.mxu0 %v3893
    %v5447 = vpop.f32.mrf.mxu0
    %v5448 = vadd.f32 %v5239, %v5447
    %5449 = vmatmul.f32.gmra.mxu0 %v3894
    %v5450 = vpop.f32.mrf.mxu0
    %v5451 = vadd.f32 %v5242, %v5450
    %5452 = vmatmul.f32.gmra.mxu0 %v3895
    %v5453 = vpop.f32.mrf.mxu0
    %v5454 = vadd.f32 %v5245, %v5453
    %5455 = vmatmul.f32.gmra.mxu0 %v3896
    %v5456 = vpop.f32.mrf.mxu0
    %v5457 = vadd.f32 %v5248, %v5456
    %5458 = vmatmul.f32.gmra.mxu0 %v3897
    %v5459 = vpop.f32.mrf.mxu0
    %v5460 = vadd.f32 %v5251, %v5459
    %5461 = vmatmul.f32.gmra.mxu0 %v3898
    %v5462 = vpop.f32.mrf.mxu0
    %v5463 = vadd.f32 %v5254, %v5462
    %5464 = vmatmul.f32.gmra.mxu0 %v3899
    %v5465 = vpop.f32.mrf.mxu0
    %v5466 = vadd.f32 %v5257, %v5465
    %5467 = vmatmul.f32.gmra.mxu0 %v3900
    %v5468 = vpop.f32.mrf.mxu0
    %v5469 = vadd.f32 %v5260, %v5468
    %5470 = vmatmul.f32.gmra.mxu0 %v3901
    %v5471 = vpop.f32.mrf.mxu0
    %v5472 = vadd.f32 %v5263, %v5471
    %5473 = vmatmul.f32.gmra.mxu0 %v3902
    %v5474 = vpop.f32.mrf.mxu0
    %v5475 = vadd.f32 %v5266, %v5474
    %5476 = vmatmul.f32.gmra.mxu0 %v3903
    %v5477 = vpop.f32.mrf.mxu0
    %v5478 = vadd.f32 %v5269, %v5477
    %5479 = vmatmul.f32.gmra.mxu0 %v3904
    %v5480 = vpop.f32.mrf.mxu0
    %v5481 = vadd.f32 %v5272, %v5480
    %5482 = vmatmul.f32.gmra.mxu0 %v3905
    %v5483 = vpop.f32.mrf.mxu0
    %v5484 = vadd.f32 %v5275, %v5483
    %5485 = vmatmul.f32.gmra.mxu0 %v3906
    %v5486 = vpop.f32.mrf.mxu0
    %v5487 = vadd.f32 %v5278, %v5486
    %5488 = vmatmul.f32.gmra.mxu0 %v3907
    %v5489 = vpop.f32.mrf.mxu0
    %v5490 = vadd.f32 %v5281, %v5489
    %5491 = vmatmul.f32.gmra.mxu0 %v3908
    %v5492 = vpop.f32.mrf.mxu0
    %v5493 = vadd.f32 %v5284, %v5492
    %5494 = vmatmul.f32.gmra.mxu0 %v3909
    %v5495 = vpop.f32.mrf.mxu0
    %v5496 = vadd.f32 %v5287, %v5495
    %5497 = vmatmul.f32.gmra.mxu0 %v3910
    %v5498 = vpop.f32.mrf.mxu0
    %v5499 = vadd.f32 %v5290, %v5498
    %5500 = vdwg.mxu0
    %5501 = vmatpush.msra.mxu0 %v4214
    %5502 = vmatpush.msra.mxu0 %v4213
    %5503 = vmatpush.msra.mxu0 %v4212
    %5504 = vmatpush.msra.mxu0 %v4211
    %5505 = vmatpush.msra.mxu0 %v4210
    %5506 = vmatpush.msra.mxu0 %v4209
    %5507 = vmatpush.msra.mxu0 %v4208
    %5508 = vmatpush.msra.mxu0 %v4207
    %5509 = vmatpush.msra.mxu0 %v4206
    %5510 = vmatpush.msra.mxu0 %v4205
    %5511 = vmatpush.msra.mxu0 %v4204
    %5512 = vmatpush.msra.mxu0 %v4203
    %5513 = vmatpush.msra.mxu0 %v4202
    %5514 = vmatpush.msra.mxu0 %v4201
    %5515 = vmatpush.msra.mxu0 %v4200
    %5516 = vmatpush.msra.mxu0 %v4199
    %5517 = vmatmul.f32.gmra.mxu0 %v3911
    %v5518 = vpop.f32.mrf.mxu0
    %v5519 = vadd.f32 %v5310, %v5518
    %5520 = vmatmul.f32.gmra.mxu0 %v3912
    %v5521 = vpop.f32.mrf.mxu0
    %v5522 = vadd.f32 %v5313, %v5521
    %5523 = vmatmul.f32.gmra.mxu0 %v3913
    %v5524 = vpop.f32.mrf.mxu0
    %v5525 = vadd.f32 %v5316, %v5524
    %5526 = vmatmul.f32.gmra.mxu0 %v3914
    %v5527 = vpop.f32.mrf.mxu0
    %v5528 = vadd.f32 %v5319, %v5527
    %5529 = vmatmul.f32.gmra.mxu0 %v3915
    %v5530 = vpop.f32.mrf.mxu0
    %v5531 = vadd.f32 %v5322, %v5530
    %5532 = vmatmul.f32.gmra.mxu0 %v3916
    %v5533 = vpop.f32.mrf.mxu0
    %v5534 = vadd.f32 %v5325, %v5533
    %5535 = vmatmul.f32.gmra.mxu0 %v3917
    %v5536 = vpop.f32.mrf.mxu0
    %v5537 = vadd.f32 %v5328, %v5536
    %5538 = vmatmul.f32.gmra.mxu0 %v3918
    %v5539 = vpop.f32.mrf.mxu0
    %v5540 = vadd.f32 %v5331, %v5539
    %5541 = vmatmul.f32.gmra.mxu0 %v3919
    %v5542 = vpop.f32.mrf.mxu0
    %v5543 = vadd.f32 %v5334, %v5542
    %5544 = vmatmul.f32.gmra.mxu0 %v3920
    %v5545 = vpop.f32.mrf.mxu0
    %v5546 = vadd.f32 %v5337, %v5545
    %5547 = vmatmul.f32.gmra.mxu0 %v3921
    %v5548 = vpop.f32.mrf.mxu0
    %v5549 = vadd.f32 %v5340, %v5548
    %5550 = vmatmul.f32.gmra.mxu0 %v3922
    %v5551 = vpop.f32.mrf.mxu0
    %v5552 = vadd.f32 %v5343, %v5551
    %5553 = vmatmul.f32.gmra.mxu0 %v3923
    %v5554 = vpop.f32.mrf.mxu0
    %v5555 = vadd.f32 %v5346, %v5554
    %5556 = vmatmul.f32.gmra.mxu0 %v3924
    %v5557 = vpop.f32.mrf.mxu0
    %v5558 = vadd.f32 %v5349, %v5557
    %5559 = vmatmul.f32.gmra.mxu0 %v3925
    %v5560 = vpop.f32.mrf.mxu0
    %v5561 = vadd.f32 %v5352, %v5560
    %5562 = vmatmul.f32.gmra.mxu0 %v3926
    %v5563 = vpop.f32.mrf.mxu0
    %v5564 = vadd.f32 %v5355, %v5563
    %5565 = vmatmul.f32.gmra.mxu0 %v3927
    %v5566 = vpop.f32.mrf.mxu0
    %v5567 = vadd.f32 %v5358, %v5566
    %5568 = vmatmul.f32.gmra.mxu0 %v3928
    %v5569 = vpop.f32.mrf.mxu0
    %v5570 = vadd.f32 %v5361, %v5569
    %5571 = vmatmul.f32.gmra.mxu0 %v3929
    %v5572 = vpop.f32.mrf.mxu0
    %v5573 = vadd.f32 %v5364, %v5572
    %5574 = vmatmul.f32.gmra.mxu0 %v3930
    %v5575 = vpop.f32.mrf.mxu0
    %v5576 = vadd.f32 %v5367, %v5575
    %5577 = vmatmul.f32.gmra.mxu0 %v3931
    %v5578 = vpop.f32.mrf.mxu0
    %v5579 = vadd.f32 %v5370, %v5578
    %5580 = vmatmul.f32.gmra.mxu0 %v3932
    %v5581 = vpop.f32.mrf.mxu0
    %v5582 = vadd.f32 %v5373, %v5581
    %5583 = vmatmul.f32.gmra.mxu0 %v3933
    %v5584 = vpop.f32.mrf.mxu0
    %v5585 = vadd.f32 %v5376, %v5584
    %5586 = vmatmul.f32.gmra.mxu0 %v3934
    %v5587 = vpop.f32.mrf.mxu0
    %v5588 = vadd.f32 %v5379, %v5587
    %5589 = vmatmul.f32.gmra.mxu0 %v3935
    %v5590 = vpop.f32.mrf.mxu0
    %v5591 = vadd.f32 %v5382, %v5590
    %5592 = vmatmul.f32.gmra.mxu0 %v3936
    %v5593 = vpop.f32.mrf.mxu0
    %v5594 = vadd.f32 %v5385, %v5593
    %5595 = vmatmul.f32.gmra.mxu0 %v3937
    %v5596 = vpop.f32.mrf.mxu0
    %v5597 = vadd.f32 %v5388, %v5596
    %5598 = vmatmul.f32.gmra.mxu0 %v3938
    %v5599 = vpop.f32.mrf.mxu0
    %v5600 = vadd.f32 %v5391, %v5599
    %5601 = vmatmul.f32.gmra.mxu0 %v3939
    %v5602 = vpop.f32.mrf.mxu0
    %v5603 = vadd.f32 %v5394, %v5602
    %5604 = vmatmul.f32.gmra.mxu0 %v3940
    %v5605 = vpop.f32.mrf.mxu0
    %v5606 = vadd.f32 %v5397, %v5605
    %5607 = vmatmul.f32.gmra.mxu0 %v3941
    %v5608 = vpop.f32.mrf.mxu0
    %v5609 = vadd.f32 %v5400, %v5608
    %5610 = vmatmul.f32.gmra.mxu0 %v3942
    %v5611 = vpop.f32.mrf.mxu0
    %v5612 = vadd.f32 %v5403, %v5611
    %5613 = vmatmul.f32.gmra.mxu0 %v3943
    %v5614 = vpop.f32.mrf.mxu0
    %v5615 = vadd.f32 %v5406, %v5614
    %5616 = vmatmul.f32.gmra.mxu0 %v3944
    %v5617 = vpop.f32.mrf.mxu0
    %v5618 = vadd.f32 %v5409, %v5617
    %5619 = vmatmul.f32.gmra.mxu0 %v3945
    %v5620 = vpop.f32.mrf.mxu0
    %v5621 = vadd.f32 %v5412, %v5620
    %5622 = vmatmul.f32.gmra.mxu0 %v3946
    %v5623 = vpop.f32.mrf.mxu0
    %v5624 = vadd.f32 %v5415, %v5623
    %5625 = vmatmul.f32.gmra.mxu0 %v3947
    %v5626 = vpop.f32.mrf.mxu0
    %v5627 = vadd.f32 %v5418, %v5626
    %5628 = vmatmul.f32.gmra.mxu0 %v3948
    %v5629 = vpop.f32.mrf.mxu0
    %v5630 = vadd.f32 %v5421, %v5629
    %5631 = vmatmul.f32.gmra.mxu0 %v3949
    %v5632 = vpop.f32.mrf.mxu0
    %v5633 = vadd.f32 %v5424, %v5632
    %5634 = vmatmul.f32.gmra.mxu0 %v3950
    %v5635 = vpop.f32.mrf.mxu0
    %v5636 = vadd.f32 %v5427, %v5635
    %5637 = vmatmul.f32.gmra.mxu0 %v3951
    %v5638 = vpop.f32.mrf.mxu0
    %v5639 = vadd.f32 %v5430, %v5638
    %5640 = vmatmul.f32.gmra.mxu0 %v3952
    %v5641 = vpop.f32.mrf.mxu0
    %v5642 = vadd.f32 %v5433, %v5641
    %5643 = vmatmul.f32.gmra.mxu0 %v3953
    %v5644 = vpop.f32.mrf.mxu0
    %v5645 = vadd.f32 %v5436, %v5644
    %5646 = vmatmul.f32.gmra.mxu0 %v3954
    %v5647 = vpop.f32.mrf.mxu0
    %v5648 = vadd.f32 %v5439, %v5647
    %5649 = vmatmul.f32.gmra.mxu0 %v3955
    %v5650 = vpop.f32.mrf.mxu0
    %v5651 = vadd.f32 %v5442, %v5650
    %5652 = vmatmul.f32.gmra.mxu0 %v3956
    %v5653 = vpop.f32.mrf.mxu0
    %v5654 = vadd.f32 %v5445, %v5653
    %5655 = vmatmul.f32.gmra.mxu0 %v3957
    %v5656 = vpop.f32.mrf.mxu0
    %v5657 = vadd.f32 %v5448, %v5656
    %5658 = vmatmul.f32.gmra.mxu0 %v3958
    %v5659 = vpop.f32.mrf.mxu0
    %v5660 = vadd.f32 %v5451, %v5659
    %5661 = vmatmul.f32.gmra.mxu0 %v3959
    %v5662 = vpop.f32.mrf.mxu0
    %v5663 = vadd.f32 %v5454, %v5662
    %5664 = vmatmul.f32.gmra.mxu0 %v3960
    %v5665 = vpop.f32.mrf.mxu0
    %v5666 = vadd.f32 %v5457, %v5665
    %5667 = vmatmul.f32.gmra.mxu0 %v3961
    %v5668 = vpop.f32.mrf.mxu0
    %v5669 = vadd.f32 %v5460, %v5668
    %5670 = vmatmul.f32.gmra.mxu0 %v3962
    %v5671 = vpop.f32.mrf.mxu0
    %v5672 = vadd.f32 %v5463, %v5671
    %5673 = vmatmul.f32.gmra.mxu0 %v3963
    %v5674 = vpop.f32.mrf.mxu0
    %v5675 = vadd.f32 %v5466, %v5674
    %5676 = vmatmul.f32.gmra.mxu0 %v3964
    %v5677 = vpop.f32.mrf.mxu0
    %v5678 = vadd.f32 %v5469, %v5677
    %5679 = vmatmul.f32.gmra.mxu0 %v3965
    %v5680 = vpop.f32.mrf.mxu0
    %v5681 = vadd.f32 %v5472, %v5680
    %5682 = vmatmul.f32.gmra.mxu0 %v3966
    %v5683 = vpop.f32.mrf.mxu0
    %v5684 = vadd.f32 %v5475, %v5683
    %5685 = vmatmul.f32.gmra.mxu0 %v3967
    %v5686 = vpop.f32.mrf.mxu0
    %v5687 = vadd.f32 %v5478, %v5686
    %5688 = vmatmul.f32.gmra.mxu0 %v3968
    %v5689 = vpop.f32.mrf.mxu0
    %v5690 = vadd.f32 %v5481, %v5689
    %5691 = vmatmul.f32.gmra.mxu0 %v3969
    %v5692 = vpop.f32.mrf.mxu0
    %v5693 = vadd.f32 %v5484, %v5692
    %5694 = vmatmul.f32.gmra.mxu0 %v3970
    %v5695 = vpop.f32.mrf.mxu0
    %v5696 = vadd.f32 %v5487, %v5695
    %5697 = vmatmul.f32.gmra.mxu0 %v3971
    %v5698 = vpop.f32.mrf.mxu0
    %v5699 = vadd.f32 %v5490, %v5698
    %5700 = vmatmul.f32.gmra.mxu0 %v3972
    %v5701 = vpop.f32.mrf.mxu0
    %v5702 = vadd.f32 %v5493, %v5701
    %5703 = vmatmul.f32.gmra.mxu0 %v3973
    %v5704 = vpop.f32.mrf.mxu0
    %v5705 = vadd.f32 %v5496, %v5704
    %5706 = vmatmul.f32.gmra.mxu0 %v3974
    %v5707 = vpop.f32.mrf.mxu0
    %v5708 = vadd.f32 %v5499, %v5707
    %5709 = vdwg.mxu0
    %5710 = vmatpush.msra.mxu0 %v4230
    %5711 = vmatpush.msra.mxu0 %v4229
    %5712 = vmatpush.msra.mxu0 %v4228
    %5713 = vmatpush.msra.mxu0 %v4227
    %5714 = vmatpush.msra.mxu0 %v4226
    %5715 = vmatpush.msra.mxu0 %v4225
    %5716 = vmatpush.msra.mxu0 %v4224
    %5717 = vmatpush.msra.mxu0 %v4223
    %5718 = vmatpush.msra.mxu0 %v4222
    %5719 = vmatpush.msra.mxu0 %v4221
    %5720 = vmatpush.msra.mxu0 %v4220
    %5721 = vmatpush.msra.mxu0 %v4219
    %5722 = vmatpush.msra.mxu0 %v4218
    %5723 = vmatpush.msra.mxu0 %v4217
    %5724 = vmatpush.msra.mxu0 %v4216
    %5725 = vmatpush.msra.mxu0 %v4215
    %5726 = vmatmul.f32.gmra.mxu0 %v3975
    %v5727 = vpop.f32.mrf.mxu0
    %v5728 = vadd.f32 %v5519, %v5727
    %5729 = vmatmul.f32.gmra.mxu0 %v3976
    %v5730 = vpop.f32.mrf.mxu0
    %v5731 = vadd.f32 %v5522, %v5730
    %5732 = vmatmul.f32.gmra.mxu0 %v3977
    %v5733 = vpop.f32.mrf.mxu0
    %v5734 = vadd.f32 %v5525, %v5733
    %5735 = vmatmul.f32.gmra.mxu0 %v3978
    %v5736 = vpop.f32.mrf.mxu0
    %v5737 = vadd.f32 %v5528, %v5736
    %5738 = vmatmul.f32.gmra.mxu0 %v3979
    %v5739 = vpop.f32.mrf.mxu0
    %v5740 = vadd.f32 %v5531, %v5739
    %5741 = vmatmul.f32.gmra.mxu0 %v3980
    %v5742 = vpop.f32.mrf.mxu0
    %v5743 = vadd.f32 %v5534, %v5742
    %5744 = vmatmul.f32.gmra.mxu0 %v3981
    %v5745 = vpop.f32.mrf.mxu0
    %v5746 = vadd.f32 %v5537, %v5745
    %5747 = vmatmul.f32.gmra.mxu0 %v3982
    %v5748 = vpop.f32.mrf.mxu0
    %v5749 = vadd.f32 %v5540, %v5748
    %5750 = vmatmul.f32.gmra.mxu0 %v3983
    %v5751 = vpop.f32.mrf.mxu0
    %v5752 = vadd.f32 %v5543, %v5751
    %5753 = vmatmul.f32.gmra.mxu0 %v3984
    %v5754 = vpop.f32.mrf.mxu0
    %v5755 = vadd.f32 %v5546, %v5754
    %5756 = vmatmul.f32.gmra.mxu0 %v3985
    %v5757 = vpop.f32.mrf.mxu0
    %v5758 = vadd.f32 %v5549, %v5757
    %5759 = vmatmul.f32.gmra.mxu0 %v3986
    %v5760 = vpop.f32.mrf.mxu0
    %v5761 = vadd.f32 %v5552, %v5760
    %5762 = vmatmul.f32.gmra.mxu0 %v3987
    %v5763 = vpop.f32.mrf.mxu0
    %v5764 = vadd.f32 %v5555, %v5763
    %5765 = vmatmul.f32.gmra.mxu0 %v3988
    %v5766 = vpop.f32.mrf.mxu0
    %v5767 = vadd.f32 %v5558, %v5766
    %5768 = vmatmul.f32.gmra.mxu0 %v3989
    %v5769 = vpop.f32.mrf.mxu0
    %v5770 = vadd.f32 %v5561, %v5769
    %5771 = vmatmul.f32.gmra.mxu0 %v3990
    %v5772 = vpop.f32.mrf.mxu0
    %v5773 = vadd.f32 %v5564, %v5772
    %5774 = vmatmul.f32.gmra.mxu0 %v3991
    %v5775 = vpop.f32.mrf.mxu0
    %v5776 = vadd.f32 %v5567, %v5775
    %5777 = vmatmul.f32.gmra.mxu0 %v3992
    %v5778 = vpop.f32.mrf.mxu0
    %v5779 = vadd.f32 %v5570, %v5778
    %5780 = vmatmul.f32.gmra.mxu0 %v3993
    %v5781 = vpop.f32.mrf.mxu0
    %v5782 = vadd.f32 %v5573, %v5781
    %5783 = vmatmul.f32.gmra.mxu0 %v3994
    %v5784 = vpop.f32.mrf.mxu0
    %v5785 = vadd.f32 %v5576, %v5784
    %5786 = vmatmul.f32.gmra.mxu0 %v3995
    %v5787 = vpop.f32.mrf.mxu0
    %v5788 = vadd.f32 %v5579, %v5787
    %5789 = vmatmul.f32.gmra.mxu0 %v3996
    %v5790 = vpop.f32.mrf.mxu0
    %v5791 = vadd.f32 %v5582, %v5790
    %5792 = vmatmul.f32.gmra.mxu0 %v3997
    %v5793 = vpop.f32.mrf.mxu0
    %v5794 = vadd.f32 %v5585, %v5793
    %5795 = vmatmul.f32.gmra.mxu0 %v3998
    %v5796 = vpop.f32.mrf.mxu0
    %v5797 = vadd.f32 %v5588, %v5796
    %5798 = vmatmul.f32.gmra.mxu0 %v3999
    %v5799 = vpop.f32.mrf.mxu0
    %v5800 = vadd.f32 %v5591, %v5799
    %5801 = vmatmul.f32.gmra.mxu0 %v4000
    %v5802 = vpop.f32.mrf.mxu0
    %v5803 = vadd.f32 %v5594, %v5802
    %5804 = vmatmul.f32.gmra.mxu0 %v4001
    %v5805 = vpop.f32.mrf.mxu0
    %v5806 = vadd.f32 %v5597, %v5805
    %5807 = vmatmul.f32.gmra.mxu0 %v4002
    %v5808 = vpop.f32.mrf.mxu0
    %v5809 = vadd.f32 %v5600, %v5808
    %5810 = vmatmul.f32.gmra.mxu0 %v4003
    %v5811 = vpop.f32.mrf.mxu0
    %v5812 = vadd.f32 %v5603, %v5811
    %5813 = vmatmul.f32.gmra.mxu0 %v4004
    %v5814 = vpop.f32.mrf.mxu0
    %v5815 = vadd.f32 %v5606, %v5814
    %5816 = vmatmul.f32.gmra.mxu0 %v4005
    %v5817 = vpop.f32.mrf.mxu0
    %v5818 = vadd.f32 %v5609, %v5817
    %5819 = vmatmul.f32.gmra.mxu0 %v4006
    %v5820 = vpop.f32.mrf.mxu0
    %v5821 = vadd.f32 %v5612, %v5820
    %5822 = vmatmul.f32.gmra.mxu0 %v4007
    %v5823 = vpop.f32.mrf.mxu0
    %v5824 = vadd.f32 %v5615, %v5823
    %5825 = vmatmul.f32.gmra.mxu0 %v4008
    %v5826 = vpop.f32.mrf.mxu0
    %v5827 = vadd.f32 %v5618, %v5826
    %5828 = vmatmul.f32.gmra.mxu0 %v4009
    %v5829 = vpop.f32.mrf.mxu0
    %v5830 = vadd.f32 %v5621, %v5829
    %5831 = vmatmul.f32.gmra.mxu0 %v4010
    %v5832 = vpop.f32.mrf.mxu0
    %v5833 = vadd.f32 %v5624, %v5832
    %5834 = vmatmul.f32.gmra.mxu0 %v4011
    %v5835 = vpop.f32.mrf.mxu0
    %v5836 = vadd.f32 %v5627, %v5835
    %5837 = vmatmul.f32.gmra.mxu0 %v4012
    %v5838 = vpop.f32.mrf.mxu0
    %v5839 = vadd.f32 %v5630, %v5838
    %5840 = vmatmul.f32.gmra.mxu0 %v4013
    %v5841 = vpop.f32.mrf.mxu0
    %v5842 = vadd.f32 %v5633, %v5841
    %5843 = vmatmul.f32.gmra.mxu0 %v4014
    %v5844 = vpop.f32.mrf.mxu0
    %v5845 = vadd.f32 %v5636, %v5844
    %5846 = vmatmul.f32.gmra.mxu0 %v4015
    %v5847 = vpop.f32.mrf.mxu0
    %v5848 = vadd.f32 %v5639, %v5847
    %5849 = vmatmul.f32.gmra.mxu0 %v4016
    %v5850 = vpop.f32.mrf.mxu0
    %v5851 = vadd.f32 %v5642, %v5850
    %5852 = vmatmul.f32.gmra.mxu0 %v4017
    %v5853 = vpop.f32.mrf.mxu0
    %v5854 = vadd.f32 %v5645, %v5853
    %5855 = vmatmul.f32.gmra.mxu0 %v4018
    %v5856 = vpop.f32.mrf.mxu0
    %v5857 = vadd.f32 %v5648, %v5856
    %5858 = vmatmul.f32.gmra.mxu0 %v4019
    %v5859 = vpop.f32.mrf.mxu0
    %v5860 = vadd.f32 %v5651, %v5859
    %5861 = vmatmul.f32.gmra.mxu0 %v4020
    %v5862 = vpop.f32.mrf.mxu0
    %v5863 = vadd.f32 %v5654, %v5862
    %5864 = vmatmul.f32.gmra.mxu0 %v4021
    %v5865 = vpop.f32.mrf.mxu0
    %v5866 = vadd.f32 %v5657, %v5865
    %5867 = vmatmul.f32.gmra.mxu0 %v4022
    %v5868 = vpop.f32.mrf.mxu0
    %v5869 = vadd.f32 %v5660, %v5868
    %5870 = vmatmul.f32.gmra.mxu0 %v4023
    %v5871 = vpop.f32.mrf.mxu0
    %v5872 = vadd.f32 %v5663, %v5871
    %5873 = vmatmul.f32.gmra.mxu0 %v4024
    %v5874 = vpop.f32.mrf.mxu0
    %v5875 = vadd.f32 %v5666, %v5874
    %5876 = vmatmul.f32.gmra.mxu0 %v4025
    %v5877 = vpop.f32.mrf.mxu0
    %v5878 = vadd.f32 %v5669, %v5877
    %5879 = vmatmul.f32.gmra.mxu0 %v4026
    %v5880 = vpop.f32.mrf.mxu0
    %v5881 = vadd.f32 %v5672, %v5880
    %5882 = vmatmul.f32.gmra.mxu0 %v4027
    %v5883 = vpop.f32.mrf.mxu0
    %v5884 = vadd.f32 %v5675, %v5883
    %5885 = vmatmul.f32.gmra.mxu0 %v4028
    %v5886 = vpop.f32.mrf.mxu0
    %v5887 = vadd.f32 %v5678, %v5886
    %5888 = vmatmul.f32.gmra.mxu0 %v4029
    %v5889 = vpop.f32.mrf.mxu0
    %v5890 = vadd.f32 %v5681, %v5889
    %5891 = vmatmul.f32.gmra.mxu0 %v4030
    %v5892 = vpop.f32.mrf.mxu0
    %v5893 = vadd.f32 %v5684, %v5892
    %5894 = vmatmul.f32.gmra.mxu0 %v4031
    %v5895 = vpop.f32.mrf.mxu0
    %v5896 = vadd.f32 %v5687, %v5895
    %5897 = vmatmul.f32.gmra.mxu0 %v4032
    %v5898 = vpop.f32.mrf.mxu0
    %v5899 = vadd.f32 %v5690, %v5898
    %5900 = vmatmul.f32.gmra.mxu0 %v4033
    %v5901 = vpop.f32.mrf.mxu0
    %v5902 = vadd.f32 %v5693, %v5901
    %5903 = vmatmul.f32.gmra.mxu0 %v4034
    %v5904 = vpop.f32.mrf.mxu0
    %v5905 = vadd.f32 %v5696, %v5904
    %5906 = vmatmul.f32.gmra.mxu0 %v4035
    %v5907 = vpop.f32.mrf.mxu0
    %v5908 = vadd.f32 %v5699, %v5907
    %5909 = vmatmul.f32.gmra.mxu0 %v4036
    %v5910 = vpop.f32.mrf.mxu0
    %v5911 = vadd.f32 %v5702, %v5910
    %5912 = vmatmul.f32.gmra.mxu0 %v4037
    %v5913 = vpop.f32.mrf.mxu0
    %v5914 = vadd.f32 %v5705, %v5913
    %5915 = vmatmul.f32.gmra.mxu0 %v4038
    %v5916 = vpop.f32.mrf.mxu0
    %v5917 = vadd.f32 %v5708, %v5916
    %5918 = vdwg.mxu0
    %5919 = vmatpush.msra.mxu0 %v4246
    %5920 = vmatpush.msra.mxu0 %v4245
    %5921 = vmatpush.msra.mxu0 %v4244
    %5922 = vmatpush.msra.mxu0 %v4243
    %5923 = vmatpush.msra.mxu0 %v4242
    %5924 = vmatpush.msra.mxu0 %v4241
    %5925 = vmatpush.msra.mxu0 %v4240
    %5926 = vmatpush.msra.mxu0 %v4239
    %5927 = vmatpush.msra.mxu0 %v4238
    %5928 = vmatpush.msra.mxu0 %v4237
    %5929 = vmatpush.msra.mxu0 %v4236
    %5930 = vmatpush.msra.mxu0 %v4235
    %5931 = vmatpush.msra.mxu0 %v4234
    %5932 = vmatpush.msra.mxu0 %v4233
    %5933 = vmatpush.msra.mxu0 %v4232
    %5934 = vmatpush.msra.mxu0 %v4231
    %5935 = vmatmul.f32.gmra.mxu0 %v4039
    %v5936 = vpop.f32.mrf.mxu0
    %v5937 = vadd.f32 %v5728, %v5936
    %5938 = vmatmul.f32.gmra.mxu0 %v4040
    %v5939 = vpop.f32.mrf.mxu0
    %v5940 = vadd.f32 %v5731, %v5939
    %5941 = vmatmul.f32.gmra.mxu0 %v4041
    %v5942 = vpop.f32.mrf.mxu0
    %v5943 = vadd.f32 %v5734, %v5942
    %5944 = vmatmul.f32.gmra.mxu0 %v4042
    %v5945 = vpop.f32.mrf.mxu0
    %v5946 = vadd.f32 %v5737, %v5945
    %5947 = vmatmul.f32.gmra.mxu0 %v4043
    %v5948 = vpop.f32.mrf.mxu0
    %v5949 = vadd.f32 %v5740, %v5948
    %5950 = vmatmul.f32.gmra.mxu0 %v4044
    %v5951 = vpop.f32.mrf.mxu0
    %v5952 = vadd.f32 %v5743, %v5951
    %5953 = vmatmul.f32.gmra.mxu0 %v4045
    %v5954 = vpop.f32.mrf.mxu0
    %v5955 = vadd.f32 %v5746, %v5954
    %5956 = vmatmul.f32.gmra.mxu0 %v4046
    %v5957 = vpop.f32.mrf.mxu0
    %v5958 = vadd.f32 %v5749, %v5957
    %5959 = vmatmul.f32.gmra.mxu0 %v4047
    %v5960 = vpop.f32.mrf.mxu0
    %v5961 = vadd.f32 %v5752, %v5960
    %5962 = vmatmul.f32.gmra.mxu0 %v4048
    %v5963 = vpop.f32.mrf.mxu0
    %v5964 = vadd.f32 %v5755, %v5963
    %5965 = vmatmul.f32.gmra.mxu0 %v4049
    %v5966 = vpop.f32.mrf.mxu0
    %v5967 = vadd.f32 %v5758, %v5966
    %5968 = vmatmul.f32.gmra.mxu0 %v4050
    %v5969 = vpop.f32.mrf.mxu0
    %v5970 = vadd.f32 %v5761, %v5969
    %5971 = vmatmul.f32.gmra.mxu0 %v4051
    %v5972 = vpop.f32.mrf.mxu0
    %v5973 = vadd.f32 %v5764, %v5972
    %5974 = vmatmul.f32.gmra.mxu0 %v4052
    %v5975 = vpop.f32.mrf.mxu0
    %v5976 = vadd.f32 %v5767, %v5975
    %5977 = vmatmul.f32.gmra.mxu0 %v4053
    %v5978 = vpop.f32.mrf.mxu0
    %v5979 = vadd.f32 %v5770, %v5978
    %5980 = vmatmul.f32.gmra.mxu0 %v4054
    %v5981 = vpop.f32.mrf.mxu0
    %v5982 = vadd.f32 %v5773, %v5981
    %5983 = vmatmul.f32.gmra.mxu0 %v4055
    %v5984 = vpop.f32.mrf.mxu0
    %v5985 = vadd.f32 %v5776, %v5984
    %5986 = vmatmul.f32.gmra.mxu0 %v4056
    %v5987 = vpop.f32.mrf.mxu0
    %v5988 = vadd.f32 %v5779, %v5987
    %5989 = vmatmul.f32.gmra.mxu0 %v4057
    %v5990 = vpop.f32.mrf.mxu0
    %v5991 = vadd.f32 %v5782, %v5990
    %5992 = vmatmul.f32.gmra.mxu0 %v4058
    %v5993 = vpop.f32.mrf.mxu0
    %v5994 = vadd.f32 %v5785, %v5993
    %5995 = vmatmul.f32.gmra.mxu0 %v4059
    %v5996 = vpop.f32.mrf.mxu0
    %v5997 = vadd.f32 %v5788, %v5996
    %5998 = vmatmul.f32.gmra.mxu0 %v4060
    %v5999 = vpop.f32.mrf.mxu0
    %v6000 = vadd.f32 %v5791, %v5999
    %6001 = vmatmul.f32.gmra.mxu0 %v4061
    %v6002 = vpop.f32.mrf.mxu0
    %v6003 = vadd.f32 %v5794, %v6002
    %6004 = vmatmul.f32.gmra.mxu0 %v4062
    %v6005 = vpop.f32.mrf.mxu0
    %v6006 = vadd.f32 %v5797, %v6005
    %6007 = vmatmul.f32.gmra.mxu0 %v4063
    %v6008 = vpop.f32.mrf.mxu0
    %v6009 = vadd.f32 %v5800, %v6008
    %6010 = vmatmul.f32.gmra.mxu0 %v4064
    %v6011 = vpop.f32.mrf.mxu0
    %v6012 = vadd.f32 %v5803, %v6011
    %6013 = vmatmul.f32.gmra.mxu0 %v4065
    %v6014 = vpop.f32.mrf.mxu0
    %v6015 = vadd.f32 %v5806, %v6014
    %6016 = vmatmul.f32.gmra.mxu0 %v4066
    %v6017 = vpop.f32.mrf.mxu0
    %v6018 = vadd.f32 %v5809, %v6017
    %6019 = vmatmul.f32.gmra.mxu0 %v4067
    %v6020 = vpop.f32.mrf.mxu0
    %v6021 = vadd.f32 %v5812, %v6020
    %6022 = vmatmul.f32.gmra.mxu0 %v4068
    %v6023 = vpop.f32.mrf.mxu0
    %v6024 = vadd.f32 %v5815, %v6023
    %6025 = vmatmul.f32.gmra.mxu0 %v4069
    %v6026 = vpop.f32.mrf.mxu0
    %v6027 = vadd.f32 %v5818, %v6026
    %6028 = vmatmul.f32.gmra.mxu0 %v4070
    %v6029 = vpop.f32.mrf.mxu0
    %v6030 = vadd.f32 %v5821, %v6029
    %6031 = vmatmul.f32.gmra.mxu0 %v4071
    %v6032 = vpop.f32.mrf.mxu0
    %v6033 = vadd.f32 %v5824, %v6032
    %6034 = vmatmul.f32.gmra.mxu0 %v4072
    %v6035 = vpop.f32.mrf.mxu0
    %v6036 = vadd.f32 %v5827, %v6035
    %6037 = vmatmul.f32.gmra.mxu0 %v4073
    %v6038 = vpop.f32.mrf.mxu0
    %v6039 = vadd.f32 %v5830, %v6038
    %6040 = vmatmul.f32.gmra.mxu0 %v4074
    %v6041 = vpop.f32.mrf.mxu0
    %v6042 = vadd.f32 %v5833, %v6041
    %6043 = vmatmul.f32.gmra.mxu0 %v4075
    %v6044 = vpop.f32.mrf.mxu0
    %v6045 = vadd.f32 %v5836, %v6044
    %6046 = vmatmul.f32.gmra.mxu0 %v4076
    %v6047 = vpop.f32.mrf.mxu0
    %v6048 = vadd.f32 %v5839, %v6047
    %6049 = vmatmul.f32.gmra.mxu0 %v4077
    %v6050 = vpop.f32.mrf.mxu0
    %v6051 = vadd.f32 %v5842, %v6050
    %6052 = vmatmul.f32.gmra.mxu0 %v4078
    %v6053 = vpop.f32.mrf.mxu0
    %v6054 = vadd.f32 %v5845, %v6053
    %6055 = vmatmul.f32.gmra.mxu0 %v4079
    %v6056 = vpop.f32.mrf.mxu0
    %v6057 = vadd.f32 %v5848, %v6056
    %6058 = vmatmul.f32.gmra.mxu0 %v4080
    %v6059 = vpop.f32.mrf.mxu0
    %v6060 = vadd.f32 %v5851, %v6059
    %6061 = vmatmul.f32.gmra.mxu0 %v4081
    %v6062 = vpop.f32.mrf.mxu0
    %v6063 = vadd.f32 %v5854, %v6062
    %6064 = vmatmul.f32.gmra.mxu0 %v4082
    %v6065 = vpop.f32.mrf.mxu0
    %v6066 = vadd.f32 %v5857, %v6065
    %6067 = vmatmul.f32.gmra.mxu0 %v4083
    %v6068 = vpop.f32.mrf.mxu0
    %v6069 = vadd.f32 %v5860, %v6068
    %6070 = vmatmul.f32.gmra.mxu0 %v4084
    %v6071 = vpop.f32.mrf.mxu0
    %v6072 = vadd.f32 %v5863, %v6071
    %6073 = vmatmul.f32.gmra.mxu0 %v4085
    %v6074 = vpop.f32.mrf.mxu0
    %v6075 = vadd.f32 %v5866, %v6074
    %6076 = vmatmul.f32.gmra.mxu0 %v4086
    %v6077 = vpop.f32.mrf.mxu0
    %v6078 = vadd.f32 %v5869, %v6077
    %6079 = vmatmul.f32.gmra.mxu0 %v4087
    %v6080 = vpop.f32.mrf.mxu0
    %v6081 = vadd.f32 %v5872, %v6080
    %6082 = vmatmul.f32.gmra.mxu0 %v4088
    %v6083 = vpop.f32.mrf.mxu0
    %v6084 = vadd.f32 %v5875, %v6083
    %6085 = vmatmul.f32.gmra.mxu0 %v4089
    %v6086 = vpop.f32.mrf.mxu0
    %v6087 = vadd.f32 %v5878, %v6086
    %6088 = vmatmul.f32.gmra.mxu0 %v4090
    %v6089 = vpop.f32.mrf.mxu0
    %v6090 = vadd.f32 %v5881, %v6089
    %6091 = vmatmul.f32.gmra.mxu0 %v4091
    %v6092 = vpop.f32.mrf.mxu0
    %v6093 = vadd.f32 %v5884, %v6092
    %6094 = vmatmul.f32.gmra.mxu0 %v4092
    %v6095 = vpop.f32.mrf.mxu0
    %v6096 = vadd.f32 %v5887, %v6095
    %6097 = vmatmul.f32.gmra.mxu0 %v4093
    %v6098 = vpop.f32.mrf.mxu0
    %v6099 = vadd.f32 %v5890, %v6098
    %6100 = vmatmul.f32.gmra.mxu0 %v4094
    %v6101 = vpop.f32.mrf.mxu0
    %v6102 = vadd.f32 %v5893, %v6101
    %6103 = vmatmul.f32.gmra.mxu0 %v4095
    %v6104 = vpop.f32.mrf.mxu0
    %v6105 = vadd.f32 %v5896, %v6104
    %6106 = vmatmul.f32.gmra.mxu0 %v4096
    %v6107 = vpop.f32.mrf.mxu0
    %v6108 = vadd.f32 %v5899, %v6107
    %6109 = vmatmul.f32.gmra.mxu0 %v4097
    %v6110 = vpop.f32.mrf.mxu0
    %v6111 = vadd.f32 %v5902, %v6110
    %6112 = vmatmul.f32.gmra.mxu0 %v4098
    %v6113 = vpop.f32.mrf.mxu0
    %v6114 = vadd.f32 %v5905, %v6113
    %6115 = vmatmul.f32.gmra.mxu0 %v4099
    %v6116 = vpop.f32.mrf.mxu0
    %v6117 = vadd.f32 %v5908, %v6116
    %6118 = vmatmul.f32.gmra.mxu0 %v4100
    %v6119 = vpop.f32.mrf.mxu0
    %v6120 = vadd.f32 %v5911, %v6119
    %6121 = vmatmul.f32.gmra.mxu0 %v4101
    %v6122 = vpop.f32.mrf.mxu0
    %v6123 = vadd.f32 %v5914, %v6122
    %6124 = vmatmul.f32.gmra.mxu0 %v4102
    %v6125 = vpop.f32.mrf.mxu0
    %v6126 = vadd.f32 %v5917, %v6125
    %6127 = vdwg.mxu0
    %v6128 = vadd.f32 %v5937, %v5940
    %v6129 = vadd.f32 %v6128, %v5943
    %v6130 = vadd.f32 %v6129, %v5946
    %v6131 = vadd.f32 %v6130, %v5949
    %v6132 = vadd.f32 %v6131, %v5952
    %v6133 = vadd.f32 %v6132, %v5955
    %v6134 = vadd.f32 %v6133, %v5958
    %v6135 = vadd.f32 %v6134, %v5961
    %v6136 = vadd.f32 %v6135, %v5964
    %v6137 = vadd.f32 %v6136, %v5967
    %v6138 = vadd.f32 %v6137, %v5970
    %v6139 = vadd.f32 %v6138, %v5973
    %v6140 = vadd.f32 %v6139, %v5976
    %v6141 = vadd.f32 %v6140, %v5979
    %v6142 = vadd.f32 %v6141, %v5982
    %v6143 = vadd.f32 %v6142, %v5985
    %v6144 = vadd.f32 %v6143, %v5988
    %v6145 = vadd.f32 %v6144, %v5991
    %v6146 = vadd.f32 %v6145, %v5994
    %v6147 = vadd.f32 %v6146, %v5997
    %v6148 = vadd.f32 %v6147, %v6000
    %v6149 = vadd.f32 %v6148, %v6003
    %v6150 = vadd.f32 %v6149, %v6006
    %v6151 = vadd.f32 %v6150, %v6009
    %v6152 = vadd.f32 %v6151, %v6012
    %v6153 = vadd.f32 %v6152, %v6015
    %v6154 = vadd.f32 %v6153, %v6018
    %v6155 = vadd.f32 %v6154, %v6021
    %v6156 = vadd.f32 %v6155, %v6024
    %v6157 = vadd.f32 %v6156, %v6027
    %v6158 = vadd.f32 %v6157, %v6030
    %v6159 = vadd.f32 %v6158, %v6033
    %v6160 = vadd.f32 %v6159, %v6036
    %v6161 = vadd.f32 %v6160, %v6039
    %v6162 = vadd.f32 %v6161, %v6042
    %v6163 = vadd.f32 %v6162, %v6045
    %v6164 = vadd.f32 %v6163, %v6048
    %v6165 = vadd.f32 %v6164, %v6051
    %v6166 = vadd.f32 %v6165, %v6054
    %v6167 = vadd.f32 %v6166, %v6057
    %v6168 = vadd.f32 %v6167, %v6060
    %v6169 = vadd.f32 %v6168, %v6063
    %v6170 = vadd.f32 %v6169, %v6066
    %v6171 = vadd.f32 %v6170, %v6069
    %v6172 = vadd.f32 %v6171, %v6072
    %v6173 = vadd.f32 %v6172, %v6075
    %v6174 = vadd.f32 %v6173, %v6078
    %v6175 = vadd.f32 %v6174, %v6081
    %v6176 = vadd.f32 %v6175, %v6084
    %v6177 = vadd.f32 %v6176, %v6087
    %v6178 = vadd.f32 %v6177, %v6090
    %v6179 = vadd.f32 %v6178, %v6093
    %v6180 = vadd.f32 %v6179, %v6096
    %v6181 = vadd.f32 %v6180, %v6099
    %v6182 = vadd.f32 %v6181, %v6102
    %v6183 = vadd.f32 %v6182, %v6105
    %v6184 = vadd.f32 %v6183, %v6108
    %v6185 = vadd.f32 %v6184, %v6111
    %v6186 = vadd.f32 %v6185, %v6114
    %v6187 = vadd.f32 %v6186, %v6117
    %v6188 = vadd.f32 %v6187, %v6120
    %v6189 = vadd.f32 %v6188, %v6123
    %v6190 = vadd.f32 %v6189, %v6126
    %v6191 = vrot.slane %v6190, 4
    %v6192 = vadd.f32 %v6190, %v6191
    %v6193 = vrot.slane %v6192, 2
    %v6194 = vadd.f32 %v6192, %v6193
    %v6195 = vrot.slane %v6194, 1
    %v6196 = vadd.f32 %v6194, %v6195
    %v6197 = vmul.f32 %v6196, %v2988
    %v6198 = vsub.f32 %v5937, %v6197
    %v6199 = vsub.f32 %v5940, %v6197
    %v6200 = vsub.f32 %v5943, %v6197
    %v6201 = vsub.f32 %v5946, %v6197
    %v6202 = vsub.f32 %v5949, %v6197
    %v6203 = vsub.f32 %v5952, %v6197
    %v6204 = vsub.f32 %v5955, %v6197
    %v6205 = vsub.f32 %v5958, %v6197
    %v6206 = vsub.f32 %v5961, %v6197
    %v6207 = vsub.f32 %v5964, %v6197
    %v6208 = vsub.f32 %v5967, %v6197
    %v6209 = vsub.f32 %v5970, %v6197
    %v6210 = vsub.f32 %v5973, %v6197
    %v6211 = vsub.f32 %v5976, %v6197
    %v6212 = vsub.f32 %v5979, %v6197
    %v6213 = vsub.f32 %v5982, %v6197
    %v6214 = vsub.f32 %v5985, %v6197
    %v6215 = vsub.f32 %v5988, %v6197
    %v6216 = vsub.f32 %v5991, %v6197
    %v6217 = vsub.f32 %v5994, %v6197
    %v6218 = vsub.f32 %v5997, %v6197
    %v6219 = vsub.f32 %v6000, %v6197
    %v6220 = vsub.f32 %v6003, %v6197
    %v6221 = vsub.f32 %v6006, %v6197
    %v6222 = vsub.f32 %v6009, %v6197
    %v6223 = vsub.f32 %v6012, %v6197
    %v6224 = vsub.f32 %v6015, %v6197
    %v6225 = vsub.f32 %v6018, %v6197
    %v6226 = vsub.f32 %v6021, %v6197
    %v6227 = vsub.f32 %v6024, %v6197
    %v6228 = vsub.f32 %v6027, %v6197
    %v6229 = vsub.f32 %v6030, %v6197
    %v6230 = vsub.f32 %v6033, %v6197
    %v6231 = vsub.f32 %v6036, %v6197
    %v6232 = vsub.f32 %v6039, %v6197
    %v6233 = vsub.f32 %v6042, %v6197
    %v6234 = vsub.f32 %v6045, %v6197
    %v6235 = vsub.f32 %v6048, %v6197
    %v6236 = vsub.f32 %v6051, %v6197
    %v6237 = vsub.f32 %v6054, %v6197
    %v6238 = vsub.f32 %v6057, %v6197
    %v6239 = vsub.f32 %v6060, %v6197
    %v6240 = vsub.f32 %v6063, %v6197
    %v6241 = vsub.f32 %v6066, %v6197
    %v6242 = vsub.f32 %v6069, %v6197
    %v6243 = vsub.f32 %v6072, %v6197
    %v6244 = vsub.f32 %v6075, %v6197
    %v6245 = vsub.f32 %v6078, %v6197
    %v6246 = vsub.f32 %v6081, %v6197
    %v6247 = vsub.f32 %v6084, %v6197
    %v6248 = vsub.f32 %v6087, %v6197
    %v6249 = vsub.f32 %v6090, %v6197
    %v6250 = vsub.f32 %v6093, %v6197
    %v6251 = vsub.f32 %v6096, %v6197
    %v6252 = vsub.f32 %v6099, %v6197
    %v6253 = vsub.f32 %v6102, %v6197
    %v6254 = vsub.f32 %v6105, %v6197
    %v6255 = vsub.f32 %v6108, %v6197
    %v6256 = vsub.f32 %v6111, %v6197
    %v6257 = vsub.f32 %v6114, %v6197
    %v6258 = vsub.f32 %v6117, %v6197
    %v6259 = vsub.f32 %v6120, %v6197
    %v6260 = vsub.f32 %v6123, %v6197
    %v6261 = vsub.f32 %v6126, %v6197
    %v6262 = vmul.f32 %v6198, %v6198
    %v6263 = vmul.f32 %v6199, %v6199
    %v6264 = vmul.f32 %v6200, %v6200
    %v6265 = vmul.f32 %v6201, %v6201
    %v6266 = vmul.f32 %v6202, %v6202
    %v6267 = vmul.f32 %v6203, %v6203
    %v6268 = vmul.f32 %v6204, %v6204
    %v6269 = vmul.f32 %v6205, %v6205
    %v6270 = vmul.f32 %v6206, %v6206
    %v6271 = vmul.f32 %v6207, %v6207
    %v6272 = vmul.f32 %v6208, %v6208
    %v6273 = vmul.f32 %v6209, %v6209
    %v6274 = vmul.f32 %v6210, %v6210
    %v6275 = vmul.f32 %v6211, %v6211
    %v6276 = vmul.f32 %v6212, %v6212
    %v6277 = vmul.f32 %v6213, %v6213
    %v6278 = vmul.f32 %v6214, %v6214
    %v6279 = vmul.f32 %v6215, %v6215
    %v6280 = vmul.f32 %v6216, %v6216
    %v6281 = vmul.f32 %v6217, %v6217
    %v6282 = vmul.f32 %v6218, %v6218
    %v6283 = vmul.f32 %v6219, %v6219
    %v6284 = vmul.f32 %v6220, %v6220
    %v6285 = vmul.f32 %v6221, %v6221
    %v6286 = vmul.f32 %v6222, %v6222
    %v6287 = vmul.f32 %v6223, %v6223
    %v6288 = vmul.f32 %v6224, %v6224
    %v6289 = vmul.f32 %v6225, %v6225
    %v6290 = vmul.f32 %v6226, %v6226
    %v6291 = vmul.f32 %v6227, %v6227
    %v6292 = vmul.f32 %v6228, %v6228
    %v6293 = vmul.f32 %v6229, %v6229
    %v6294 = vmul.f32 %v6230, %v6230
    %v6295 = vmul.f32 %v6231, %v6231
    %v6296 = vmul.f32 %v6232, %v6232
    %v6297 = vmul.f32 %v6233, %v6233
    %v6298 = vmul.f32 %v6234, %v6234
    %v6299 = vmul.f32 %v6235, %v6235
    %v6300 = vmul.f32 %v6236, %v6236
    %v6301 = vmul.f32 %v6237, %v6237
    %v6302 = vmul.f32 %v6238, %v6238
    %v6303 = vmul.f32 %v6239, %v6239
    %v6304 = vmul.f32 %v6240, %v6240
    %v6305 = vmul.f32 %v6241, %v6241
    %v6306 = vmul.f32 %v6242, %v6242
    %v6307 = vmul.f32 %v6243, %v6243
    %v6308 = vmul.f32 %v6244, %v6244
    %v6309 = vmul.f32 %v6245, %v6245
    %v6310 = vmul.f32 %v6246, %v6246
    %v6311 = vmul.f32 %v6247, %v6247
    %v6312 = vmul.f32 %v6248, %v6248
    %v6313 = vmul.f32 %v6249, %v6249
    %v6314 = vmul.f32 %v6250, %v6250
    %v6315 = vmul.f32 %v6251, %v6251
    %v6316 = vmul.f32 %v6252, %v6252
    %v6317 = vmul.f32 %v6253, %v6253
    %v6318 = vmul.f32 %v6254, %v6254
    %v6319 = vmul.f32 %v6255, %v6255
    %v6320 = vmul.f32 %v6256, %v6256
    %v6321 = vmul.f32 %v6257, %v6257
    %v6322 = vmul.f32 %v6258, %v6258
    %v6323 = vmul.f32 %v6259, %v6259
    %v6324 = vmul.f32 %v6260, %v6260
    %v6325 = vmul.f32 %v6261, %v6261
    %v6326 = vadd.f32 %v6262, %v6263
    %v6327 = vadd.f32 %v6326, %v6264
    %v6328 = vadd.f32 %v6327, %v6265
    %v6329 = vadd.f32 %v6328, %v6266
    %v6330 = vadd.f32 %v6329, %v6267
    %v6331 = vadd.f32 %v6330, %v6268
    %v6332 = vadd.f32 %v6331, %v6269
    %v6333 = vadd.f32 %v6332, %v6270
    %v6334 = vadd.f32 %v6333, %v6271
    %v6335 = vadd.f32 %v6334, %v6272
    %v6336 = vadd.f32 %v6335, %v6273
    %v6337 = vadd.f32 %v6336, %v6274
    %v6338 = vadd.f32 %v6337, %v6275
    %v6339 = vadd.f32 %v6338, %v6276
    %v6340 = vadd.f32 %v6339, %v6277
    %v6341 = vadd.f32 %v6340, %v6278
    %v6342 = vadd.f32 %v6341, %v6279
    %v6343 = vadd.f32 %v6342, %v6280
    %v6344 = vadd.f32 %v6343, %v6281
    %v6345 = vadd.f32 %v6344, %v6282
    %v6346 = vadd.f32 %v6345, %v6283
    %v6347 = vadd.f32 %v6346, %v6284
    %v6348 = vadd.f32 %v6347, %v6285
    %v6349 = vadd.f32 %v6348, %v6286
    %v6350 = vadd.f32 %v6349, %v6287
    %v6351 = vadd.f32 %v6350, %v6288
    %v6352 = vadd.f32 %v6351, %v6289
    %v6353 = vadd.f32 %v6352, %v6290
    %v6354 = vadd.f32 %v6353, %v6291
    %v6355 = vadd.f32 %v6354, %v6292
    %v6356 = vadd.f32 %v6355, %v6293
    %v6357 = vadd.f32 %v6356, %v6294
    %v6358 = vadd.f32 %v6357, %v6295
    %v6359 = vadd.f32 %v6358, %v6296
    %v6360 = vadd.f32 %v6359, %v6297
    %v6361 = vadd.f32 %v6360, %v6298
    %v6362 = vadd.f32 %v6361, %v6299
    %v6363 = vadd.f32 %v6362, %v6300
    %v6364 = vadd.f32 %v6363, %v6301
    %v6365 = vadd.f32 %v6364, %v6302
    %v6366 = vadd.f32 %v6365, %v6303
    %v6367 = vadd.f32 %v6366, %v6304
    %v6368 = vadd.f32 %v6367, %v6305
    %v6369 = vadd.f32 %v6368, %v6306
    %v6370 = vadd.f32 %v6369, %v6307
    %v6371 = vadd.f32 %v6370, %v6308
    %v6372 = vadd.f32 %v6371, %v6309
    %v6373 = vadd.f32 %v6372, %v6310
    %v6374 = vadd.f32 %v6373, %v6311
    %v6375 = vadd.f32 %v6374, %v6312
    %v6376 = vadd.f32 %v6375, %v6313
    %v6377 = vadd.f32 %v6376, %v6314
    %v6378 = vadd.f32 %v6377, %v6315
    %v6379 = vadd.f32 %v6378, %v6316
    %v6380 = vadd.f32 %v6379, %v6317
    %v6381 = vadd.f32 %v6380, %v6318
    %v6382 = vadd.f32 %v6381, %v6319
    %v6383 = vadd.f32 %v6382, %v6320
    %v6384 = vadd.f32 %v6383, %v6321
    %v6385 = vadd.f32 %v6384, %v6322
    %v6386 = vadd.f32 %v6385, %v6323
    %v6387 = vadd.f32 %v6386, %v6324
    %v6388 = vadd.f32 %v6387, %v6325
    %v6389 = vrot.slane %v6388, 4
    %v6390 = vadd.f32 %v6388, %v6389
    %v6391 = vrot.slane %v6390, 2
    %v6392 = vadd.f32 %v6390, %v6391
    %v6393 = vrot.slane %v6392, 1
    %v6394 = vadd.f32 %v6392, %v6393
    %v6395 = vmul.f32 %v6394, %v2988
    %v6396 = vadd.f32 %v6395, 1e-05
    %v6397 = vrsqrt.pop %v6396
    %v6398 = vmul.f32 %v6397, %v6396
    %v6399 = vmul.f32 %v6398, %v6397
    %v6400 = vmul.f32 0.5, %v6399
    %v6401 = vsub.f32 1.5, %v6400
    %v6402 = vmul.f32 %v6397, %v6401
    %vm6403 = vweird.f32 %v6396
    %vm6404 = vweird.f32 %v6397
    %vm6405 = vmor %vm6403, %vm6404
    %v6406 = vsel %vm6405, %v6397, %v6402
    %v6407 = vmul.f32 %v6198, %v6406
    %v6408 = vmul.f32 %v6199, %v6406
    %v6409 = vmul.f32 %v6200, %v6406
    %v6410 = vmul.f32 %v6201, %v6406
    %v6411 = vmul.f32 %v6202, %v6406
    %v6412 = vmul.f32 %v6203, %v6406
    %v6413 = vmul.f32 %v6204, %v6406
    %v6414 = vmul.f32 %v6205, %v6406
    %v6415 = vmul.f32 %v6206, %v6406
    %v6416 = vmul.f32 %v6207, %v6406
    %v6417 = vmul.f32 %v6208, %v6406
    %v6418 = vmul.f32 %v6209, %v6406
    %v6419 = vmul.f32 %v6210, %v6406
    %v6420 = vmul.f32 %v6211, %v6406
    %v6421 = vmul.f32 %v6212, %v6406
    %v6422 = vmul.f32 %v6213, %v6406
    %v6423 = vmul.f32 %v6214, %v6406
    %v6424 = vmul.f32 %v6215, %v6406
    %v6425 = vmul.f32 %v6216, %v6406
    %v6426 = vmul.f32 %v6217, %v6406
    %v6427 = vmul.f32 %v6218, %v6406
    %v6428 = vmul.f32 %v6219, %v6406
    %v6429 = vmul.f32 %v6220, %v6406
    %v6430 = vmul.f32 %v6221, %v6406
    %v6431 = vmul.f32 %v6222, %v6406
    %v6432 = vmul.f32 %v6223, %v6406
    %v6433 = vmul.f32 %v6224, %v6406
    %v6434 = vmul.f32 %v6225, %v6406
    %v6435 = vmul.f32 %v6226, %v6406
    %v6436 = vmul.f32 %v6227, %v6406
    %v6437 = vmul.f32 %v6228, %v6406
    %v6438 = vmul.f32 %v6229, %v6406
    %v6439 = vmul.f32 %v6230, %v6406
    %v6440 = vmul.f32 %v6231, %v6406
    %v6441 = vmul.f32 %v6232, %v6406
    %v6442 = vmul.f32 %v6233, %v6406
    %v6443 = vmul.f32 %v6234, %v6406
    %v6444 = vmul.f32 %v6235, %v6406
    %v6445 = vmul.f32 %v6236, %v6406
    %v6446 = vmul.f32 %v6237, %v6406
    %v6447 = vmul.f32 %v6238, %v6406
    %v6448 = vmul.f32 %v6239, %v6406
    %v6449 = vmul.f32 %v6240, %v6406
    %v6450 = vmul.f32 %v6241, %v6406
    %v6451 = vmul.f32 %v6242, %v6406
    %v6452 = vmul.f32 %v6243, %v6406
    %v6453 = vmul.f32 %v6244, %v6406
    %v6454 = vmul.f32 %v6245, %v6406
    %v6455 = vmul.f32 %v6246, %v6406
    %v6456 = vmul.f32 %v6247, %v6406
    %v6457 = vmul.f32 %v6248, %v6406
    %v6458 = vmul.f32 %v6249, %v6406
    %v6459 = vmul.f32 %v6250, %v6406
    %v6460 = vmul.f32 %v6251, %v6406
    %v6461 = vmul.f32 %v6252, %v6406
    %v6462 = vmul.f32 %v6253, %v6406
    %v6463 = vmul.f32 %v6254, %v6406
    %v6464 = vmul.f32 %v6255, %v6406
    %v6465 = vmul.f32 %v6256, %v6406
    %v6466 = vmul.f32 %v6257, %v6406
    %v6467 = vmul.f32 %v6258, %v6406
    %v6468 = vmul.f32 %v6259, %v6406
    %v6469 = vmul.f32 %v6260, %v6406
    %v6470 = vmul.f32 %v6261, %v6406
    %v6471 = vld [vmem:[%s5] sm:$0x1]
    %v6473 = vperm.slane %v6471, 0
    %v6475 = vmul.f32 %v6407, %v6473
    %v6476 = vmul.f32 %v6408, %v6473
    %v6477 = vmul.f32 %v6409, %v6473
    %v6478 = vmul.f32 %v6410, %v6473
    %v6479 = vmul.f32 %v6411, %v6473
    %v6480 = vmul.f32 %v6412, %v6473
    %v6481 = vmul.f32 %v6413, %v6473
    %v6482 = vmul.f32 %v6414, %v6473
    %v6483 = vmul.f32 %v6415, %v6473
    %v6484 = vmul.f32 %v6416, %v6473
    %v6485 = vmul.f32 %v6417, %v6473
    %v6486 = vmul.f32 %v6418, %v6473
    %v6487 = vmul.f32 %v6419, %v6473
    %v6488 = vmul.f32 %v6420, %v6473
    %v6489 = vmul.f32 %v6421, %v6473
    %v6490 = vmul.f32 %v6422, %v6473
    %v6491 = vmul.f32 %v6423, %v6473
    %v6492 = vmul.f32 %v6424, %v6473
    %v6493 = vmul.f32 %v6425, %v6473
    %v6494 = vmul.f32 %v6426, %v6473
    %v6495 = vmul.f32 %v6427, %v6473
    %v6496 = vmul.f32 %v6428, %v6473
    %v6497 = vmul.f32 %v6429, %v6473
    %v6498 = vmul.f32 %v6430, %v6473
    %v6499 = vmul.f32 %v6431, %v6473
    %v6500 = vmul.f32 %v6432, %v6473
    %v6501 = vmul.f32 %v6433, %v6473
    %v6502 = vmul.f32 %v6434, %v6473
    %v6503 = vmul.f32 %v6435, %v6473
    %v6504 = vmul.f32 %v6436, %v6473
    %v6505 = vmul.f32 %v6437, %v6473
    %v6506 = vmul.f32 %v6438, %v6473
    %v6507 = vmul.f32 %v6439, %v6473
    %v6508 = vmul.f32 %v6440, %v6473
    %v6509 = vmul.f32 %v6441, %v6473
    %v6510 = vmul.f32 %v6442, %v6473
    %v6511 = vmul.f32 %v6443, %v6473
    %v6512 = vmul.f32 %v6444, %v6473
    %v6513 = vmul.f32 %v6445, %v6473
    %v6514 = vmul.f32 %v6446, %v6473
    %v6515 = vmul.f32 %v6447, %v6473
    %v6516 = vmul.f32 %v6448, %v6473
    %v6517 = vmul.f32 %v6449, %v6473
    %v6518 = vmul.f32 %v6450, %v6473
    %v6519 = vmul.f32 %v6451, %v6473
    %v6520 = vmul.f32 %v6452, %v6473
    %v6521 = vmul.f32 %v6453, %v6473
    %v6522 = vmul.f32 %v6454, %v6473
    %v6523 = vmul.f32 %v6455, %v6473
    %v6524 = vmul.f32 %v6456, %v6473
    %v6525 = vmul.f32 %v6457, %v6473
    %v6526 = vmul.f32 %v6458, %v6473
    %v6527 = vmul.f32 %v6459, %v6473
    %v6528 = vmul.f32 %v6460, %v6473
    %v6529 = vmul.f32 %v6461, %v6473
    %v6530 = vmul.f32 %v6462, %v6473
    %v6531 = vmul.f32 %v6463, %v6473
    %v6532 = vmul.f32 %v6464, %v6473
    %v6533 = vmul.f32 %v6465, %v6473
    %v6534 = vmul.f32 %v6466, %v6473
    %v6535 = vmul.f32 %v6467, %v6473
    %v6536 = vmul.f32 %v6468, %v6473
    %v6537 = vmul.f32 %v6469, %v6473
    %v6538 = vmul.f32 %v6470, %v6473
    %v6539 = vld [vmem:[%s6] sm:$0x1]
    %v6541 = vperm.slane %v6539, 0
    %v6543 = vadd.f32 %v6475, %v6541
    %v6544 = vadd.f32 %v6476, %v6541
    %v6545 = vadd.f32 %v6477, %v6541
    %v6546 = vadd.f32 %v6478, %v6541
    %v6547 = vadd.f32 %v6479, %v6541
    %v6548 = vadd.f32 %v6480, %v6541
    %v6549 = vadd.f32 %v6481, %v6541
    %v6550 = vadd.f32 %v6482, %v6541
    %v6551 = vadd.f32 %v6483, %v6541
    %v6552 = vadd.f32 %v6484, %v6541
    %v6553 = vadd.f32 %v6485, %v6541
    %v6554 = vadd.f32 %v6486, %v6541
    %v6555 = vadd.f32 %v6487, %v6541
    %v6556 = vadd.f32 %v6488, %v6541
    %v6557 = vadd.f32 %v6489, %v6541
    %v6558 = vadd.f32 %v6490, %v6541
    %v6559 = vadd.f32 %v6491, %v6541
    %v6560 = vadd.f32 %v6492, %v6541
    %v6561 = vadd.f32 %v6493, %v6541
    %v6562 = vadd.f32 %v6494, %v6541
    %v6563 = vadd.f32 %v6495, %v6541
    %v6564 = vadd.f32 %v6496, %v6541
    %v6565 = vadd.f32 %v6497, %v6541
    %v6566 = vadd.f32 %v6498, %v6541
    %v6567 = vadd.f32 %v6499, %v6541
    %v6568 = vadd.f32 %v6500, %v6541
    %v6569 = vadd.f32 %v6501, %v6541
    %v6570 = vadd.f32 %v6502, %v6541
    %v6571 = vadd.f32 %v6503, %v6541
    %v6572 = vadd.f32 %v6504, %v6541
    %v6573 = vadd.f32 %v6505, %v6541
    %v6574 = vadd.f32 %v6506, %v6541
    %v6575 = vadd.f32 %v6507, %v6541
    %v6576 = vadd.f32 %v6508, %v6541
    %v6577 = vadd.f32 %v6509, %v6541
    %v6578 = vadd.f32 %v6510, %v6541
    %v6579 = vadd.f32 %v6511, %v6541
    %v6580 = vadd.f32 %v6512, %v6541
    %v6581 = vadd.f32 %v6513, %v6541
    %v6582 = vadd.f32 %v6514, %v6541
    %v6583 = vadd.f32 %v6515, %v6541
    %v6584 = vadd.f32 %v6516, %v6541
    %v6585 = vadd.f32 %v6517, %v6541
    %v6586 = vadd.f32 %v6518, %v6541
    %v6587 = vadd.f32 %v6519, %v6541
    %v6588 = vadd.f32 %v6520, %v6541
    %v6589 = vadd.f32 %v6521, %v6541
    %v6590 = vadd.f32 %v6522, %v6541
    %v6591 = vadd.f32 %v6523, %v6541
    %v6592 = vadd.f32 %v6524, %v6541
    %v6593 = vadd.f32 %v6525, %v6541
    %v6594 = vadd.f32 %v6526, %v6541
    %v6595 = vadd.f32 %v6527, %v6541
    %v6596 = vadd.f32 %v6528, %v6541
    %v6597 = vadd.f32 %v6529, %v6541
    %v6598 = vadd.f32 %v6530, %v6541
    %v6599 = vadd.f32 %v6531, %v6541
    %v6600 = vadd.f32 %v6532, %v6541
    %v6601 = vadd.f32 %v6533, %v6541
    %v6602 = vadd.f32 %v6534, %v6541
    %v6603 = vadd.f32 %v6535, %v6541
    %v6604 = vadd.f32 %v6536, %v6541
    %v6605 = vadd.f32 %v6537, %v6541
    %v6606 = vadd.f32 %v6538, %v6541
    %v6607 = vadd.f32 %v6543, %v567
    %v6608 = vadd.f32 %v6544, %v568
    %v6609 = vadd.f32 %v6545, %v569
    %v6610 = vadd.f32 %v6546, %v570
    %v6611 = vadd.f32 %v6547, %v571
    %v6612 = vadd.f32 %v6548, %v572
    %v6613 = vadd.f32 %v6549, %v573
    %v6614 = vadd.f32 %v6550, %v574
    %v6615 = vadd.f32 %v6551, %v575
    %v6616 = vadd.f32 %v6552, %v576
    %v6617 = vadd.f32 %v6553, %v577
    %v6618 = vadd.f32 %v6554, %v578
    %v6619 = vadd.f32 %v6555, %v579
    %v6620 = vadd.f32 %v6556, %v580
    %v6621 = vadd.f32 %v6557, %v581
    %v6622 = vadd.f32 %v6558, %v582
    %v6623 = vadd.f32 %v6559, %v583
    %v6624 = vadd.f32 %v6560, %v584
    %v6625 = vadd.f32 %v6561, %v585
    %v6626 = vadd.f32 %v6562, %v586
    %v6627 = vadd.f32 %v6563, %v587
    %v6628 = vadd.f32 %v6564, %v588
    %v6629 = vadd.f32 %v6565, %v589
    %v6630 = vadd.f32 %v6566, %v590
    %v6631 = vadd.f32 %v6567, %v591
    %v6632 = vadd.f32 %v6568, %v592
    %v6633 = vadd.f32 %v6569, %v593
    %v6634 = vadd.f32 %v6570, %v594
    %v6635 = vadd.f32 %v6571, %v595
    %v6636 = vadd.f32 %v6572, %v596
    %v6637 = vadd.f32 %v6573, %v597
    %v6638 = vadd.f32 %v6574, %v598
    %v6639 = vadd.f32 %v6575, %v599
    %v6640 = vadd.f32 %v6576, %v600
    %v6641 = vadd.f32 %v6577, %v601
    %v6642 = vadd.f32 %v6578, %v602
    %v6643 = vadd.f32 %v6579, %v603
    %v6644 = vadd.f32 %v6580, %v604
    %v6645 = vadd.f32 %v6581, %v605
    %v6646 = vadd.f32 %v6582, %v606
    %v6647 = vadd.f32 %v6583, %v607
    %v6648 = vadd.f32 %v6584, %v608
    %v6649 = vadd.f32 %v6585, %v609
    %v6650 = vadd.f32 %v6586, %v610
    %v6651 = vadd.f32 %v6587, %v611
    %v6652 = vadd.f32 %v6588, %v612
    %v6653 = vadd.f32 %v6589, %v613
    %v6654 = vadd.f32 %v6590, %v614
    %v6655 = vadd.f32 %v6591, %v615
    %v6656 = vadd.f32 %v6592, %v616
    %v6657 = vadd.f32 %v6593, %v617
    %v6658 = vadd.f32 %v6594, %v618
    %v6659 = vadd.f32 %v6595, %v619
    %v6660 = vadd.f32 %v6596, %v620
    %v6661 = vadd.f32 %v6597, %v621
    %v6662 = vadd.f32 %v6598, %v622
    %v6663 = vadd.f32 %v6599, %v623
    %v6664 = vadd.f32 %v6600, %v624
    %v6665 = vadd.f32 %v6601, %v625
    %v6666 = vadd.f32 %v6602, %v626
    %v6667 = vadd.f32 %v6603, %v627
    %v6668 = vadd.f32 %v6604, %v628
    %v6669 = vadd.f32 %v6605, %v629
    %v6670 = vadd.f32 %v6606, %v630
    %v6671 = vmax.f32 %v6607, 0.0
    %v6672 = vmax.f32 %v6608, 0.0
    %v6673 = vmax.f32 %v6609, 0.0
    %v6674 = vmax.f32 %v6610, 0.0
    %v6675 = vmax.f32 %v6611, 0.0
    %v6676 = vmax.f32 %v6612, 0.0
    %v6677 = vmax.f32 %v6613, 0.0
    %v6678 = vmax.f32 %v6614, 0.0
    %v6679 = vmax.f32 %v6615, 0.0
    %v6680 = vmax.f32 %v6616, 0.0
    %v6681 = vmax.f32 %v6617, 0.0
    %v6682 = vmax.f32 %v6618, 0.0
    %v6683 = vmax.f32 %v6619, 0.0
    %v6684 = vmax.f32 %v6620, 0.0
    %v6685 = vmax.f32 %v6621, 0.0
    %v6686 = vmax.f32 %v6622, 0.0
    %v6687 = vmax.f32 %v6623, 0.0
    %v6688 = vmax.f32 %v6624, 0.0
    %v6689 = vmax.f32 %v6625, 0.0
    %v6690 = vmax.f32 %v6626, 0.0
    %v6691 = vmax.f32 %v6627, 0.0
    %v6692 = vmax.f32 %v6628, 0.0
    %v6693 = vmax.f32 %v6629, 0.0
    %v6694 = vmax.f32 %v6630, 0.0
    %v6695 = vmax.f32 %v6631, 0.0
    %v6696 = vmax.f32 %v6632, 0.0
    %v6697 = vmax.f32 %v6633, 0.0
    %v6698 = vmax.f32 %v6634, 0.0
    %v6699 = vmax.f32 %v6635, 0.0
    %v6700 = vmax.f32 %v6636, 0.0
    %v6701 = vmax.f32 %v6637, 0.0
    %v6702 = vmax.f32 %v6638, 0.0
    %v6703 = vmax.f32 %v6639, 0.0
    %v6704 = vmax.f32 %v6640, 0.0
    %v6705 = vmax.f32 %v6641, 0.0
    %v6706 = vmax.f32 %v6642, 0.0
    %v6707 = vmax.f32 %v6643, 0.0
    %v6708 = vmax.f32 %v6644, 0.0
    %v6709 = vmax.f32 %v6645, 0.0
    %v6710 = vmax.f32 %v6646, 0.0
    %v6711 = vmax.f32 %v6647, 0.0
    %v6712 = vmax.f32 %v6648, 0.0
    %v6713 = vmax.f32 %v6649, 0.0
    %v6714 = vmax.f32 %v6650, 0.0
    %v6715 = vmax.f32 %v6651, 0.0
    %v6716 = vmax.f32 %v6652, 0.0
    %v6717 = vmax.f32 %v6653, 0.0
    %v6718 = vmax.f32 %v6654, 0.0
    %v6719 = vmax.f32 %v6655, 0.0
    %v6720 = vmax.f32 %v6656, 0.0
    %v6721 = vmax.f32 %v6657, 0.0
    %v6722 = vmax.f32 %v6658, 0.0
    %v6723 = vmax.f32 %v6659, 0.0
    %v6724 = vmax.f32 %v6660, 0.0
    %v6725 = vmax.f32 %v6661, 0.0
    %v6726 = vmax.f32 %v6662, 0.0
    %v6727 = vmax.f32 %v6663, 0.0
    %v6728 = vmax.f32 %v6664, 0.0
    %v6729 = vmax.f32 %v6665, 0.0
    %v6730 = vmax.f32 %v6666, 0.0
    %v6731 = vmax.f32 %v6667, 0.0
    %v6732 = vmax.f32 %v6668, 0.0
    %v6733 = vmax.f32 %v6669, 0.0
    %v6734 = vmax.f32 %v6670, 0.0
    %6735 = vst [vmem:[#allocation9] sm:$0xff] %v6671
    %6736 = vst [vmem:[#allocation9 + $0x8] sm:$0xff] %v6672
    %6737 = vst [vmem:[#allocation9 + $0x10] sm:$0xff] %v6673
    %6738 = vst [vmem:[#allocation9 + $0x18] sm:$0xff] %v6674
    %6739 = vst [vmem:[#allocation9 + $0x20] sm:$0xff] %v6675
    %6740 = vst [vmem:[#allocation9 + $0x28] sm:$0xff] %v6676
    %6741 = vst [vmem:[#allocation9 + $0x30] sm:$0xff] %v6677
    %6742 = vst [vmem:[#allocation9 + $0x38] sm:$0xff] %v6678
    %6743 = vst [vmem:[#allocation9 + $0x40] sm:$0xff] %v6679
    %6744 = vst [vmem:[#allocation9 + $0x48] sm:$0xff] %v6680
    %6745 = vst [vmem:[#allocation9 + $0x50] sm:$0xff] %v6681
    %6746 = vst [vmem:[#allocation9 + $0x58] sm:$0xff] %v6682
    %6747 = vst [vmem:[#allocation9 + $0x60] sm:$0xff] %v6683
    %6748 = vst [vmem:[#allocation9 + $0x68] sm:$0xff] %v6684
    %6749 = vst [vmem:[#allocation9 + $0x70] sm:$0xff] %v6685
    %6750 = vst [vmem:[#allocation9 + $0x78] sm:$0xff] %v6686
    %6751 = vst [vmem:[#allocation9 + $0x80] sm:$0xff] %v6687
    %6752 = vst [vmem:[#allocation9 + $0x88] sm:$0xff] %v6688
    %6753 = vst [vmem:[#allocation9 + $0x90] sm:$0xff] %v6689
    %6754 = vst [vmem:[#allocation9 + $0x98] sm:$0xff] %v6690
    %6755 = vst [vmem:[#allocation9 + $0xa0] sm:$0xff] %v6691
    %6756 = vst [vmem:[#allocation9 + $0xa8] sm:$0xff] %v6692
    %6757 = vst [vmem:[#allocation9 + $0xb0] sm:$0xff] %v6693
    %6758 = vst [vmem:[#allocation9 + $0xb8] sm:$0xff] %v6694
    %6759 = vst [vmem:[#allocation9 + $0xc0] sm:$0xff] %v6695
    %6760 = vst [vmem:[#allocation9 + $0xc8] sm:$0xff] %v6696
    %6761 = vst [vmem:[#allocation9 + $0xd0] sm:$0xff] %v6697
    %6762 = vst [vmem:[#allocation9 + $0xd8] sm:$0xff] %v6698
    %6763 = vst [vmem:[#allocation9 + $0xe0] sm:$0xff] %v6699
    %6764 = vst [vmem:[#allocation9 + $0xe8] sm:$0xff] %v6700
    %6765 = vst [vmem:[#allocation9 + $0xf0] sm:$0xff] %v6701
    %6766 = vst [vmem:[#allocation9 + $0xf8] sm:$0xff] %v6702
    %6767 = vst [vmem:[#allocation9 + $0x100] sm:$0xff] %v6703
    %6768 = vst [vmem:[#allocation9 + $0x108] sm:$0xff] %v6704
    %6769 = vst [vmem:[#allocation9 + $0x110] sm:$0xff] %v6705
    %6770 = vst [vmem:[#allocation9 + $0x118] sm:$0xff] %v6706
    %6771 = vst [vmem:[#allocation9 + $0x120] sm:$0xff] %v6707
    %6772 = vst [vmem:[#allocation9 + $0x128] sm:$0xff] %v6708
    %6773 = vst [vmem:[#allocation9 + $0x130] sm:$0xff] %v6709
    %6774 = vst [vmem:[#allocation9 + $0x138] sm:$0xff] %v6710
    %6775 = vst [vmem:[#allocation9 + $0x140] sm:$0xff] %v6711
    %6776 = vst [vmem:[#allocation9 + $0x148] sm:$0xff] %v6712
    %6777 = vst [vmem:[#allocation9 + $0x150] sm:$0xff] %v6713
    %6778 = vst [vmem:[#allocation9 + $0x158] sm:$0xff] %v6714
    %6779 = vst [vmem:[#allocation9 + $0x160] sm:$0xff] %v6715
    %6780 = vst [vmem:[#allocation9 + $0x168] sm:$0xff] %v6716
    %6781 = vst [vmem:[#allocation9 + $0x170] sm:$0xff] %v6717
    %6782 = vst [vmem:[#allocation9 + $0x178] sm:$0xff] %v6718
    %6783 = vst [vmem:[#allocation9 + $0x180] sm:$0xff] %v6719
    %6784 = vst [vmem:[#allocation9 + $0x188] sm:$0xff] %v6720
    %6785 = vst [vmem:[#allocation9 + $0x190] sm:$0xff] %v6721
    %6786 = vst [vmem:[#allocation9 + $0x198] sm:$0xff] %v6722
    %6787 = vst [vmem:[#allocation9 + $0x1a0] sm:$0xff] %v6723
    %6788 = vst [vmem:[#allocation9 + $0x1a8] sm:$0xff] %v6724
    %6789 = vst [vmem:[#allocation9 + $0x1b0] sm:$0xff] %v6725
    %6790 = vst [vmem:[#allocation9 + $0x1b8] sm:$0xff] %v6726
    %6791 = vst [vmem:[#allocation9 + $0x1c0] sm:$0xff] %v6727
    %6792 = vst [vmem:[#allocation9 + $0x1c8] sm:$0xff] %v6728
    %6793 = vst [vmem:[#allocation9 + $0x1d0] sm:$0xff] %v6729
    %6794 = vst [vmem:[#allocation9 + $0x1d8] sm:$0xff] %v6730
    %6795 = vst [vmem:[#allocation9 + $0x1e0] sm:$0xff] %v6731
    %6796 = vst [vmem:[#allocation9 + $0x1e8] sm:$0xff] %v6732
    %6797 = vst [vmem:[#allocation9 + $0x1f0] sm:$0xff] %v6733
    %6798 = vst [vmem:[#allocation9 + $0x1f8] sm:$0xff] %v6734
    // Predicated region
    $region42: #{tpu_custom_call.1} parent=1 // pred_check
      _
    $region43: #{tpu_custom_call.1} parent=1 // pred_check_branch
      %6800 = sbr.rel (0) target = $region45
    $region44: #{tpu_custom_call.1} parent=1 // pred_region
      %6802 = vsyncadd [#allocation5], 0
      %s6803 = sshll.u32 [#allocation9], 4
      %s6804 = int_to_ptr.vmem [resolvable:$true] %s6803
      %s6805 = sshll.u32 %s7, 4
      %s6806 = int_to_ptr.hbm [resolvable:$true] %s6805
      %6811 = dma.vmem_to_hbm [thread:$0]  %s6804, 8192, %s6806, [#allocation5], 128, 128, 8
    $region45: #{tpu_custom_call.1} parent=1 // pred_fallthru
      _
    // Predicated region
    $region46: #{tpu_custom_call.1} parent=1 // pred_check
      _
    $region47: #{tpu_custom_call.1} parent=1 // pred_check_branch
      %6813 = sbr.rel (0) target = $region49
    $region48: #{tpu_custom_call.1} parent=1 // pred_region
      %6815 = dma.done [#allocation5], 8192
    $region49: #{tpu_custom_call.1} parent=1 // pred_fallthru
      _
    %6816 = vsyncpa [#allocation4], 1
    %6817 = vsyncpa [#allocation7], 1
    %6818 = vsyncpa [#allocation5], 1

</llo_original>
